<compile_context>
chip_gen: v7x
topology: tpu7x:2x2x1
jax: 0.10.0
libtpu: 0.0.40
codegen_flags: <defaults>
</compile_context>

<pallas_src>
import functools

import numpy as np
import jax
import jax.numpy as jnp
from jax import lax
from jax.experimental import pallas as pl
from jax.experimental.pallas import tpu as pltpu

# ----------------------------- configuration ---------------------------------
B = 2                 # batch
C = 3                 # image channels
IMG = 16              # image height / width
PATCH = 4
NP = (IMG // PATCH) ** 2      # 16 patches
N = NP + 1                    # +cls token -> 17 tokens
DIM = 32
HEADS = 4
HEAD_DIM = DIM // HEADS
LAYERS = 2
NUM_CLASSES = 10
DISCARD_RATIO = 0.9           # Recorder default
HEAD_FUSION = "max"           # Recorder default
K_DISCARD = int(N * N * DISCARD_RATIO)   # 260

# ------------------- packed-constant layout (rows x 3*DIM) -------------------
POS_ROW = 0                    # rows [0, N)       cols [0, DIM)
CLS_ROW = POS_ROW + N          # row  17           cols [0, DIM)
PB_ROW = CLS_ROW + 1           # row  18           cols [0, DIM)
BQKV_ROW = PB_ROW + 1          # rows [19, 19+L)   cols [0, 3*DIM)   (head-reordered)
BO_ROW = BQKV_ROW + LAYERS     # rows [21, 21+L)   cols [0, DIM)
HB_ROW = BO_ROW + LAYERS       # row  23           cols [0, NUM_CLASSES)
HW_ROW = HB_ROW + 1            # rows [24, 24+DIM) cols [0, NUM_CLASSES)
CONST_ROWS = HW_ROW + DIM      # 56


# ====================== fused ViT forward (one pallas_call) ===================
def _vit_kernel(head_fusion,
                patches_ref, pw_ref, wqkv_ref, wo_ref, const_ref,
                pred_ref, fused_ref, tok_ref):
    const = const_ref[...]                                   # (56, 96), loaded once
    pos = const[POS_ROW:POS_ROW + N, :DIM]                   # (N, DIM)
    cls_row = const[CLS_ROW:CLS_ROW + 1, :DIM] + pos[0:1, :] # (1, DIM)
    patch_b = const[PB_ROW:PB_ROW + 1, :DIM]                 # (1, DIM)

    # ---- patch embedding + cls + positional embedding -> token scratch ------
    emb = jnp.dot(patches_ref[...], pw_ref[...],
                  preferred_element_type=jnp.float32) + patch_b   # (B*NP, DIM)
    for b in range(B):
        slab = jnp.concatenate(
            [cls_row, emb[b * NP:(b + 1) * NP, :] + pos[1:N, :]], axis=0)   # (N, DIM)
        tok_ref[b] = slab                                     # full-slab aligned store

    scale = 1.0 / (HEAD_DIM ** 0.5)

    # ---- transformer layers (weights resident in VMEM, static unroll) -------
    for l in range(LAYERS):
        wqkv_l = wqkv_ref[l]                                  # (DIM, 3*DIM), per-head blocks
        wo_l = wo_ref[l]                                      # (DIM, DIM)
        bqkv_l = const[BQKV_ROW + l:BQKV_ROW + l + 1, :]      # (1, 3*DIM), same reorder
        bo_l = const[BO_ROW + l:BO_ROW + l + 1, :DIM]         # (1, DIM)

        for b in range(B):
            x_b = tok_ref[b]                                  # (N, DIM) aligned slab
            # qkv computed per batch -> short live range, same total MXU work
            qkv = jnp.dot(x_b, wqkv_l,
                          preferred_element_type=jnp.float32) + bqkv_l       # (N, 3*DIM)

            pv_list = []
            fused_b = None
            for h in range(HEADS):
                base = h * 3 * HEAD_DIM                       # contiguous [q_h|k_h|v_h]
                q = qkv[:, base:base + HEAD_DIM]
                k = qkv[:, base + HEAD_DIM:base + 2 * HEAD_DIM]
                v = qkv[:, base + 2 * HEAD_DIM:base + 3 * HEAD_DIM]

                s = lax.dot_general(q, k, (((1,), (1,)), ((), ())),
                                    preferred_element_type=jnp.float32) * scale
                s = s - jnp.max(s, axis=-1, keepdims=True)
                p = jnp.exp(s)
                p = p * pl.reciprocal(jnp.sum(p, axis=-1, keepdims=True),
                                      approx=True)            # EUP reciprocal (~1e-4 rel err)

                # head fusion folded into the kernel (only the fused map is consumed)
                if fused_b is None:
                    fused_b = p
                elif head_fusion == "mean":
                    fused_b = fused_b + p
                elif head_fusion == "max":
                    fused_b = jnp.maximum(fused_b, p)
                elif head_fusion == "min":
                    fused_b = jnp.minimum(fused_b, p)
                else:
                    raise ValueError("Attention head fusion type Not supported")

                pv_list.append(jnp.dot(p, v, preferred_element_type=jnp.float32))  # (N, HEAD_DIM)

            if head_fusion == "mean":
                fused_b = fused_b * (1.0 / HEADS)
            fused_ref[l, b] = fused_b                         # only fused maps hit HBM

            # single output projection for all heads: concat contexts, one matmul
            ctx = jnp.concatenate(pv_list, axis=1)            # (N, DIM)
            out_b = jnp.dot(ctx, wo_l, preferred_element_type=jnp.float32)
            tok_ref[b] = x_b + out_b + bo_l                   # full-slab aligned store

    # ---- classifier head: ONE matmul for all batches --------------------------
    head_w = const[HW_ROW:HW_ROW + DIM, :NUM_CLASSES]         # (DIM, NUM_CLASSES)
    head_b = const[HB_ROW:HB_ROW + 1, :NUM_CLASSES]           # (1, NUM_CLASSES)
    cls_all = jnp.concatenate([tok_ref[b][0:1, :] for b in range(B)], axis=0)  # (B, DIM)
    pred_ref[...] = jnp.dot(cls_all, head_w,
                            preferred_element_type=jnp.float32) + head_b


def vit_forward(img, packed, head_fusion):
    # patchify NCHW -> (B*NP, C*P*P): tiny layout op, done once in XLA
    x = img.reshape(B, C, IMG // PATCH, PATCH, IMG // PATCH, PATCH)
    x = x.transpose(0, 2, 4, 1, 3, 5).reshape(B * NP, C * PATCH * PATCH)

    vspec = pl.BlockSpec(memory_space=pltpu.MemorySpace.VMEM)
    pred, fused = pl.pallas_call(
        functools.partial(_vit_kernel, head_fusion),
        out_shape=(jax.ShapeDtypeStruct((B, NUM_CLASSES), jnp.float32),
                   jax.ShapeDtypeStruct((LAYERS, B, N, N), jnp.float32)),
        in_specs=[vspec] * 5,
        out_specs=(vspec, vspec),
        scratch_shapes=[pltpu.VMEM((B, N, DIM), jnp.float32)],   # per-batch aligned slabs
    )(x, packed["patch_w"], packed["wqkv"], packed["wo"], packed["const"])
    return pred, fused


# ====== fused discard + attention-rollout + bilinear-resize kernel ============
def _rollout_resize_kernel(fused_ref, thr_ref, wyx_ref, mask_ref):
    # identity / flat-index-0 masks built once
    ii = lax.broadcasted_iota(jnp.int32, (N, N), 0)
    jj = lax.broadcasted_iota(jnp.int32, (N, N), 1)
    eye = (ii == jj).astype(jnp.float32)
    not_origin = jnp.logical_or(ii != 0, jj != 0)             # flat index != 0

    results = [eye for _ in range(B)]                          # result = torch.eye(N)

    for l in range(LAYERS):
        maps = [fused_ref[l, b] for b in range(B)]

        # discard step: zero (in batch row 0 only) every position whose value is
        # among the k smallest of ANY batch row, excluding flat position 0.
        drop = maps[0] <= thr_ref[l, 0]
        for b in range(1, B):
            drop = jnp.logical_or(drop, maps[b] <= thr_ref[l, b])
        drop = jnp.logical_and(drop, not_origin)
        maps[0] = jnp.where(drop, 0.0, maps[0])

        a_list = [(maps[b] + eye) * 0.5 for b in range(B)]     # (fused + 1.0*I)/2
        denom = a_list[0]
        for b in range(1, B):
            denom = denom + a_list[b]                          # a.sum(dim=0) (batch dim)
        inv_denom = pl.reciprocal(denom, approx=True)
        a_list = [a * inv_denom for a in a_list]
        results = [jnp.dot(a_list[b], results[b],
                           preferred_element_type=jnp.float32) for b in range(B)]

    rmin = results[0]
    rmax = results[0]
    for b in range(1, B):
        rmin = jnp.minimum(rmin, results[b])                   # result.min(dim=0)
        rmax = jnp.maximum(rmax, results[b])                   # result.max(dim=0)
    inv_range = pl.reciprocal(rmax - rmin + 1e-5, approx=True)

    # bilinear resize fused into the finalize: out[b] = wy @ mask_small[b] @ wx^T
    wy = wyx_ref[0]
    wx = wyx_ref[1]
    for b in range(B):
        m = (results[b] - rmin) * inv_range                    # (N, N)
        tmp = jnp.dot(wy, m, preferred_element_type=jnp.float32)          # (IMG, N)
        mask_ref[b] = lax.dot_general(tmp, wx, (((1,), (1,)), ((), ())),
                                      preferred_element_type=jnp.float32)  # (IMG, IMG)


def rollout_and_resize(fused, thr, wyx):
    vspec = pl.BlockSpec(memory_space=pltpu.MemorySpace.VMEM)
    sspec = pl.BlockSpec(memory_space=pltpu.MemorySpace.SMEM)
    return pl.pallas_call(
        _rollout_resize_kernel,
        out_shape=jax.ShapeDtypeStruct((B, IMG, IMG), jnp.float32),
        in_specs=[vspec, sspec, vspec],
        out_specs=vspec,
    )(fused, thr, wyx)


# ----------------------- minimal inter-kernel XLA glue ------------------------
def discard_thresholds(fused):
    # Per (layer, batch) k-th-smallest value of the flattened fused map; the
    # zeroing itself happens inside the rollout kernel (value <= threshold).
    # TODO(synk): exact torch.topk tie-breaking is not reproduced; ties at the
    # threshold may zero a few extra positions (benign for continuous data).
    flat = fused.reshape(LAYERS * B, N * N)
    neg_topk, _ = lax.top_k(-flat, K_DISCARD)                  # k smallest per row
    thr = -neg_topk[:, K_DISCARD - 1]                          # k-th smallest value
    return thr.reshape(LAYERS, B)


def _bilinear_matrix(in_size, out_size):
    # torch.nn.functional.interpolate(mode='bilinear', align_corners=False)
    scale = in_size / out_size
    dst = np.arange(out_size, dtype=np.float64)
    src = np.maximum((dst + 0.5) * scale - 0.5, 0.0)
    i0 = np.minimum(np.floor(src).astype(np.int64), in_size - 1)
    frac = src - i0
    i1 = np.minimum(i0 + 1, in_size - 1)
    w = np.zeros((out_size, in_size), np.float64)
    rows = np.arange(out_size)
    np.add.at(w, (rows, i0), 1.0 - frac)
    np.add.at(w, (rows, i1), frac)
    return w.astype(np.float32)


_WYX = np.stack([_bilinear_matrix(N, IMG), _bilinear_matrix(N, IMG)], axis=0)  # (2, IMG, N)


@jax.jit
def recorder_forward(img, packed):
    pred, fused = vit_forward(img, packed, HEAD_FUSION)        # fused: (L, B, N, N)
    thr = discard_thresholds(fused)                            # (L, B) scalars via one top_k
    mask = rollout_and_resize(fused, thr, jnp.asarray(_WYX))   # (B, IMG, IMG)
    return pred, mask


# ----------------------------- synthetic ViT params ---------------------------
def init_params(key):
    ks = jax.random.split(key, 6)

    def nrm(k, shape, scale=0.02):
        return scale * jax.random.normal(k, shape, dtype=jnp.float32)

    return {
        "patch_w": nrm(ks[0], (C * PATCH * PATCH, DIM)),
        "patch_b": jnp.zeros((1, DIM), jnp.float32),
        "cls": nrm(ks[1], (1, DIM)),
        "pos": nrm(ks[2], (N, DIM)),
        "head_w": nrm(ks[3], (DIM, NUM_CLASSES)),
        "head_b": jnp.zeros((1, NUM_CLASSES), jnp.float32),
        "wqkv": nrm(ks[4], (LAYERS, DIM, 3 * DIM)),
        "bqkv": jnp.zeros((LAYERS, 1, 3 * DIM), jnp.float32),
        "wo": nrm(ks[5], (LAYERS, DIM, DIM)),
        "bo": jnp.zeros((LAYERS, 1, DIM), jnp.float32),
    }


def pack_params(p):
    """One-time host-side repack: per-head qkv column reorder + constant packing."""
    def reorder_cols(w):
        # [q(all heads) | k | v]  ->  per-head contiguous [q_h | k_h | v_h] blocks
        cols = []
        for h in range(HEADS):
            cols.extend(range(h * HEAD_DIM, (h + 1) * HEAD_DIM))
            cols.extend(range(DIM + h * HEAD_DIM, DIM + (h + 1) * HEAD_DIM))
            cols.extend(range(2 * DIM + h * HEAD_DIM, 2 * DIM + (h + 1) * HEAD_DIM))
        return w[..., np.array(cols)]

    wqkv_r = reorder_cols(np.asarray(p["wqkv"]))               # (L, DIM, 3*DIM)
    bqkv_r = reorder_cols(np.asarray(p["bqkv"]))               # (L, 1, 3*DIM)

    const = np.zeros((CONST_ROWS, 3 * DIM), np.float32)
    const[POS_ROW:POS_ROW + N, :DIM] = np.asarray(p["pos"])
    const[CLS_ROW, :DIM] = np.asarray(p["cls"])[0]
    const[PB_ROW, :DIM] = np.asarray(p["patch_b"])[0]
    for l in range(LAYERS):
        const[BQKV_ROW + l, :] = bqkv_r[l, 0]
        const[BO_ROW + l, :DIM] = np.asarray(p["bo"])[l, 0]
    const[HB_ROW, :NUM_CLASSES] = np.asarray(p["head_b"])[0]
    const[HW_ROW:HW_ROW + DIM, :NUM_CLASSES] = np.asarray(p["head_w"])

    return {
        "patch_w": jnp.asarray(np.asarray(p["patch_w"])),
        "wqkv": jnp.asarray(wqkv_r),
        "wo": jnp.asarray(np.asarray(p["wo"])),
        "const": jnp.asarray(const),
    }


# ----------------------------- main --------------------------------------------
if __name__ == "__main__":
    key = jax.random.PRNGKey(0)
    kp, ki = jax.random.split(key)
    params = init_params(kp)
    packed = pack_params(params)
    img = jax.random.normal(ki, (B, C, IMG, IMG), dtype=jnp.float32)

    pred, mask = recorder_forward(img, packed)
    jax.block_until_ready((pred, mask))

    assert pred.shape == (B, NUM_CLASSES)
    assert mask.shape == (B, IMG, IMG)
    assert bool(jnp.all(jnp.isfinite(pred))) and bool(jnp.all(jnp.isfinite(mask)))
    print("KERNEL_OK")
</pallas_src>

<mosaic_0001>
module attributes {stable_mosaic.version = 11 : i64} {
  func.func @_vit_kernel(%arg0: memref<32x48xf32, #tpu.memory_space<vmem>>, %arg1: memref<48x32xf32, #tpu.memory_space<vmem>>, %arg2: memref<2x32x96xf32, #tpu.memory_space<vmem>>, %arg3: memref<2x32x32xf32, #tpu.memory_space<vmem>>, %arg4: memref<56x96xf32, #tpu.memory_space<vmem>>, %arg5: memref<2x10xf32, #tpu.memory_space<vmem>>, %arg6: memref<2x2x17x17xf32, #tpu.memory_space<vmem>>, %arg7: memref<2x17x32xf32, #tpu.memory_space<vmem>>) attributes {dimension_semantics = [], scalar_prefetch = 0 : i64, scratch_operands = 1 : i64, tpu.core_type = #tpu.core_type<tc>} {
    %c0 = arith.constant 0 : index
    %c0_0 = arith.constant 0 : index
    %0 = vector.load %arg4[%c0, %c0_0] : memref<56x96xf32, #tpu.memory_space<vmem>>, vector<56x96xf32>
    %1 = vector.extract_strided_slice %0 {offsets = [0, 0], sizes = [17, 32], strides = [1, 1]} : vector<56x96xf32> to vector<17x32xf32>
    %2 = vector.extract_strided_slice %0 {offsets = [17, 0], sizes = [1, 32], strides = [1, 1]} : vector<56x96xf32> to vector<1x32xf32>
    %3 = vector.extract_strided_slice %1 {offsets = [0, 0], sizes = [1, 32], strides = [1, 1]} : vector<17x32xf32> to vector<1x32xf32>
    %4 = arith.addf %2, %3 : vector<1x32xf32>
    %5 = vector.extract_strided_slice %0 {offsets = [18, 0], sizes = [1, 32], strides = [1, 1]} : vector<56x96xf32> to vector<1x32xf32>
    %c0_1 = arith.constant 0 : index
    %c0_2 = arith.constant 0 : index
    %6 = vector.load %arg0[%c0_1, %c0_2] : memref<32x48xf32, #tpu.memory_space<vmem>>, vector<32x48xf32>
    %c0_3 = arith.constant 0 : index
    %c0_4 = arith.constant 0 : index
    %7 = vector.load %arg1[%c0_3, %c0_4] : memref<48x32xf32, #tpu.memory_space<vmem>>, vector<48x32xf32>
    %cst = arith.constant dense<0.000000e+00> : vector<32x32xf32>
    %8 = tpu.matmul %6, %7, %cst {dimension_numbers = #tpu.dot_dimension_numbers<[1], [0], [0], [1], [0, 0, 1, 1], [], []>} : vector<32x48xf32>, vector<48x32xf32>, vector<32x32xf32> -> vector<32x32xf32>
    %9 = vector.broadcast %5 : vector<1x32xf32> to vector<32x32xf32>
    %10 = arith.addf %8, %9 : vector<32x32xf32>
    %11 = vector.extract_strided_slice %10 {offsets = [0, 0], sizes = [16, 32], strides = [1, 1]} : vector<32x32xf32> to vector<16x32xf32>
    %12 = vector.extract_strided_slice %1 {offsets = [1, 0], sizes = [16, 32], strides = [1, 1]} : vector<17x32xf32> to vector<16x32xf32>
    %13 = arith.addf %11, %12 : vector<16x32xf32>
    %14 = tpu.concatenate %4, %13 in 0 : vector<1x32xf32>, vector<16x32xf32> -> vector<17x32xf32>
    %c0_5 = arith.constant 0 : index
    %c0_6 = arith.constant 0 : index
    %c0_7 = arith.constant 0 : index
    %15 = vector.load %arg7[%c0_5, %c0_6, %c0_7] : memref<2x17x32xf32, #tpu.memory_space<vmem>>, vector<1x17x32xf32>
    %16 = vector.shape_cast %15 : vector<1x17x32xf32> to vector<17x32xf32>
    %17 = vector.shape_cast %14 : vector<17x32xf32> to vector<1x17x32xf32>
    tpu.vector_store %arg7[%c0_5, %c0_6, %c0_7], %17 {strides = array<i32>} : memref<2x17x32xf32, #tpu.memory_space<vmem>>, vector<1x17x32xf32>,
    %18 = vector.extract_strided_slice %10 {offsets = [16, 0], sizes = [16, 32], strides = [1, 1]} : vector<32x32xf32> to vector<16x32xf32>
    %19 = vector.extract_strided_slice %1 {offsets = [1, 0], sizes = [16, 32], strides = [1, 1]} : vector<17x32xf32> to vector<16x32xf32>
    %20 = arith.addf %18, %19 : vector<16x32xf32>
    %21 = tpu.concatenate %4, %20 in 0 : vector<1x32xf32>, vector<16x32xf32> -> vector<17x32xf32>
    %c1 = arith.constant 1 : index
    %c0_8 = arith.constant 0 : index
    %c0_9 = arith.constant 0 : index
    %22 = vector.load %arg7[%c1, %c0_8, %c0_9] : memref<2x17x32xf32, #tpu.memory_space<vmem>>, vector<1x17x32xf32>
    %23 = vector.shape_cast %22 : vector<1x17x32xf32> to vector<17x32xf32>
    %24 = vector.shape_cast %21 : vector<17x32xf32> to vector<1x17x32xf32>
    tpu.vector_store %arg7[%c1, %c0_8, %c0_9], %24 {strides = array<i32>} : memref<2x17x32xf32, #tpu.memory_space<vmem>>, vector<1x17x32xf32>,
    %c0_10 = arith.constant 0 : index
    %c0_11 = arith.constant 0 : index
    %c0_12 = arith.constant 0 : index
    %25 = vector.load %arg2[%c0_10, %c0_11, %c0_12] : memref<2x32x96xf32, #tpu.memory_space<vmem>>, vector<1x32x96xf32>
    %26 = vector.shape_cast %25 : vector<1x32x96xf32> to vector<32x96xf32>
    %c0_13 = arith.constant 0 : index
    %c0_14 = arith.constant 0 : index
    %c0_15 = arith.constant 0 : index
    %27 = vector.load %arg3[%c0_13, %c0_14, %c0_15] : memref<2x32x32xf32, #tpu.memory_space<vmem>>, vector<1x32x32xf32>
    %28 = vector.shape_cast %27 : vector<1x32x32xf32> to vector<32x32xf32>
    %29 = vector.extract_strided_slice %0 {offsets = [19, 0], sizes = [1, 96], strides = [1, 1]} : vector<56x96xf32> to vector<1x96xf32>
    %30 = vector.extract_strided_slice %0 {offsets = [21, 0], sizes = [1, 32], strides = [1, 1]} : vector<56x96xf32> to vector<1x32xf32>
    %c0_16 = arith.constant 0 : index
    %c0_17 = arith.constant 0 : index
    %c0_18 = arith.constant 0 : index
    %31 = vector.load %arg7[%c0_16, %c0_17, %c0_18] : memref<2x17x32xf32, #tpu.memory_space<vmem>>, vector<1x17x32xf32>
    %32 = vector.shape_cast %31 : vector<1x17x32xf32> to vector<17x32xf32>
    %cst_19 = arith.constant dense<0.000000e+00> : vector<17x96xf32>
    %33 = tpu.matmul %32, %26, %cst_19 {dimension_numbers = #tpu.dot_dimension_numbers<[1], [0], [0], [1], [0, 0, 1, 1], [], []>} : vector<17x32xf32>, vector<32x96xf32>, vector<17x96xf32> -> vector<17x96xf32>
    %34 = vector.broadcast %29 : vector<1x96xf32> to vector<17x96xf32>
    %35 = arith.addf %33, %34 : vector<17x96xf32>
    %36 = vector.extract_strided_slice %35 {offsets = [0, 0], sizes = [17, 8], strides = [1, 1]} : vector<17x96xf32> to vector<17x8xf32>
    %37 = vector.extract_strided_slice %35 {offsets = [0, 8], sizes = [17, 8], strides = [1, 1]} : vector<17x96xf32> to vector<17x8xf32>
    %38 = vector.extract_strided_slice %35 {offsets = [0, 16], sizes = [17, 8], strides = [1, 1]} : vector<17x96xf32> to vector<17x8xf32>
    %cst_20 = arith.constant dense<0.000000e+00> : vector<17x17xf32>
    %39 = tpu.matmul %36, %37, %cst_20 {dimension_numbers = #tpu.dot_dimension_numbers<[1], [1], [0], [0], [0, 0, 1, 0], [], []>} : vector<17x8xf32>, vector<17x8xf32>, vector<17x17xf32> -> vector<17x17xf32>
    %cst_21 = arith.constant 0.353553385 : f32
    %40 = vector.broadcast %cst_21 : f32 to vector<17x17xf32>
    %41 = arith.mulf %39, %40 : vector<17x17xf32>
    %cst_22 = arith.constant dense<0xFF800000> : vector<17xf32>
    %42 = vector.multi_reduction <maximumf>, %41, %cst_22 [1] : vector<17x17xf32> to vector<17xf32>
    %43 = vector.shape_cast %42 : vector<17xf32> to vector<17x1xf32>
    %44 = vector.broadcast %43 : vector<17x1xf32> to vector<17x17xf32>
    %45 = arith.subf %41, %44 : vector<17x17xf32>
    %46 = math.exp %45 : vector<17x17xf32>
    %cst_23 = arith.constant dense<0.000000e+00> : vector<17xf32>
    %47 = vector.multi_reduction <add>, %46, %cst_23 [1] : vector<17x17xf32> to vector<17xf32>
    %48 = vector.shape_cast %47 : vector<17xf32> to vector<17x1xf32>
    %49 = tpu.reciprocal %48 {approx = true} : vector<17x1xf32> -> vector<17x1xf32>
    %50 = vector.broadcast %49 : vector<17x1xf32> to vector<17x17xf32>
    %51 = arith.mulf %46, %50 : vector<17x17xf32>
    %cst_24 = arith.constant dense<0.000000e+00> : vector<17x8xf32>
    %52 = tpu.matmul %51, %38, %cst_24 {dimension_numbers = #tpu.dot_dimension_numbers<[1], [0], [0], [1], [0, 0, 1, 1], [], []>} : vector<17x17xf32>, vector<17x8xf32>, vector<17x8xf32> -> vector<17x8xf32>
    %53 = vector.extract_strided_slice %35 {offsets = [0, 24], sizes = [17, 8], strides = [1, 1]} : vector<17x96xf32> to vector<17x8xf32>
    %54 = vector.extract_strided_slice %35 {offsets = [0, 32], sizes = [17, 8], strides = [1, 1]} : vector<17x96xf32> to vector<17x8xf32>
    %55 = vector.extract_strided_slice %35 {offsets = [0, 40], sizes = [17, 8], strides = [1, 1]} : vector<17x96xf32> to vector<17x8xf32>
    %cst_25 = arith.constant dense<0.000000e+00> : vector<17x17xf32>
    %56 = tpu.matmul %53, %54, %cst_25 {dimension_numbers = #tpu.dot_dimension_numbers<[1], [1], [0], [0], [0, 0, 1, 0], [], []>} : vector<17x8xf32>, vector<17x8xf32>, vector<17x17xf32> -> vector<17x17xf32>
    %cst_26 = arith.constant 0.353553385 : f32
    %57 = vector.broadcast %cst_26 : f32 to vector<17x17xf32>
    %58 = arith.mulf %56, %57 : vector<17x17xf32>
    %cst_27 = arith.constant dense<0xFF800000> : vector<17xf32>
    %59 = vector.multi_reduction <maximumf>, %58, %cst_27 [1] : vector<17x17xf32> to vector<17xf32>
    %60 = vector.shape_cast %59 : vector<17xf32> to vector<17x1xf32>
    %61 = vector.broadcast %60 : vector<17x1xf32> to vector<17x17xf32>
    %62 = arith.subf %58, %61 : vector<17x17xf32>
    %63 = math.exp %62 : vector<17x17xf32>
    %cst_28 = arith.constant dense<0.000000e+00> : vector<17xf32>
    %64 = vector.multi_reduction <add>, %63, %cst_28 [1] : vector<17x17xf32> to vector<17xf32>
    %65 = vector.shape_cast %64 : vector<17xf32> to vector<17x1xf32>
    %66 = tpu.reciprocal %65 {approx = true} : vector<17x1xf32> -> vector<17x1xf32>
    %67 = vector.broadcast %66 : vector<17x1xf32> to vector<17x17xf32>
    %68 = arith.mulf %63, %67 : vector<17x17xf32>
    %69 = arith.maximumf %51, %68 : vector<17x17xf32>
    %cst_29 = arith.constant dense<0.000000e+00> : vector<17x8xf32>
    %70 = tpu.matmul %68, %55, %cst_29 {dimension_numbers = #tpu.dot_dimension_numbers<[1], [0], [0], [1], [0, 0, 1, 1], [], []>} : vector<17x17xf32>, vector<17x8xf32>, vector<17x8xf32> -> vector<17x8xf32>
    %71 = vector.extract_strided_slice %35 {offsets = [0, 48], sizes = [17, 8], strides = [1, 1]} : vector<17x96xf32> to vector<17x8xf32>
    %72 = vector.extract_strided_slice %35 {offsets = [0, 56], sizes = [17, 8], strides = [1, 1]} : vector<17x96xf32> to vector<17x8xf32>
    %73 = vector.extract_strided_slice %35 {offsets = [0, 64], sizes = [17, 8], strides = [1, 1]} : vector<17x96xf32> to vector<17x8xf32>
    %cst_30 = arith.constant dense<0.000000e+00> : vector<17x17xf32>
    %74 = tpu.matmul %71, %72, %cst_30 {dimension_numbers = #tpu.dot_dimension_numbers<[1], [1], [0], [0], [0, 0, 1, 0], [], []>} : vector<17x8xf32>, vector<17x8xf32>, vector<17x17xf32> -> vector<17x17xf32>
    %cst_31 = arith.constant 0.353553385 : f32
    %75 = vector.broadcast %cst_31 : f32 to vector<17x17xf32>
    %76 = arith.mulf %74, %75 : vector<17x17xf32>
    %cst_32 = arith.constant dense<0xFF800000> : vector<17xf32>
    %77 = vector.multi_reduction <maximumf>, %76, %cst_32 [1] : vector<17x17xf32> to vector<17xf32>
    %78 = vector.shape_cast %77 : vector<17xf32> to vector<17x1xf32>
    %79 = vector.broadcast %78 : vector<17x1xf32> to vector<17x17xf32>
    %80 = arith.subf %76, %79 : vector<17x17xf32>
    %81 = math.exp %80 : vector<17x17xf32>
    %cst_33 = arith.constant dense<0.000000e+00> : vector<17xf32>
    %82 = vector.multi_reduction <add>, %81, %cst_33 [1] : vector<17x17xf32> to vector<17xf32>
    %83 = vector.shape_cast %82 : vector<17xf32> to vector<17x1xf32>
    %84 = tpu.reciprocal %83 {approx = true} : vector<17x1xf32> -> vector<17x1xf32>
    %85 = vector.broadcast %84 : vector<17x1xf32> to vector<17x17xf32>
    %86 = arith.mulf %81, %85 : vector<17x17xf32>
    %87 = arith.maximumf %69, %86 : vector<17x17xf32>
    %cst_34 = arith.constant dense<0.000000e+00> : vector<17x8xf32>
    %88 = tpu.matmul %86, %73, %cst_34 {dimension_numbers = #tpu.dot_dimension_numbers<[1], [0], [0], [1], [0, 0, 1, 1], [], []>} : vector<17x17xf32>, vector<17x8xf32>, vector<17x8xf32> -> vector<17x8xf32>
    %89 = vector.extract_strided_slice %35 {offsets = [0, 72], sizes = [17, 8], strides = [1, 1]} : vector<17x96xf32> to vector<17x8xf32>
    %90 = vector.extract_strided_slice %35 {offsets = [0, 80], sizes = [17, 8], strides = [1, 1]} : vector<17x96xf32> to vector<17x8xf32>
    %91 = vector.extract_strided_slice %35 {offsets = [0, 88], sizes = [17, 8], strides = [1, 1]} : vector<17x96xf32> to vector<17x8xf32>
    %cst_35 = arith.constant dense<0.000000e+00> : vector<17x17xf32>
    %92 = tpu.matmul %89, %90, %cst_35 {dimension_numbers = #tpu.dot_dimension_numbers<[1], [1], [0], [0], [0, 0, 1, 0], [], []>} : vector<17x8xf32>, vector<17x8xf32>, vector<17x17xf32> -> vector<17x17xf32>
    %cst_36 = arith.constant 0.353553385 : f32
    %93 = vector.broadcast %cst_36 : f32 to vector<17x17xf32>
    %94 = arith.mulf %92, %93 : vector<17x17xf32>
    %cst_37 = arith.constant dense<0xFF800000> : vector<17xf32>
    %95 = vector.multi_reduction <maximumf>, %94, %cst_37 [1] : vector<17x17xf32> to vector<17xf32>
    %96 = vector.shape_cast %95 : vector<17xf32> to vector<17x1xf32>
    %97 = vector.broadcast %96 : vector<17x1xf32> to vector<17x17xf32>
    %98 = arith.subf %94, %97 : vector<17x17xf32>
    %99 = math.exp %98 : vector<17x17xf32>
    %cst_38 = arith.constant dense<0.000000e+00> : vector<17xf32>
    %100 = vector.multi_reduction <add>, %99, %cst_38 [1] : vector<17x17xf32> to vector<17xf32>
    %101 = vector.shape_cast %100 : vector<17xf32> to vector<17x1xf32>
    %102 = tpu.reciprocal %101 {approx = true} : vector<17x1xf32> -> vector<17x1xf32>
    %103 = vector.broadcast %102 : vector<17x1xf32> to vector<17x17xf32>
    %104 = arith.mulf %99, %103 : vector<17x17xf32>
    %105 = arith.maximumf %87, %104 : vector<17x17xf32>
    %cst_39 = arith.constant dense<0.000000e+00> : vector<17x8xf32>
    %106 = tpu.matmul %104, %91, %cst_39 {dimension_numbers = #tpu.dot_dimension_numbers<[1], [0], [0], [1], [0, 0, 1, 1], [], []>} : vector<17x17xf32>, vector<17x8xf32>, vector<17x8xf32> -> vector<17x8xf32>
    %c0_40 = arith.constant 0 : index
    %c0_41 = arith.constant 0 : index
    %c0_42 = arith.constant 0 : index
    %c0_43 = arith.constant 0 : index
    %107 = vector.load %arg6[%c0_40, %c0_41, %c0_42, %c0_43] : memref<2x2x17x17xf32, #tpu.memory_space<vmem>>, vector<1x1x17x17xf32>
    %108 = vector.shape_cast %107 : vector<1x1x17x17xf32> to vector<17x17xf32>
    %109 = vector.shape_cast %105 : vector<17x17xf32> to vector<1x1x17x17xf32>
    tpu.vector_store %arg6[%c0_40, %c0_41, %c0_42, %c0_43], %109 {strides = array<i32>} : memref<2x2x17x17xf32, #tpu.memory_space<vmem>>, vector<1x1x17x17xf32>,
    %110 = tpu.concatenate %52, %70, %88, %106 in 1 : vector<17x8xf32>, vector<17x8xf32>, vector<17x8xf32>, vector<17x8xf32> -> vector<17x32xf32>
    %cst_44 = arith.constant dense<0.000000e+00> : vector<17x32xf32>
    %111 = tpu.matmul %110, %28, %cst_44 {dimension_numbers = #tpu.dot_dimension_numbers<[1], [0], [0], [1], [0, 0, 1, 1], [], []>} : vector<17x32xf32>, vector<32x32xf32>, vector<17x32xf32> -> vector<17x32xf32>
    %112 = arith.addf %32, %111 : vector<17x32xf32>
    %113 = vector.broadcast %30 : vector<1x32xf32> to vector<17x32xf32>
    %114 = arith.addf %112, %113 : vector<17x32xf32>
    %c0_45 = arith.constant 0 : index
    %c0_46 = arith.constant 0 : index
    %c0_47 = arith.constant 0 : index
    %115 = vector.load %arg7[%c0_45, %c0_46, %c0_47] : memref<2x17x32xf32, #tpu.memory_space<vmem>>, vector<1x17x32xf32>
    %116 = vector.shape_cast %115 : vector<1x17x32xf32> to vector<17x32xf32>
    %117 = vector.shape_cast %114 : vector<17x32xf32> to vector<1x17x32xf32>
    tpu.vector_store %arg7[%c0_45, %c0_46, %c0_47], %117 {strides = array<i32>} : memref<2x17x32xf32, #tpu.memory_space<vmem>>, vector<1x17x32xf32>,
    %c1_48 = arith.constant 1 : index
    %c0_49 = arith.constant 0 : index
    %c0_50 = arith.constant 0 : index
    %118 = vector.load %arg7[%c1_48, %c0_49, %c0_50] : memref<2x17x32xf32, #tpu.memory_space<vmem>>, vector<1x17x32xf32>
    %119 = vector.shape_cast %118 : vector<1x17x32xf32> to vector<17x32xf32>
    %cst_51 = arith.constant dense<0.000000e+00> : vector<17x96xf32>
    %120 = tpu.matmul %119, %26, %cst_51 {dimension_numbers = #tpu.dot_dimension_numbers<[1], [0], [0], [1], [0, 0, 1, 1], [], []>} : vector<17x32xf32>, vector<32x96xf32>, vector<17x96xf32> -> vector<17x96xf32>
    %121 = vector.broadcast %29 : vector<1x96xf32> to vector<17x96xf32>
    %122 = arith.addf %120, %121 : vector<17x96xf32>
    %123 = vector.extract_strided_slice %122 {offsets = [0, 0], sizes = [17, 8], strides = [1, 1]} : vector<17x96xf32> to vector<17x8xf32>
    %124 = vector.extract_strided_slice %122 {offsets = [0, 8], sizes = [17, 8], strides = [1, 1]} : vector<17x96xf32> to vector<17x8xf32>
    %125 = vector.extract_strided_slice %122 {offsets = [0, 16], sizes = [17, 8], strides = [1, 1]} : vector<17x96xf32> to vector<17x8xf32>
    %cst_52 = arith.constant dense<0.000000e+00> : vector<17x17xf32>
    %126 = tpu.matmul %123, %124, %cst_52 {dimension_numbers = #tpu.dot_dimension_numbers<[1], [1], [0], [0], [0, 0, 1, 0], [], []>} : vector<17x8xf32>, vector<17x8xf32>, vector<17x17xf32> -> vector<17x17xf32>
    %cst_53 = arith.constant 0.353553385 : f32
    %127 = vector.broadcast %cst_53 : f32 to vector<17x17xf32>
    %128 = arith.mulf %126, %127 : vector<17x17xf32>
    %cst_54 = arith.constant dense<0xFF800000> : vector<17xf32>
    %129 = vector.multi_reduction <maximumf>, %128, %cst_54 [1] : vector<17x17xf32> to vector<17xf32>
    %130 = vector.shape_cast %129 : vector<17xf32> to vector<17x1xf32>
    %131 = vector.broadcast %130 : vector<17x1xf32> to vector<17x17xf32>
    %132 = arith.subf %128, %131 : vector<17x17xf32>
    %133 = math.exp %132 : vector<17x17xf32>
    %cst_55 = arith.constant dense<0.000000e+00> : vector<17xf32>
    %134 = vector.multi_reduction <add>, %133, %cst_55 [1] : vector<17x17xf32> to vector<17xf32>
    %135 = vector.shape_cast %134 : vector<17xf32> to vector<17x1xf32>
    %136 = tpu.reciprocal %135 {approx = true} : vector<17x1xf32> -> vector<17x1xf32>
    %137 = vector.broadcast %136 : vector<17x1xf32> to vector<17x17xf32>
    %138 = arith.mulf %133, %137 : vector<17x17xf32>
    %cst_56 = arith.constant dense<0.000000e+00> : vector<17x8xf32>
    %139 = tpu.matmul %138, %125, %cst_56 {dimension_numbers = #tpu.dot_dimension_numbers<[1], [0], [0], [1], [0, 0, 1, 1], [], []>} : vector<17x17xf32>, vector<17x8xf32>, vector<17x8xf32> -> vector<17x8xf32>
    %140 = vector.extract_strided_slice %122 {offsets = [0, 24], sizes = [17, 8], strides = [1, 1]} : vector<17x96xf32> to vector<17x8xf32>
    %141 = vector.extract_strided_slice %122 {offsets = [0, 32], sizes = [17, 8], strides = [1, 1]} : vector<17x96xf32> to vector<17x8xf32>
    %142 = vector.extract_strided_slice %122 {offsets = [0, 40], sizes = [17, 8], strides = [1, 1]} : vector<17x96xf32> to vector<17x8xf32>
    %cst_57 = arith.constant dense<0.000000e+00> : vector<17x17xf32>
    %143 = tpu.matmul %140, %141, %cst_57 {dimension_numbers = #tpu.dot_dimension_numbers<[1], [1], [0], [0], [0, 0, 1, 0], [], []>} : vector<17x8xf32>, vector<17x8xf32>, vector<17x17xf32> -> vector<17x17xf32>
    %cst_58 = arith.constant 0.353553385 : f32
    %144 = vector.broadcast %cst_58 : f32 to vector<17x17xf32>
    %145 = arith.mulf %143, %144 : vector<17x17xf32>
    %cst_59 = arith.constant dense<0xFF800000> : vector<17xf32>
    %146 = vector.multi_reduction <maximumf>, %145, %cst_59 [1] : vector<17x17xf32> to vector<17xf32>
    %147 = vector.shape_cast %146 : vector<17xf32> to vector<17x1xf32>
    %148 = vector.broadcast %147 : vector<17x1xf32> to vector<17x17xf32>
    %149 = arith.subf %145, %148 : vector<17x17xf32>
    %150 = math.exp %149 : vector<17x17xf32>
    %cst_60 = arith.constant dense<0.000000e+00> : vector<17xf32>
    %151 = vector.multi_reduction <add>, %150, %cst_60 [1] : vector<17x17xf32> to vector<17xf32>
    %152 = vector.shape_cast %151 : vector<17xf32> to vector<17x1xf32>
    %153 = tpu.reciprocal %152 {approx = true} : vector<17x1xf32> -> vector<17x1xf32>
    %154 = vector.broadcast %153 : vector<17x1xf32> to vector<17x17xf32>
    %155 = arith.mulf %150, %154 : vector<17x17xf32>
    %156 = arith.maximumf %138, %155 : vector<17x17xf32>
    %cst_61 = arith.constant dense<0.000000e+00> : vector<17x8xf32>
    %157 = tpu.matmul %155, %142, %cst_61 {dimension_numbers = #tpu.dot_dimension_numbers<[1], [0], [0], [1], [0, 0, 1, 1], [], []>} : vector<17x17xf32>, vector<17x8xf32>, vector<17x8xf32> -> vector<17x8xf32>
    %158 = vector.extract_strided_slice %122 {offsets = [0, 48], sizes = [17, 8], strides = [1, 1]} : vector<17x96xf32> to vector<17x8xf32>
    %159 = vector.extract_strided_slice %122 {offsets = [0, 56], sizes = [17, 8], strides = [1, 1]} : vector<17x96xf32> to vector<17x8xf32>
    %160 = vector.extract_strided_slice %122 {offsets = [0, 64], sizes = [17, 8], strides = [1, 1]} : vector<17x96xf32> to vector<17x8xf32>
    %cst_62 = arith.constant dense<0.000000e+00> : vector<17x17xf32>
    %161 = tpu.matmul %158, %159, %cst_62 {dimension_numbers = #tpu.dot_dimension_numbers<[1], [1], [0], [0], [0, 0, 1, 0], [], []>} : vector<17x8xf32>, vector<17x8xf32>, vector<17x17xf32> -> vector<17x17xf32>
    %cst_63 = arith.constant 0.353553385 : f32
    %162 = vector.broadcast %cst_63 : f32 to vector<17x17xf32>
    %163 = arith.mulf %161, %162 : vector<17x17xf32>
    %cst_64 = arith.constant dense<0xFF800000> : vector<17xf32>
    %164 = vector.multi_reduction <maximumf>, %163, %cst_64 [1] : vector<17x17xf32> to vector<17xf32>
    %165 = vector.shape_cast %164 : vector<17xf32> to vector<17x1xf32>
    %166 = vector.broadcast %165 : vector<17x1xf32> to vector<17x17xf32>
    %167 = arith.subf %163, %166 : vector<17x17xf32>
    %168 = math.exp %167 : vector<17x17xf32>
    %cst_65 = arith.constant dense<0.000000e+00> : vector<17xf32>
    %169 = vector.multi_reduction <add>, %168, %cst_65 [1] : vector<17x17xf32> to vector<17xf32>
    %170 = vector.shape_cast %169 : vector<17xf32> to vector<17x1xf32>
    %171 = tpu.reciprocal %170 {approx = true} : vector<17x1xf32> -> vector<17x1xf32>
    %172 = vector.broadcast %171 : vector<17x1xf32> to vector<17x17xf32>
    %173 = arith.mulf %168, %172 : vector<17x17xf32>
    %174 = arith.maximumf %156, %173 : vector<17x17xf32>
    %cst_66 = arith.constant dense<0.000000e+00> : vector<17x8xf32>
    %175 = tpu.matmul %173, %160, %cst_66 {dimension_numbers = #tpu.dot_dimension_numbers<[1], [0], [0], [1], [0, 0, 1, 1], [], []>} : vector<17x17xf32>, vector<17x8xf32>, vector<17x8xf32> -> vector<17x8xf32>
    %176 = vector.extract_strided_slice %122 {offsets = [0, 72], sizes = [17, 8], strides = [1, 1]} : vector<17x96xf32> to vector<17x8xf32>
    %177 = vector.extract_strided_slice %122 {offsets = [0, 80], sizes = [17, 8], strides = [1, 1]} : vector<17x96xf32> to vector<17x8xf32>
    %178 = vector.extract_strided_slice %122 {offsets = [0, 88], sizes = [17, 8], strides = [1, 1]} : vector<17x96xf32> to vector<17x8xf32>
    %cst_67 = arith.constant dense<0.000000e+00> : vector<17x17xf32>
    %179 = tpu.matmul %176, %177, %cst_67 {dimension_numbers = #tpu.dot_dimension_numbers<[1], [1], [0], [0], [0, 0, 1, 0], [], []>} : vector<17x8xf32>, vector<17x8xf32>, vector<17x17xf32> -> vector<17x17xf32>
    %cst_68 = arith.constant 0.353553385 : f32
    %180 = vector.broadcast %cst_68 : f32 to vector<17x17xf32>
    %181 = arith.mulf %179, %180 : vector<17x17xf32>
    %cst_69 = arith.constant dense<0xFF800000> : vector<17xf32>
    %182 = vector.multi_reduction <maximumf>, %181, %cst_69 [1] : vector<17x17xf32> to vector<17xf32>
    %183 = vector.shape_cast %182 : vector<17xf32> to vector<17x1xf32>
    %184 = vector.broadcast %183 : vector<17x1xf32> to vector<17x17xf32>
    %185 = arith.subf %181, %184 : vector<17x17xf32>
    %186 = math.exp %185 : vector<17x17xf32>
    %cst_70 = arith.constant dense<0.000000e+00> : vector<17xf32>
    %187 = vector.multi_reduction <add>, %186, %cst_70 [1] : vector<17x17xf32> to vector<17xf32>
    %188 = vector.shape_cast %187 : vector<17xf32> to vector<17x1xf32>
    %189 = tpu.reciprocal %188 {approx = true} : vector<17x1xf32> -> vector<17x1xf32>
    %190 = vector.broadcast %189 : vector<17x1xf32> to vector<17x17xf32>
    %191 = arith.mulf %186, %190 : vector<17x17xf32>
    %192 = arith.maximumf %174, %191 : vector<17x17xf32>
    %cst_71 = arith.constant dense<0.000000e+00> : vector<17x8xf32>
    %193 = tpu.matmul %191, %178, %cst_71 {dimension_numbers = #tpu.dot_dimension_numbers<[1], [0], [0], [1], [0, 0, 1, 1], [], []>} : vector<17x17xf32>, vector<17x8xf32>, vector<17x8xf32> -> vector<17x8xf32>
    %c0_72 = arith.constant 0 : index
    %c1_73 = arith.constant 1 : index
    %c0_74 = arith.constant 0 : index
    %c0_75 = arith.constant 0 : index
    %194 = vector.load %arg6[%c0_72, %c1_73, %c0_74, %c0_75] : memref<2x2x17x17xf32, #tpu.memory_space<vmem>>, vector<1x1x17x17xf32>
    %195 = vector.shape_cast %194 : vector<1x1x17x17xf32> to vector<17x17xf32>
    %196 = vector.shape_cast %192 : vector<17x17xf32> to vector<1x1x17x17xf32>
    tpu.vector_store %arg6[%c0_72, %c1_73, %c0_74, %c0_75], %196 {strides = array<i32>} : memref<2x2x17x17xf32, #tpu.memory_space<vmem>>, vector<1x1x17x17xf32>,
    %197 = tpu.concatenate %139, %157, %175, %193 in 1 : vector<17x8xf32>, vector<17x8xf32>, vector<17x8xf32>, vector<17x8xf32> -> vector<17x32xf32>
    %cst_76 = arith.constant dense<0.000000e+00> : vector<17x32xf32>
    %198 = tpu.matmul %197, %28, %cst_76 {dimension_numbers = #tpu.dot_dimension_numbers<[1], [0], [0], [1], [0, 0, 1, 1], [], []>} : vector<17x32xf32>, vector<32x32xf32>, vector<17x32xf32> -> vector<17x32xf32>
    %199 = arith.addf %119, %198 : vector<17x32xf32>
    %200 = vector.broadcast %30 : vector<1x32xf32> to vector<17x32xf32>
    %201 = arith.addf %199, %200 : vector<17x32xf32>
    %c1_77 = arith.constant 1 : index
    %c0_78 = arith.constant 0 : index
    %c0_79 = arith.constant 0 : index
    %202 = vector.load %arg7[%c1_77, %c0_78, %c0_79] : memref<2x17x32xf32, #tpu.memory_space<vmem>>, vector<1x17x32xf32>
    %203 = vector.shape_cast %202 : vector<1x17x32xf32> to vector<17x32xf32>
    %204 = vector.shape_cast %201 : vector<17x32xf32> to vector<1x17x32xf32>
    tpu.vector_store %arg7[%c1_77, %c0_78, %c0_79], %204 {strides = array<i32>} : memref<2x17x32xf32, #tpu.memory_space<vmem>>, vector<1x17x32xf32>,
    %c1_80 = arith.constant 1 : index
    %c0_81 = arith.constant 0 : index
    %c0_82 = arith.constant 0 : index
    %205 = vector.load %arg2[%c1_80, %c0_81, %c0_82] : memref<2x32x96xf32, #tpu.memory_space<vmem>>, vector<1x32x96xf32>
    %206 = vector.shape_cast %205 : vector<1x32x96xf32> to vector<32x96xf32>
    %c1_83 = arith.constant 1 : index
    %c0_84 = arith.constant 0 : index
    %c0_85 = arith.constant 0 : index
    %207 = vector.load %arg3[%c1_83, %c0_84, %c0_85] : memref<2x32x32xf32, #tpu.memory_space<vmem>>, vector<1x32x32xf32>
    %208 = vector.shape_cast %207 : vector<1x32x32xf32> to vector<32x32xf32>
    %209 = vector.extract_strided_slice %0 {offsets = [20, 0], sizes = [1, 96], strides = [1, 1]} : vector<56x96xf32> to vector<1x96xf32>
    %210 = vector.extract_strided_slice %0 {offsets = [22, 0], sizes = [1, 32], strides = [1, 1]} : vector<56x96xf32> to vector<1x32xf32>
    %c0_86 = arith.constant 0 : index
    %c0_87 = arith.constant 0 : index
    %c0_88 = arith.constant 0 : index
    %211 = vector.load %arg7[%c0_86, %c0_87, %c0_88] : memref<2x17x32xf32, #tpu.memory_space<vmem>>, vector<1x17x32xf32>
    %212 = vector.shape_cast %211 : vector<1x17x32xf32> to vector<17x32xf32>
    %cst_89 = arith.constant dense<0.000000e+00> : vector<17x96xf32>
    %213 = tpu.matmul %212, %206, %cst_89 {dimension_numbers = #tpu.dot_dimension_numbers<[1], [0], [0], [1], [0, 0, 1, 1], [], []>} : vector<17x32xf32>, vector<32x96xf32>, vector<17x96xf32> -> vector<17x96xf32>
    %214 = vector.broadcast %209 : vector<1x96xf32> to vector<17x96xf32>
    %215 = arith.addf %213, %214 : vector<17x96xf32>
    %216 = vector.extract_strided_slice %215 {offsets = [0, 0], sizes = [17, 8], strides = [1, 1]} : vector<17x96xf32> to vector<17x8xf32>
    %217 = vector.extract_strided_slice %215 {offsets = [0, 8], sizes = [17, 8], strides = [1, 1]} : vector<17x96xf32> to vector<17x8xf32>
    %218 = vector.extract_strided_slice %215 {offsets = [0, 16], sizes = [17, 8], strides = [1, 1]} : vector<17x96xf32> to vector<17x8xf32>
    %cst_90 = arith.constant dense<0.000000e+00> : vector<17x17xf32>
    %219 = tpu.matmul %216, %217, %cst_90 {dimension_numbers = #tpu.dot_dimension_numbers<[1], [1], [0], [0], [0, 0, 1, 0], [], []>} : vector<17x8xf32>, vector<17x8xf32>, vector<17x17xf32> -> vector<17x17xf32>
    %cst_91 = arith.constant 0.353553385 : f32
    %220 = vector.broadcast %cst_91 : f32 to vector<17x17xf32>
    %221 = arith.mulf %219, %220 : vector<17x17xf32>
    %cst_92 = arith.constant dense<0xFF800000> : vector<17xf32>
    %222 = vector.multi_reduction <maximumf>, %221, %cst_92 [1] : vector<17x17xf32> to vector<17xf32>
    %223 = vector.shape_cast %222 : vector<17xf32> to vector<17x1xf32>
    %224 = vector.broadcast %223 : vector<17x1xf32> to vector<17x17xf32>
    %225 = arith.subf %221, %224 : vector<17x17xf32>
    %226 = math.exp %225 : vector<17x17xf32>
    %cst_93 = arith.constant dense<0.000000e+00> : vector<17xf32>
    %227 = vector.multi_reduction <add>, %226, %cst_93 [1] : vector<17x17xf32> to vector<17xf32>
    %228 = vector.shape_cast %227 : vector<17xf32> to vector<17x1xf32>
    %229 = tpu.reciprocal %228 {approx = true} : vector<17x1xf32> -> vector<17x1xf32>
    %230 = vector.broadcast %229 : vector<17x1xf32> to vector<17x17xf32>
    %231 = arith.mulf %226, %230 : vector<17x17xf32>
    %cst_94 = arith.constant dense<0.000000e+00> : vector<17x8xf32>
    %232 = tpu.matmul %231, %218, %cst_94 {dimension_numbers = #tpu.dot_dimension_numbers<[1], [0], [0], [1], [0, 0, 1, 1], [], []>} : vector<17x17xf32>, vector<17x8xf32>, vector<17x8xf32> -> vector<17x8xf32>
    %233 = vector.extract_strided_slice %215 {offsets = [0, 24], sizes = [17, 8], strides = [1, 1]} : vector<17x96xf32> to vector<17x8xf32>
    %234 = vector.extract_strided_slice %215 {offsets = [0, 32], sizes = [17, 8], strides = [1, 1]} : vector<17x96xf32> to vector<17x8xf32>
    %235 = vector.extract_strided_slice %215 {offsets = [0, 40], sizes = [17, 8], strides = [1, 1]} : vector<17x96xf32> to vector<17x8xf32>
    %cst_95 = arith.constant dense<0.000000e+00> : vector<17x17xf32>
    %236 = tpu.matmul %233, %234, %cst_95 {dimension_numbers = #tpu.dot_dimension_numbers<[1], [1], [0], [0], [0, 0, 1, 0], [], []>} : vector<17x8xf32>, vector<17x8xf32>, vector<17x17xf32> -> vector<17x17xf32>
    %cst_96 = arith.constant 0.353553385 : f32
    %237 = vector.broadcast %cst_96 : f32 to vector<17x17xf32>
    %238 = arith.mulf %236, %237 : vector<17x17xf32>
    %cst_97 = arith.constant dense<0xFF800000> : vector<17xf32>
    %239 = vector.multi_reduction <maximumf>, %238, %cst_97 [1] : vector<17x17xf32> to vector<17xf32>
    %240 = vector.shape_cast %239 : vector<17xf32> to vector<17x1xf32>
    %241 = vector.broadcast %240 : vector<17x1xf32> to vector<17x17xf32>
    %242 = arith.subf %238, %241 : vector<17x17xf32>
    %243 = math.exp %242 : vector<17x17xf32>
    %cst_98 = arith.constant dense<0.000000e+00> : vector<17xf32>
    %244 = vector.multi_reduction <add>, %243, %cst_98 [1] : vector<17x17xf32> to vector<17xf32>
    %245 = vector.shape_cast %244 : vector<17xf32> to vector<17x1xf32>
    %246 = tpu.reciprocal %245 {approx = true} : vector<17x1xf32> -> vector<17x1xf32>
    %247 = vector.broadcast %246 : vector<17x1xf32> to vector<17x17xf32>
    %248 = arith.mulf %243, %247 : vector<17x17xf32>
    %249 = arith.maximumf %231, %248 : vector<17x17xf32>
    %cst_99 = arith.constant dense<0.000000e+00> : vector<17x8xf32>
    %250 = tpu.matmul %248, %235, %cst_99 {dimension_numbers = #tpu.dot_dimension_numbers<[1], [0], [0], [1], [0, 0, 1, 1], [], []>} : vector<17x17xf32>, vector<17x8xf32>, vector<17x8xf32> -> vector<17x8xf32>
    %251 = vector.extract_strided_slice %215 {offsets = [0, 48], sizes = [17, 8], strides = [1, 1]} : vector<17x96xf32> to vector<17x8xf32>
    %252 = vector.extract_strided_slice %215 {offsets = [0, 56], sizes = [17, 8], strides = [1, 1]} : vector<17x96xf32> to vector<17x8xf32>
    %253 = vector.extract_strided_slice %215 {offsets = [0, 64], sizes = [17, 8], strides = [1, 1]} : vector<17x96xf32> to vector<17x8xf32>
    %cst_100 = arith.constant dense<0.000000e+00> : vector<17x17xf32>
    %254 = tpu.matmul %251, %252, %cst_100 {dimension_numbers = #tpu.dot_dimension_numbers<[1], [1], [0], [0], [0, 0, 1, 0], [], []>} : vector<17x8xf32>, vector<17x8xf32>, vector<17x17xf32> -> vector<17x17xf32>
    %cst_101 = arith.constant 0.353553385 : f32
    %255 = vector.broadcast %cst_101 : f32 to vector<17x17xf32>
    %256 = arith.mulf %254, %255 : vector<17x17xf32>
    %cst_102 = arith.constant dense<0xFF800000> : vector<17xf32>
    %257 = vector.multi_reduction <maximumf>, %256, %cst_102 [1] : vector<17x17xf32> to vector<17xf32>
    %258 = vector.shape_cast %257 : vector<17xf32> to vector<17x1xf32>
    %259 = vector.broadcast %258 : vector<17x1xf32> to vector<17x17xf32>
    %260 = arith.subf %256, %259 : vector<17x17xf32>
    %261 = math.exp %260 : vector<17x17xf32>
    %cst_103 = arith.constant dense<0.000000e+00> : vector<17xf32>
    %262 = vector.multi_reduction <add>, %261, %cst_103 [1] : vector<17x17xf32> to vector<17xf32>
    %263 = vector.shape_cast %262 : vector<17xf32> to vector<17x1xf32>
    %264 = tpu.reciprocal %263 {approx = true} : vector<17x1xf32> -> vector<17x1xf32>
    %265 = vector.broadcast %264 : vector<17x1xf32> to vector<17x17xf32>
    %266 = arith.mulf %261, %265 : vector<17x17xf32>
    %267 = arith.maximumf %249, %266 : vector<17x17xf32>
    %cst_104 = arith.constant dense<0.000000e+00> : vector<17x8xf32>
    %268 = tpu.matmul %266, %253, %cst_104 {dimension_numbers = #tpu.dot_dimension_numbers<[1], [0], [0], [1], [0, 0, 1, 1], [], []>} : vector<17x17xf32>, vector<17x8xf32>, vector<17x8xf32> -> vector<17x8xf32>
    %269 = vector.extract_strided_slice %215 {offsets = [0, 72], sizes = [17, 8], strides = [1, 1]} : vector<17x96xf32> to vector<17x8xf32>
    %270 = vector.extract_strided_slice %215 {offsets = [0, 80], sizes = [17, 8], strides = [1, 1]} : vector<17x96xf32> to vector<17x8xf32>
    %271 = vector.extract_strided_slice %215 {offsets = [0, 88], sizes = [17, 8], strides = [1, 1]} : vector<17x96xf32> to vector<17x8xf32>
    %cst_105 = arith.constant dense<0.000000e+00> : vector<17x17xf32>
    %272 = tpu.matmul %269, %270, %cst_105 {dimension_numbers = #tpu.dot_dimension_numbers<[1], [1], [0], [0], [0, 0, 1, 0], [], []>} : vector<17x8xf32>, vector<17x8xf32>, vector<17x17xf32> -> vector<17x17xf32>
    %cst_106 = arith.constant 0.353553385 : f32
    %273 = vector.broadcast %cst_106 : f32 to vector<17x17xf32>
    %274 = arith.mulf %272, %273 : vector<17x17xf32>
    %cst_107 = arith.constant dense<0xFF800000> : vector<17xf32>
    %275 = vector.multi_reduction <maximumf>, %274, %cst_107 [1] : vector<17x17xf32> to vector<17xf32>
    %276 = vector.shape_cast %275 : vector<17xf32> to vector<17x1xf32>
    %277 = vector.broadcast %276 : vector<17x1xf32> to vector<17x17xf32>
    %278 = arith.subf %274, %277 : vector<17x17xf32>
    %279 = math.exp %278 : vector<17x17xf32>
    %cst_108 = arith.constant dense<0.000000e+00> : vector<17xf32>
    %280 = vector.multi_reduction <add>, %279, %cst_108 [1] : vector<17x17xf32> to vector<17xf32>
    %281 = vector.shape_cast %280 : vector<17xf32> to vector<17x1xf32>
    %282 = tpu.reciprocal %281 {approx = true} : vector<17x1xf32> -> vector<17x1xf32>
    %283 = vector.broadcast %282 : vector<17x1xf32> to vector<17x17xf32>
    %284 = arith.mulf %279, %283 : vector<17x17xf32>
    %285 = arith.maximumf %267, %284 : vector<17x17xf32>
    %cst_109 = arith.constant dense<0.000000e+00> : vector<17x8xf32>
    %286 = tpu.matmul %284, %271, %cst_109 {dimension_numbers = #tpu.dot_dimension_numbers<[1], [0], [0], [1], [0, 0, 1, 1], [], []>} : vector<17x17xf32>, vector<17x8xf32>, vector<17x8xf32> -> vector<17x8xf32>
    %c1_110 = arith.constant 1 : index
    %c0_111 = arith.constant 0 : index
    %c0_112 = arith.constant 0 : index
    %c0_113 = arith.constant 0 : index
    %287 = vector.load %arg6[%c1_110, %c0_111, %c0_112, %c0_113] : memref<2x2x17x17xf32, #tpu.memory_space<vmem>>, vector<1x1x17x17xf32>
    %288 = vector.shape_cast %287 : vector<1x1x17x17xf32> to vector<17x17xf32>
    %289 = vector.shape_cast %285 : vector<17x17xf32> to vector<1x1x17x17xf32>
    tpu.vector_store %arg6[%c1_110, %c0_111, %c0_112, %c0_113], %289 {strides = array<i32>} : memref<2x2x17x17xf32, #tpu.memory_space<vmem>>, vector<1x1x17x17xf32>,
    %290 = tpu.concatenate %232, %250, %268, %286 in 1 : vector<17x8xf32>, vector<17x8xf32>, vector<17x8xf32>, vector<17x8xf32> -> vector<17x32xf32>
    %cst_114 = arith.constant dense<0.000000e+00> : vector<17x32xf32>
    %291 = tpu.matmul %290, %208, %cst_114 {dimension_numbers = #tpu.dot_dimension_numbers<[1], [0], [0], [1], [0, 0, 1, 1], [], []>} : vector<17x32xf32>, vector<32x32xf32>, vector<17x32xf32> -> vector<17x32xf32>
    %292 = arith.addf %212, %291 : vector<17x32xf32>
    %293 = vector.broadcast %210 : vector<1x32xf32> to vector<17x32xf32>
    %294 = arith.addf %292, %293 : vector<17x32xf32>
    %c0_115 = arith.constant 0 : index
    %c0_116 = arith.constant 0 : index
    %c0_117 = arith.constant 0 : index
    %295 = vector.load %arg7[%c0_115, %c0_116, %c0_117] : memref<2x17x32xf32, #tpu.memory_space<vmem>>, vector<1x17x32xf32>
    %296 = vector.shape_cast %295 : vector<1x17x32xf32> to vector<17x32xf32>
    %297 = vector.shape_cast %294 : vector<17x32xf32> to vector<1x17x32xf32>
    tpu.vector_store %arg7[%c0_115, %c0_116, %c0_117], %297 {strides = array<i32>} : memref<2x17x32xf32, #tpu.memory_space<vmem>>, vector<1x17x32xf32>,
    %c1_118 = arith.constant 1 : index
    %c0_119 = arith.constant 0 : index
    %c0_120 = arith.constant 0 : index
    %298 = vector.load %arg7[%c1_118, %c0_119, %c0_120] : memref<2x17x32xf32, #tpu.memory_space<vmem>>, vector<1x17x32xf32>
    %299 = vector.shape_cast %298 : vector<1x17x32xf32> to vector<17x32xf32>
    %cst_121 = arith.constant dense<0.000000e+00> : vector<17x96xf32>
    %300 = tpu.matmul %299, %206, %cst_121 {dimension_numbers = #tpu.dot_dimension_numbers<[1], [0], [0], [1], [0, 0, 1, 1], [], []>} : vector<17x32xf32>, vector<32x96xf32>, vector<17x96xf32> -> vector<17x96xf32>
    %301 = vector.broadcast %209 : vector<1x96xf32> to vector<17x96xf32>
    %302 = arith.addf %300, %301 : vector<17x96xf32>
    %303 = vector.extract_strided_slice %302 {offsets = [0, 0], sizes = [17, 8], strides = [1, 1]} : vector<17x96xf32> to vector<17x8xf32>
    %304 = vector.extract_strided_slice %302 {offsets = [0, 8], sizes = [17, 8], strides = [1, 1]} : vector<17x96xf32> to vector<17x8xf32>
    %305 = vector.extract_strided_slice %302 {offsets = [0, 16], sizes = [17, 8], strides = [1, 1]} : vector<17x96xf32> to vector<17x8xf32>
    %cst_122 = arith.constant dense<0.000000e+00> : vector<17x17xf32>
    %306 = tpu.matmul %303, %304, %cst_122 {dimension_numbers = #tpu.dot_dimension_numbers<[1], [1], [0], [0], [0, 0, 1, 0], [], []>} : vector<17x8xf32>, vector<17x8xf32>, vector<17x17xf32> -> vector<17x17xf32>
    %cst_123 = arith.constant 0.353553385 : f32
    %307 = vector.broadcast %cst_123 : f32 to vector<17x17xf32>
    %308 = arith.mulf %306, %307 : vector<17x17xf32>
    %cst_124 = arith.constant dense<0xFF800000> : vector<17xf32>
    %309 = vector.multi_reduction <maximumf>, %308, %cst_124 [1] : vector<17x17xf32> to vector<17xf32>
    %310 = vector.shape_cast %309 : vector<17xf32> to vector<17x1xf32>
    %311 = vector.broadcast %310 : vector<17x1xf32> to vector<17x17xf32>
    %312 = arith.subf %308, %311 : vector<17x17xf32>
    %313 = math.exp %312 : vector<17x17xf32>
    %cst_125 = arith.constant dense<0.000000e+00> : vector<17xf32>
    %314 = vector.multi_reduction <add>, %313, %cst_125 [1] : vector<17x17xf32> to vector<17xf32>
    %315 = vector.shape_cast %314 : vector<17xf32> to vector<17x1xf32>
    %316 = tpu.reciprocal %315 {approx = true} : vector<17x1xf32> -> vector<17x1xf32>
    %317 = vector.broadcast %316 : vector<17x1xf32> to vector<17x17xf32>
    %318 = arith.mulf %313, %317 : vector<17x17xf32>
    %cst_126 = arith.constant dense<0.000000e+00> : vector<17x8xf32>
    %319 = tpu.matmul %318, %305, %cst_126 {dimension_numbers = #tpu.dot_dimension_numbers<[1], [0], [0], [1], [0, 0, 1, 1], [], []>} : vector<17x17xf32>, vector<17x8xf32>, vector<17x8xf32> -> vector<17x8xf32>
    %320 = vector.extract_strided_slice %302 {offsets = [0, 24], sizes = [17, 8], strides = [1, 1]} : vector<17x96xf32> to vector<17x8xf32>
    %321 = vector.extract_strided_slice %302 {offsets = [0, 32], sizes = [17, 8], strides = [1, 1]} : vector<17x96xf32> to vector<17x8xf32>
    %322 = vector.extract_strided_slice %302 {offsets = [0, 40], sizes = [17, 8], strides = [1, 1]} : vector<17x96xf32> to vector<17x8xf32>
    %cst_127 = arith.constant dense<0.000000e+00> : vector<17x17xf32>
    %323 = tpu.matmul %320, %321, %cst_127 {dimension_numbers = #tpu.dot_dimension_numbers<[1], [1], [0], [0], [0, 0, 1, 0], [], []>} : vector<17x8xf32>, vector<17x8xf32>, vector<17x17xf32> -> vector<17x17xf32>
    %cst_128 = arith.constant 0.353553385 : f32
    %324 = vector.broadcast %cst_128 : f32 to vector<17x17xf32>
    %325 = arith.mulf %323, %324 : vector<17x17xf32>
    %cst_129 = arith.constant dense<0xFF800000> : vector<17xf32>
    %326 = vector.multi_reduction <maximumf>, %325, %cst_129 [1] : vector<17x17xf32> to vector<17xf32>
    %327 = vector.shape_cast %326 : vector<17xf32> to vector<17x1xf32>
    %328 = vector.broadcast %327 : vector<17x1xf32> to vector<17x17xf32>
    %329 = arith.subf %325, %328 : vector<17x17xf32>
    %330 = math.exp %329 : vector<17x17xf32>
    %cst_130 = arith.constant dense<0.000000e+00> : vector<17xf32>
    %331 = vector.multi_reduction <add>, %330, %cst_130 [1] : vector<17x17xf32> to vector<17xf32>
    %332 = vector.shape_cast %331 : vector<17xf32> to vector<17x1xf32>
    %333 = tpu.reciprocal %332 {approx = true} : vector<17x1xf32> -> vector<17x1xf32>
    %334 = vector.broadcast %333 : vector<17x1xf32> to vector<17x17xf32>
    %335 = arith.mulf %330, %334 : vector<17x17xf32>
    %336 = arith.maximumf %318, %335 : vector<17x17xf32>
    %cst_131 = arith.constant dense<0.000000e+00> : vector<17x8xf32>
    %337 = tpu.matmul %335, %322, %cst_131 {dimension_numbers = #tpu.dot_dimension_numbers<[1], [0], [0], [1], [0, 0, 1, 1], [], []>} : vector<17x17xf32>, vector<17x8xf32>, vector<17x8xf32> -> vector<17x8xf32>
    %338 = vector.extract_strided_slice %302 {offsets = [0, 48], sizes = [17, 8], strides = [1, 1]} : vector<17x96xf32> to vector<17x8xf32>
    %339 = vector.extract_strided_slice %302 {offsets = [0, 56], sizes = [17, 8], strides = [1, 1]} : vector<17x96xf32> to vector<17x8xf32>
    %340 = vector.extract_strided_slice %302 {offsets = [0, 64], sizes = [17, 8], strides = [1, 1]} : vector<17x96xf32> to vector<17x8xf32>
    %cst_132 = arith.constant dense<0.000000e+00> : vector<17x17xf32>
    %341 = tpu.matmul %338, %339, %cst_132 {dimension_numbers = #tpu.dot_dimension_numbers<[1], [1], [0], [0], [0, 0, 1, 0], [], []>} : vector<17x8xf32>, vector<17x8xf32>, vector<17x17xf32> -> vector<17x17xf32>
    %cst_133 = arith.constant 0.353553385 : f32
    %342 = vector.broadcast %cst_133 : f32 to vector<17x17xf32>
    %343 = arith.mulf %341, %342 : vector<17x17xf32>
    %cst_134 = arith.constant dense<0xFF800000> : vector<17xf32>
    %344 = vector.multi_reduction <maximumf>, %343, %cst_134 [1] : vector<17x17xf32> to vector<17xf32>
    %345 = vector.shape_cast %344 : vector<17xf32> to vector<17x1xf32>
    %346 = vector.broadcast %345 : vector<17x1xf32> to vector<17x17xf32>
    %347 = arith.subf %343, %346 : vector<17x17xf32>
    %348 = math.exp %347 : vector<17x17xf32>
    %cst_135 = arith.constant dense<0.000000e+00> : vector<17xf32>
    %349 = vector.multi_reduction <add>, %348, %cst_135 [1] : vector<17x17xf32> to vector<17xf32>
    %350 = vector.shape_cast %349 : vector<17xf32> to vector<17x1xf32>
    %351 = tpu.reciprocal %350 {approx = true} : vector<17x1xf32> -> vector<17x1xf32>
    %352 = vector.broadcast %351 : vector<17x1xf32> to vector<17x17xf32>
    %353 = arith.mulf %348, %352 : vector<17x17xf32>
    %354 = arith.maximumf %336, %353 : vector<17x17xf32>
    %cst_136 = arith.constant dense<0.000000e+00> : vector<17x8xf32>
    %355 = tpu.matmul %353, %340, %cst_136 {dimension_numbers = #tpu.dot_dimension_numbers<[1], [0], [0], [1], [0, 0, 1, 1], [], []>} : vector<17x17xf32>, vector<17x8xf32>, vector<17x8xf32> -> vector<17x8xf32>
    %356 = vector.extract_strided_slice %302 {offsets = [0, 72], sizes = [17, 8], strides = [1, 1]} : vector<17x96xf32> to vector<17x8xf32>
    %357 = vector.extract_strided_slice %302 {offsets = [0, 80], sizes = [17, 8], strides = [1, 1]} : vector<17x96xf32> to vector<17x8xf32>
    %358 = vector.extract_strided_slice %302 {offsets = [0, 88], sizes = [17, 8], strides = [1, 1]} : vector<17x96xf32> to vector<17x8xf32>
    %cst_137 = arith.constant dense<0.000000e+00> : vector<17x17xf32>
    %359 = tpu.matmul %356, %357, %cst_137 {dimension_numbers = #tpu.dot_dimension_numbers<[1], [1], [0], [0], [0, 0, 1, 0], [], []>} : vector<17x8xf32>, vector<17x8xf32>, vector<17x17xf32> -> vector<17x17xf32>
    %cst_138 = arith.constant 0.353553385 : f32
    %360 = vector.broadcast %cst_138 : f32 to vector<17x17xf32>
    %361 = arith.mulf %359, %360 : vector<17x17xf32>
    %cst_139 = arith.constant dense<0xFF800000> : vector<17xf32>
    %362 = vector.multi_reduction <maximumf>, %361, %cst_139 [1] : vector<17x17xf32> to vector<17xf32>
    %363 = vector.shape_cast %362 : vector<17xf32> to vector<17x1xf32>
    %364 = vector.broadcast %363 : vector<17x1xf32> to vector<17x17xf32>
    %365 = arith.subf %361, %364 : vector<17x17xf32>
    %366 = math.exp %365 : vector<17x17xf32>
    %cst_140 = arith.constant dense<0.000000e+00> : vector<17xf32>
    %367 = vector.multi_reduction <add>, %366, %cst_140 [1] : vector<17x17xf32> to vector<17xf32>
    %368 = vector.shape_cast %367 : vector<17xf32> to vector<17x1xf32>
    %369 = tpu.reciprocal %368 {approx = true} : vector<17x1xf32> -> vector<17x1xf32>
    %370 = vector.broadcast %369 : vector<17x1xf32> to vector<17x17xf32>
    %371 = arith.mulf %366, %370 : vector<17x17xf32>
    %372 = arith.maximumf %354, %371 : vector<17x17xf32>
    %cst_141 = arith.constant dense<0.000000e+00> : vector<17x8xf32>
    %373 = tpu.matmul %371, %358, %cst_141 {dimension_numbers = #tpu.dot_dimension_numbers<[1], [0], [0], [1], [0, 0, 1, 1], [], []>} : vector<17x17xf32>, vector<17x8xf32>, vector<17x8xf32> -> vector<17x8xf32>
    %c1_142 = arith.constant 1 : index
    %c1_143 = arith.constant 1 : index
    %c0_144 = arith.constant 0 : index
    %c0_145 = arith.constant 0 : index
    %374 = vector.load %arg6[%c1_142, %c1_143, %c0_144, %c0_145] : memref<2x2x17x17xf32, #tpu.memory_space<vmem>>, vector<1x1x17x17xf32>
    %375 = vector.shape_cast %374 : vector<1x1x17x17xf32> to vector<17x17xf32>
    %376 = vector.shape_cast %372 : vector<17x17xf32> to vector<1x1x17x17xf32>
    tpu.vector_store %arg6[%c1_142, %c1_143, %c0_144, %c0_145], %376 {strides = array<i32>} : memref<2x2x17x17xf32, #tpu.memory_space<vmem>>, vector<1x1x17x17xf32>,
    %377 = tpu.concatenate %319, %337, %355, %373 in 1 : vector<17x8xf32>, vector<17x8xf32>, vector<17x8xf32>, vector<17x8xf32> -> vector<17x32xf32>
    %cst_146 = arith.constant dense<0.000000e+00> : vector<17x32xf32>
    %378 = tpu.matmul %377, %208, %cst_146 {dimension_numbers = #tpu.dot_dimension_numbers<[1], [0], [0], [1], [0, 0, 1, 1], [], []>} : vector<17x32xf32>, vector<32x32xf32>, vector<17x32xf32> -> vector<17x32xf32>
    %379 = arith.addf %299, %378 : vector<17x32xf32>
    %380 = vector.broadcast %210 : vector<1x32xf32> to vector<17x32xf32>
    %381 = arith.addf %379, %380 : vector<17x32xf32>
    %c1_147 = arith.constant 1 : index
    %c0_148 = arith.constant 0 : index
    %c0_149 = arith.constant 0 : index
    %382 = vector.load %arg7[%c1_147, %c0_148, %c0_149] : memref<2x17x32xf32, #tpu.memory_space<vmem>>, vector<1x17x32xf32>
    %383 = vector.shape_cast %382 : vector<1x17x32xf32> to vector<17x32xf32>
    %384 = vector.shape_cast %381 : vector<17x32xf32> to vector<1x17x32xf32>
    tpu.vector_store %arg7[%c1_147, %c0_148, %c0_149], %384 {strides = array<i32>} : memref<2x17x32xf32, #tpu.memory_space<vmem>>, vector<1x17x32xf32>,
    %385 = vector.extract_strided_slice %0 {offsets = [24, 0], sizes = [32, 10], strides = [1, 1]} : vector<56x96xf32> to vector<32x10xf32>
    %386 = vector.extract_strided_slice %0 {offsets = [23, 0], sizes = [1, 10], strides = [1, 1]} : vector<56x96xf32> to vector<1x10xf32>
    %c0_150 = arith.constant 0 : index
    %c0_151 = arith.constant 0 : index
    %c0_152 = arith.constant 0 : index
    %387 = vector.load %arg7[%c0_150, %c0_151, %c0_152] : memref<2x17x32xf32, #tpu.memory_space<vmem>>, vector<1x17x32xf32>
    %388 = vector.shape_cast %387 : vector<1x17x32xf32> to vector<17x32xf32>
    %389 = vector.extract_strided_slice %388 {offsets = [0, 0], sizes = [1, 32], strides = [1, 1]} : vector<17x32xf32> to vector<1x32xf32>
    %c1_153 = arith.constant 1 : index
    %c0_154 = arith.constant 0 : index
    %c0_155 = arith.constant 0 : index
    %390 = vector.load %arg7[%c1_153, %c0_154, %c0_155] : memref<2x17x32xf32, #tpu.memory_space<vmem>>, vector<1x17x32xf32>
    %391 = vector.shape_cast %390 : vector<1x17x32xf32> to vector<17x32xf32>
    %392 = vector.extract_strided_slice %391 {offsets = [0, 0], sizes = [1, 32], strides = [1, 1]} : vector<17x32xf32> to vector<1x32xf32>
    %393 = tpu.concatenate %389, %392 in 0 : vector<1x32xf32>, vector<1x32xf32> -> vector<2x32xf32>
    %cst_156 = arith.constant dense<0.000000e+00> : vector<2x10xf32>
    %394 = tpu.matmul %393, %385, %cst_156 {dimension_numbers = #tpu.dot_dimension_numbers<[1], [0], [0], [1], [0, 0, 1, 1], [], []>} : vector<2x32xf32>, vector<32x10xf32>, vector<2x10xf32> -> vector<2x10xf32>
    %395 = vector.broadcast %386 : vector<1x10xf32> to vector<2x10xf32>
    %396 = arith.addf %394, %395 : vector<2x10xf32>
    %c0_157 = arith.constant 0 : index
    %c0_158 = arith.constant 0 : index
    %397 = vector.load %arg5[%c0_157, %c0_158] : memref<2x10xf32, #tpu.memory_space<vmem>>, vector<2x10xf32>
    tpu.vector_store %arg5[%c0_157, %c0_158], %396 {strides = array<i32>} : memref<2x10xf32, #tpu.memory_space<vmem>>, vector<2x10xf32>,
    return
  }
}

module attributes {stable_mosaic.version = 11 : i64} {
  func.func @_rollout_resize_kernel(%arg0: memref<2x2x17x17xf32, #tpu.memory_space<vmem>>, %arg1: memref<2x2xf32, #tpu.memory_space<smem>>, %arg2: memref<2x16x17xf32, #tpu.memory_space<vmem>>, %arg3: memref<2x16x16xf32, #tpu.memory_space<vmem>>) attributes {dimension_semantics = [], scalar_prefetch = 0 : i64, scratch_operands = 0 : i64, tpu.core_type = #tpu.core_type<tc>} {
    %0 = tpu.iota {dimensions = array<i32: 0>} : vector<17x17xi32>
    %1 = tpu.iota {dimensions = array<i32: 1>} : vector<17x17xi32>
    %2 = arith.cmpi eq, %0, %1 : vector<17x17xi32>
    %3 = arith.extui %2 : vector<17x17xi1> to vector<17x17xi32>
    %4 = arith.sitofp %3 : vector<17x17xi32> to vector<17x17xf32>
    %c0_i32 = arith.constant 0 : i32
    %5 = vector.broadcast %c0_i32 : i32 to vector<17x17xi32>
    %6 = arith.cmpi ne, %0, %5 : vector<17x17xi32>
    %c0_i32_0 = arith.constant 0 : i32
    %7 = vector.broadcast %c0_i32_0 : i32 to vector<17x17xi32>
    %8 = arith.cmpi ne, %1, %7 : vector<17x17xi32>
    %9 = arith.ori %6, %8 : vector<17x17xi1>
    %c0 = arith.constant 0 : index
    %c0_1 = arith.constant 0 : index
    %c0_2 = arith.constant 0 : index
    %c0_3 = arith.constant 0 : index
    %10 = vector.load %arg0[%c0, %c0_1, %c0_2, %c0_3] : memref<2x2x17x17xf32, #tpu.memory_space<vmem>>, vector<1x1x17x17xf32>
    %11 = vector.shape_cast %10 : vector<1x1x17x17xf32> to vector<17x17xf32>
    %c0_4 = arith.constant 0 : index
    %c1 = arith.constant 1 : index
    %c0_5 = arith.constant 0 : index
    %c0_6 = arith.constant 0 : index
    %12 = vector.load %arg0[%c0_4, %c1, %c0_5, %c0_6] : memref<2x2x17x17xf32, #tpu.memory_space<vmem>>, vector<1x1x17x17xf32>
    %13 = vector.shape_cast %12 : vector<1x1x17x17xf32> to vector<17x17xf32>
    %c0_7 = arith.constant 0 : index
    %c0_8 = arith.constant 0 : index
    %14 = memref.load %arg1[%c0_7, %c0_8] : memref<2x2xf32, #tpu.memory_space<smem>>
    %15 = vector.broadcast %14 : f32 to vector<17x17xf32>
    %16 = arith.cmpf ole, %11, %15 : vector<17x17xf32>
    %c0_9 = arith.constant 0 : index
    %c1_10 = arith.constant 1 : index
    %17 = memref.load %arg1[%c0_9, %c1_10] : memref<2x2xf32, #tpu.memory_space<smem>>
    %18 = vector.broadcast %17 : f32 to vector<17x17xf32>
    %19 = arith.cmpf ole, %13, %18 : vector<17x17xf32>
    %20 = arith.ori %16, %19 : vector<17x17xi1>
    %21 = arith.andi %20, %9 : vector<17x17xi1>
    %cst = arith.constant 0.000000e+00 : f32
    %22 = vector.broadcast %cst : f32 to vector<17x17xf32>
    %23 = arith.select %21, %22, %11 : vector<17x17xi1>, vector<17x17xf32>
    %24 = arith.addf %23, %4 : vector<17x17xf32>
    %cst_11 = arith.constant 5.000000e-01 : f32
    %25 = vector.broadcast %cst_11 : f32 to vector<17x17xf32>
    %26 = arith.mulf %24, %25 : vector<17x17xf32>
    %27 = arith.addf %13, %4 : vector<17x17xf32>
    %cst_12 = arith.constant 5.000000e-01 : f32
    %28 = vector.broadcast %cst_12 : f32 to vector<17x17xf32>
    %29 = arith.mulf %27, %28 : vector<17x17xf32>
    %30 = arith.addf %26, %29 : vector<17x17xf32>
    %31 = tpu.reciprocal %30 {approx = true} : vector<17x17xf32> -> vector<17x17xf32>
    %32 = arith.mulf %26, %31 : vector<17x17xf32>
    %33 = arith.mulf %29, %31 : vector<17x17xf32>
    %cst_13 = arith.constant dense<0.000000e+00> : vector<17x17xf32>
    %34 = tpu.matmul %32, %4, %cst_13 {dimension_numbers = #tpu.dot_dimension_numbers<[1], [0], [0], [1], [0, 0, 1, 1], [], []>} : vector<17x17xf32>, vector<17x17xf32>, vector<17x17xf32> -> vector<17x17xf32>
    %cst_14 = arith.constant dense<0.000000e+00> : vector<17x17xf32>
    %35 = tpu.matmul %33, %4, %cst_14 {dimension_numbers = #tpu.dot_dimension_numbers<[1], [0], [0], [1], [0, 0, 1, 1], [], []>} : vector<17x17xf32>, vector<17x17xf32>, vector<17x17xf32> -> vector<17x17xf32>
    %c1_15 = arith.constant 1 : index
    %c0_16 = arith.constant 0 : index
    %c0_17 = arith.constant 0 : index
    %c0_18 = arith.constant 0 : index
    %36 = vector.load %arg0[%c1_15, %c0_16, %c0_17, %c0_18] : memref<2x2x17x17xf32, #tpu.memory_space<vmem>>, vector<1x1x17x17xf32>
    %37 = vector.shape_cast %36 : vector<1x1x17x17xf32> to vector<17x17xf32>
    %c1_19 = arith.constant 1 : index
    %c1_20 = arith.constant 1 : index
    %c0_21 = arith.constant 0 : index
    %c0_22 = arith.constant 0 : index
    %38 = vector.load %arg0[%c1_19, %c1_20, %c0_21, %c0_22] : memref<2x2x17x17xf32, #tpu.memory_space<vmem>>, vector<1x1x17x17xf32>
    %39 = vector.shape_cast %38 : vector<1x1x17x17xf32> to vector<17x17xf32>
    %c1_23 = arith.constant 1 : index
    %c0_24 = arith.constant 0 : index
    %40 = memref.load %arg1[%c1_23, %c0_24] : memref<2x2xf32, #tpu.memory_space<smem>>
    %41 = vector.broadcast %40 : f32 to vector<17x17xf32>
    %42 = arith.cmpf ole, %37, %41 : vector<17x17xf32>
    %c1_25 = arith.constant 1 : index
    %c1_26 = arith.constant 1 : index
    %43 = memref.load %arg1[%c1_25, %c1_26] : memref<2x2xf32, #tpu.memory_space<smem>>
    %44 = vector.broadcast %43 : f32 to vector<17x17xf32>
    %45 = arith.cmpf ole, %39, %44 : vector<17x17xf32>
    %46 = arith.ori %42, %45 : vector<17x17xi1>
    %47 = arith.andi %46, %9 : vector<17x17xi1>
    %cst_27 = arith.constant 0.000000e+00 : f32
    %48 = vector.broadcast %cst_27 : f32 to vector<17x17xf32>
    %49 = arith.select %47, %48, %37 : vector<17x17xi1>, vector<17x17xf32>
    %50 = arith.addf %49, %4 : vector<17x17xf32>
    %cst_28 = arith.constant 5.000000e-01 : f32
    %51 = vector.broadcast %cst_28 : f32 to vector<17x17xf32>
    %52 = arith.mulf %50, %51 : vector<17x17xf32>
    %53 = arith.addf %39, %4 : vector<17x17xf32>
    %cst_29 = arith.constant 5.000000e-01 : f32
    %54 = vector.broadcast %cst_29 : f32 to vector<17x17xf32>
    %55 = arith.mulf %53, %54 : vector<17x17xf32>
    %56 = arith.addf %52, %55 : vector<17x17xf32>
    %57 = tpu.reciprocal %56 {approx = true} : vector<17x17xf32> -> vector<17x17xf32>
    %58 = arith.mulf %52, %57 : vector<17x17xf32>
    %59 = arith.mulf %55, %57 : vector<17x17xf32>
    %cst_30 = arith.constant dense<0.000000e+00> : vector<17x17xf32>
    %60 = tpu.matmul %58, %34, %cst_30 {dimension_numbers = #tpu.dot_dimension_numbers<[1], [0], [0], [1], [0, 0, 1, 1], [], []>} : vector<17x17xf32>, vector<17x17xf32>, vector<17x17xf32> -> vector<17x17xf32>
    %cst_31 = arith.constant dense<0.000000e+00> : vector<17x17xf32>
    %61 = tpu.matmul %59, %35, %cst_31 {dimension_numbers = #tpu.dot_dimension_numbers<[1], [0], [0], [1], [0, 0, 1, 1], [], []>} : vector<17x17xf32>, vector<17x17xf32>, vector<17x17xf32> -> vector<17x17xf32>
    %62 = arith.minimumf %60, %61 : vector<17x17xf32>
    %63 = arith.maximumf %60, %61 : vector<17x17xf32>
    %64 = arith.subf %63, %62 : vector<17x17xf32>
    %cst_32 = arith.constant 9.99999974E-6 : f32
    %65 = vector.broadcast %cst_32 : f32 to vector<17x17xf32>
    %66 = arith.addf %64, %65 : vector<17x17xf32>
    %67 = tpu.reciprocal %66 {approx = true} : vector<17x17xf32> -> vector<17x17xf32>
    %c0_33 = arith.constant 0 : index
    %c0_34 = arith.constant 0 : index
    %c0_35 = arith.constant 0 : index
    %68 = vector.load %arg2[%c0_33, %c0_34, %c0_35] : memref<2x16x17xf32, #tpu.memory_space<vmem>>, vector<1x16x17xf32>
    %69 = vector.shape_cast %68 : vector<1x16x17xf32> to vector<16x17xf32>
    %c1_36 = arith.constant 1 : index
    %c0_37 = arith.constant 0 : index
    %c0_38 = arith.constant 0 : index
    %70 = vector.load %arg2[%c1_36, %c0_37, %c0_38] : memref<2x16x17xf32, #tpu.memory_space<vmem>>, vector<1x16x17xf32>
    %71 = vector.shape_cast %70 : vector<1x16x17xf32> to vector<16x17xf32>
    %72 = arith.subf %60, %62 : vector<17x17xf32>
    %73 = arith.mulf %72, %67 : vector<17x17xf32>
    %cst_39 = arith.constant dense<0.000000e+00> : vector<16x17xf32>
    %74 = tpu.matmul %69, %73, %cst_39 {dimension_numbers = #tpu.dot_dimension_numbers<[1], [0], [0], [1], [0, 0, 1, 1], [], []>} : vector<16x17xf32>, vector<17x17xf32>, vector<16x17xf32> -> vector<16x17xf32>
    %cst_40 = arith.constant dense<0.000000e+00> : vector<16x16xf32>
    %75 = tpu.matmul %74, %71, %cst_40 {dimension_numbers = #tpu.dot_dimension_numbers<[1], [1], [0], [0], [0, 0, 1, 0], [], []>} : vector<16x17xf32>, vector<16x17xf32>, vector<16x16xf32> -> vector<16x16xf32>
    %c0_41 = arith.constant 0 : index
    %c0_42 = arith.constant 0 : index
    %c0_43 = arith.constant 0 : index
    %76 = vector.load %arg3[%c0_41, %c0_42, %c0_43] : memref<2x16x16xf32, #tpu.memory_space<vmem>>, vector<1x16x16xf32>
    %77 = vector.shape_cast %76 : vector<1x16x16xf32> to vector<16x16xf32>
    %78 = vector.shape_cast %75 : vector<16x16xf32> to vector<1x16x16xf32>
    tpu.vector_store %arg3[%c0_41, %c0_42, %c0_43], %78 {strides = array<i32>} : memref<2x16x16xf32, #tpu.memory_space<vmem>>, vector<1x16x16xf32>,
    %79 = arith.subf %61, %62 : vector<17x17xf32>
    %80 = arith.mulf %79, %67 : vector<17x17xf32>
    %cst_44 = arith.constant dense<0.000000e+00> : vector<16x17xf32>
    %81 = tpu.matmul %69, %80, %cst_44 {dimension_numbers = #tpu.dot_dimension_numbers<[1], [0], [0], [1], [0, 0, 1, 1], [], []>} : vector<16x17xf32>, vector<17x17xf32>, vector<16x17xf32> -> vector<16x17xf32>
    %cst_45 = arith.constant dense<0.000000e+00> : vector<16x16xf32>
    %82 = tpu.matmul %81, %71, %cst_45 {dimension_numbers = #tpu.dot_dimension_numbers<[1], [1], [0], [0], [0, 0, 1, 0], [], []>} : vector<16x17xf32>, vector<16x17xf32>, vector<16x16xf32> -> vector<16x16xf32>
    %c1_46 = arith.constant 1 : index
    %c0_47 = arith.constant 0 : index
    %c0_48 = arith.constant 0 : index
    %83 = vector.load %arg3[%c1_46, %c0_47, %c0_48] : memref<2x16x16xf32, #tpu.memory_space<vmem>>, vector<1x16x16xf32>
    %84 = vector.shape_cast %83 : vector<1x16x16xf32> to vector<16x16xf32>
    %85 = vector.shape_cast %82 : vector<16x16xf32> to vector<1x16x16xf32>
    tpu.vector_store %arg3[%c1_46, %c0_47, %c0_48], %85 {strides = array<i32>} : memref<2x16x16xf32, #tpu.memory_space<vmem>>, vector<1x16x16xf32>,
    return
  }
}

</mosaic_0001>

<llo_original>
// kernel: neg.1
$region0: #{neg.1}
  #allocation0 [shape = 's32[1]{0}', space=sflag, size = 0x4, scoped, tag = 'scoped memory for neg.1']
  %s0 = inlined_call_operand.vmem [shape: f32[2,2,17,17], index: 0, kind: input, shape index: {}]
  %s1 = inlined_call_operand.vmem [shape: f32[2,2,17,17], index: 1, kind: output, shape index: {}]
  %v2 = vld [vmem:[%s0] sm:$0xff]
  %3 = xla_tuple %v2
  %4 = xla_tuple %3
  %v5 = vxor.u32 %v2, 2147483648
  %6 = xla_tuple %v5
  %7 = vst [vmem:[%s1] sm:$0xff] %v5
  %s8 = scalar_lea.vmem %s0, 48
  %v9 = vld [vmem:[%s8] sm:$0xff]
  %10 = xla_tuple %v9
  %11 = xla_tuple %10
  %v12 = vxor.u32 %v9, 2147483648
  %13 = xla_tuple %v12
  %s14 = scalar_lea.vmem %s1, 48
  %15 = vst [vmem:[%s14] sm:$0xff] %v12
  %s16 = scalar_lea.vmem %s0, 24
  %v17 = vld [vmem:[%s16] sm:$0xff]
  %18 = xla_tuple %v17
  %19 = xla_tuple %18
  %v20 = vxor.u32 %v17, 2147483648
  %21 = xla_tuple %v20
  %s22 = scalar_lea.vmem %s1, 24
  %23 = vst [vmem:[%s22] sm:$0xff] %v20
  %s24 = scalar_lea.vmem %s0, 72
  %v25 = vld [vmem:[%s24] sm:$0xff]
  %26 = xla_tuple %v25
  %27 = xla_tuple %26
  %v28 = vxor.u32 %v25, 2147483648
  %29 = xla_tuple %v28
  %s30 = scalar_lea.vmem %s1, 72
  %31 = vst [vmem:[%s30] sm:$0xff] %v28
  %s32 = scalar_lea.vmem %s0, 8
  %v33 = vld [vmem:[%s32] sm:$0xff]
  %34 = xla_tuple %v33
  %35 = xla_tuple %34
  %v36 = vxor.u32 %v33, 2147483648
  %37 = xla_tuple %v36
  %s38 = scalar_lea.vmem %s1, 8
  %39 = vst [vmem:[%s38] sm:$0xff] %v36
  %s40 = scalar_lea.vmem %s0, 56
  %v41 = vld [vmem:[%s40] sm:$0xff]
  %42 = xla_tuple %v41
  %43 = xla_tuple %42
  %v44 = vxor.u32 %v41, 2147483648
  %45 = xla_tuple %v44
  %s46 = scalar_lea.vmem %s1, 56
  %47 = vst [vmem:[%s46] sm:$0xff] %v44
  %s48 = scalar_lea.vmem %s0, 32
  %v49 = vld [vmem:[%s48] sm:$0xff]
  %50 = xla_tuple %v49
  %51 = xla_tuple %50
  %v52 = vxor.u32 %v49, 2147483648
  %53 = xla_tuple %v52
  %s54 = scalar_lea.vmem %s1, 32
  %55 = vst [vmem:[%s54] sm:$0xff] %v52
  %s56 = scalar_lea.vmem %s0, 80
  %v57 = vld [vmem:[%s56] sm:$0xff]
  %58 = xla_tuple %v57
  %59 = xla_tuple %58
  %v60 = vxor.u32 %v57, 2147483648
  %61 = xla_tuple %v60
  %s62 = scalar_lea.vmem %s1, 80
  %63 = vst [vmem:[%s62] sm:$0xff] %v60
  %s64 = scalar_lea.vmem %s0, 16
  %v65 = vld [vmem:[%s64] sm:$0xff]
  %66 = xla_tuple %v65
  %67 = xla_tuple %66
  %v68 = vxor.u32 %v65, 2147483648
  %69 = xla_tuple %v68
  %s70 = scalar_lea.vmem %s1, 16
  %71 = vst [vmem:[%s70] sm:$0xff] %v68
  %s72 = scalar_lea.vmem %s0, 64
  %v73 = vld [vmem:[%s72] sm:$0xff]
  %74 = xla_tuple %v73
  %75 = xla_tuple %74
  %v76 = vxor.u32 %v73, 2147483648
  %77 = xla_tuple %v76
  %s78 = scalar_lea.vmem %s1, 64
  %79 = vst [vmem:[%s78] sm:$0xff] %v76
  %s80 = scalar_lea.vmem %s0, 40
  %v81 = vld [vmem:[%s80] sm:$0xff]
  %82 = xla_tuple %v81
  %83 = xla_tuple %82
  %v84 = vxor.u32 %v81, 2147483648
  %85 = xla_tuple %v84
  %s86 = scalar_lea.vmem %s1, 40
  %87 = vst [vmem:[%s86] sm:$0xff] %v84
  %s88 = scalar_lea.vmem %s0, 88
  %v89 = vld [vmem:[%s88] sm:$0xff]
  %90 = xla_tuple %v89
  %91 = xla_tuple %90
  %v92 = vxor.u32 %v89, 2147483648
  %93 = xla_tuple %v92
  %s94 = scalar_lea.vmem %s1, 88
  %95 = vst [vmem:[%s94] sm:$0xff] %v92

// kernel: recorder_forward.3
$region0: #{recorder_forward.3}
  #allocation0 [shape = 'u32[]', space=smem, size = 0x4, offset = 0x4, fixed_abs, tag = 'smem constant byte address 0x4 - core index']
  #allocation1 [shape = 'u32[144,128]{1,0:T(1,128)}', space=vmem, size = 0x12000, scoped, tag = 'internal scratch']
  %s0 = inlined_call_operand.vmem [shape: f32[2,2,17,17], index: 0, kind: input, shape index: {}]
  %s1 = inlined_call_operand.vmem [shape: f32[2,2], index: 1, kind: input, shape index: {}]
  %s2 = inlined_call_operand.vmem [shape: f32[2,16,17], index: 2, kind: input, shape index: {}]
  %s3 = inlined_call_operand.hbm [shape: f32[2,16,16], index: 3, kind: output, shape index: {}]
  %s4 = sld [smem:[#allocation0]]
  $region26: #{recorder_forward.3} parent=0
    _
  %s6 = ssub.s32 1, %s4
  %s7 = scalar_select 0, %s6, %s4
  $region1: #{recorder_forward.3} parent=0
    #allocation2 [shape = 'u8[1024]{0}', space=smem, size = 0x400, scoped, tag = 'input window, operand 1, single buffered']
    #allocation3 [shape = 's32[1]{0}', space=sflag, size = 0x4, scoped, tag = 'scoped memory for recorder_forward.3']
    #allocation4 [shape = 's32[1]{0}', space=sflag, size = 0x4, scoped, tag = 'scoped memory for recorder_forward.3']
    #allocation5 [shape = 'u8[16384]{0}', space=vmem, size = 0x4000, scoped, tag = 'output window, operand 0, single buffered']
    %8 = vsyncpa [#allocation4], 0
    %9 = vsyncpa [#allocation3], 0
    // Predicated region
    $region2: #{recorder_forward.3} parent=1 // pred_check
      _
    $region3: #{recorder_forward.3} parent=1 // pred_check_branch
      %11 = sbr.rel (0) target = $region5
    $region4: #{recorder_forward.3} parent=1 // pred_region
      _
    $region5: #{recorder_forward.3} parent=1 // pred_fallthru
      _
    // Predicated region
    $region6: #{recorder_forward.3} parent=1 // pred_check
      _
    $region7: #{recorder_forward.3} parent=1 // pred_check_branch
      %13 = sbr.rel (0) target = $region9
    $region8: #{recorder_forward.3} parent=1 // pred_region
      %s15 = ssub.s32 32, 32
      %16 = vsyncadd [#allocation4], %s15
      %s18 = sshll.u32 %s1, 4
      %s19 = int_to_ptr.vmem [resolvable:$true] %s18
      %21 = dma.vmem_to_smem %s19, 32, [#allocation2], [#allocation4]
    $region9: #{recorder_forward.3} parent=1 // pred_fallthru
      _
    // Predicated region
    $region10: #{recorder_forward.3} parent=1 // pred_check
      _
    $region11: #{recorder_forward.3} parent=1 // pred_check_branch
      %23 = sbr.rel (0) target = $region13
    $region12: #{recorder_forward.3} parent=1 // pred_region
      _
    $region13: #{recorder_forward.3} parent=1 // pred_fallthru
      _
    // Predicated region
    $region14: #{recorder_forward.3} parent=1 // pred_check
      _
    $region15: #{recorder_forward.3} parent=1 // pred_check_branch
      %25 = sbr.rel (0) target = $region17
    $region16: #{recorder_forward.3} parent=1 // pred_region
      %26 = dma.done [#allocation4], 32
    $region17: #{recorder_forward.3} parent=1 // pred_fallthru
      _
    %27 = sfence
    %v28 = vlaneseq
    %v29 = vshrl.u32 %v28, 7
    %v30 = vadd.s32 %v29, 8
    %v31 = vadd.s32 %v29, 16
    %v32 = vlaneseq
    %v33 = vand.u32 %v32, 127
    %vm34 = vcmp.eq.s32.totalorder %v29, %v33
    %vm35 = vcmp.eq.s32.totalorder %v30, %v33
    %vm36 = vcmp.eq.s32.totalorder %v31, %v33
    %v37 = vsel %vm34, 1, 0
    %v38 = vsel %vm35, 1, 0
    %v39 = vsel %vm36, 1, 0
    %v40 = vcvt.s32.f32 %v37
    %v41 = vcvt.s32.f32 %v38
    %v42 = vcvt.s32.f32 %v39
    %vm43 = vcmp.ne.s32.totalorder %v29, 0
    %vm44 = vcmp.ne.s32.totalorder %v30, 0
    %vm45 = vcmp.ne.s32.totalorder %v31, 0
    %vm46 = vcmp.ne.s32.totalorder %v33, 0
    %vm47 = vmor %vm43, %vm46
    %vm48 = vmor %vm44, %vm46
    %vm49 = vmor %vm45, %vm46
    %v50 = vld [vmem:[%s0] sm:$0xff]
    %v51 = vld [vmem:[%s0 + $0x8] sm:$0xff]
    %v52 = vld [vmem:[%s0 + $0x10] sm:$0x1]
    %s53 = scalar_lea.vmem %s0, 24
    %v54 = vld [vmem:[%s53] sm:$0xff]
    %v55 = vld [vmem:[%s53 + $0x8] sm:$0xff]
    %v56 = vld [vmem:[%s53 + $0x10] sm:$0x1]
    %s57 = sld [smem:[#allocation2]]
    %v58 = vstv %s57
    %vm59 = vcmp.le.f32.partialorder %v50, %v58
    %vm60 = vcmp.le.f32.partialorder %v51, %v58
    %vm61 = vcmp.le.f32.partialorder %v52, %v58
    %s62 = sld [smem:[#allocation2 + $0x1]]
    %v63 = vstv %s62
    %vm64 = vcmp.le.f32.partialorder %v54, %v63
    %vm65 = vcmp.le.f32.partialorder %v55, %v63
    %vm66 = vcmp.le.f32.partialorder %v56, %v63
    %vm67 = vmor %vm59, %vm64
    %vm68 = vmor %vm60, %vm65
    %vm69 = vmor %vm61, %vm66
    %vm70 = vmand %vm67, %vm47
    %vm71 = vmand %vm68, %vm48
    %vm72 = vmand %vm69, %vm49
    %v73 = vsel %vm70, 0.0, %v50
    %v74 = vsel %vm71, 0.0, %v51
    %v75 = vsel %vm72, 0.0, %v52
    %v76 = vadd.f32 %v73, %v40
    %v77 = vadd.f32 %v74, %v41
    %v78 = vadd.f32 %v75, %v42
    %v79 = vmul.f32 %v76, 0.5
    %v80 = vmul.f32 %v77, 0.5
    %v81 = vmul.f32 %v78, 0.5
    %v82 = vadd.f32 %v54, %v40
    %v83 = vadd.f32 %v55, %v41
    %v84 = vadd.f32 %v56, %v42
    %v85 = vmul.f32 %v82, 0.5
    %v86 = vmul.f32 %v83, 0.5
    %v87 = vmul.f32 %v84, 0.5
    %v88 = vadd.f32 %v79, %v85
    %v89 = vadd.f32 %v80, %v86
    %v90 = vadd.f32 %v81, %v87
    %v91 = vrcp.pop %v88
    %v92 = vrcp.pop %v89
    %v93 = vrcp.pop %v90
    %v94 = vmul.f32 %v79, %v91
    %v95 = vmul.f32 %v80, %v92
    %v96 = vmul.f32 %v81, %v93
    %v97 = vmul.f32 %v85, %v91
    %v98 = vmul.f32 %v86, %v92
    %v99 = vmul.f32 %v87, %v93
    %vm100 = vcmask 138240
    %v102 = vsel %vm100, %v94, 0
    %v105 = vsel %vm100, %v95, 0
    %v108 = vsel %vm100, %v96, 0
    %vm110 = vcmask 1040384
    %v112 = vsel %vm110, %v42, 0
    %114 = vmatprep.subr.mxu0 0.0
    %115 = vmatpush1.msra.mxu0 %v40
    %116 = vmatprep.subr.mxu0 0.0
    %117 = vmatpush1.msra.mxu0 %v41
    %118 = vmatprep.subr.mxu0 0.0
    %119 = vmatpush1.msra.mxu0 %v112
    %120 = vmatprep.subr.mxu0 0.0
    %121 = vmatpush1.msra.mxu0 0.0
    %122 = vmatprep.subr.mxu0 0.0
    %123 = vmatpush1.msra.mxu0 0.0
    %124 = vmatprep.subr.mxu0 0.0
    %125 = vmatpush1.msra.mxu0 0.0
    %126 = vmatprep.subr.mxu0 0.0
    %127 = vmatpush1.msra.mxu0 0.0
    %128 = vmatprep.subr.mxu0 0.0
    %129 = vmatpush1.msra.mxu0 0.0
    %130 = vmatprep.subr.mxu0 0.0
    %131 = vmatpush1.msra.mxu0 0.0
    %132 = vmatprep.subr.mxu0 0.0
    %133 = vmatpush1.msra.mxu0 0.0
    %134 = vmatprep.subr.mxu0 0.0
    %135 = vmatpush1.msra.mxu0 0.0
    %136 = vmatprep.subr.mxu0 0.0
    %137 = vmatpush1.msra.mxu0 0.0
    %138 = vmatprep.subr.mxu0 0.0
    %139 = vmatpush1.msra.mxu0 0.0
    %140 = vmatprep.subr.mxu0 0.0
    %141 = vmatpush1.msra.mxu0 0.0
    %142 = vmatprep.subr.mxu0 0.0
    %143 = vmatpush1.msra.mxu0 0.0
    %144 = vmatprep.subr.mxu0 0.0
    %145 = vmatpush1.msra.mxu0 0.0
    %146 = vmatprep.subr.mxu0 0.0
    %147 = vmatpush1.msra.mxu0 0.0
    %148 = vmatprep.subr.mxu0 0.0
    %149 = vmatpush1.msra.mxu0 0.0
    %150 = vmatprep.subr.mxu0 0.0
    %151 = vmatpush1.msra.mxu0 0.0
    %152 = vmatprep.subr.mxu0 0.0
    %153 = vmatpush1.msra.mxu0 0.0
    %154 = vmatprep.subr.mxu0 0.0
    %155 = vmatpush1.msra.mxu0 0.0
    %156 = vmatprep.subr.mxu0 0.0
    %157 = vmatpush1.msra.mxu0 0.0
    %158 = vmatprep.subr.mxu0 0.0
    %159 = vmatpush1.msra.mxu0 0.0
    %160 = vmatprep.subr.mxu0 0.0
    %161 = vmatpush1.msra.mxu0 0.0
    %162 = vmatprep.subr.mxu0 0.0
    %163 = vmatpush1.msra.mxu0 0.0
    %164 = vmatprep.subr.mxu0 0.0
    %165 = vmatpush1.msra.mxu0 0.0
    %166 = vmatprep.subr.mxu0 0.0
    %167 = vmatpush1.msra.mxu0 0.0
    %168 = vmatprep.subr.mxu0 0.0
    %169 = vmatpush1.msra.mxu0 0.0
    %170 = vmatprep.subr.mxu0 0.0
    %171 = vmatpush1.msra.mxu0 0.0
    %172 = vmatprep.subr.mxu0 0.0
    %173 = vmatpush1.msra.mxu0 0.0
    %174 = vmatprep.subr.mxu0 0.0
    %175 = vmatpush1.msra.mxu0 0.0
    %176 = vmatprep.subr.mxu0 0.0
    %177 = vmatpush1.msra.mxu0 0.0
    %178 = vmatprep.mubr.f32.mxu0 0.0
    %179 = vmatmul.mubr.f32.gmra.mrb[0].mxu0 %v102
    %v180 = vpop.f32.mrb[0].mxu0
    %v181 = vadd.f32 0.0, %v180
    %v182 = vpop.f32.mrb[0].mxu0
    %183 = vmatprep.mubr.f32.mxu0 0.0
    %184 = vmatmul.mubr.f32.gmra.mrb[0].mxu0 %v105
    %v185 = vpop.f32.mrb[0].mxu0
    %v186 = vadd.f32 0.0, %v185
    %v187 = vpop.f32.mrb[0].mxu0
    %188 = vmatprep.mubr.f32.mxu0 0.0
    %189 = vmatmul.mubr.f32.gmra.mrb[0].mxu0 %v108
    %v190 = vpop.f32.mrb[0].mxu0
    %v191 = vadd.f32 0.0, %v190
    %v192 = vpop.f32.mrb[0].mxu0
    %193 = vdwg.mxu0
    %v195 = vsel %vm100, %v97, 0
    %v198 = vsel %vm100, %v98, 0
    %v201 = vsel %vm100, %v99, 0
    %203 = vmatprep.subr.mxu0 0.0
    %204 = vmatpush1.msra.mxu0 %v40
    %205 = vmatprep.subr.mxu0 0.0
    %206 = vmatpush1.msra.mxu0 %v41
    %207 = vmatprep.subr.mxu0 0.0
    %208 = vmatpush1.msra.mxu0 %v112
    %209 = vmatprep.subr.mxu0 0.0
    %210 = vmatpush1.msra.mxu0 0.0
    %211 = vmatprep.subr.mxu0 0.0
    %212 = vmatpush1.msra.mxu0 0.0
    %213 = vmatprep.subr.mxu0 0.0
    %214 = vmatpush1.msra.mxu0 0.0
    %215 = vmatprep.subr.mxu0 0.0
    %216 = vmatpush1.msra.mxu0 0.0
    %217 = vmatprep.subr.mxu0 0.0
    %218 = vmatpush1.msra.mxu0 0.0
    %219 = vmatprep.subr.mxu0 0.0
    %220 = vmatpush1.msra.mxu0 0.0
    %221 = vmatprep.subr.mxu0 0.0
    %222 = vmatpush1.msra.mxu0 0.0
    %223 = vmatprep.subr.mxu0 0.0
    %224 = vmatpush1.msra.mxu0 0.0
    %225 = vmatprep.subr.mxu0 0.0
    %226 = vmatpush1.msra.mxu0 0.0
    %227 = vmatprep.subr.mxu0 0.0
    %228 = vmatpush1.msra.mxu0 0.0
    %229 = vmatprep.subr.mxu0 0.0
    %230 = vmatpush1.msra.mxu0 0.0
    %231 = vmatprep.subr.mxu0 0.0
    %232 = vmatpush1.msra.mxu0 0.0
    %233 = vmatprep.subr.mxu0 0.0
    %234 = vmatpush1.msra.mxu0 0.0
    %235 = vmatprep.subr.mxu0 0.0
    %236 = vmatpush1.msra.mxu0 0.0
    %237 = vmatprep.subr.mxu0 0.0
    %238 = vmatpush1.msra.mxu0 0.0
    %239 = vmatprep.subr.mxu0 0.0
    %240 = vmatpush1.msra.mxu0 0.0
    %241 = vmatprep.subr.mxu0 0.0
    %242 = vmatpush1.msra.mxu0 0.0
    %243 = vmatprep.subr.mxu0 0.0
    %244 = vmatpush1.msra.mxu0 0.0
    %245 = vmatprep.subr.mxu0 0.0
    %246 = vmatpush1.msra.mxu0 0.0
    %247 = vmatprep.subr.mxu0 0.0
    %248 = vmatpush1.msra.mxu0 0.0
    %249 = vmatprep.subr.mxu0 0.0
    %250 = vmatpush1.msra.mxu0 0.0
    %251 = vmatprep.subr.mxu0 0.0
    %252 = vmatpush1.msra.mxu0 0.0
    %253 = vmatprep.subr.mxu0 0.0
    %254 = vmatpush1.msra.mxu0 0.0
    %255 = vmatprep.subr.mxu0 0.0
    %256 = vmatpush1.msra.mxu0 0.0
    %257 = vmatprep.subr.mxu0 0.0
    %258 = vmatpush1.msra.mxu0 0.0
    %259 = vmatprep.subr.mxu0 0.0
    %260 = vmatpush1.msra.mxu0 0.0
    %261 = vmatprep.subr.mxu0 0.0
    %262 = vmatpush1.msra.mxu0 0.0
    %263 = vmatprep.subr.mxu0 0.0
    %264 = vmatpush1.msra.mxu0 0.0
    %265 = vmatprep.subr.mxu0 0.0
    %266 = vmatpush1.msra.mxu0 0.0
    %267 = vmatprep.mubr.f32.mxu0 0.0
    %268 = vmatmul.mubr.f32.gmra.mrb[0].mxu0 %v195
    %v269 = vpop.f32.mrb[0].mxu0
    %v270 = vadd.f32 0.0, %v269
    %v271 = vpop.f32.mrb[0].mxu0
    %272 = vmatprep.mubr.f32.mxu0 0.0
    %273 = vmatmul.mubr.f32.gmra.mrb[0].mxu0 %v198
    %v274 = vpop.f32.mrb[0].mxu0
    %v275 = vadd.f32 0.0, %v274
    %v276 = vpop.f32.mrb[0].mxu0
    %277 = vmatprep.mubr.f32.mxu0 0.0
    %278 = vmatmul.mubr.f32.gmra.mrb[0].mxu0 %v201
    %v279 = vpop.f32.mrb[0].mxu0
    %v280 = vadd.f32 0.0, %v279
    %v281 = vpop.f32.mrb[0].mxu0
    %282 = vdwg.mxu0
    %s283 = scalar_lea.vmem %s0, 48
    %v284 = vld [vmem:[%s283] sm:$0xff]
    %v285 = vld [vmem:[%s283 + $0x8] sm:$0xff]
    %v286 = vld [vmem:[%s283 + $0x10] sm:$0x1]
    %s287 = scalar_lea.vmem %s0, 72
    %v288 = vld [vmem:[%s287] sm:$0xff]
    %v289 = vld [vmem:[%s287 + $0x8] sm:$0xff]
    %v290 = vld [vmem:[%s287 + $0x10] sm:$0x1]
    %s291 = sld [smem:[#allocation2 + $0x80]]
    %v292 = vstv %s291
    %vm293 = vcmp.le.f32.partialorder %v284, %v292
    %vm294 = vcmp.le.f32.partialorder %v285, %v292
    %vm295 = vcmp.le.f32.partialorder %v286, %v292
    %s296 = sld [smem:[#allocation2 + $0x81]]
    %v297 = vstv %s296
    %vm298 = vcmp.le.f32.partialorder %v288, %v297
    %vm299 = vcmp.le.f32.partialorder %v289, %v297
    %vm300 = vcmp.le.f32.partialorder %v290, %v297
    %vm301 = vmor %vm293, %vm298
    %vm302 = vmor %vm294, %vm299
    %vm303 = vmor %vm295, %vm300
    %vm304 = vmand %vm301, %vm47
    %vm305 = vmand %vm302, %vm48
    %vm306 = vmand %vm303, %vm49
    %v307 = vsel %vm304, 0.0, %v284
    %v308 = vsel %vm305, 0.0, %v285
    %v309 = vsel %vm306, 0.0, %v286
    %v310 = vadd.f32 %v307, %v40
    %v311 = vadd.f32 %v308, %v41
    %v312 = vadd.f32 %v309, %v42
    %v313 = vmul.f32 %v310, 0.5
    %v314 = vmul.f32 %v311, 0.5
    %v315 = vmul.f32 %v312, 0.5
    %v316 = vadd.f32 %v288, %v40
    %v317 = vadd.f32 %v289, %v41
    %v318 = vadd.f32 %v290, %v42
    %v319 = vmul.f32 %v316, 0.5
    %v320 = vmul.f32 %v317, 0.5
    %v321 = vmul.f32 %v318, 0.5
    %v322 = vadd.f32 %v313, %v319
    %v323 = vadd.f32 %v314, %v320
    %v324 = vadd.f32 %v315, %v321
    %v325 = vrcp.pop %v322
    %v326 = vrcp.pop %v323
    %v327 = vrcp.pop %v324
    %v328 = vmul.f32 %v313, %v325
    %v329 = vmul.f32 %v314, %v326
    %v330 = vmul.f32 %v315, %v327
    %v331 = vmul.f32 %v319, %v325
    %v332 = vmul.f32 %v320, %v326
    %v333 = vmul.f32 %v321, %v327
    %v335 = vsel %vm100, %v328, 0
    %v338 = vsel %vm100, %v329, 0
    %v341 = vsel %vm100, %v330, 0
    %v344 = vsel %vm110, %v191, 0
    %346 = vmatprep.subr.mxu0 0.0
    %347 = vmatpush1.msra.mxu0 %v181
    %348 = vmatprep.subr.mxu0 0.0
    %349 = vmatpush1.msra.mxu0 %v186
    %350 = vmatprep.subr.mxu0 0.0
    %351 = vmatpush1.msra.mxu0 %v344
    %352 = vmatprep.subr.mxu0 0.0
    %353 = vmatpush1.msra.mxu0 0.0
    %354 = vmatprep.subr.mxu0 0.0
    %355 = vmatpush1.msra.mxu0 0.0
    %356 = vmatprep.subr.mxu0 0.0
    %357 = vmatpush1.msra.mxu0 0.0
    %358 = vmatprep.subr.mxu0 0.0
    %359 = vmatpush1.msra.mxu0 0.0
    %360 = vmatprep.subr.mxu0 0.0
    %361 = vmatpush1.msra.mxu0 0.0
    %362 = vmatprep.subr.mxu0 0.0
    %363 = vmatpush1.msra.mxu0 0.0
    %364 = vmatprep.subr.mxu0 0.0
    %365 = vmatpush1.msra.mxu0 0.0
    %366 = vmatprep.subr.mxu0 0.0
    %367 = vmatpush1.msra.mxu0 0.0
    %368 = vmatprep.subr.mxu0 0.0
    %369 = vmatpush1.msra.mxu0 0.0
    %370 = vmatprep.subr.mxu0 0.0
    %371 = vmatpush1.msra.mxu0 0.0
    %372 = vmatprep.subr.mxu0 0.0
    %373 = vmatpush1.msra.mxu0 0.0
    %374 = vmatprep.subr.mxu0 0.0
    %375 = vmatpush1.msra.mxu0 0.0
    %376 = vmatprep.subr.mxu0 0.0
    %377 = vmatpush1.msra.mxu0 0.0
    %378 = vmatprep.subr.mxu0 0.0
    %379 = vmatpush1.msra.mxu0 0.0
    %380 = vmatprep.subr.mxu0 0.0
    %381 = vmatpush1.msra.mxu0 0.0
    %382 = vmatprep.subr.mxu0 0.0
    %383 = vmatpush1.msra.mxu0 0.0
    %384 = vmatprep.subr.mxu0 0.0
    %385 = vmatpush1.msra.mxu0 0.0
    %386 = vmatprep.subr.mxu0 0.0
    %387 = vmatpush1.msra.mxu0 0.0
    %388 = vmatprep.subr.mxu0 0.0
    %389 = vmatpush1.msra.mxu0 0.0
    %390 = vmatprep.subr.mxu0 0.0
    %391 = vmatpush1.msra.mxu0 0.0
    %392 = vmatprep.subr.mxu0 0.0
    %393 = vmatpush1.msra.mxu0 0.0
    %394 = vmatprep.subr.mxu0 0.0
    %395 = vmatpush1.msra.mxu0 0.0
    %396 = vmatprep.subr.mxu0 0.0
    %397 = vmatpush1.msra.mxu0 0.0
    %398 = vmatprep.subr.mxu0 0.0
    %399 = vmatpush1.msra.mxu0 0.0
    %400 = vmatprep.subr.mxu0 0.0
    %401 = vmatpush1.msra.mxu0 0.0
    %402 = vmatprep.subr.mxu0 0.0
    %403 = vmatpush1.msra.mxu0 0.0
    %404 = vmatprep.subr.mxu0 0.0
    %405 = vmatpush1.msra.mxu0 0.0
    %406 = vmatprep.subr.mxu0 0.0
    %407 = vmatpush1.msra.mxu0 0.0
    %408 = vmatprep.subr.mxu0 0.0
    %409 = vmatpush1.msra.mxu0 0.0
    %410 = vmatprep.mubr.f32.mxu0 0.0
    %411 = vmatmul.mubr.f32.gmra.mrb[0].mxu0 %v335
    %v412 = vpop.f32.mrb[0].mxu0
    %v413 = vadd.f32 0.0, %v412
    %v414 = vpop.f32.mrb[0].mxu0
    %415 = vmatprep.mubr.f32.mxu0 0.0
    %416 = vmatmul.mubr.f32.gmra.mrb[0].mxu0 %v338
    %v417 = vpop.f32.mrb[0].mxu0
    %v418 = vadd.f32 0.0, %v417
    %v419 = vpop.f32.mrb[0].mxu0
    %420 = vmatprep.mubr.f32.mxu0 0.0
    %421 = vmatmul.mubr.f32.gmra.mrb[0].mxu0 %v341
    %v422 = vpop.f32.mrb[0].mxu0
    %v423 = vadd.f32 0.0, %v422
    %v424 = vpop.f32.mrb[0].mxu0
    %425 = vdwg.mxu0
    %v427 = vsel %vm100, %v331, 0
    %v430 = vsel %vm100, %v332, 0
    %v433 = vsel %vm100, %v333, 0
    %v436 = vsel %vm110, %v280, 0
    %438 = vmatprep.subr.mxu0 0.0
    %439 = vmatpush1.msra.mxu0 %v270
    %440 = vmatprep.subr.mxu0 0.0
    %441 = vmatpush1.msra.mxu0 %v275
    %442 = vmatprep.subr.mxu0 0.0
    %443 = vmatpush1.msra.mxu0 %v436
    %444 = vmatprep.subr.mxu0 0.0
    %445 = vmatpush1.msra.mxu0 0.0
    %446 = vmatprep.subr.mxu0 0.0
    %447 = vmatpush1.msra.mxu0 0.0
    %448 = vmatprep.subr.mxu0 0.0
    %449 = vmatpush1.msra.mxu0 0.0
    %450 = vmatprep.subr.mxu0 0.0
    %451 = vmatpush1.msra.mxu0 0.0
    %452 = vmatprep.subr.mxu0 0.0
    %453 = vmatpush1.msra.mxu0 0.0
    %454 = vmatprep.subr.mxu0 0.0
    %455 = vmatpush1.msra.mxu0 0.0
    %456 = vmatprep.subr.mxu0 0.0
    %457 = vmatpush1.msra.mxu0 0.0
    %458 = vmatprep.subr.mxu0 0.0
    %459 = vmatpush1.msra.mxu0 0.0
    %460 = vmatprep.subr.mxu0 0.0
    %461 = vmatpush1.msra.mxu0 0.0
    %462 = vmatprep.subr.mxu0 0.0
    %463 = vmatpush1.msra.mxu0 0.0
    %464 = vmatprep.subr.mxu0 0.0
    %465 = vmatpush1.msra.mxu0 0.0
    %466 = vmatprep.subr.mxu0 0.0
    %467 = vmatpush1.msra.mxu0 0.0
    %468 = vmatprep.subr.mxu0 0.0
    %469 = vmatpush1.msra.mxu0 0.0
    %470 = vmatprep.subr.mxu0 0.0
    %471 = vmatpush1.msra.mxu0 0.0
    %472 = vmatprep.subr.mxu0 0.0
    %473 = vmatpush1.msra.mxu0 0.0
    %474 = vmatprep.subr.mxu0 0.0
    %475 = vmatpush1.msra.mxu0 0.0
    %476 = vmatprep.subr.mxu0 0.0
    %477 = vmatpush1.msra.mxu0 0.0
    %478 = vmatprep.subr.mxu0 0.0
    %479 = vmatpush1.msra.mxu0 0.0
    %480 = vmatprep.subr.mxu0 0.0
    %481 = vmatpush1.msra.mxu0 0.0
    %482 = vmatprep.subr.mxu0 0.0
    %483 = vmatpush1.msra.mxu0 0.0
    %484 = vmatprep.subr.mxu0 0.0
    %485 = vmatpush1.msra.mxu0 0.0
    %486 = vmatprep.subr.mxu0 0.0
    %487 = vmatpush1.msra.mxu0 0.0
    %488 = vmatprep.subr.mxu0 0.0
    %489 = vmatpush1.msra.mxu0 0.0
    %490 = vmatprep.subr.mxu0 0.0
    %491 = vmatpush1.msra.mxu0 0.0
    %492 = vmatprep.subr.mxu0 0.0
    %493 = vmatpush1.msra.mxu0 0.0
    %494 = vmatprep.subr.mxu0 0.0
    %495 = vmatpush1.msra.mxu0 0.0
    %496 = vmatprep.subr.mxu0 0.0
    %497 = vmatpush1.msra.mxu0 0.0
    %498 = vmatprep.subr.mxu0 0.0
    %499 = vmatpush1.msra.mxu0 0.0
    %500 = vmatprep.subr.mxu0 0.0
    %501 = vmatpush1.msra.mxu0 0.0
    %502 = vmatprep.mubr.f32.mxu0 0.0
    %503 = vmatmul.mubr.f32.gmra.mrb[0].mxu0 %v427
    %v504 = vpop.f32.mrb[0].mxu0
    %v505 = vadd.f32 0.0, %v504
    %v506 = vpop.f32.mrb[0].mxu0
    %507 = vmatprep.mubr.f32.mxu0 0.0
    %508 = vmatmul.mubr.f32.gmra.mrb[0].mxu0 %v430
    %v509 = vpop.f32.mrb[0].mxu0
    %v510 = vadd.f32 0.0, %v509
    %v511 = vpop.f32.mrb[0].mxu0
    %512 = vmatprep.mubr.f32.mxu0 0.0
    %513 = vmatmul.mubr.f32.gmra.mrb[0].mxu0 %v433
    %v514 = vpop.f32.mrb[0].mxu0
    %v515 = vadd.f32 0.0, %v514
    %v516 = vpop.f32.mrb[0].mxu0
    %517 = vdwg.mxu0
    %v518 = vmin.f32 %v413, %v505
    %v519 = vmin.f32 %v418, %v510
    %v520 = vmin.f32 %v423, %v515
    %v521 = vmax.f32 %v413, %v505
    %v522 = vmax.f32 %v418, %v510
    %v523 = vmax.f32 %v423, %v515
    %v524 = vsub.f32 %v521, %v518
    %v525 = vsub.f32 %v522, %v519
    %v526 = vsub.f32 %v523, %v520
    %v527 = vadd.f32 %v524, 1e-05
    %v528 = vadd.f32 %v525, 1e-05
    %v529 = vadd.f32 %v526, 1e-05
    %v530 = vrcp.pop %v527
    %v531 = vrcp.pop %v528
    %v532 = vrcp.pop %v529
    %v533 = vld [vmem:[%s2] sm:$0xff]
    %v534 = vld [vmem:[%s2 + $0x8] sm:$0xff]
    %s535 = scalar_lea.vmem %s2, 16
    %v536 = vld [vmem:[%s535] sm:$0xff]
    %v537 = vld [vmem:[%s535 + $0x8] sm:$0xff]
    %v538 = vsub.f32 %v413, %v518
    %v539 = vsub.f32 %v418, %v519
    %v540 = vsub.f32 %v423, %v520
    %v541 = vmul.f32 %v538, %v530
    %v542 = vmul.f32 %v539, %v531
    %v543 = vmul.f32 %v540, %v532
    %v545 = vsel %vm100, %v533, 0
    %v548 = vsel %vm100, %v534, 0
    %v551 = vsel %vm110, %v543, 0
    %553 = vmatprep.subr.mxu0 0.0
    %554 = vmatpush1.msra.mxu0 %v541
    %555 = vmatprep.subr.mxu0 0.0
    %556 = vmatpush1.msra.mxu0 %v542
    %557 = vmatprep.subr.mxu0 0.0
    %558 = vmatpush1.msra.mxu0 %v551
    %559 = vmatprep.subr.mxu0 0.0
    %560 = vmatpush1.msra.mxu0 0.0
    %561 = vmatprep.subr.mxu0 0.0
    %562 = vmatpush1.msra.mxu0 0.0
    %563 = vmatprep.subr.mxu0 0.0
    %564 = vmatpush1.msra.mxu0 0.0
    %565 = vmatprep.subr.mxu0 0.0
    %566 = vmatpush1.msra.mxu0 0.0
    %567 = vmatprep.subr.mxu0 0.0
    %568 = vmatpush1.msra.mxu0 0.0
    %569 = vmatprep.subr.mxu0 0.0
    %570 = vmatpush1.msra.mxu0 0.0
    %571 = vmatprep.subr.mxu0 0.0
    %572 = vmatpush1.msra.mxu0 0.0
    %573 = vmatprep.subr.mxu0 0.0
    %574 = vmatpush1.msra.mxu0 0.0
    %575 = vmatprep.subr.mxu0 0.0
    %576 = vmatpush1.msra.mxu0 0.0
    %577 = vmatprep.subr.mxu0 0.0
    %578 = vmatpush1.msra.mxu0 0.0
    %579 = vmatprep.subr.mxu0 0.0
    %580 = vmatpush1.msra.mxu0 0.0
    %581 = vmatprep.subr.mxu0 0.0
    %582 = vmatpush1.msra.mxu0 0.0
    %583 = vmatprep.subr.mxu0 0.0
    %584 = vmatpush1.msra.mxu0 0.0
    %585 = vmatprep.subr.mxu0 0.0
    %586 = vmatpush1.msra.mxu0 0.0
    %587 = vmatprep.subr.mxu0 0.0
    %588 = vmatpush1.msra.mxu0 0.0
    %589 = vmatprep.subr.mxu0 0.0
    %590 = vmatpush1.msra.mxu0 0.0
    %591 = vmatprep.subr.mxu0 0.0
    %592 = vmatpush1.msra.mxu0 0.0
    %593 = vmatprep.subr.mxu0 0.0
    %594 = vmatpush1.msra.mxu0 0.0
    %595 = vmatprep.subr.mxu0 0.0
    %596 = vmatpush1.msra.mxu0 0.0
    %597 = vmatprep.subr.mxu0 0.0
    %598 = vmatpush1.msra.mxu0 0.0
    %599 = vmatprep.subr.mxu0 0.0
    %600 = vmatpush1.msra.mxu0 0.0
    %601 = vmatprep.subr.mxu0 0.0
    %602 = vmatpush1.msra.mxu0 0.0
    %603 = vmatprep.subr.mxu0 0.0
    %604 = vmatpush1.msra.mxu0 0.0
    %605 = vmatprep.subr.mxu0 0.0
    %606 = vmatpush1.msra.mxu0 0.0
    %607 = vmatprep.subr.mxu0 0.0
    %608 = vmatpush1.msra.mxu0 0.0
    %609 = vmatprep.subr.mxu0 0.0
    %610 = vmatpush1.msra.mxu0 0.0
    %611 = vmatprep.subr.mxu0 0.0
    %612 = vmatpush1.msra.mxu0 0.0
    %613 = vmatprep.subr.mxu0 0.0
    %614 = vmatpush1.msra.mxu0 0.0
    %615 = vmatprep.subr.mxu0 0.0
    %616 = vmatpush1.msra.mxu0 0.0
    %617 = vmatprep.mubr.f32.mxu0 0.0
    %618 = vmatmul.mubr.f32.gmra.mrb[0].mxu0 %v545
    %v619 = vpop.f32.mrb[0].mxu0
    %v620 = vadd.f32 0.0, %v619
    %v621 = vpop.f32.mrb[0].mxu0
    %622 = vmatprep.mubr.f32.mxu0 0.0
    %623 = vmatmul.mubr.f32.gmra.mrb[0].mxu0 %v548
    %v624 = vpop.f32.mrb[0].mxu0
    %v625 = vadd.f32 0.0, %v624
    %v626 = vpop.f32.mrb[0].mxu0
    %627 = vdwg.mxu0
    %v629 = vsel %vm100, %v620, 0
    %v632 = vsel %vm100, %v625, 0
    %v635 = vsel %vm100, %v536, 0
    %v638 = vsel %vm100, %v537, 0
    %640 = vmatprep.subr.mxu0 0.0
    %641 = vmatpush1.xpose.msra.mxu0 %v635
    %642 = vmatprep.subr.mxu0 0.0
    %643 = vmatpush1.xpose.msra.mxu0 %v638
    %644 = vmatprep.subr.mxu0 0.0
    %645 = vmatpush1.xpose.msra.mxu0 0.0
    %646 = vmatprep.subr.mxu0 0.0
    %647 = vmatpush1.xpose.msra.mxu0 0.0
    %648 = vmatprep.subr.mxu0 0.0
    %649 = vmatpush1.xpose.msra.mxu0 0.0
    %650 = vmatprep.subr.mxu0 0.0
    %651 = vmatpush1.xpose.msra.mxu0 0.0
    %652 = vmatprep.subr.mxu0 0.0
    %653 = vmatpush1.xpose.msra.mxu0 0.0
    %654 = vmatprep.subr.mxu0 0.0
    %655 = vmatpush1.xpose.msra.mxu0 0.0
    %656 = vmatprep.subr.mxu0 0.0
    %657 = vmatpush1.xpose.msra.mxu0 0.0
    %658 = vmatprep.subr.mxu0 0.0
    %659 = vmatpush1.xpose.msra.mxu0 0.0
    %660 = vmatprep.subr.mxu0 0.0
    %661 = vmatpush1.xpose.msra.mxu0 0.0
    %662 = vmatprep.subr.mxu0 0.0
    %663 = vmatpush1.xpose.msra.mxu0 0.0
    %664 = vmatprep.subr.mxu0 0.0
    %665 = vmatpush1.xpose.msra.mxu0 0.0
    %666 = vmatprep.subr.mxu0 0.0
    %667 = vmatpush1.xpose.msra.mxu0 0.0
    %668 = vmatprep.subr.mxu0 0.0
    %669 = vmatpush1.xpose.msra.mxu0 0.0
    %670 = vmatprep.subr.mxu0 0.0
    %671 = vmatpush1.xpose.msra.mxu0 0.0
    %672 = vmatprep.subr.mxu0 0.0
    %673 = vmatpush1.xpose.msra.mxu0 0.0
    %674 = vmatprep.subr.mxu0 0.0
    %675 = vmatpush1.xpose.msra.mxu0 0.0
    %676 = vmatprep.subr.mxu0 0.0
    %677 = vmatpush1.xpose.msra.mxu0 0.0
    %678 = vmatprep.subr.mxu0 0.0
    %679 = vmatpush1.xpose.msra.mxu0 0.0
    %680 = vmatprep.subr.mxu0 0.0
    %681 = vmatpush1.xpose.msra.mxu0 0.0
    %682 = vmatprep.subr.mxu0 0.0
    %683 = vmatpush1.xpose.msra.mxu0 0.0
    %684 = vmatprep.subr.mxu0 0.0
    %685 = vmatpush1.xpose.msra.mxu0 0.0
    %686 = vmatprep.subr.mxu0 0.0
    %687 = vmatpush1.xpose.msra.mxu0 0.0
    %688 = vmatprep.subr.mxu0 0.0
    %689 = vmatpush1.xpose.msra.mxu0 0.0
    %690 = vmatprep.subr.mxu0 0.0
    %691 = vmatpush1.xpose.msra.mxu0 0.0
    %692 = vmatprep.subr.mxu0 0.0
    %693 = vmatpush1.xpose.msra.mxu0 0.0
    %694 = vmatprep.subr.mxu0 0.0
    %695 = vmatpush1.xpose.msra.mxu0 0.0
    %696 = vmatprep.subr.mxu0 0.0
    %697 = vmatpush1.xpose.msra.mxu0 0.0
    %698 = vmatprep.subr.mxu0 0.0
    %699 = vmatpush1.xpose.msra.mxu0 0.0
    %700 = vmatprep.subr.mxu0 0.0
    %701 = vmatpush1.xpose.msra.mxu0 0.0
    %702 = vmatprep.subr.mxu0 0.0
    %703 = vmatpush1.xpose.msra.mxu0 0.0
    %704 = vmatprep.mubr.f32.mxu0 0.0
    %705 = vmatmul.mubr.f32.gmra.mrb[0].mxu0 %v629
    %v706 = vpop.f32.mrb[0].mxu0
    %v707 = vadd.f32 0.0, %v706
    %v708 = vpop.f32.mrb[0].mxu0
    %709 = vmatprep.mubr.f32.mxu0 0.0
    %710 = vmatmul.mubr.f32.gmra.mrb[0].mxu0 %v632
    %v711 = vpop.f32.mrb[0].mxu0
    %v712 = vadd.f32 0.0, %v711
    %v713 = vpop.f32.mrb[0].mxu0
    %714 = vdwg.mxu0
    %vm715 = vcmask 130048
    %716 = vst.msk [vmem:[#allocation5] sm:$0xff] %vm715, %v707
    %717 = vst.msk [vmem:[#allocation5 + $0x8] sm:$0xff] %vm715, %v712
    %v718 = vsub.f32 %v505, %v518
    %v719 = vsub.f32 %v510, %v519
    %v720 = vsub.f32 %v515, %v520
    %v721 = vmul.f32 %v718, %v530
    %v722 = vmul.f32 %v719, %v531
    %v723 = vmul.f32 %v720, %v532
    %v725 = vsel %vm110, %v723, 0
    %727 = vmatprep.subr.mxu0 0.0
    %728 = vmatpush1.msra.mxu0 %v721
    %729 = vmatprep.subr.mxu0 0.0
    %730 = vmatpush1.msra.mxu0 %v722
    %731 = vmatprep.subr.mxu0 0.0
    %732 = vmatpush1.msra.mxu0 %v725
    %733 = vmatprep.subr.mxu0 0.0
    %734 = vmatpush1.msra.mxu0 0.0
    %735 = vmatprep.subr.mxu0 0.0
    %736 = vmatpush1.msra.mxu0 0.0
    %737 = vmatprep.subr.mxu0 0.0
    %738 = vmatpush1.msra.mxu0 0.0
    %739 = vmatprep.subr.mxu0 0.0
    %740 = vmatpush1.msra.mxu0 0.0
    %741 = vmatprep.subr.mxu0 0.0
    %742 = vmatpush1.msra.mxu0 0.0
    %743 = vmatprep.subr.mxu0 0.0
    %744 = vmatpush1.msra.mxu0 0.0
    %745 = vmatprep.subr.mxu0 0.0
    %746 = vmatpush1.msra.mxu0 0.0
    %747 = vmatprep.subr.mxu0 0.0
    %748 = vmatpush1.msra.mxu0 0.0
    %749 = vmatprep.subr.mxu0 0.0
    %750 = vmatpush1.msra.mxu0 0.0
    %751 = vmatprep.subr.mxu0 0.0
    %752 = vmatpush1.msra.mxu0 0.0
    %753 = vmatprep.subr.mxu0 0.0
    %754 = vmatpush1.msra.mxu0 0.0
    %755 = vmatprep.subr.mxu0 0.0
    %756 = vmatpush1.msra.mxu0 0.0
    %757 = vmatprep.subr.mxu0 0.0
    %758 = vmatpush1.msra.mxu0 0.0
    %759 = vmatprep.subr.mxu0 0.0
    %760 = vmatpush1.msra.mxu0 0.0
    %761 = vmatprep.subr.mxu0 0.0
    %762 = vmatpush1.msra.mxu0 0.0
    %763 = vmatprep.subr.mxu0 0.0
    %764 = vmatpush1.msra.mxu0 0.0
    %765 = vmatprep.subr.mxu0 0.0
    %766 = vmatpush1.msra.mxu0 0.0
    %767 = vmatprep.subr.mxu0 0.0
    %768 = vmatpush1.msra.mxu0 0.0
    %769 = vmatprep.subr.mxu0 0.0
    %770 = vmatpush1.msra.mxu0 0.0
    %771 = vmatprep.subr.mxu0 0.0
    %772 = vmatpush1.msra.mxu0 0.0
    %773 = vmatprep.subr.mxu0 0.0
    %774 = vmatpush1.msra.mxu0 0.0
    %775 = vmatprep.subr.mxu0 0.0
    %776 = vmatpush1.msra.mxu0 0.0
    %777 = vmatprep.subr.mxu0 0.0
    %778 = vmatpush1.msra.mxu0 0.0
    %779 = vmatprep.subr.mxu0 0.0
    %780 = vmatpush1.msra.mxu0 0.0
    %781 = vmatprep.subr.mxu0 0.0
    %782 = vmatpush1.msra.mxu0 0.0
    %783 = vmatprep.subr.mxu0 0.0
    %784 = vmatpush1.msra.mxu0 0.0
    %785 = vmatprep.subr.mxu0 0.0
    %786 = vmatpush1.msra.mxu0 0.0
    %787 = vmatprep.subr.mxu0 0.0
    %788 = vmatpush1.msra.mxu0 0.0
    %789 = vmatprep.subr.mxu0 0.0
    %790 = vmatpush1.msra.mxu0 0.0
    %791 = vmatprep.mubr.f32.mxu0 0.0
    %792 = vmatmul.mubr.f32.gmra.mrb[0].mxu0 %v545
    %v793 = vpop.f32.mrb[0].mxu0
    %v794 = vadd.f32 0.0, %v793
    %v795 = vpop.f32.mrb[0].mxu0
    %796 = vmatprep.mubr.f32.mxu0 0.0
    %797 = vmatmul.mubr.f32.gmra.mrb[0].mxu0 %v548
    %v798 = vpop.f32.mrb[0].mxu0
    %v799 = vadd.f32 0.0, %v798
    %v800 = vpop.f32.mrb[0].mxu0
    %801 = vdwg.mxu0
    %v803 = vsel %vm100, %v794, 0
    %v806 = vsel %vm100, %v799, 0
    %808 = vmatprep.subr.mxu0 0.0
    %809 = vmatpush1.xpose.msra.mxu0 %v635
    %810 = vmatprep.subr.mxu0 0.0
    %811 = vmatpush1.xpose.msra.mxu0 %v638
    %812 = vmatprep.subr.mxu0 0.0
    %813 = vmatpush1.xpose.msra.mxu0 0.0
    %814 = vmatprep.subr.mxu0 0.0
    %815 = vmatpush1.xpose.msra.mxu0 0.0
    %816 = vmatprep.subr.mxu0 0.0
    %817 = vmatpush1.xpose.msra.mxu0 0.0
    %818 = vmatprep.subr.mxu0 0.0
    %819 = vmatpush1.xpose.msra.mxu0 0.0
    %820 = vmatprep.subr.mxu0 0.0
    %821 = vmatpush1.xpose.msra.mxu0 0.0
    %822 = vmatprep.subr.mxu0 0.0
    %823 = vmatpush1.xpose.msra.mxu0 0.0
    %824 = vmatprep.subr.mxu0 0.0
    %825 = vmatpush1.xpose.msra.mxu0 0.0
    %826 = vmatprep.subr.mxu0 0.0
    %827 = vmatpush1.xpose.msra.mxu0 0.0
    %828 = vmatprep.subr.mxu0 0.0
    %829 = vmatpush1.xpose.msra.mxu0 0.0
    %830 = vmatprep.subr.mxu0 0.0
    %831 = vmatpush1.xpose.msra.mxu0 0.0
    %832 = vmatprep.subr.mxu0 0.0
    %833 = vmatpush1.xpose.msra.mxu0 0.0
    %834 = vmatprep.subr.mxu0 0.0
    %835 = vmatpush1.xpose.msra.mxu0 0.0
    %836 = vmatprep.subr.mxu0 0.0
    %837 = vmatpush1.xpose.msra.mxu0 0.0
    %838 = vmatprep.subr.mxu0 0.0
    %839 = vmatpush1.xpose.msra.mxu0 0.0
    %840 = vmatprep.subr.mxu0 0.0
    %841 = vmatpush1.xpose.msra.mxu0 0.0
    %842 = vmatprep.subr.mxu0 0.0
    %843 = vmatpush1.xpose.msra.mxu0 0.0
    %844 = vmatprep.subr.mxu0 0.0
    %845 = vmatpush1.xpose.msra.mxu0 0.0
    %846 = vmatprep.subr.mxu0 0.0
    %847 = vmatpush1.xpose.msra.mxu0 0.0
    %848 = vmatprep.subr.mxu0 0.0
    %849 = vmatpush1.xpose.msra.mxu0 0.0
    %850 = vmatprep.subr.mxu0 0.0
    %851 = vmatpush1.xpose.msra.mxu0 0.0
    %852 = vmatprep.subr.mxu0 0.0
    %853 = vmatpush1.xpose.msra.mxu0 0.0
    %854 = vmatprep.subr.mxu0 0.0
    %855 = vmatpush1.xpose.msra.mxu0 0.0
    %856 = vmatprep.subr.mxu0 0.0
    %857 = vmatpush1.xpose.msra.mxu0 0.0
    %858 = vmatprep.subr.mxu0 0.0
    %859 = vmatpush1.xpose.msra.mxu0 0.0
    %860 = vmatprep.subr.mxu0 0.0
    %861 = vmatpush1.xpose.msra.mxu0 0.0
    %862 = vmatprep.subr.mxu0 0.0
    %863 = vmatpush1.xpose.msra.mxu0 0.0
    %864 = vmatprep.subr.mxu0 0.0
    %865 = vmatpush1.xpose.msra.mxu0 0.0
    %866 = vmatprep.subr.mxu0 0.0
    %867 = vmatpush1.xpose.msra.mxu0 0.0
    %868 = vmatprep.subr.mxu0 0.0
    %869 = vmatpush1.xpose.msra.mxu0 0.0
    %870 = vmatprep.subr.mxu0 0.0
    %871 = vmatpush1.xpose.msra.mxu0 0.0
    %872 = vmatprep.mubr.f32.mxu0 0.0
    %873 = vmatmul.mubr.f32.gmra.mrb[0].mxu0 %v803
    %v874 = vpop.f32.mrb[0].mxu0
    %v875 = vadd.f32 0.0, %v874
    %v876 = vpop.f32.mrb[0].mxu0
    %877 = vmatprep.mubr.f32.mxu0 0.0
    %878 = vmatmul.mubr.f32.gmra.mrb[0].mxu0 %v806
    %v879 = vpop.f32.mrb[0].mxu0
    %v880 = vadd.f32 0.0, %v879
    %v881 = vpop.f32.mrb[0].mxu0
    %882 = vdwg.mxu0
    %s883 = scalar_lea.vmem [#allocation5], 16
    %884 = vst.msk [vmem:[%s883] sm:$0xff] %vm715, %v875
    %885 = vst.msk [vmem:[%s883 + $0x8] sm:$0xff] %vm715, %v880
    // Predicated region
    $region18: #{recorder_forward.3} parent=1 // pred_check
      _
    $region19: #{recorder_forward.3} parent=1 // pred_check_branch
      %887 = sbr.rel (0) target = $region21
    $region20: #{recorder_forward.3} parent=1 // pred_region
      %s889 = ssub.s32 512, 512
      %890 = vsyncadd [#allocation3], %s889
      %s891 = sshll.u32 [#allocation5], 4
      %s892 = int_to_ptr.vmem [resolvable:$true] %s891
      %897 = dma.vmem_to_hbm [thread:$0]  %s892, 512, %s3, [#allocation3], 128, 128, 8
    $region21: #{recorder_forward.3} parent=1 // pred_fallthru
      _
    // Predicated region
    $region22: #{recorder_forward.3} parent=1 // pred_check
      _
    $region23: #{recorder_forward.3} parent=1 // pred_check_branch
      %899 = sbr.rel (0) target = $region25
    $region24: #{recorder_forward.3} parent=1 // pred_region
      %900 = dma.done [#allocation3], 512
    $region25: #{recorder_forward.3} parent=1 // pred_fallthru
      _
    %901 = vsyncpa [#allocation3], 1
    %902 = vsyncpa [#allocation4], 1

// kernel: recorder_forward.2
$region0: #{recorder_forward.2}
  #allocation0 [shape = 'u32[]', space=smem, size = 0x4, offset = 0x4, fixed_abs, tag = 'smem constant byte address 0x4 - core index']
  #allocation1 [shape = 'u32[144,128]{1,0:T(1,128)}', space=vmem, size = 0x12000, scoped, tag = 'internal scratch']
  #allocation2 [shape = 'f32[2,17,32]{2,1,0:T(8,128)}', space=vmem, size = 0x6000, scoped, tag = 'scratch operand']
  %s0 = inlined_call_operand.vmem [shape: f32[32,48], index: 0, kind: input, shape index: {}]
  %s1 = inlined_call_operand.vmem [shape: f32[48,32], index: 1, kind: input, shape index: {}]
  %s2 = inlined_call_operand.vmem [shape: f32[2,32,96], index: 2, kind: input, shape index: {}]
  %s3 = inlined_call_operand.vmem [shape: f32[2,32,32], index: 3, kind: input, shape index: {}]
  %s4 = inlined_call_operand.vmem [shape: f32[56,96], index: 4, kind: input, shape index: {}]
  %s5 = inlined_call_operand.hbm [shape: f32[2,10], index: 5, kind: output, shape index: {0}]
  %s6 = inlined_call_operand.vmem [shape: f32[2,2,17,17], index: 6, kind: output, shape index: {1}]
  %7 = xla_tuple %s5, %s6
  %s8 = sld [smem:[#allocation0]]
  $region38: #{recorder_forward.2} parent=0
    _
  %s10 = ssub.s32 1, %s8
  %s11 = scalar_select 0, %s10, %s8
  $region1: #{recorder_forward.2} parent=0
    #allocation3 [shape = 'u8[1024]{0}', space=vmem, size = 0x400, scoped, tag = 'output window, operand 0, single buffered']
    #allocation4 [shape = 's32[1]{0}', space=sflag, size = 0x4, scoped, tag = 'scoped memory for recorder_forward.2']
    %12 = vsyncpa [#allocation4], 0
    // Predicated region
    $region2: #{recorder_forward.2} parent=1 // pred_check
      _
    $region3: #{recorder_forward.2} parent=1 // pred_check_branch
      %14 = sbr.rel (0) target = $region5
    $region4: #{recorder_forward.2} parent=1 // pred_region
      _
    $region5: #{recorder_forward.2} parent=1 // pred_fallthru
      _
    // Predicated region
    $region6: #{recorder_forward.2} parent=1 // pred_check
      _
    $region7: #{recorder_forward.2} parent=1 // pred_check_branch
      %16 = sbr.rel (0) target = $region9
    $region8: #{recorder_forward.2} parent=1 // pred_region
      _
    $region9: #{recorder_forward.2} parent=1 // pred_fallthru
      _
    // Predicated region
    $region10: #{recorder_forward.2} parent=1 // pred_check
      _
    $region11: #{recorder_forward.2} parent=1 // pred_check_branch
      %18 = sbr.rel (0) target = $region13
    $region12: #{recorder_forward.2} parent=1 // pred_region
      _
    $region13: #{recorder_forward.2} parent=1 // pred_fallthru
      _
    // Predicated region
    $region14: #{recorder_forward.2} parent=1 // pred_check
      _
    $region15: #{recorder_forward.2} parent=1 // pred_check_branch
      %20 = sbr.rel (0) target = $region17
    $region16: #{recorder_forward.2} parent=1 // pred_region
      _
    $region17: #{recorder_forward.2} parent=1 // pred_fallthru
      _
    // Predicated region
    $region18: #{recorder_forward.2} parent=1 // pred_check
      _
    $region19: #{recorder_forward.2} parent=1 // pred_check_branch
      %22 = sbr.rel (0) target = $region21
    $region20: #{recorder_forward.2} parent=1 // pred_region
      _
    $region21: #{recorder_forward.2} parent=1 // pred_fallthru
      _
    %v23 = vld [vmem:[%s4] sm:$0xff]
    %v24 = vld [vmem:[%s4 + $0x8] sm:$0xff]
    %v25 = vld [vmem:[%s4 + $0x10] sm:$0xff]
    %v26 = vld [vmem:[%s4 + $0x18] sm:$0xff]
    %v27 = vld [vmem:[%s4 + $0x20] sm:$0xff]
    %v28 = vld [vmem:[%s4 + $0x28] sm:$0xff]
    %v29 = vld [vmem:[%s4 + $0x30] sm:$0xff]
    %v31 = vrot.slane %v23, 7
    %v33 = vadd.f32 %v25, %v31
    %v34 = vld [vmem:[%s0] sm:$0xff]
    %v35 = vld [vmem:[%s0 + $0x8] sm:$0xff]
    %v36 = vld [vmem:[%s0 + $0x10] sm:$0xff]
    %v37 = vld [vmem:[%s0 + $0x18] sm:$0xff]
    %v38 = vld [vmem:[%s1] sm:$0xff]
    %v39 = vld [vmem:[%s1 + $0x8] sm:$0xff]
    %v40 = vld [vmem:[%s1 + $0x10] sm:$0xff]
    %v41 = vld [vmem:[%s1 + $0x18] sm:$0xff]
    %v42 = vld [vmem:[%s1 + $0x20] sm:$0xff]
    %v43 = vld [vmem:[%s1 + $0x28] sm:$0xff]
    %v44 = vlaneseq
    %v45 = vshrl.u32 %v44, 7
    %v46 = vsub.s32 2, %v45
    %v47 = vrot.slane %v25, %v46
    %vm48 = vcmask 392192
    %v50 = vsel %vm48, %v34, 0
    %v53 = vsel %vm48, %v35, 0
    %v56 = vsel %vm48, %v36, 0
    %v59 = vsel %vm48, %v37, 0
    %61 = vmatprep.subr.mxu0 0.0
    %62 = vmatpush1.msra.mxu0 %v38
    %63 = vmatprep.subr.mxu0 0.0
    %64 = vmatpush1.msra.mxu0 %v39
    %65 = vmatprep.subr.mxu0 0.0
    %66 = vmatpush1.msra.mxu0 %v40
    %67 = vmatprep.subr.mxu0 0.0
    %68 = vmatpush1.msra.mxu0 %v41
    %69 = vmatprep.subr.mxu0 0.0
    %70 = vmatpush1.msra.mxu0 %v42
    %71 = vmatprep.subr.mxu0 0.0
    %72 = vmatpush1.msra.mxu0 %v43
    %73 = vmatprep.subr.mxu0 0.0
    %74 = vmatpush1.msra.mxu0 0.0
    %75 = vmatprep.subr.mxu0 0.0
    %76 = vmatpush1.msra.mxu0 0.0
    %77 = vmatprep.subr.mxu0 0.0
    %78 = vmatpush1.msra.mxu0 0.0
    %79 = vmatprep.subr.mxu0 0.0
    %80 = vmatpush1.msra.mxu0 0.0
    %81 = vmatprep.subr.mxu0 0.0
    %82 = vmatpush1.msra.mxu0 0.0
    %83 = vmatprep.subr.mxu0 0.0
    %84 = vmatpush1.msra.mxu0 0.0
    %85 = vmatprep.subr.mxu0 0.0
    %86 = vmatpush1.msra.mxu0 0.0
    %87 = vmatprep.subr.mxu0 0.0
    %88 = vmatpush1.msra.mxu0 0.0
    %89 = vmatprep.subr.mxu0 0.0
    %90 = vmatpush1.msra.mxu0 0.0
    %91 = vmatprep.subr.mxu0 0.0
    %92 = vmatpush1.msra.mxu0 0.0
    %93 = vmatprep.subr.mxu0 0.0
    %94 = vmatpush1.msra.mxu0 0.0
    %95 = vmatprep.subr.mxu0 0.0
    %96 = vmatpush1.msra.mxu0 0.0
    %97 = vmatprep.subr.mxu0 0.0
    %98 = vmatpush1.msra.mxu0 0.0
    %99 = vmatprep.subr.mxu0 0.0
    %100 = vmatpush1.msra.mxu0 0.0
    %101 = vmatprep.subr.mxu0 0.0
    %102 = vmatpush1.msra.mxu0 0.0
    %103 = vmatprep.subr.mxu0 0.0
    %104 = vmatpush1.msra.mxu0 0.0
    %105 = vmatprep.subr.mxu0 0.0
    %106 = vmatpush1.msra.mxu0 0.0
    %107 = vmatprep.subr.mxu0 0.0
    %108 = vmatpush1.msra.mxu0 0.0
    %109 = vmatprep.subr.mxu0 0.0
    %110 = vmatpush1.msra.mxu0 0.0
    %111 = vmatprep.subr.mxu0 0.0
    %112 = vmatpush1.msra.mxu0 0.0
    %113 = vmatprep.subr.mxu0 0.0
    %114 = vmatpush1.msra.mxu0 0.0
    %115 = vmatprep.subr.mxu0 0.0
    %116 = vmatpush1.msra.mxu0 0.0
    %117 = vmatprep.subr.mxu0 0.0
    %118 = vmatpush1.msra.mxu0 0.0
    %119 = vmatprep.subr.mxu0 0.0
    %120 = vmatpush1.msra.mxu0 0.0
    %121 = vmatprep.subr.mxu0 0.0
    %122 = vmatpush1.msra.mxu0 0.0
    %123 = vmatprep.subr.mxu0 0.0
    %124 = vmatpush1.msra.mxu0 0.0
    %125 = vmatprep.mubr.f32.mxu0 0.0
    %126 = vmatmul.mubr.f32.gmra.mrb[0].mxu0 %v50
    %v127 = vpop.f32.mrb[0].mxu0
    %v128 = vadd.f32 %v47, %v127
    %v129 = vpop.f32.mrb[0].mxu0
    %130 = vmatprep.mubr.f32.mxu0 0.0
    %131 = vmatmul.mubr.f32.gmra.mrb[0].mxu0 %v53
    %v132 = vpop.f32.mrb[0].mxu0
    %v133 = vadd.f32 %v47, %v132
    %v134 = vpop.f32.mrb[0].mxu0
    %135 = vmatprep.mubr.f32.mxu0 0.0
    %136 = vmatmul.mubr.f32.gmra.mrb[0].mxu0 %v56
    %v137 = vpop.f32.mrb[0].mxu0
    %v138 = vadd.f32 %v47, %v137
    %v139 = vpop.f32.mrb[0].mxu0
    %140 = vmatprep.mubr.f32.mxu0 0.0
    %141 = vmatmul.mubr.f32.gmra.mrb[0].mxu0 %v59
    %v142 = vpop.f32.mrb[0].mxu0
    %v143 = vadd.f32 %v47, %v142
    %v144 = vpop.f32.mrb[0].mxu0
    %145 = vdwg.mxu0
    %vm148 = vcmask 1046528
    %v149 = vrot.slane %v23, 1
    %v150 = vrot.slane %v24, 1
    %v151 = vsel %vm148, %v149, %v150
    %v152 = vrot.slane %v25, 1
    %v153 = vsel %vm148, %v150, %v152
    %v156 = vadd.f32 %v128, %v151
    %v157 = vadd.f32 %v133, %v153
    %v159 = vrot.slane %v33, 1
    %vm163 = vcmask 1040384
    %v164 = vrot.slane %v156, 7
    %v165 = vrot.slane %v157, 7
    %v166 = vsel %vm163, %v164, %v165
    %v170 = vsel %vm163, %v159, %v164
    %vm171 = vcmask 261120
    %172 = vst.msk [vmem:[#allocation2] sm:$0xff] %vm171, %v170
    %173 = vst.msk [vmem:[#allocation2 + $0x8] sm:$0xff] %vm171, %v166
    %vm174 = vcmask 253952
    %175 = vst.msk [vmem:[#allocation2 + $0x10] sm:$0x1] %vm174, %v165
    %v176 = vadd.f32 %v138, %v151
    %v177 = vadd.f32 %v143, %v153
    %v180 = vrot.slane %v176, 7
    %v181 = vrot.slane %v177, 7
    %v182 = vsel %vm163, %v180, %v181
    %v186 = vsel %vm163, %v159, %v180
    %s187 = scalar_lea.vmem [#allocation2], 24
    %188 = vst.msk [vmem:[%s187] sm:$0xff] %vm171, %v186
    %189 = vst.msk [vmem:[%s187 + $0x8] sm:$0xff] %vm171, %v182
    %190 = vst.msk [vmem:[%s187 + $0x10] sm:$0x1] %vm174, %v181
    %v191 = vld [vmem:[%s2] sm:$0xff]
    %v192 = vld [vmem:[%s2 + $0x8] sm:$0xff]
    %v193 = vld [vmem:[%s2 + $0x10] sm:$0xff]
    %v194 = vld [vmem:[%s2 + $0x18] sm:$0xff]
    %v195 = vld [vmem:[%s3] sm:$0xff]
    %v196 = vld [vmem:[%s3 + $0x8] sm:$0xff]
    %v197 = vld [vmem:[%s3 + $0x10] sm:$0xff]
    %v198 = vld [vmem:[%s3 + $0x18] sm:$0xff]
    %v199 = vld [vmem:[#allocation2] sm:$0xff]
    %v200 = vld [vmem:[#allocation2 + $0x8] sm:$0xff]
    %v201 = vld [vmem:[#allocation2 + $0x10] sm:$0x1]
    %v202 = vlaneseq
    %v203 = vshrl.u32 %v202, 7
    %v204 = vsub.s32 3, %v203
    %v205 = vrot.slane %v25, %v204
    %v207 = vsel %vm171, %v199, 0
    %v210 = vsel %vm171, %v200, 0
    %v213 = vsel %vm171, %v201, 0
    %215 = vmatprep.subr.mxu0 0.0
    %216 = vmatpush1.msra.mxu0 %v191
    %217 = vmatprep.subr.mxu0 0.0
    %218 = vmatpush1.msra.mxu0 %v192
    %219 = vmatprep.subr.mxu0 0.0
    %220 = vmatpush1.msra.mxu0 %v193
    %221 = vmatprep.subr.mxu0 0.0
    %222 = vmatpush1.msra.mxu0 %v194
    %223 = vmatprep.subr.mxu0 0.0
    %224 = vmatpush1.msra.mxu0 0.0
    %225 = vmatprep.subr.mxu0 0.0
    %226 = vmatpush1.msra.mxu0 0.0
    %227 = vmatprep.subr.mxu0 0.0
    %228 = vmatpush1.msra.mxu0 0.0
    %229 = vmatprep.subr.mxu0 0.0
    %230 = vmatpush1.msra.mxu0 0.0
    %231 = vmatprep.subr.mxu0 0.0
    %232 = vmatpush1.msra.mxu0 0.0
    %233 = vmatprep.subr.mxu0 0.0
    %234 = vmatpush1.msra.mxu0 0.0
    %235 = vmatprep.subr.mxu0 0.0
    %236 = vmatpush1.msra.mxu0 0.0
    %237 = vmatprep.subr.mxu0 0.0
    %238 = vmatpush1.msra.mxu0 0.0
    %239 = vmatprep.subr.mxu0 0.0
    %240 = vmatpush1.msra.mxu0 0.0
    %241 = vmatprep.subr.mxu0 0.0
    %242 = vmatpush1.msra.mxu0 0.0
    %243 = vmatprep.subr.mxu0 0.0
    %244 = vmatpush1.msra.mxu0 0.0
    %245 = vmatprep.subr.mxu0 0.0
    %246 = vmatpush1.msra.mxu0 0.0
    %247 = vmatprep.subr.mxu0 0.0
    %248 = vmatpush1.msra.mxu0 0.0
    %249 = vmatprep.subr.mxu0 0.0
    %250 = vmatpush1.msra.mxu0 0.0
    %251 = vmatprep.subr.mxu0 0.0
    %252 = vmatpush1.msra.mxu0 0.0
    %253 = vmatprep.subr.mxu0 0.0
    %254 = vmatpush1.msra.mxu0 0.0
    %255 = vmatprep.subr.mxu0 0.0
    %256 = vmatpush1.msra.mxu0 0.0
    %257 = vmatprep.subr.mxu0 0.0
    %258 = vmatpush1.msra.mxu0 0.0
    %259 = vmatprep.subr.mxu0 0.0
    %260 = vmatpush1.msra.mxu0 0.0
    %261 = vmatprep.subr.mxu0 0.0
    %262 = vmatpush1.msra.mxu0 0.0
    %263 = vmatprep.subr.mxu0 0.0
    %264 = vmatpush1.msra.mxu0 0.0
    %265 = vmatprep.subr.mxu0 0.0
    %266 = vmatpush1.msra.mxu0 0.0
    %267 = vmatprep.subr.mxu0 0.0
    %268 = vmatpush1.msra.mxu0 0.0
    %269 = vmatprep.subr.mxu0 0.0
    %270 = vmatpush1.msra.mxu0 0.0
    %271 = vmatprep.subr.mxu0 0.0
    %272 = vmatpush1.msra.mxu0 0.0
    %273 = vmatprep.subr.mxu0 0.0
    %274 = vmatpush1.msra.mxu0 0.0
    %275 = vmatprep.subr.mxu0 0.0
    %276 = vmatpush1.msra.mxu0 0.0
    %277 = vmatprep.subr.mxu0 0.0
    %278 = vmatpush1.msra.mxu0 0.0
    %279 = vmatprep.mubr.f32.mxu0 0.0
    %280 = vmatmul.mubr.f32.gmra.mrb[0].mxu0 %v207
    %v281 = vpop.f32.mrb[0].mxu0
    %v282 = vadd.f32 %v205, %v281
    %v283 = vpop.f32.mrb[0].mxu0
    %284 = vmatprep.mubr.f32.mxu0 0.0
    %285 = vmatmul.mubr.f32.gmra.mrb[0].mxu0 %v210
    %v286 = vpop.f32.mrb[0].mxu0
    %v287 = vadd.f32 %v205, %v286
    %v288 = vpop.f32.mrb[0].mxu0
    %289 = vmatprep.mubr.f32.mxu0 0.0
    %290 = vmatmul.mubr.f32.gmra.mrb[0].mxu0 %v213
    %v291 = vpop.f32.mrb[0].mxu0
    %v292 = vadd.f32 %v205, %v291
    %v293 = vpop.f32.mrb[0].mxu0
    %294 = vdwg.mxu0
    %298 = vrot.lane.b32.xlu0 %v282, 120
    %v299 = vpop.permute.xlu0 %298
    %300 = vrot.lane.b32.xlu0 %v287, 120
    %v301 = vpop.permute.xlu0 %300
    %302 = vrot.lane.b32.xlu0 %v292, 120
    %v303 = vpop.permute.xlu0 %302
    %vm304 = vcmask 64512
    %v305 = vsel %vm304, %v282, 0
    %v307 = vsel %vm304, %v287, 0
    %v309 = vsel %vm304, %v292, 0
    %v311 = vsel %vm304, %v299, 0
    %v313 = vsel %vm304, %v301, 0
    %v315 = vsel %vm304, %v303, 0
    %317 = vmatprep.subr.mxu0 0.0
    %318 = vmatpush1.xpose.msra.mxu0 %v311
    %319 = vmatprep.subr.mxu0 0.0
    %320 = vmatpush1.xpose.msra.mxu0 %v313
    %321 = vmatprep.subr.mxu0 0.0
    %322 = vmatpush1.xpose.msra.mxu0 %v315
    %323 = vmatprep.subr.mxu0 0.0
    %324 = vmatpush1.xpose.msra.mxu0 0.0
    %325 = vmatprep.subr.mxu0 0.0
    %326 = vmatpush1.xpose.msra.mxu0 0.0
    %327 = vmatprep.subr.mxu0 0.0
    %328 = vmatpush1.xpose.msra.mxu0 0.0
    %329 = vmatprep.subr.mxu0 0.0
    %330 = vmatpush1.xpose.msra.mxu0 0.0
    %331 = vmatprep.subr.mxu0 0.0
    %332 = vmatpush1.xpose.msra.mxu0 0.0
    %333 = vmatprep.subr.mxu0 0.0
    %334 = vmatpush1.xpose.msra.mxu0 0.0
    %335 = vmatprep.subr.mxu0 0.0
    %336 = vmatpush1.xpose.msra.mxu0 0.0
    %337 = vmatprep.subr.mxu0 0.0
    %338 = vmatpush1.xpose.msra.mxu0 0.0
    %339 = vmatprep.subr.mxu0 0.0
    %340 = vmatpush1.xpose.msra.mxu0 0.0
    %341 = vmatprep.subr.mxu0 0.0
    %342 = vmatpush1.xpose.msra.mxu0 0.0
    %343 = vmatprep.subr.mxu0 0.0
    %344 = vmatpush1.xpose.msra.mxu0 0.0
    %345 = vmatprep.subr.mxu0 0.0
    %346 = vmatpush1.xpose.msra.mxu0 0.0
    %347 = vmatprep.subr.mxu0 0.0
    %348 = vmatpush1.xpose.msra.mxu0 0.0
    %349 = vmatprep.subr.mxu0 0.0
    %350 = vmatpush1.xpose.msra.mxu0 0.0
    %351 = vmatprep.subr.mxu0 0.0
    %352 = vmatpush1.xpose.msra.mxu0 0.0
    %353 = vmatprep.subr.mxu0 0.0
    %354 = vmatpush1.xpose.msra.mxu0 0.0
    %355 = vmatprep.subr.mxu0 0.0
    %356 = vmatpush1.xpose.msra.mxu0 0.0
    %357 = vmatprep.subr.mxu0 0.0
    %358 = vmatpush1.xpose.msra.mxu0 0.0
    %359 = vmatprep.subr.mxu0 0.0
    %360 = vmatpush1.xpose.msra.mxu0 0.0
    %361 = vmatprep.subr.mxu0 0.0
    %362 = vmatpush1.xpose.msra.mxu0 0.0
    %363 = vmatprep.subr.mxu0 0.0
    %364 = vmatpush1.xpose.msra.mxu0 0.0
    %365 = vmatprep.subr.mxu0 0.0
    %366 = vmatpush1.xpose.msra.mxu0 0.0
    %367 = vmatprep.subr.mxu0 0.0
    %368 = vmatpush1.xpose.msra.mxu0 0.0
    %369 = vmatprep.subr.mxu0 0.0
    %370 = vmatpush1.xpose.msra.mxu0 0.0
    %371 = vmatprep.subr.mxu0 0.0
    %372 = vmatpush1.xpose.msra.mxu0 0.0
    %373 = vmatprep.subr.mxu0 0.0
    %374 = vmatpush1.xpose.msra.mxu0 0.0
    %375 = vmatprep.subr.mxu0 0.0
    %376 = vmatpush1.xpose.msra.mxu0 0.0
    %377 = vmatprep.subr.mxu0 0.0
    %378 = vmatpush1.xpose.msra.mxu0 0.0
    %379 = vmatprep.subr.mxu0 0.0
    %380 = vmatpush1.xpose.msra.mxu0 0.0
    %381 = vmatprep.mubr.f32.mxu0 0.0
    %382 = vmatmul.mubr.f32.gmra.mrb[0].mxu0 %v305
    %v383 = vpop.f32.mrb[0].mxu0
    %v384 = vadd.f32 0.0, %v383
    %v385 = vpop.f32.mrb[0].mxu0
    %386 = vmatprep.mubr.f32.mxu0 0.0
    %387 = vmatmul.mubr.f32.gmra.mrb[0].mxu0 %v307
    %v388 = vpop.f32.mrb[0].mxu0
    %v389 = vadd.f32 0.0, %v388
    %v390 = vpop.f32.mrb[0].mxu0
    %391 = vmatprep.mubr.f32.mxu0 0.0
    %392 = vmatmul.mubr.f32.gmra.mrb[0].mxu0 %v309
    %v393 = vpop.f32.mrb[0].mxu0
    %v394 = vadd.f32 0.0, %v393
    %v395 = vpop.f32.mrb[0].mxu0
    %396 = vdwg.mxu0
    %v397 = vmul.f32 %v384, 0.35355338
    %v398 = vmul.f32 %v389, 0.35355338
    %v399 = vmul.f32 %v394, 0.35355338
    %vm400 = vcmask 138240
    %v401 = vsel %vm400, %v397, -inf
    %402 = vmax.xlane.f32.xlu0 %v401
    %v403 = vpop.xlane.xlu0 %402
    %v404 = vsel %vm400, %v398, -inf
    %405 = vmax.xlane.f32.xlu0 %v404
    %v406 = vpop.xlane.xlu0 %405
    %vm407 = vcmask 131072
    %v408 = vsel %vm407, %v399, -inf
    %409 = vmax.xlane.f32.xlu0 %v408
    %v410 = vpop.xlane.xlu0 %409
    %v411 = vsub.f32 %v397, %v403
    %v412 = vsub.f32 %v398, %v406
    %v413 = vsub.f32 %v399, %v410
    %v414 = vmul.f32 %v411, 1.442695
    %v415 = vpow.pop %v414
    %v416 = vmul.f32 %v412, 1.442695
    %v417 = vpow.pop %v416
    %v418 = vmul.f32 %v413, 1.442695
    %v419 = vpow.pop %v418
    %v420 = vsel %vm400, %v415, 0.0
    %421 = vadd.xlane.f32.xlu0 %v420
    %v422 = vpop.xlane.xlu0 %421
    %v423 = vsel %vm400, %v417, 0.0
    %424 = vadd.xlane.f32.xlu0 %v423
    %v425 = vpop.xlane.xlu0 %424
    %v426 = vsel %vm407, %v419, 0.0
    %427 = vadd.xlane.f32.xlu0 %v426
    %v428 = vpop.xlane.xlu0 %427
    %v429 = vrcp.pop %v422
    %v430 = vrcp.pop %v425
    %v431 = vrcp.pop %v428
    %v432 = vmul.f32 %v415, %v429
    %v433 = vmul.f32 %v417, %v430
    %v434 = vmul.f32 %v419, %v431
    %435 = vrot.lane.b32.xlu0 %v282, 112
    %v436 = vpop.permute.xlu0 %435
    %437 = vrot.lane.b32.xlu0 %v287, 112
    %v438 = vpop.permute.xlu0 %437
    %439 = vrot.lane.b32.xlu0 %v292, 112
    %v440 = vpop.permute.xlu0 %439
    %v444 = vsel %vm400, %v432, 0
    %v447 = vsel %vm400, %v433, 0
    %v450 = vsel %vm400, %v434, 0
    %v452 = vsel %vm163, %v440, 0
    %454 = vmatprep.subr.mxu0 0.0
    %455 = vmatpush1.msra.mxu0 %v436
    %456 = vmatprep.subr.mxu0 0.0
    %457 = vmatpush1.msra.mxu0 %v438
    %458 = vmatprep.subr.mxu0 0.0
    %459 = vmatpush1.msra.mxu0 %v452
    %460 = vmatprep.subr.mxu0 0.0
    %461 = vmatpush1.msra.mxu0 0.0
    %462 = vmatprep.subr.mxu0 0.0
    %463 = vmatpush1.msra.mxu0 0.0
    %464 = vmatprep.subr.mxu0 0.0
    %465 = vmatpush1.msra.mxu0 0.0
    %466 = vmatprep.subr.mxu0 0.0
    %467 = vmatpush1.msra.mxu0 0.0
    %468 = vmatprep.subr.mxu0 0.0
    %469 = vmatpush1.msra.mxu0 0.0
    %470 = vmatprep.subr.mxu0 0.0
    %471 = vmatpush1.msra.mxu0 0.0
    %472 = vmatprep.subr.mxu0 0.0
    %473 = vmatpush1.msra.mxu0 0.0
    %474 = vmatprep.subr.mxu0 0.0
    %475 = vmatpush1.msra.mxu0 0.0
    %476 = vmatprep.subr.mxu0 0.0
    %477 = vmatpush1.msra.mxu0 0.0
    %478 = vmatprep.subr.mxu0 0.0
    %479 = vmatpush1.msra.mxu0 0.0
    %480 = vmatprep.subr.mxu0 0.0
    %481 = vmatpush1.msra.mxu0 0.0
    %482 = vmatprep.subr.mxu0 0.0
    %483 = vmatpush1.msra.mxu0 0.0
    %484 = vmatprep.subr.mxu0 0.0
    %485 = vmatpush1.msra.mxu0 0.0
    %486 = vmatprep.subr.mxu0 0.0
    %487 = vmatpush1.msra.mxu0 0.0
    %488 = vmatprep.subr.mxu0 0.0
    %489 = vmatpush1.msra.mxu0 0.0
    %490 = vmatprep.subr.mxu0 0.0
    %491 = vmatpush1.msra.mxu0 0.0
    %492 = vmatprep.subr.mxu0 0.0
    %493 = vmatpush1.msra.mxu0 0.0
    %494 = vmatprep.subr.mxu0 0.0
    %495 = vmatpush1.msra.mxu0 0.0
    %496 = vmatprep.subr.mxu0 0.0
    %497 = vmatpush1.msra.mxu0 0.0
    %498 = vmatprep.subr.mxu0 0.0
    %499 = vmatpush1.msra.mxu0 0.0
    %500 = vmatprep.subr.mxu0 0.0
    %501 = vmatpush1.msra.mxu0 0.0
    %502 = vmatprep.subr.mxu0 0.0
    %503 = vmatpush1.msra.mxu0 0.0
    %504 = vmatprep.subr.mxu0 0.0
    %505 = vmatpush1.msra.mxu0 0.0
    %506 = vmatprep.subr.mxu0 0.0
    %507 = vmatpush1.msra.mxu0 0.0
    %508 = vmatprep.subr.mxu0 0.0
    %509 = vmatpush1.msra.mxu0 0.0
    %510 = vmatprep.subr.mxu0 0.0
    %511 = vmatpush1.msra.mxu0 0.0
    %512 = vmatprep.subr.mxu0 0.0
    %513 = vmatpush1.msra.mxu0 0.0
    %514 = vmatprep.subr.mxu0 0.0
    %515 = vmatpush1.msra.mxu0 0.0
    %516 = vmatprep.subr.mxu0 0.0
    %517 = vmatpush1.msra.mxu0 0.0
    %518 = vmatprep.mubr.f32.mxu0 0.0
    %519 = vmatmul.mubr.f32.gmra.mrb[0].mxu0 %v444
    %v520 = vpop.f32.mrb[0].mxu0
    %v521 = vadd.f32 0.0, %v520
    %v522 = vpop.f32.mrb[0].mxu0
    %523 = vmatprep.mubr.f32.mxu0 0.0
    %524 = vmatmul.mubr.f32.gmra.mrb[0].mxu0 %v447
    %v525 = vpop.f32.mrb[0].mxu0
    %v526 = vadd.f32 0.0, %v525
    %v527 = vpop.f32.mrb[0].mxu0
    %528 = vmatprep.mubr.f32.mxu0 0.0
    %529 = vmatmul.mubr.f32.gmra.mrb[0].mxu0 %v450
    %v530 = vpop.f32.mrb[0].mxu0
    %v531 = vadd.f32 0.0, %v530
    %v532 = vpop.f32.mrb[0].mxu0
    %533 = vdwg.mxu0
    %534 = vrot.lane.b32.xlu0 %v282, 104
    %v535 = vpop.permute.xlu0 %534
    %536 = vrot.lane.b32.xlu0 %v287, 104
    %v537 = vpop.permute.xlu0 %536
    %538 = vrot.lane.b32.xlu0 %v292, 104
    %v539 = vpop.permute.xlu0 %538
    %540 = vrot.lane.b32.xlu0 %v282, 96
    %v541 = vpop.permute.xlu0 %540
    %542 = vrot.lane.b32.xlu0 %v287, 96
    %v543 = vpop.permute.xlu0 %542
    %544 = vrot.lane.b32.xlu0 %v292, 96
    %v545 = vpop.permute.xlu0 %544
    %v546 = vsel %vm304, %v535, 0
    %v548 = vsel %vm304, %v537, 0
    %v550 = vsel %vm304, %v539, 0
    %v552 = vsel %vm304, %v541, 0
    %v554 = vsel %vm304, %v543, 0
    %v556 = vsel %vm304, %v545, 0
    %558 = vmatprep.subr.mxu0 0.0
    %559 = vmatpush1.xpose.msra.mxu0 %v552
    %560 = vmatprep.subr.mxu0 0.0
    %561 = vmatpush1.xpose.msra.mxu0 %v554
    %562 = vmatprep.subr.mxu0 0.0
    %563 = vmatpush1.xpose.msra.mxu0 %v556
    %564 = vmatprep.subr.mxu0 0.0
    %565 = vmatpush1.xpose.msra.mxu0 0.0
    %566 = vmatprep.subr.mxu0 0.0
    %567 = vmatpush1.xpose.msra.mxu0 0.0
    %568 = vmatprep.subr.mxu0 0.0
    %569 = vmatpush1.xpose.msra.mxu0 0.0
    %570 = vmatprep.subr.mxu0 0.0
    %571 = vmatpush1.xpose.msra.mxu0 0.0
    %572 = vmatprep.subr.mxu0 0.0
    %573 = vmatpush1.xpose.msra.mxu0 0.0
    %574 = vmatprep.subr.mxu0 0.0
    %575 = vmatpush1.xpose.msra.mxu0 0.0
    %576 = vmatprep.subr.mxu0 0.0
    %577 = vmatpush1.xpose.msra.mxu0 0.0
    %578 = vmatprep.subr.mxu0 0.0
    %579 = vmatpush1.xpose.msra.mxu0 0.0
    %580 = vmatprep.subr.mxu0 0.0
    %581 = vmatpush1.xpose.msra.mxu0 0.0
    %582 = vmatprep.subr.mxu0 0.0
    %583 = vmatpush1.xpose.msra.mxu0 0.0
    %584 = vmatprep.subr.mxu0 0.0
    %585 = vmatpush1.xpose.msra.mxu0 0.0
    %586 = vmatprep.subr.mxu0 0.0
    %587 = vmatpush1.xpose.msra.mxu0 0.0
    %588 = vmatprep.subr.mxu0 0.0
    %589 = vmatpush1.xpose.msra.mxu0 0.0
    %590 = vmatprep.subr.mxu0 0.0
    %591 = vmatpush1.xpose.msra.mxu0 0.0
    %592 = vmatprep.subr.mxu0 0.0
    %593 = vmatpush1.xpose.msra.mxu0 0.0
    %594 = vmatprep.subr.mxu0 0.0
    %595 = vmatpush1.xpose.msra.mxu0 0.0
    %596 = vmatprep.subr.mxu0 0.0
    %597 = vmatpush1.xpose.msra.mxu0 0.0
    %598 = vmatprep.subr.mxu0 0.0
    %599 = vmatpush1.xpose.msra.mxu0 0.0
    %600 = vmatprep.subr.mxu0 0.0
    %601 = vmatpush1.xpose.msra.mxu0 0.0
    %602 = vmatprep.subr.mxu0 0.0
    %603 = vmatpush1.xpose.msra.mxu0 0.0
    %604 = vmatprep.subr.mxu0 0.0
    %605 = vmatpush1.xpose.msra.mxu0 0.0
    %606 = vmatprep.subr.mxu0 0.0
    %607 = vmatpush1.xpose.msra.mxu0 0.0
    %608 = vmatprep.subr.mxu0 0.0
    %609 = vmatpush1.xpose.msra.mxu0 0.0
    %610 = vmatprep.subr.mxu0 0.0
    %611 = vmatpush1.xpose.msra.mxu0 0.0
    %612 = vmatprep.subr.mxu0 0.0
    %613 = vmatpush1.xpose.msra.mxu0 0.0
    %614 = vmatprep.subr.mxu0 0.0
    %615 = vmatpush1.xpose.msra.mxu0 0.0
    %616 = vmatprep.subr.mxu0 0.0
    %617 = vmatpush1.xpose.msra.mxu0 0.0
    %618 = vmatprep.subr.mxu0 0.0
    %619 = vmatpush1.xpose.msra.mxu0 0.0
    %620 = vmatprep.subr.mxu0 0.0
    %621 = vmatpush1.xpose.msra.mxu0 0.0
    %622 = vmatprep.mubr.f32.mxu0 0.0
    %623 = vmatmul.mubr.f32.gmra.mrb[0].mxu0 %v546
    %v624 = vpop.f32.mrb[0].mxu0
    %v625 = vadd.f32 0.0, %v624
    %v626 = vpop.f32.mrb[0].mxu0
    %627 = vmatprep.mubr.f32.mxu0 0.0
    %628 = vmatmul.mubr.f32.gmra.mrb[0].mxu0 %v548
    %v629 = vpop.f32.mrb[0].mxu0
    %v630 = vadd.f32 0.0, %v629
    %v631 = vpop.f32.mrb[0].mxu0
    %632 = vmatprep.mubr.f32.mxu0 0.0
    %633 = vmatmul.mubr.f32.gmra.mrb[0].mxu0 %v550
    %v634 = vpop.f32.mrb[0].mxu0
    %v635 = vadd.f32 0.0, %v634
    %v636 = vpop.f32.mrb[0].mxu0
    %637 = vdwg.mxu0
    %v638 = vmul.f32 %v625, 0.35355338
    %v639 = vmul.f32 %v630, 0.35355338
    %v640 = vmul.f32 %v635, 0.35355338
    %v641 = vsel %vm400, %v638, -inf
    %642 = vmax.xlane.f32.xlu0 %v641
    %v643 = vpop.xlane.xlu0 %642
    %v644 = vsel %vm400, %v639, -inf
    %645 = vmax.xlane.f32.xlu0 %v644
    %v646 = vpop.xlane.xlu0 %645
    %v647 = vsel %vm407, %v640, -inf
    %648 = vmax.xlane.f32.xlu0 %v647
    %v649 = vpop.xlane.xlu0 %648
    %v650 = vsub.f32 %v638, %v643
    %v651 = vsub.f32 %v639, %v646
    %v652 = vsub.f32 %v640, %v649
    %v653 = vmul.f32 %v650, 1.442695
    %v654 = vpow.pop %v653
    %v655 = vmul.f32 %v651, 1.442695
    %v656 = vpow.pop %v655
    %v657 = vmul.f32 %v652, 1.442695
    %v658 = vpow.pop %v657
    %v659 = vsel %vm400, %v654, 0.0
    %660 = vadd.xlane.f32.xlu0 %v659
    %v661 = vpop.xlane.xlu0 %660
    %v662 = vsel %vm400, %v656, 0.0
    %663 = vadd.xlane.f32.xlu0 %v662
    %v664 = vpop.xlane.xlu0 %663
    %v665 = vsel %vm407, %v658, 0.0
    %666 = vadd.xlane.f32.xlu0 %v665
    %v667 = vpop.xlane.xlu0 %666
    %v668 = vrcp.pop %v661
    %v669 = vrcp.pop %v664
    %v670 = vrcp.pop %v667
    %v671 = vmul.f32 %v654, %v668
    %v672 = vmul.f32 %v656, %v669
    %v673 = vmul.f32 %v658, %v670
    %v674 = vmax.f32 %v432, %v671
    %v675 = vmax.f32 %v433, %v672
    %v676 = vmax.f32 %v434, %v673
    %677 = vrot.lane.b32.xlu0 %v282, 88
    %v678 = vpop.permute.xlu0 %677
    %679 = vrot.lane.b32.xlu0 %v287, 88
    %v680 = vpop.permute.xlu0 %679
    %681 = vrot.lane.b32.xlu0 %v292, 88
    %v682 = vpop.permute.xlu0 %681
    %v686 = vsel %vm400, %v671, 0
    %v689 = vsel %vm400, %v672, 0
    %v692 = vsel %vm400, %v673, 0
    %v694 = vsel %vm163, %v682, 0
    %696 = vmatprep.subr.mxu0 0.0
    %697 = vmatpush1.msra.mxu0 %v678
    %698 = vmatprep.subr.mxu0 0.0
    %699 = vmatpush1.msra.mxu0 %v680
    %700 = vmatprep.subr.mxu0 0.0
    %701 = vmatpush1.msra.mxu0 %v694
    %702 = vmatprep.subr.mxu0 0.0
    %703 = vmatpush1.msra.mxu0 0.0
    %704 = vmatprep.subr.mxu0 0.0
    %705 = vmatpush1.msra.mxu0 0.0
    %706 = vmatprep.subr.mxu0 0.0
    %707 = vmatpush1.msra.mxu0 0.0
    %708 = vmatprep.subr.mxu0 0.0
    %709 = vmatpush1.msra.mxu0 0.0
    %710 = vmatprep.subr.mxu0 0.0
    %711 = vmatpush1.msra.mxu0 0.0
    %712 = vmatprep.subr.mxu0 0.0
    %713 = vmatpush1.msra.mxu0 0.0
    %714 = vmatprep.subr.mxu0 0.0
    %715 = vmatpush1.msra.mxu0 0.0
    %716 = vmatprep.subr.mxu0 0.0
    %717 = vmatpush1.msra.mxu0 0.0
    %718 = vmatprep.subr.mxu0 0.0
    %719 = vmatpush1.msra.mxu0 0.0
    %720 = vmatprep.subr.mxu0 0.0
    %721 = vmatpush1.msra.mxu0 0.0
    %722 = vmatprep.subr.mxu0 0.0
    %723 = vmatpush1.msra.mxu0 0.0
    %724 = vmatprep.subr.mxu0 0.0
    %725 = vmatpush1.msra.mxu0 0.0
    %726 = vmatprep.subr.mxu0 0.0
    %727 = vmatpush1.msra.mxu0 0.0
    %728 = vmatprep.subr.mxu0 0.0
    %729 = vmatpush1.msra.mxu0 0.0
    %730 = vmatprep.subr.mxu0 0.0
    %731 = vmatpush1.msra.mxu0 0.0
    %732 = vmatprep.subr.mxu0 0.0
    %733 = vmatpush1.msra.mxu0 0.0
    %734 = vmatprep.subr.mxu0 0.0
    %735 = vmatpush1.msra.mxu0 0.0
    %736 = vmatprep.subr.mxu0 0.0
    %737 = vmatpush1.msra.mxu0 0.0
    %738 = vmatprep.subr.mxu0 0.0
    %739 = vmatpush1.msra.mxu0 0.0
    %740 = vmatprep.subr.mxu0 0.0
    %741 = vmatpush1.msra.mxu0 0.0
    %742 = vmatprep.subr.mxu0 0.0
    %743 = vmatpush1.msra.mxu0 0.0
    %744 = vmatprep.subr.mxu0 0.0
    %745 = vmatpush1.msra.mxu0 0.0
    %746 = vmatprep.subr.mxu0 0.0
    %747 = vmatpush1.msra.mxu0 0.0
    %748 = vmatprep.subr.mxu0 0.0
    %749 = vmatpush1.msra.mxu0 0.0
    %750 = vmatprep.subr.mxu0 0.0
    %751 = vmatpush1.msra.mxu0 0.0
    %752 = vmatprep.subr.mxu0 0.0
    %753 = vmatpush1.msra.mxu0 0.0
    %754 = vmatprep.subr.mxu0 0.0
    %755 = vmatpush1.msra.mxu0 0.0
    %756 = vmatprep.subr.mxu0 0.0
    %757 = vmatpush1.msra.mxu0 0.0
    %758 = vmatprep.subr.mxu0 0.0
    %759 = vmatpush1.msra.mxu0 0.0
    %760 = vmatprep.mubr.f32.mxu0 0.0
    %761 = vmatmul.mubr.f32.gmra.mrb[0].mxu0 %v686
    %v762 = vpop.f32.mrb[0].mxu0
    %v763 = vadd.f32 0.0, %v762
    %v764 = vpop.f32.mrb[0].mxu0
    %765 = vmatprep.mubr.f32.mxu0 0.0
    %766 = vmatmul.mubr.f32.gmra.mrb[0].mxu0 %v689
    %v767 = vpop.f32.mrb[0].mxu0
    %v768 = vadd.f32 0.0, %v767
    %v769 = vpop.f32.mrb[0].mxu0
    %770 = vmatprep.mubr.f32.mxu0 0.0
    %771 = vmatmul.mubr.f32.gmra.mrb[0].mxu0 %v692
    %v772 = vpop.f32.mrb[0].mxu0
    %v773 = vadd.f32 0.0, %v772
    %v774 = vpop.f32.mrb[0].mxu0
    %775 = vdwg.mxu0
    %776 = vrot.lane.b32.xlu0 %v282, 80
    %v777 = vpop.permute.xlu0 %776
    %778 = vrot.lane.b32.xlu0 %v287, 80
    %v779 = vpop.permute.xlu0 %778
    %780 = vrot.lane.b32.xlu0 %v292, 80
    %v781 = vpop.permute.xlu0 %780
    %782 = vrot.lane.b32.xlu0 %v282, 72
    %v783 = vpop.permute.xlu0 %782
    %784 = vrot.lane.b32.xlu0 %v287, 72
    %v785 = vpop.permute.xlu0 %784
    %786 = vrot.lane.b32.xlu0 %v292, 72
    %v787 = vpop.permute.xlu0 %786
    %v788 = vsel %vm304, %v777, 0
    %v790 = vsel %vm304, %v779, 0
    %v792 = vsel %vm304, %v781, 0
    %v794 = vsel %vm304, %v783, 0
    %v796 = vsel %vm304, %v785, 0
    %v798 = vsel %vm304, %v787, 0
    %800 = vmatprep.subr.mxu0 0.0
    %801 = vmatpush1.xpose.msra.mxu0 %v794
    %802 = vmatprep.subr.mxu0 0.0
    %803 = vmatpush1.xpose.msra.mxu0 %v796
    %804 = vmatprep.subr.mxu0 0.0
    %805 = vmatpush1.xpose.msra.mxu0 %v798
    %806 = vmatprep.subr.mxu0 0.0
    %807 = vmatpush1.xpose.msra.mxu0 0.0
    %808 = vmatprep.subr.mxu0 0.0
    %809 = vmatpush1.xpose.msra.mxu0 0.0
    %810 = vmatprep.subr.mxu0 0.0
    %811 = vmatpush1.xpose.msra.mxu0 0.0
    %812 = vmatprep.subr.mxu0 0.0
    %813 = vmatpush1.xpose.msra.mxu0 0.0
    %814 = vmatprep.subr.mxu0 0.0
    %815 = vmatpush1.xpose.msra.mxu0 0.0
    %816 = vmatprep.subr.mxu0 0.0
    %817 = vmatpush1.xpose.msra.mxu0 0.0
    %818 = vmatprep.subr.mxu0 0.0
    %819 = vmatpush1.xpose.msra.mxu0 0.0
    %820 = vmatprep.subr.mxu0 0.0
    %821 = vmatpush1.xpose.msra.mxu0 0.0
    %822 = vmatprep.subr.mxu0 0.0
    %823 = vmatpush1.xpose.msra.mxu0 0.0
    %824 = vmatprep.subr.mxu0 0.0
    %825 = vmatpush1.xpose.msra.mxu0 0.0
    %826 = vmatprep.subr.mxu0 0.0
    %827 = vmatpush1.xpose.msra.mxu0 0.0
    %828 = vmatprep.subr.mxu0 0.0
    %829 = vmatpush1.xpose.msra.mxu0 0.0
    %830 = vmatprep.subr.mxu0 0.0
    %831 = vmatpush1.xpose.msra.mxu0 0.0
    %832 = vmatprep.subr.mxu0 0.0
    %833 = vmatpush1.xpose.msra.mxu0 0.0
    %834 = vmatprep.subr.mxu0 0.0
    %835 = vmatpush1.xpose.msra.mxu0 0.0
    %836 = vmatprep.subr.mxu0 0.0
    %837 = vmatpush1.xpose.msra.mxu0 0.0
    %838 = vmatprep.subr.mxu0 0.0
    %839 = vmatpush1.xpose.msra.mxu0 0.0
    %840 = vmatprep.subr.mxu0 0.0
    %841 = vmatpush1.xpose.msra.mxu0 0.0
    %842 = vmatprep.subr.mxu0 0.0
    %843 = vmatpush1.xpose.msra.mxu0 0.0
    %844 = vmatprep.subr.mxu0 0.0
    %845 = vmatpush1.xpose.msra.mxu0 0.0
    %846 = vmatprep.subr.mxu0 0.0
    %847 = vmatpush1.xpose.msra.mxu0 0.0
    %848 = vmatprep.subr.mxu0 0.0
    %849 = vmatpush1.xpose.msra.mxu0 0.0
    %850 = vmatprep.subr.mxu0 0.0
    %851 = vmatpush1.xpose.msra.mxu0 0.0
    %852 = vmatprep.subr.mxu0 0.0
    %853 = vmatpush1.xpose.msra.mxu0 0.0
    %854 = vmatprep.subr.mxu0 0.0
    %855 = vmatpush1.xpose.msra.mxu0 0.0
    %856 = vmatprep.subr.mxu0 0.0
    %857 = vmatpush1.xpose.msra.mxu0 0.0
    %858 = vmatprep.subr.mxu0 0.0
    %859 = vmatpush1.xpose.msra.mxu0 0.0
    %860 = vmatprep.subr.mxu0 0.0
    %861 = vmatpush1.xpose.msra.mxu0 0.0
    %862 = vmatprep.subr.mxu0 0.0
    %863 = vmatpush1.xpose.msra.mxu0 0.0
    %864 = vmatprep.mubr.f32.mxu0 0.0
    %865 = vmatmul.mubr.f32.gmra.mrb[0].mxu0 %v788
    %v866 = vpop.f32.mrb[0].mxu0
    %v867 = vadd.f32 0.0, %v866
    %v868 = vpop.f32.mrb[0].mxu0
    %869 = vmatprep.mubr.f32.mxu0 0.0
    %870 = vmatmul.mubr.f32.gmra.mrb[0].mxu0 %v790
    %v871 = vpop.f32.mrb[0].mxu0
    %v872 = vadd.f32 0.0, %v871
    %v873 = vpop.f32.mrb[0].mxu0
    %874 = vmatprep.mubr.f32.mxu0 0.0
    %875 = vmatmul.mubr.f32.gmra.mrb[0].mxu0 %v792
    %v876 = vpop.f32.mrb[0].mxu0
    %v877 = vadd.f32 0.0, %v876
    %v878 = vpop.f32.mrb[0].mxu0
    %879 = vdwg.mxu0
    %v880 = vmul.f32 %v867, 0.35355338
    %v881 = vmul.f32 %v872, 0.35355338
    %v882 = vmul.f32 %v877, 0.35355338
    %v883 = vsel %vm400, %v880, -inf
    %884 = vmax.xlane.f32.xlu0 %v883
    %v885 = vpop.xlane.xlu0 %884
    %v886 = vsel %vm400, %v881, -inf
    %887 = vmax.xlane.f32.xlu0 %v886
    %v888 = vpop.xlane.xlu0 %887
    %v889 = vsel %vm407, %v882, -inf
    %890 = vmax.xlane.f32.xlu0 %v889
    %v891 = vpop.xlane.xlu0 %890
    %v892 = vsub.f32 %v880, %v885
    %v893 = vsub.f32 %v881, %v888
    %v894 = vsub.f32 %v882, %v891
    %v895 = vmul.f32 %v892, 1.442695
    %v896 = vpow.pop %v895
    %v897 = vmul.f32 %v893, 1.442695
    %v898 = vpow.pop %v897
    %v899 = vmul.f32 %v894, 1.442695
    %v900 = vpow.pop %v899
    %v901 = vsel %vm400, %v896, 0.0
    %902 = vadd.xlane.f32.xlu0 %v901
    %v903 = vpop.xlane.xlu0 %902
    %v904 = vsel %vm400, %v898, 0.0
    %905 = vadd.xlane.f32.xlu0 %v904
    %v906 = vpop.xlane.xlu0 %905
    %v907 = vsel %vm407, %v900, 0.0
    %908 = vadd.xlane.f32.xlu0 %v907
    %v909 = vpop.xlane.xlu0 %908
    %v910 = vrcp.pop %v903
    %v911 = vrcp.pop %v906
    %v912 = vrcp.pop %v909
    %v913 = vmul.f32 %v896, %v910
    %v914 = vmul.f32 %v898, %v911
    %v915 = vmul.f32 %v900, %v912
    %v916 = vmax.f32 %v674, %v913
    %v917 = vmax.f32 %v675, %v914
    %v918 = vmax.f32 %v676, %v915
    %919 = vrot.lane.b32.xlu0 %v282, 64
    %v920 = vpop.permute.xlu0 %919
    %921 = vrot.lane.b32.xlu0 %v287, 64
    %v922 = vpop.permute.xlu0 %921
    %923 = vrot.lane.b32.xlu0 %v292, 64
    %v924 = vpop.permute.xlu0 %923
    %v928 = vsel %vm400, %v913, 0
    %v931 = vsel %vm400, %v914, 0
    %v934 = vsel %vm400, %v915, 0
    %v936 = vsel %vm163, %v924, 0
    %938 = vmatprep.subr.mxu0 0.0
    %939 = vmatpush1.msra.mxu0 %v920
    %940 = vmatprep.subr.mxu0 0.0
    %941 = vmatpush1.msra.mxu0 %v922
    %942 = vmatprep.subr.mxu0 0.0
    %943 = vmatpush1.msra.mxu0 %v936
    %944 = vmatprep.subr.mxu0 0.0
    %945 = vmatpush1.msra.mxu0 0.0
    %946 = vmatprep.subr.mxu0 0.0
    %947 = vmatpush1.msra.mxu0 0.0
    %948 = vmatprep.subr.mxu0 0.0
    %949 = vmatpush1.msra.mxu0 0.0
    %950 = vmatprep.subr.mxu0 0.0
    %951 = vmatpush1.msra.mxu0 0.0
    %952 = vmatprep.subr.mxu0 0.0
    %953 = vmatpush1.msra.mxu0 0.0
    %954 = vmatprep.subr.mxu0 0.0
    %955 = vmatpush1.msra.mxu0 0.0
    %956 = vmatprep.subr.mxu0 0.0
    %957 = vmatpush1.msra.mxu0 0.0
    %958 = vmatprep.subr.mxu0 0.0
    %959 = vmatpush1.msra.mxu0 0.0
    %960 = vmatprep.subr.mxu0 0.0
    %961 = vmatpush1.msra.mxu0 0.0
    %962 = vmatprep.subr.mxu0 0.0
    %963 = vmatpush1.msra.mxu0 0.0
    %964 = vmatprep.subr.mxu0 0.0
    %965 = vmatpush1.msra.mxu0 0.0
    %966 = vmatprep.subr.mxu0 0.0
    %967 = vmatpush1.msra.mxu0 0.0
    %968 = vmatprep.subr.mxu0 0.0
    %969 = vmatpush1.msra.mxu0 0.0
    %970 = vmatprep.subr.mxu0 0.0
    %971 = vmatpush1.msra.mxu0 0.0
    %972 = vmatprep.subr.mxu0 0.0
    %973 = vmatpush1.msra.mxu0 0.0
    %974 = vmatprep.subr.mxu0 0.0
    %975 = vmatpush1.msra.mxu0 0.0
    %976 = vmatprep.subr.mxu0 0.0
    %977 = vmatpush1.msra.mxu0 0.0
    %978 = vmatprep.subr.mxu0 0.0
    %979 = vmatpush1.msra.mxu0 0.0
    %980 = vmatprep.subr.mxu0 0.0
    %981 = vmatpush1.msra.mxu0 0.0
    %982 = vmatprep.subr.mxu0 0.0
    %983 = vmatpush1.msra.mxu0 0.0
    %984 = vmatprep.subr.mxu0 0.0
    %985 = vmatpush1.msra.mxu0 0.0
    %986 = vmatprep.subr.mxu0 0.0
    %987 = vmatpush1.msra.mxu0 0.0
    %988 = vmatprep.subr.mxu0 0.0
    %989 = vmatpush1.msra.mxu0 0.0
    %990 = vmatprep.subr.mxu0 0.0
    %991 = vmatpush1.msra.mxu0 0.0
    %992 = vmatprep.subr.mxu0 0.0
    %993 = vmatpush1.msra.mxu0 0.0
    %994 = vmatprep.subr.mxu0 0.0
    %995 = vmatpush1.msra.mxu0 0.0
    %996 = vmatprep.subr.mxu0 0.0
    %997 = vmatpush1.msra.mxu0 0.0
    %998 = vmatprep.subr.mxu0 0.0
    %999 = vmatpush1.msra.mxu0 0.0
    %1000 = vmatprep.subr.mxu0 0.0
    %1001 = vmatpush1.msra.mxu0 0.0
    %1002 = vmatprep.mubr.f32.mxu0 0.0
    %1003 = vmatmul.mubr.f32.gmra.mrb[0].mxu0 %v928
    %v1004 = vpop.f32.mrb[0].mxu0
    %v1005 = vadd.f32 0.0, %v1004
    %v1006 = vpop.f32.mrb[0].mxu0
    %1007 = vmatprep.mubr.f32.mxu0 0.0
    %1008 = vmatmul.mubr.f32.gmra.mrb[0].mxu0 %v931
    %v1009 = vpop.f32.mrb[0].mxu0
    %v1010 = vadd.f32 0.0, %v1009
    %v1011 = vpop.f32.mrb[0].mxu0
    %1012 = vmatprep.mubr.f32.mxu0 0.0
    %1013 = vmatmul.mubr.f32.gmra.mrb[0].mxu0 %v934
    %v1014 = vpop.f32.mrb[0].mxu0
    %v1015 = vadd.f32 0.0, %v1014
    %v1016 = vpop.f32.mrb[0].mxu0
    %1017 = vdwg.mxu0
    %1018 = vrot.lane.b32.xlu0 %v282, 56
    %v1019 = vpop.permute.xlu0 %1018
    %1020 = vrot.lane.b32.xlu0 %v287, 56
    %v1021 = vpop.permute.xlu0 %1020
    %1022 = vrot.lane.b32.xlu0 %v292, 56
    %v1023 = vpop.permute.xlu0 %1022
    %1024 = vrot.lane.b32.xlu0 %v282, 48
    %v1025 = vpop.permute.xlu0 %1024
    %1026 = vrot.lane.b32.xlu0 %v287, 48
    %v1027 = vpop.permute.xlu0 %1026
    %1028 = vrot.lane.b32.xlu0 %v292, 48
    %v1029 = vpop.permute.xlu0 %1028
    %v1030 = vsel %vm304, %v1019, 0
    %v1032 = vsel %vm304, %v1021, 0
    %v1034 = vsel %vm304, %v1023, 0
    %v1036 = vsel %vm304, %v1025, 0
    %v1038 = vsel %vm304, %v1027, 0
    %v1040 = vsel %vm304, %v1029, 0
    %1042 = vmatprep.subr.mxu0 0.0
    %1043 = vmatpush1.xpose.msra.mxu0 %v1036
    %1044 = vmatprep.subr.mxu0 0.0
    %1045 = vmatpush1.xpose.msra.mxu0 %v1038
    %1046 = vmatprep.subr.mxu0 0.0
    %1047 = vmatpush1.xpose.msra.mxu0 %v1040
    %1048 = vmatprep.subr.mxu0 0.0
    %1049 = vmatpush1.xpose.msra.mxu0 0.0
    %1050 = vmatprep.subr.mxu0 0.0
    %1051 = vmatpush1.xpose.msra.mxu0 0.0
    %1052 = vmatprep.subr.mxu0 0.0
    %1053 = vmatpush1.xpose.msra.mxu0 0.0
    %1054 = vmatprep.subr.mxu0 0.0
    %1055 = vmatpush1.xpose.msra.mxu0 0.0
    %1056 = vmatprep.subr.mxu0 0.0
    %1057 = vmatpush1.xpose.msra.mxu0 0.0
    %1058 = vmatprep.subr.mxu0 0.0
    %1059 = vmatpush1.xpose.msra.mxu0 0.0
    %1060 = vmatprep.subr.mxu0 0.0
    %1061 = vmatpush1.xpose.msra.mxu0 0.0
    %1062 = vmatprep.subr.mxu0 0.0
    %1063 = vmatpush1.xpose.msra.mxu0 0.0
    %1064 = vmatprep.subr.mxu0 0.0
    %1065 = vmatpush1.xpose.msra.mxu0 0.0
    %1066 = vmatprep.subr.mxu0 0.0
    %1067 = vmatpush1.xpose.msra.mxu0 0.0
    %1068 = vmatprep.subr.mxu0 0.0
    %1069 = vmatpush1.xpose.msra.mxu0 0.0
    %1070 = vmatprep.subr.mxu0 0.0
    %1071 = vmatpush1.xpose.msra.mxu0 0.0
    %1072 = vmatprep.subr.mxu0 0.0
    %1073 = vmatpush1.xpose.msra.mxu0 0.0
    %1074 = vmatprep.subr.mxu0 0.0
    %1075 = vmatpush1.xpose.msra.mxu0 0.0
    %1076 = vmatprep.subr.mxu0 0.0
    %1077 = vmatpush1.xpose.msra.mxu0 0.0
    %1078 = vmatprep.subr.mxu0 0.0
    %1079 = vmatpush1.xpose.msra.mxu0 0.0
    %1080 = vmatprep.subr.mxu0 0.0
    %1081 = vmatpush1.xpose.msra.mxu0 0.0
    %1082 = vmatprep.subr.mxu0 0.0
    %1083 = vmatpush1.xpose.msra.mxu0 0.0
    %1084 = vmatprep.subr.mxu0 0.0
    %1085 = vmatpush1.xpose.msra.mxu0 0.0
    %1086 = vmatprep.subr.mxu0 0.0
    %1087 = vmatpush1.xpose.msra.mxu0 0.0
    %1088 = vmatprep.subr.mxu0 0.0
    %1089 = vmatpush1.xpose.msra.mxu0 0.0
    %1090 = vmatprep.subr.mxu0 0.0
    %1091 = vmatpush1.xpose.msra.mxu0 0.0
    %1092 = vmatprep.subr.mxu0 0.0
    %1093 = vmatpush1.xpose.msra.mxu0 0.0
    %1094 = vmatprep.subr.mxu0 0.0
    %1095 = vmatpush1.xpose.msra.mxu0 0.0
    %1096 = vmatprep.subr.mxu0 0.0
    %1097 = vmatpush1.xpose.msra.mxu0 0.0
    %1098 = vmatprep.subr.mxu0 0.0
    %1099 = vmatpush1.xpose.msra.mxu0 0.0
    %1100 = vmatprep.subr.mxu0 0.0
    %1101 = vmatpush1.xpose.msra.mxu0 0.0
    %1102 = vmatprep.subr.mxu0 0.0
    %1103 = vmatpush1.xpose.msra.mxu0 0.0
    %1104 = vmatprep.subr.mxu0 0.0
    %1105 = vmatpush1.xpose.msra.mxu0 0.0
    %1106 = vmatprep.mubr.f32.mxu0 0.0
    %1107 = vmatmul.mubr.f32.gmra.mrb[0].mxu0 %v1030
    %v1108 = vpop.f32.mrb[0].mxu0
    %v1109 = vadd.f32 0.0, %v1108
    %v1110 = vpop.f32.mrb[0].mxu0
    %1111 = vmatprep.mubr.f32.mxu0 0.0
    %1112 = vmatmul.mubr.f32.gmra.mrb[0].mxu0 %v1032
    %v1113 = vpop.f32.mrb[0].mxu0
    %v1114 = vadd.f32 0.0, %v1113
    %v1115 = vpop.f32.mrb[0].mxu0
    %1116 = vmatprep.mubr.f32.mxu0 0.0
    %1117 = vmatmul.mubr.f32.gmra.mrb[0].mxu0 %v1034
    %v1118 = vpop.f32.mrb[0].mxu0
    %v1119 = vadd.f32 0.0, %v1118
    %v1120 = vpop.f32.mrb[0].mxu0
    %1121 = vdwg.mxu0
    %v1122 = vmul.f32 %v1109, 0.35355338
    %v1123 = vmul.f32 %v1114, 0.35355338
    %v1124 = vmul.f32 %v1119, 0.35355338
    %v1125 = vsel %vm400, %v1122, -inf
    %1126 = vmax.xlane.f32.xlu0 %v1125
    %v1127 = vpop.xlane.xlu0 %1126
    %v1128 = vsel %vm400, %v1123, -inf
    %1129 = vmax.xlane.f32.xlu0 %v1128
    %v1130 = vpop.xlane.xlu0 %1129
    %v1131 = vsel %vm407, %v1124, -inf
    %1132 = vmax.xlane.f32.xlu0 %v1131
    %v1133 = vpop.xlane.xlu0 %1132
    %v1134 = vsub.f32 %v1122, %v1127
    %v1135 = vsub.f32 %v1123, %v1130
    %v1136 = vsub.f32 %v1124, %v1133
    %v1137 = vmul.f32 %v1134, 1.442695
    %v1138 = vpow.pop %v1137
    %v1139 = vmul.f32 %v1135, 1.442695
    %v1140 = vpow.pop %v1139
    %v1141 = vmul.f32 %v1136, 1.442695
    %v1142 = vpow.pop %v1141
    %v1143 = vsel %vm400, %v1138, 0.0
    %1144 = vadd.xlane.f32.xlu0 %v1143
    %v1145 = vpop.xlane.xlu0 %1144
    %v1146 = vsel %vm400, %v1140, 0.0
    %1147 = vadd.xlane.f32.xlu0 %v1146
    %v1148 = vpop.xlane.xlu0 %1147
    %v1149 = vsel %vm407, %v1142, 0.0
    %1150 = vadd.xlane.f32.xlu0 %v1149
    %v1151 = vpop.xlane.xlu0 %1150
    %v1152 = vrcp.pop %v1145
    %v1153 = vrcp.pop %v1148
    %v1154 = vrcp.pop %v1151
    %v1155 = vmul.f32 %v1138, %v1152
    %v1156 = vmul.f32 %v1140, %v1153
    %v1157 = vmul.f32 %v1142, %v1154
    %v1158 = vmax.f32 %v916, %v1155
    %v1159 = vmax.f32 %v917, %v1156
    %v1160 = vmax.f32 %v918, %v1157
    %1161 = vrot.lane.b32.xlu0 %v282, 40
    %v1162 = vpop.permute.xlu0 %1161
    %1163 = vrot.lane.b32.xlu0 %v287, 40
    %v1164 = vpop.permute.xlu0 %1163
    %1165 = vrot.lane.b32.xlu0 %v292, 40
    %v1166 = vpop.permute.xlu0 %1165
    %v1170 = vsel %vm400, %v1155, 0
    %v1173 = vsel %vm400, %v1156, 0
    %v1176 = vsel %vm400, %v1157, 0
    %v1178 = vsel %vm163, %v1166, 0
    %1180 = vmatprep.subr.mxu0 0.0
    %1181 = vmatpush1.msra.mxu0 %v1162
    %1182 = vmatprep.subr.mxu0 0.0
    %1183 = vmatpush1.msra.mxu0 %v1164
    %1184 = vmatprep.subr.mxu0 0.0
    %1185 = vmatpush1.msra.mxu0 %v1178
    %1186 = vmatprep.subr.mxu0 0.0
    %1187 = vmatpush1.msra.mxu0 0.0
    %1188 = vmatprep.subr.mxu0 0.0
    %1189 = vmatpush1.msra.mxu0 0.0
    %1190 = vmatprep.subr.mxu0 0.0
    %1191 = vmatpush1.msra.mxu0 0.0
    %1192 = vmatprep.subr.mxu0 0.0
    %1193 = vmatpush1.msra.mxu0 0.0
    %1194 = vmatprep.subr.mxu0 0.0
    %1195 = vmatpush1.msra.mxu0 0.0
    %1196 = vmatprep.subr.mxu0 0.0
    %1197 = vmatpush1.msra.mxu0 0.0
    %1198 = vmatprep.subr.mxu0 0.0
    %1199 = vmatpush1.msra.mxu0 0.0
    %1200 = vmatprep.subr.mxu0 0.0
    %1201 = vmatpush1.msra.mxu0 0.0
    %1202 = vmatprep.subr.mxu0 0.0
    %1203 = vmatpush1.msra.mxu0 0.0
    %1204 = vmatprep.subr.mxu0 0.0
    %1205 = vmatpush1.msra.mxu0 0.0
    %1206 = vmatprep.subr.mxu0 0.0
    %1207 = vmatpush1.msra.mxu0 0.0
    %1208 = vmatprep.subr.mxu0 0.0
    %1209 = vmatpush1.msra.mxu0 0.0
    %1210 = vmatprep.subr.mxu0 0.0
    %1211 = vmatpush1.msra.mxu0 0.0
    %1212 = vmatprep.subr.mxu0 0.0
    %1213 = vmatpush1.msra.mxu0 0.0
    %1214 = vmatprep.subr.mxu0 0.0
    %1215 = vmatpush1.msra.mxu0 0.0
    %1216 = vmatprep.subr.mxu0 0.0
    %1217 = vmatpush1.msra.mxu0 0.0
    %1218 = vmatprep.subr.mxu0 0.0
    %1219 = vmatpush1.msra.mxu0 0.0
    %1220 = vmatprep.subr.mxu0 0.0
    %1221 = vmatpush1.msra.mxu0 0.0
    %1222 = vmatprep.subr.mxu0 0.0
    %1223 = vmatpush1.msra.mxu0 0.0
    %1224 = vmatprep.subr.mxu0 0.0
    %1225 = vmatpush1.msra.mxu0 0.0
    %1226 = vmatprep.subr.mxu0 0.0
    %1227 = vmatpush1.msra.mxu0 0.0
    %1228 = vmatprep.subr.mxu0 0.0
    %1229 = vmatpush1.msra.mxu0 0.0
    %1230 = vmatprep.subr.mxu0 0.0
    %1231 = vmatpush1.msra.mxu0 0.0
    %1232 = vmatprep.subr.mxu0 0.0
    %1233 = vmatpush1.msra.mxu0 0.0
    %1234 = vmatprep.subr.mxu0 0.0
    %1235 = vmatpush1.msra.mxu0 0.0
    %1236 = vmatprep.subr.mxu0 0.0
    %1237 = vmatpush1.msra.mxu0 0.0
    %1238 = vmatprep.subr.mxu0 0.0
    %1239 = vmatpush1.msra.mxu0 0.0
    %1240 = vmatprep.subr.mxu0 0.0
    %1241 = vmatpush1.msra.mxu0 0.0
    %1242 = vmatprep.subr.mxu0 0.0
    %1243 = vmatpush1.msra.mxu0 0.0
    %1244 = vmatprep.mubr.f32.mxu0 0.0
    %1245 = vmatmul.mubr.f32.gmra.mrb[0].mxu0 %v1170
    %v1246 = vpop.f32.mrb[0].mxu0
    %v1247 = vadd.f32 0.0, %v1246
    %v1248 = vpop.f32.mrb[0].mxu0
    %1249 = vmatprep.mubr.f32.mxu0 0.0
    %1250 = vmatmul.mubr.f32.gmra.mrb[0].mxu0 %v1173
    %v1251 = vpop.f32.mrb[0].mxu0
    %v1252 = vadd.f32 0.0, %v1251
    %v1253 = vpop.f32.mrb[0].mxu0
    %1254 = vmatprep.mubr.f32.mxu0 0.0
    %1255 = vmatmul.mubr.f32.gmra.mrb[0].mxu0 %v1176
    %v1256 = vpop.f32.mrb[0].mxu0
    %v1257 = vadd.f32 0.0, %v1256
    %v1258 = vpop.f32.mrb[0].mxu0
    %1259 = vdwg.mxu0
    %1260 = vst.msk [vmem:[%s6] sm:$0xff] %vm400, %v1158
    %1261 = vst.msk [vmem:[%s6 + $0x8] sm:$0xff] %vm400, %v1159
    %1262 = vst.msk [vmem:[%s6 + $0x10] sm:$0x1] %vm407, %v1160
    %1266 = vrot.lane.b32.xlu0 %v763, 8
    %v1267 = vpop.permute.xlu0 %1266
    %1268 = vrot.lane.b32.xlu0 %v768, 8
    %v1269 = vpop.permute.xlu0 %1268
    %1270 = vrot.lane.b32.xlu0 %v773, 8
    %v1271 = vpop.permute.xlu0 %1270
    %1278 = vrot.lane.b32.xlu0 %v1005, 16
    %v1279 = vpop.permute.xlu0 %1278
    %1280 = vrot.lane.b32.xlu0 %v1010, 16
    %v1281 = vpop.permute.xlu0 %1280
    %1282 = vrot.lane.b32.xlu0 %v1015, 16
    %v1283 = vpop.permute.xlu0 %1282
    %1290 = vrot.lane.b32.xlu0 %v1247, 24
    %v1291 = vpop.permute.xlu0 %1290
    %1292 = vrot.lane.b32.xlu0 %v1252, 24
    %v1293 = vpop.permute.xlu0 %1292
    %1294 = vrot.lane.b32.xlu0 %v1257, 24
    %v1295 = vpop.permute.xlu0 %1294
    %v1299 = vsel %vm304, %v521, %v1267
    %v1300 = vsel %vm304, %v526, %v1269
    %v1301 = vsel %vm304, %v531, %v1271
    %vm1302 = vcmask 130048
    %v1303 = vsel %vm1302, %v1299, %v1279
    %v1304 = vsel %vm1302, %v1300, %v1281
    %v1305 = vsel %vm1302, %v1301, %v1283
    %vm1306 = vcmask 195584
    %v1307 = vsel %vm1306, %v1303, %v1291
    %v1308 = vsel %vm1306, %v1304, %v1293
    %v1309 = vsel %vm1306, %v1305, %v1295
    %v1311 = vsel %vm171, %v1307, 0
    %v1314 = vsel %vm171, %v1308, 0
    %v1317 = vsel %vm171, %v1309, 0
    %1319 = vmatprep.subr.mxu0 0.0
    %1320 = vmatpush1.msra.mxu0 %v195
    %1321 = vmatprep.subr.mxu0 0.0
    %1322 = vmatpush1.msra.mxu0 %v196
    %1323 = vmatprep.subr.mxu0 0.0
    %1324 = vmatpush1.msra.mxu0 %v197
    %1325 = vmatprep.subr.mxu0 0.0
    %1326 = vmatpush1.msra.mxu0 %v198
    %1327 = vmatprep.subr.mxu0 0.0
    %1328 = vmatpush1.msra.mxu0 0.0
    %1329 = vmatprep.subr.mxu0 0.0
    %1330 = vmatpush1.msra.mxu0 0.0
    %1331 = vmatprep.subr.mxu0 0.0
    %1332 = vmatpush1.msra.mxu0 0.0
    %1333 = vmatprep.subr.mxu0 0.0
    %1334 = vmatpush1.msra.mxu0 0.0
    %1335 = vmatprep.subr.mxu0 0.0
    %1336 = vmatpush1.msra.mxu0 0.0
    %1337 = vmatprep.subr.mxu0 0.0
    %1338 = vmatpush1.msra.mxu0 0.0
    %1339 = vmatprep.subr.mxu0 0.0
    %1340 = vmatpush1.msra.mxu0 0.0
    %1341 = vmatprep.subr.mxu0 0.0
    %1342 = vmatpush1.msra.mxu0 0.0
    %1343 = vmatprep.subr.mxu0 0.0
    %1344 = vmatpush1.msra.mxu0 0.0
    %1345 = vmatprep.subr.mxu0 0.0
    %1346 = vmatpush1.msra.mxu0 0.0
    %1347 = vmatprep.subr.mxu0 0.0
    %1348 = vmatpush1.msra.mxu0 0.0
    %1349 = vmatprep.subr.mxu0 0.0
    %1350 = vmatpush1.msra.mxu0 0.0
    %1351 = vmatprep.subr.mxu0 0.0
    %1352 = vmatpush1.msra.mxu0 0.0
    %1353 = vmatprep.subr.mxu0 0.0
    %1354 = vmatpush1.msra.mxu0 0.0
    %1355 = vmatprep.subr.mxu0 0.0
    %1356 = vmatpush1.msra.mxu0 0.0
    %1357 = vmatprep.subr.mxu0 0.0
    %1358 = vmatpush1.msra.mxu0 0.0
    %1359 = vmatprep.subr.mxu0 0.0
    %1360 = vmatpush1.msra.mxu0 0.0
    %1361 = vmatprep.subr.mxu0 0.0
    %1362 = vmatpush1.msra.mxu0 0.0
    %1363 = vmatprep.subr.mxu0 0.0
    %1364 = vmatpush1.msra.mxu0 0.0
    %1365 = vmatprep.subr.mxu0 0.0
    %1366 = vmatpush1.msra.mxu0 0.0
    %1367 = vmatprep.subr.mxu0 0.0
    %1368 = vmatpush1.msra.mxu0 0.0
    %1369 = vmatprep.subr.mxu0 0.0
    %1370 = vmatpush1.msra.mxu0 0.0
    %1371 = vmatprep.subr.mxu0 0.0
    %1372 = vmatpush1.msra.mxu0 0.0
    %1373 = vmatprep.subr.mxu0 0.0
    %1374 = vmatpush1.msra.mxu0 0.0
    %1375 = vmatprep.subr.mxu0 0.0
    %1376 = vmatpush1.msra.mxu0 0.0
    %1377 = vmatprep.subr.mxu0 0.0
    %1378 = vmatpush1.msra.mxu0 0.0
    %1379 = vmatprep.subr.mxu0 0.0
    %1380 = vmatpush1.msra.mxu0 0.0
    %1381 = vmatprep.subr.mxu0 0.0
    %1382 = vmatpush1.msra.mxu0 0.0
    %1383 = vmatprep.mubr.f32.mxu0 0.0
    %1384 = vmatmul.mubr.f32.gmra.mrb[0].mxu0 %v1311
    %v1385 = vpop.f32.mrb[0].mxu0
    %v1386 = vadd.f32 0.0, %v1385
    %v1387 = vpop.f32.mrb[0].mxu0
    %1388 = vmatprep.mubr.f32.mxu0 0.0
    %1389 = vmatmul.mubr.f32.gmra.mrb[0].mxu0 %v1314
    %v1390 = vpop.f32.mrb[0].mxu0
    %v1391 = vadd.f32 0.0, %v1390
    %v1392 = vpop.f32.mrb[0].mxu0
    %1393 = vmatprep.mubr.f32.mxu0 0.0
    %1394 = vmatmul.mubr.f32.gmra.mrb[0].mxu0 %v1317
    %v1395 = vpop.f32.mrb[0].mxu0
    %v1396 = vadd.f32 0.0, %v1395
    %v1397 = vpop.f32.mrb[0].mxu0
    %1398 = vdwg.mxu0
    %v1399 = vadd.f32 %v199, %v1386
    %v1400 = vadd.f32 %v200, %v1391
    %v1401 = vadd.f32 %v201, %v1396
    %v1402 = vlaneseq
    %v1403 = vshrl.u32 %v1402, 7
    %v1404 = vsub.s32 5, %v1403
    %v1405 = vrot.slane %v25, %v1404
    %v1406 = vadd.f32 %v1399, %v1405
    %v1407 = vadd.f32 %v1400, %v1405
    %v1408 = vadd.f32 %v1401, %v1405
    %1409 = vst.msk [vmem:[#allocation2] sm:$0xff] %vm171, %v1406
    %1410 = vst.msk [vmem:[#allocation2 + $0x8] sm:$0xff] %vm171, %v1407
    %1411 = vst.msk [vmem:[#allocation2 + $0x10] sm:$0x1] %vm174, %v1408
    %v1412 = vld [vmem:[%s187] sm:$0xff]
    %v1413 = vld [vmem:[%s187 + $0x8] sm:$0xff]
    %v1414 = vld [vmem:[%s187 + $0x10] sm:$0x1]
    %v1416 = vsel %vm171, %v1412, 0
    %v1419 = vsel %vm171, %v1413, 0
    %v1422 = vsel %vm171, %v1414, 0
    %1424 = vmatprep.subr.mxu0 0.0
    %1425 = vmatpush1.msra.mxu0 %v191
    %1426 = vmatprep.subr.mxu0 0.0
    %1427 = vmatpush1.msra.mxu0 %v192
    %1428 = vmatprep.subr.mxu0 0.0
    %1429 = vmatpush1.msra.mxu0 %v193
    %1430 = vmatprep.subr.mxu0 0.0
    %1431 = vmatpush1.msra.mxu0 %v194
    %1432 = vmatprep.subr.mxu0 0.0
    %1433 = vmatpush1.msra.mxu0 0.0
    %1434 = vmatprep.subr.mxu0 0.0
    %1435 = vmatpush1.msra.mxu0 0.0
    %1436 = vmatprep.subr.mxu0 0.0
    %1437 = vmatpush1.msra.mxu0 0.0
    %1438 = vmatprep.subr.mxu0 0.0
    %1439 = vmatpush1.msra.mxu0 0.0
    %1440 = vmatprep.subr.mxu0 0.0
    %1441 = vmatpush1.msra.mxu0 0.0
    %1442 = vmatprep.subr.mxu0 0.0
    %1443 = vmatpush1.msra.mxu0 0.0
    %1444 = vmatprep.subr.mxu0 0.0
    %1445 = vmatpush1.msra.mxu0 0.0
    %1446 = vmatprep.subr.mxu0 0.0
    %1447 = vmatpush1.msra.mxu0 0.0
    %1448 = vmatprep.subr.mxu0 0.0
    %1449 = vmatpush1.msra.mxu0 0.0
    %1450 = vmatprep.subr.mxu0 0.0
    %1451 = vmatpush1.msra.mxu0 0.0
    %1452 = vmatprep.subr.mxu0 0.0
    %1453 = vmatpush1.msra.mxu0 0.0
    %1454 = vmatprep.subr.mxu0 0.0
    %1455 = vmatpush1.msra.mxu0 0.0
    %1456 = vmatprep.subr.mxu0 0.0
    %1457 = vmatpush1.msra.mxu0 0.0
    %1458 = vmatprep.subr.mxu0 0.0
    %1459 = vmatpush1.msra.mxu0 0.0
    %1460 = vmatprep.subr.mxu0 0.0
    %1461 = vmatpush1.msra.mxu0 0.0
    %1462 = vmatprep.subr.mxu0 0.0
    %1463 = vmatpush1.msra.mxu0 0.0
    %1464 = vmatprep.subr.mxu0 0.0
    %1465 = vmatpush1.msra.mxu0 0.0
    %1466 = vmatprep.subr.mxu0 0.0
    %1467 = vmatpush1.msra.mxu0 0.0
    %1468 = vmatprep.subr.mxu0 0.0
    %1469 = vmatpush1.msra.mxu0 0.0
    %1470 = vmatprep.subr.mxu0 0.0
    %1471 = vmatpush1.msra.mxu0 0.0
    %1472 = vmatprep.subr.mxu0 0.0
    %1473 = vmatpush1.msra.mxu0 0.0
    %1474 = vmatprep.subr.mxu0 0.0
    %1475 = vmatpush1.msra.mxu0 0.0
    %1476 = vmatprep.subr.mxu0 0.0
    %1477 = vmatpush1.msra.mxu0 0.0
    %1478 = vmatprep.subr.mxu0 0.0
    %1479 = vmatpush1.msra.mxu0 0.0
    %1480 = vmatprep.subr.mxu0 0.0
    %1481 = vmatpush1.msra.mxu0 0.0
    %1482 = vmatprep.subr.mxu0 0.0
    %1483 = vmatpush1.msra.mxu0 0.0
    %1484 = vmatprep.subr.mxu0 0.0
    %1485 = vmatpush1.msra.mxu0 0.0
    %1486 = vmatprep.subr.mxu0 0.0
    %1487 = vmatpush1.msra.mxu0 0.0
    %1488 = vmatprep.mubr.f32.mxu0 0.0
    %1489 = vmatmul.mubr.f32.gmra.mrb[0].mxu0 %v1416
    %v1490 = vpop.f32.mrb[0].mxu0
    %v1491 = vadd.f32 %v205, %v1490
    %v1492 = vpop.f32.mrb[0].mxu0
    %1493 = vmatprep.mubr.f32.mxu0 0.0
    %1494 = vmatmul.mubr.f32.gmra.mrb[0].mxu0 %v1419
    %v1495 = vpop.f32.mrb[0].mxu0
    %v1496 = vadd.f32 %v205, %v1495
    %v1497 = vpop.f32.mrb[0].mxu0
    %1498 = vmatprep.mubr.f32.mxu0 0.0
    %1499 = vmatmul.mubr.f32.gmra.mrb[0].mxu0 %v1422
    %v1500 = vpop.f32.mrb[0].mxu0
    %v1501 = vadd.f32 %v205, %v1500
    %v1502 = vpop.f32.mrb[0].mxu0
    %1503 = vdwg.mxu0
    %1507 = vrot.lane.b32.xlu0 %v1491, 120
    %v1508 = vpop.permute.xlu0 %1507
    %1509 = vrot.lane.b32.xlu0 %v1496, 120
    %v1510 = vpop.permute.xlu0 %1509
    %1511 = vrot.lane.b32.xlu0 %v1501, 120
    %v1512 = vpop.permute.xlu0 %1511
    %v1513 = vsel %vm304, %v1491, 0
    %v1515 = vsel %vm304, %v1496, 0
    %v1517 = vsel %vm304, %v1501, 0
    %v1519 = vsel %vm304, %v1508, 0
    %v1521 = vsel %vm304, %v1510, 0
    %v1523 = vsel %vm304, %v1512, 0
    %1525 = vmatprep.subr.mxu0 0.0
    %1526 = vmatpush1.xpose.msra.mxu0 %v1519
    %1527 = vmatprep.subr.mxu0 0.0
    %1528 = vmatpush1.xpose.msra.mxu0 %v1521
    %1529 = vmatprep.subr.mxu0 0.0
    %1530 = vmatpush1.xpose.msra.mxu0 %v1523
    %1531 = vmatprep.subr.mxu0 0.0
    %1532 = vmatpush1.xpose.msra.mxu0 0.0
    %1533 = vmatprep.subr.mxu0 0.0
    %1534 = vmatpush1.xpose.msra.mxu0 0.0
    %1535 = vmatprep.subr.mxu0 0.0
    %1536 = vmatpush1.xpose.msra.mxu0 0.0
    %1537 = vmatprep.subr.mxu0 0.0
    %1538 = vmatpush1.xpose.msra.mxu0 0.0
    %1539 = vmatprep.subr.mxu0 0.0
    %1540 = vmatpush1.xpose.msra.mxu0 0.0
    %1541 = vmatprep.subr.mxu0 0.0
    %1542 = vmatpush1.xpose.msra.mxu0 0.0
    %1543 = vmatprep.subr.mxu0 0.0
    %1544 = vmatpush1.xpose.msra.mxu0 0.0
    %1545 = vmatprep.subr.mxu0 0.0
    %1546 = vmatpush1.xpose.msra.mxu0 0.0
    %1547 = vmatprep.subr.mxu0 0.0
    %1548 = vmatpush1.xpose.msra.mxu0 0.0
    %1549 = vmatprep.subr.mxu0 0.0
    %1550 = vmatpush1.xpose.msra.mxu0 0.0
    %1551 = vmatprep.subr.mxu0 0.0
    %1552 = vmatpush1.xpose.msra.mxu0 0.0
    %1553 = vmatprep.subr.mxu0 0.0
    %1554 = vmatpush1.xpose.msra.mxu0 0.0
    %1555 = vmatprep.subr.mxu0 0.0
    %1556 = vmatpush1.xpose.msra.mxu0 0.0
    %1557 = vmatprep.subr.mxu0 0.0
    %1558 = vmatpush1.xpose.msra.mxu0 0.0
    %1559 = vmatprep.subr.mxu0 0.0
    %1560 = vmatpush1.xpose.msra.mxu0 0.0
    %1561 = vmatprep.subr.mxu0 0.0
    %1562 = vmatpush1.xpose.msra.mxu0 0.0
    %1563 = vmatprep.subr.mxu0 0.0
    %1564 = vmatpush1.xpose.msra.mxu0 0.0
    %1565 = vmatprep.subr.mxu0 0.0
    %1566 = vmatpush1.xpose.msra.mxu0 0.0
    %1567 = vmatprep.subr.mxu0 0.0
    %1568 = vmatpush1.xpose.msra.mxu0 0.0
    %1569 = vmatprep.subr.mxu0 0.0
    %1570 = vmatpush1.xpose.msra.mxu0 0.0
    %1571 = vmatprep.subr.mxu0 0.0
    %1572 = vmatpush1.xpose.msra.mxu0 0.0
    %1573 = vmatprep.subr.mxu0 0.0
    %1574 = vmatpush1.xpose.msra.mxu0 0.0
    %1575 = vmatprep.subr.mxu0 0.0
    %1576 = vmatpush1.xpose.msra.mxu0 0.0
    %1577 = vmatprep.subr.mxu0 0.0
    %1578 = vmatpush1.xpose.msra.mxu0 0.0
    %1579 = vmatprep.subr.mxu0 0.0
    %1580 = vmatpush1.xpose.msra.mxu0 0.0
    %1581 = vmatprep.subr.mxu0 0.0
    %1582 = vmatpush1.xpose.msra.mxu0 0.0
    %1583 = vmatprep.subr.mxu0 0.0
    %1584 = vmatpush1.xpose.msra.mxu0 0.0
    %1585 = vmatprep.subr.mxu0 0.0
    %1586 = vmatpush1.xpose.msra.mxu0 0.0
    %1587 = vmatprep.subr.mxu0 0.0
    %1588 = vmatpush1.xpose.msra.mxu0 0.0
    %1589 = vmatprep.mubr.f32.mxu0 0.0
    %1590 = vmatmul.mubr.f32.gmra.mrb[0].mxu0 %v1513
    %v1591 = vpop.f32.mrb[0].mxu0
    %v1592 = vadd.f32 0.0, %v1591
    %v1593 = vpop.f32.mrb[0].mxu0
    %1594 = vmatprep.mubr.f32.mxu0 0.0
    %1595 = vmatmul.mubr.f32.gmra.mrb[0].mxu0 %v1515
    %v1596 = vpop.f32.mrb[0].mxu0
    %v1597 = vadd.f32 0.0, %v1596
    %v1598 = vpop.f32.mrb[0].mxu0
    %1599 = vmatprep.mubr.f32.mxu0 0.0
    %1600 = vmatmul.mubr.f32.gmra.mrb[0].mxu0 %v1517
    %v1601 = vpop.f32.mrb[0].mxu0
    %v1602 = vadd.f32 0.0, %v1601
    %v1603 = vpop.f32.mrb[0].mxu0
    %1604 = vdwg.mxu0
    %v1605 = vmul.f32 %v1592, 0.35355338
    %v1606 = vmul.f32 %v1597, 0.35355338
    %v1607 = vmul.f32 %v1602, 0.35355338
    %v1608 = vsel %vm400, %v1605, -inf
    %1609 = vmax.xlane.f32.xlu0 %v1608
    %v1610 = vpop.xlane.xlu0 %1609
    %v1611 = vsel %vm400, %v1606, -inf
    %1612 = vmax.xlane.f32.xlu0 %v1611
    %v1613 = vpop.xlane.xlu0 %1612
    %v1614 = vsel %vm407, %v1607, -inf
    %1615 = vmax.xlane.f32.xlu0 %v1614
    %v1616 = vpop.xlane.xlu0 %1615
    %v1617 = vsub.f32 %v1605, %v1610
    %v1618 = vsub.f32 %v1606, %v1613
    %v1619 = vsub.f32 %v1607, %v1616
    %v1620 = vmul.f32 %v1617, 1.442695
    %v1621 = vpow.pop %v1620
    %v1622 = vmul.f32 %v1618, 1.442695
    %v1623 = vpow.pop %v1622
    %v1624 = vmul.f32 %v1619, 1.442695
    %v1625 = vpow.pop %v1624
    %v1626 = vsel %vm400, %v1621, 0.0
    %1627 = vadd.xlane.f32.xlu0 %v1626
    %v1628 = vpop.xlane.xlu0 %1627
    %v1629 = vsel %vm400, %v1623, 0.0
    %1630 = vadd.xlane.f32.xlu0 %v1629
    %v1631 = vpop.xlane.xlu0 %1630
    %v1632 = vsel %vm407, %v1625, 0.0
    %1633 = vadd.xlane.f32.xlu0 %v1632
    %v1634 = vpop.xlane.xlu0 %1633
    %v1635 = vrcp.pop %v1628
    %v1636 = vrcp.pop %v1631
    %v1637 = vrcp.pop %v1634
    %v1638 = vmul.f32 %v1621, %v1635
    %v1639 = vmul.f32 %v1623, %v1636
    %v1640 = vmul.f32 %v1625, %v1637
    %1641 = vrot.lane.b32.xlu0 %v1491, 112
    %v1642 = vpop.permute.xlu0 %1641
    %1643 = vrot.lane.b32.xlu0 %v1496, 112
    %v1644 = vpop.permute.xlu0 %1643
    %1645 = vrot.lane.b32.xlu0 %v1501, 112
    %v1646 = vpop.permute.xlu0 %1645
    %v1650 = vsel %vm400, %v1638, 0
    %v1653 = vsel %vm400, %v1639, 0
    %v1656 = vsel %vm400, %v1640, 0
    %v1658 = vsel %vm163, %v1646, 0
    %1660 = vmatprep.subr.mxu0 0.0
    %1661 = vmatpush1.msra.mxu0 %v1642
    %1662 = vmatprep.subr.mxu0 0.0
    %1663 = vmatpush1.msra.mxu0 %v1644
    %1664 = vmatprep.subr.mxu0 0.0
    %1665 = vmatpush1.msra.mxu0 %v1658
    %1666 = vmatprep.subr.mxu0 0.0
    %1667 = vmatpush1.msra.mxu0 0.0
    %1668 = vmatprep.subr.mxu0 0.0
    %1669 = vmatpush1.msra.mxu0 0.0
    %1670 = vmatprep.subr.mxu0 0.0
    %1671 = vmatpush1.msra.mxu0 0.0
    %1672 = vmatprep.subr.mxu0 0.0
    %1673 = vmatpush1.msra.mxu0 0.0
    %1674 = vmatprep.subr.mxu0 0.0
    %1675 = vmatpush1.msra.mxu0 0.0
    %1676 = vmatprep.subr.mxu0 0.0
    %1677 = vmatpush1.msra.mxu0 0.0
    %1678 = vmatprep.subr.mxu0 0.0
    %1679 = vmatpush1.msra.mxu0 0.0
    %1680 = vmatprep.subr.mxu0 0.0
    %1681 = vmatpush1.msra.mxu0 0.0
    %1682 = vmatprep.subr.mxu0 0.0
    %1683 = vmatpush1.msra.mxu0 0.0
    %1684 = vmatprep.subr.mxu0 0.0
    %1685 = vmatpush1.msra.mxu0 0.0
    %1686 = vmatprep.subr.mxu0 0.0
    %1687 = vmatpush1.msra.mxu0 0.0
    %1688 = vmatprep.subr.mxu0 0.0
    %1689 = vmatpush1.msra.mxu0 0.0
    %1690 = vmatprep.subr.mxu0 0.0
    %1691 = vmatpush1.msra.mxu0 0.0
    %1692 = vmatprep.subr.mxu0 0.0
    %1693 = vmatpush1.msra.mxu0 0.0
    %1694 = vmatprep.subr.mxu0 0.0
    %1695 = vmatpush1.msra.mxu0 0.0
    %1696 = vmatprep.subr.mxu0 0.0
    %1697 = vmatpush1.msra.mxu0 0.0
    %1698 = vmatprep.subr.mxu0 0.0
    %1699 = vmatpush1.msra.mxu0 0.0
    %1700 = vmatprep.subr.mxu0 0.0
    %1701 = vmatpush1.msra.mxu0 0.0
    %1702 = vmatprep.subr.mxu0 0.0
    %1703 = vmatpush1.msra.mxu0 0.0
    %1704 = vmatprep.subr.mxu0 0.0
    %1705 = vmatpush1.msra.mxu0 0.0
    %1706 = vmatprep.subr.mxu0 0.0
    %1707 = vmatpush1.msra.mxu0 0.0
    %1708 = vmatprep.subr.mxu0 0.0
    %1709 = vmatpush1.msra.mxu0 0.0
    %1710 = vmatprep.subr.mxu0 0.0
    %1711 = vmatpush1.msra.mxu0 0.0
    %1712 = vmatprep.subr.mxu0 0.0
    %1713 = vmatpush1.msra.mxu0 0.0
    %1714 = vmatprep.subr.mxu0 0.0
    %1715 = vmatpush1.msra.mxu0 0.0
    %1716 = vmatprep.subr.mxu0 0.0
    %1717 = vmatpush1.msra.mxu0 0.0
    %1718 = vmatprep.subr.mxu0 0.0
    %1719 = vmatpush1.msra.mxu0 0.0
    %1720 = vmatprep.subr.mxu0 0.0
    %1721 = vmatpush1.msra.mxu0 0.0
    %1722 = vmatprep.subr.mxu0 0.0
    %1723 = vmatpush1.msra.mxu0 0.0
    %1724 = vmatprep.mubr.f32.mxu0 0.0
    %1725 = vmatmul.mubr.f32.gmra.mrb[0].mxu0 %v1650
    %v1726 = vpop.f32.mrb[0].mxu0
    %v1727 = vadd.f32 0.0, %v1726
    %v1728 = vpop.f32.mrb[0].mxu0
    %1729 = vmatprep.mubr.f32.mxu0 0.0
    %1730 = vmatmul.mubr.f32.gmra.mrb[0].mxu0 %v1653
    %v1731 = vpop.f32.mrb[0].mxu0
    %v1732 = vadd.f32 0.0, %v1731
    %v1733 = vpop.f32.mrb[0].mxu0
    %1734 = vmatprep.mubr.f32.mxu0 0.0
    %1735 = vmatmul.mubr.f32.gmra.mrb[0].mxu0 %v1656
    %v1736 = vpop.f32.mrb[0].mxu0
    %v1737 = vadd.f32 0.0, %v1736
    %v1738 = vpop.f32.mrb[0].mxu0
    %1739 = vdwg.mxu0
    %1740 = vrot.lane.b32.xlu0 %v1491, 104
    %v1741 = vpop.permute.xlu0 %1740
    %1742 = vrot.lane.b32.xlu0 %v1496, 104
    %v1743 = vpop.permute.xlu0 %1742
    %1744 = vrot.lane.b32.xlu0 %v1501, 104
    %v1745 = vpop.permute.xlu0 %1744
    %1746 = vrot.lane.b32.xlu0 %v1491, 96
    %v1747 = vpop.permute.xlu0 %1746
    %1748 = vrot.lane.b32.xlu0 %v1496, 96
    %v1749 = vpop.permute.xlu0 %1748
    %1750 = vrot.lane.b32.xlu0 %v1501, 96
    %v1751 = vpop.permute.xlu0 %1750
    %v1752 = vsel %vm304, %v1741, 0
    %v1754 = vsel %vm304, %v1743, 0
    %v1756 = vsel %vm304, %v1745, 0
    %v1758 = vsel %vm304, %v1747, 0
    %v1760 = vsel %vm304, %v1749, 0
    %v1762 = vsel %vm304, %v1751, 0
    %1764 = vmatprep.subr.mxu0 0.0
    %1765 = vmatpush1.xpose.msra.mxu0 %v1758
    %1766 = vmatprep.subr.mxu0 0.0
    %1767 = vmatpush1.xpose.msra.mxu0 %v1760
    %1768 = vmatprep.subr.mxu0 0.0
    %1769 = vmatpush1.xpose.msra.mxu0 %v1762
    %1770 = vmatprep.subr.mxu0 0.0
    %1771 = vmatpush1.xpose.msra.mxu0 0.0
    %1772 = vmatprep.subr.mxu0 0.0
    %1773 = vmatpush1.xpose.msra.mxu0 0.0
    %1774 = vmatprep.subr.mxu0 0.0
    %1775 = vmatpush1.xpose.msra.mxu0 0.0
    %1776 = vmatprep.subr.mxu0 0.0
    %1777 = vmatpush1.xpose.msra.mxu0 0.0
    %1778 = vmatprep.subr.mxu0 0.0
    %1779 = vmatpush1.xpose.msra.mxu0 0.0
    %1780 = vmatprep.subr.mxu0 0.0
    %1781 = vmatpush1.xpose.msra.mxu0 0.0
    %1782 = vmatprep.subr.mxu0 0.0
    %1783 = vmatpush1.xpose.msra.mxu0 0.0
    %1784 = vmatprep.subr.mxu0 0.0
    %1785 = vmatpush1.xpose.msra.mxu0 0.0
    %1786 = vmatprep.subr.mxu0 0.0
    %1787 = vmatpush1.xpose.msra.mxu0 0.0
    %1788 = vmatprep.subr.mxu0 0.0
    %1789 = vmatpush1.xpose.msra.mxu0 0.0
    %1790 = vmatprep.subr.mxu0 0.0
    %1791 = vmatpush1.xpose.msra.mxu0 0.0
    %1792 = vmatprep.subr.mxu0 0.0
    %1793 = vmatpush1.xpose.msra.mxu0 0.0
    %1794 = vmatprep.subr.mxu0 0.0
    %1795 = vmatpush1.xpose.msra.mxu0 0.0
    %1796 = vmatprep.subr.mxu0 0.0
    %1797 = vmatpush1.xpose.msra.mxu0 0.0
    %1798 = vmatprep.subr.mxu0 0.0
    %1799 = vmatpush1.xpose.msra.mxu0 0.0
    %1800 = vmatprep.subr.mxu0 0.0
    %1801 = vmatpush1.xpose.msra.mxu0 0.0
    %1802 = vmatprep.subr.mxu0 0.0
    %1803 = vmatpush1.xpose.msra.mxu0 0.0
    %1804 = vmatprep.subr.mxu0 0.0
    %1805 = vmatpush1.xpose.msra.mxu0 0.0
    %1806 = vmatprep.subr.mxu0 0.0
    %1807 = vmatpush1.xpose.msra.mxu0 0.0
    %1808 = vmatprep.subr.mxu0 0.0
    %1809 = vmatpush1.xpose.msra.mxu0 0.0
    %1810 = vmatprep.subr.mxu0 0.0
    %1811 = vmatpush1.xpose.msra.mxu0 0.0
    %1812 = vmatprep.subr.mxu0 0.0
    %1813 = vmatpush1.xpose.msra.mxu0 0.0
    %1814 = vmatprep.subr.mxu0 0.0
    %1815 = vmatpush1.xpose.msra.mxu0 0.0
    %1816 = vmatprep.subr.mxu0 0.0
    %1817 = vmatpush1.xpose.msra.mxu0 0.0
    %1818 = vmatprep.subr.mxu0 0.0
    %1819 = vmatpush1.xpose.msra.mxu0 0.0
    %1820 = vmatprep.subr.mxu0 0.0
    %1821 = vmatpush1.xpose.msra.mxu0 0.0
    %1822 = vmatprep.subr.mxu0 0.0
    %1823 = vmatpush1.xpose.msra.mxu0 0.0
    %1824 = vmatprep.subr.mxu0 0.0
    %1825 = vmatpush1.xpose.msra.mxu0 0.0
    %1826 = vmatprep.subr.mxu0 0.0
    %1827 = vmatpush1.xpose.msra.mxu0 0.0
    %1828 = vmatprep.mubr.f32.mxu0 0.0
    %1829 = vmatmul.mubr.f32.gmra.mrb[0].mxu0 %v1752
    %v1830 = vpop.f32.mrb[0].mxu0
    %v1831 = vadd.f32 0.0, %v1830
    %v1832 = vpop.f32.mrb[0].mxu0
    %1833 = vmatprep.mubr.f32.mxu0 0.0
    %1834 = vmatmul.mubr.f32.gmra.mrb[0].mxu0 %v1754
    %v1835 = vpop.f32.mrb[0].mxu0
    %v1836 = vadd.f32 0.0, %v1835
    %v1837 = vpop.f32.mrb[0].mxu0
    %1838 = vmatprep.mubr.f32.mxu0 0.0
    %1839 = vmatmul.mubr.f32.gmra.mrb[0].mxu0 %v1756
    %v1840 = vpop.f32.mrb[0].mxu0
    %v1841 = vadd.f32 0.0, %v1840
    %v1842 = vpop.f32.mrb[0].mxu0
    %1843 = vdwg.mxu0
    %v1844 = vmul.f32 %v1831, 0.35355338
    %v1845 = vmul.f32 %v1836, 0.35355338
    %v1846 = vmul.f32 %v1841, 0.35355338
    %v1847 = vsel %vm400, %v1844, -inf
    %1848 = vmax.xlane.f32.xlu0 %v1847
    %v1849 = vpop.xlane.xlu0 %1848
    %v1850 = vsel %vm400, %v1845, -inf
    %1851 = vmax.xlane.f32.xlu0 %v1850
    %v1852 = vpop.xlane.xlu0 %1851
    %v1853 = vsel %vm407, %v1846, -inf
    %1854 = vmax.xlane.f32.xlu0 %v1853
    %v1855 = vpop.xlane.xlu0 %1854
    %v1856 = vsub.f32 %v1844, %v1849
    %v1857 = vsub.f32 %v1845, %v1852
    %v1858 = vsub.f32 %v1846, %v1855
    %v1859 = vmul.f32 %v1856, 1.442695
    %v1860 = vpow.pop %v1859
    %v1861 = vmul.f32 %v1857, 1.442695
    %v1862 = vpow.pop %v1861
    %v1863 = vmul.f32 %v1858, 1.442695
    %v1864 = vpow.pop %v1863
    %v1865 = vsel %vm400, %v1860, 0.0
    %1866 = vadd.xlane.f32.xlu0 %v1865
    %v1867 = vpop.xlane.xlu0 %1866
    %v1868 = vsel %vm400, %v1862, 0.0
    %1869 = vadd.xlane.f32.xlu0 %v1868
    %v1870 = vpop.xlane.xlu0 %1869
    %v1871 = vsel %vm407, %v1864, 0.0
    %1872 = vadd.xlane.f32.xlu0 %v1871
    %v1873 = vpop.xlane.xlu0 %1872
    %v1874 = vrcp.pop %v1867
    %v1875 = vrcp.pop %v1870
    %v1876 = vrcp.pop %v1873
    %v1877 = vmul.f32 %v1860, %v1874
    %v1878 = vmul.f32 %v1862, %v1875
    %v1879 = vmul.f32 %v1864, %v1876
    %v1880 = vmax.f32 %v1638, %v1877
    %v1881 = vmax.f32 %v1639, %v1878
    %v1882 = vmax.f32 %v1640, %v1879
    %1883 = vrot.lane.b32.xlu0 %v1491, 88
    %v1884 = vpop.permute.xlu0 %1883
    %1885 = vrot.lane.b32.xlu0 %v1496, 88
    %v1886 = vpop.permute.xlu0 %1885
    %1887 = vrot.lane.b32.xlu0 %v1501, 88
    %v1888 = vpop.permute.xlu0 %1887
    %v1892 = vsel %vm400, %v1877, 0
    %v1895 = vsel %vm400, %v1878, 0
    %v1898 = vsel %vm400, %v1879, 0
    %v1900 = vsel %vm163, %v1888, 0
    %1902 = vmatprep.subr.mxu0 0.0
    %1903 = vmatpush1.msra.mxu0 %v1884
    %1904 = vmatprep.subr.mxu0 0.0
    %1905 = vmatpush1.msra.mxu0 %v1886
    %1906 = vmatprep.subr.mxu0 0.0
    %1907 = vmatpush1.msra.mxu0 %v1900
    %1908 = vmatprep.subr.mxu0 0.0
    %1909 = vmatpush1.msra.mxu0 0.0
    %1910 = vmatprep.subr.mxu0 0.0
    %1911 = vmatpush1.msra.mxu0 0.0
    %1912 = vmatprep.subr.mxu0 0.0
    %1913 = vmatpush1.msra.mxu0 0.0
    %1914 = vmatprep.subr.mxu0 0.0
    %1915 = vmatpush1.msra.mxu0 0.0
    %1916 = vmatprep.subr.mxu0 0.0
    %1917 = vmatpush1.msra.mxu0 0.0
    %1918 = vmatprep.subr.mxu0 0.0
    %1919 = vmatpush1.msra.mxu0 0.0
    %1920 = vmatprep.subr.mxu0 0.0
    %1921 = vmatpush1.msra.mxu0 0.0
    %1922 = vmatprep.subr.mxu0 0.0
    %1923 = vmatpush1.msra.mxu0 0.0
    %1924 = vmatprep.subr.mxu0 0.0
    %1925 = vmatpush1.msra.mxu0 0.0
    %1926 = vmatprep.subr.mxu0 0.0
    %1927 = vmatpush1.msra.mxu0 0.0
    %1928 = vmatprep.subr.mxu0 0.0
    %1929 = vmatpush1.msra.mxu0 0.0
    %1930 = vmatprep.subr.mxu0 0.0
    %1931 = vmatpush1.msra.mxu0 0.0
    %1932 = vmatprep.subr.mxu0 0.0
    %1933 = vmatpush1.msra.mxu0 0.0
    %1934 = vmatprep.subr.mxu0 0.0
    %1935 = vmatpush1.msra.mxu0 0.0
    %1936 = vmatprep.subr.mxu0 0.0
    %1937 = vmatpush1.msra.mxu0 0.0
    %1938 = vmatprep.subr.mxu0 0.0
    %1939 = vmatpush1.msra.mxu0 0.0
    %1940 = vmatprep.subr.mxu0 0.0
    %1941 = vmatpush1.msra.mxu0 0.0
    %1942 = vmatprep.subr.mxu0 0.0
    %1943 = vmatpush1.msra.mxu0 0.0
    %1944 = vmatprep.subr.mxu0 0.0
    %1945 = vmatpush1.msra.mxu0 0.0
    %1946 = vmatprep.subr.mxu0 0.0
    %1947 = vmatpush1.msra.mxu0 0.0
    %1948 = vmatprep.subr.mxu0 0.0
    %1949 = vmatpush1.msra.mxu0 0.0
    %1950 = vmatprep.subr.mxu0 0.0
    %1951 = vmatpush1.msra.mxu0 0.0
    %1952 = vmatprep.subr.mxu0 0.0
    %1953 = vmatpush1.msra.mxu0 0.0
    %1954 = vmatprep.subr.mxu0 0.0
    %1955 = vmatpush1.msra.mxu0 0.0
    %1956 = vmatprep.subr.mxu0 0.0
    %1957 = vmatpush1.msra.mxu0 0.0
    %1958 = vmatprep.subr.mxu0 0.0
    %1959 = vmatpush1.msra.mxu0 0.0
    %1960 = vmatprep.subr.mxu0 0.0
    %1961 = vmatpush1.msra.mxu0 0.0
    %1962 = vmatprep.subr.mxu0 0.0
    %1963 = vmatpush1.msra.mxu0 0.0
    %1964 = vmatprep.subr.mxu0 0.0
    %1965 = vmatpush1.msra.mxu0 0.0
    %1966 = vmatprep.mubr.f32.mxu0 0.0
    %1967 = vmatmul.mubr.f32.gmra.mrb[0].mxu0 %v1892
    %v1968 = vpop.f32.mrb[0].mxu0
    %v1969 = vadd.f32 0.0, %v1968
    %v1970 = vpop.f32.mrb[0].mxu0
    %1971 = vmatprep.mubr.f32.mxu0 0.0
    %1972 = vmatmul.mubr.f32.gmra.mrb[0].mxu0 %v1895
    %v1973 = vpop.f32.mrb[0].mxu0
    %v1974 = vadd.f32 0.0, %v1973
    %v1975 = vpop.f32.mrb[0].mxu0
    %1976 = vmatprep.mubr.f32.mxu0 0.0
    %1977 = vmatmul.mubr.f32.gmra.mrb[0].mxu0 %v1898
    %v1978 = vpop.f32.mrb[0].mxu0
    %v1979 = vadd.f32 0.0, %v1978
    %v1980 = vpop.f32.mrb[0].mxu0
    %1981 = vdwg.mxu0
    %1982 = vrot.lane.b32.xlu0 %v1491, 80
    %v1983 = vpop.permute.xlu0 %1982
    %1984 = vrot.lane.b32.xlu0 %v1496, 80
    %v1985 = vpop.permute.xlu0 %1984
    %1986 = vrot.lane.b32.xlu0 %v1501, 80
    %v1987 = vpop.permute.xlu0 %1986
    %1988 = vrot.lane.b32.xlu0 %v1491, 72
    %v1989 = vpop.permute.xlu0 %1988
    %1990 = vrot.lane.b32.xlu0 %v1496, 72
    %v1991 = vpop.permute.xlu0 %1990
    %1992 = vrot.lane.b32.xlu0 %v1501, 72
    %v1993 = vpop.permute.xlu0 %1992
    %v1994 = vsel %vm304, %v1983, 0
    %v1996 = vsel %vm304, %v1985, 0
    %v1998 = vsel %vm304, %v1987, 0
    %v2000 = vsel %vm304, %v1989, 0
    %v2002 = vsel %vm304, %v1991, 0
    %v2004 = vsel %vm304, %v1993, 0
    %2006 = vmatprep.subr.mxu0 0.0
    %2007 = vmatpush1.xpose.msra.mxu0 %v2000
    %2008 = vmatprep.subr.mxu0 0.0
    %2009 = vmatpush1.xpose.msra.mxu0 %v2002
    %2010 = vmatprep.subr.mxu0 0.0
    %2011 = vmatpush1.xpose.msra.mxu0 %v2004
    %2012 = vmatprep.subr.mxu0 0.0
    %2013 = vmatpush1.xpose.msra.mxu0 0.0
    %2014 = vmatprep.subr.mxu0 0.0
    %2015 = vmatpush1.xpose.msra.mxu0 0.0
    %2016 = vmatprep.subr.mxu0 0.0
    %2017 = vmatpush1.xpose.msra.mxu0 0.0
    %2018 = vmatprep.subr.mxu0 0.0
    %2019 = vmatpush1.xpose.msra.mxu0 0.0
    %2020 = vmatprep.subr.mxu0 0.0
    %2021 = vmatpush1.xpose.msra.mxu0 0.0
    %2022 = vmatprep.subr.mxu0 0.0
    %2023 = vmatpush1.xpose.msra.mxu0 0.0
    %2024 = vmatprep.subr.mxu0 0.0
    %2025 = vmatpush1.xpose.msra.mxu0 0.0
    %2026 = vmatprep.subr.mxu0 0.0
    %2027 = vmatpush1.xpose.msra.mxu0 0.0
    %2028 = vmatprep.subr.mxu0 0.0
    %2029 = vmatpush1.xpose.msra.mxu0 0.0
    %2030 = vmatprep.subr.mxu0 0.0
    %2031 = vmatpush1.xpose.msra.mxu0 0.0
    %2032 = vmatprep.subr.mxu0 0.0
    %2033 = vmatpush1.xpose.msra.mxu0 0.0
    %2034 = vmatprep.subr.mxu0 0.0
    %2035 = vmatpush1.xpose.msra.mxu0 0.0
    %2036 = vmatprep.subr.mxu0 0.0
    %2037 = vmatpush1.xpose.msra.mxu0 0.0
    %2038 = vmatprep.subr.mxu0 0.0
    %2039 = vmatpush1.xpose.msra.mxu0 0.0
    %2040 = vmatprep.subr.mxu0 0.0
    %2041 = vmatpush1.xpose.msra.mxu0 0.0
    %2042 = vmatprep.subr.mxu0 0.0
    %2043 = vmatpush1.xpose.msra.mxu0 0.0
    %2044 = vmatprep.subr.mxu0 0.0
    %2045 = vmatpush1.xpose.msra.mxu0 0.0
    %2046 = vmatprep.subr.mxu0 0.0
    %2047 = vmatpush1.xpose.msra.mxu0 0.0
    %2048 = vmatprep.subr.mxu0 0.0
    %2049 = vmatpush1.xpose.msra.mxu0 0.0
    %2050 = vmatprep.subr.mxu0 0.0
    %2051 = vmatpush1.xpose.msra.mxu0 0.0
    %2052 = vmatprep.subr.mxu0 0.0
    %2053 = vmatpush1.xpose.msra.mxu0 0.0
    %2054 = vmatprep.subr.mxu0 0.0
    %2055 = vmatpush1.xpose.msra.mxu0 0.0
    %2056 = vmatprep.subr.mxu0 0.0
    %2057 = vmatpush1.xpose.msra.mxu0 0.0
    %2058 = vmatprep.subr.mxu0 0.0
    %2059 = vmatpush1.xpose.msra.mxu0 0.0
    %2060 = vmatprep.subr.mxu0 0.0
    %2061 = vmatpush1.xpose.msra.mxu0 0.0
    %2062 = vmatprep.subr.mxu0 0.0
    %2063 = vmatpush1.xpose.msra.mxu0 0.0
    %2064 = vmatprep.subr.mxu0 0.0
    %2065 = vmatpush1.xpose.msra.mxu0 0.0
    %2066 = vmatprep.subr.mxu0 0.0
    %2067 = vmatpush1.xpose.msra.mxu0 0.0
    %2068 = vmatprep.subr.mxu0 0.0
    %2069 = vmatpush1.xpose.msra.mxu0 0.0
    %2070 = vmatprep.mubr.f32.mxu0 0.0
    %2071 = vmatmul.mubr.f32.gmra.mrb[0].mxu0 %v1994
    %v2072 = vpop.f32.mrb[0].mxu0
    %v2073 = vadd.f32 0.0, %v2072
    %v2074 = vpop.f32.mrb[0].mxu0
    %2075 = vmatprep.mubr.f32.mxu0 0.0
    %2076 = vmatmul.mubr.f32.gmra.mrb[0].mxu0 %v1996
    %v2077 = vpop.f32.mrb[0].mxu0
    %v2078 = vadd.f32 0.0, %v2077
    %v2079 = vpop.f32.mrb[0].mxu0
    %2080 = vmatprep.mubr.f32.mxu0 0.0
    %2081 = vmatmul.mubr.f32.gmra.mrb[0].mxu0 %v1998
    %v2082 = vpop.f32.mrb[0].mxu0
    %v2083 = vadd.f32 0.0, %v2082
    %v2084 = vpop.f32.mrb[0].mxu0
    %2085 = vdwg.mxu0
    %v2086 = vmul.f32 %v2073, 0.35355338
    %v2087 = vmul.f32 %v2078, 0.35355338
    %v2088 = vmul.f32 %v2083, 0.35355338
    %v2089 = vsel %vm400, %v2086, -inf
    %2090 = vmax.xlane.f32.xlu0 %v2089
    %v2091 = vpop.xlane.xlu0 %2090
    %v2092 = vsel %vm400, %v2087, -inf
    %2093 = vmax.xlane.f32.xlu0 %v2092
    %v2094 = vpop.xlane.xlu0 %2093
    %v2095 = vsel %vm407, %v2088, -inf
    %2096 = vmax.xlane.f32.xlu0 %v2095
    %v2097 = vpop.xlane.xlu0 %2096
    %v2098 = vsub.f32 %v2086, %v2091
    %v2099 = vsub.f32 %v2087, %v2094
    %v2100 = vsub.f32 %v2088, %v2097
    %v2101 = vmul.f32 %v2098, 1.442695
    %v2102 = vpow.pop %v2101
    %v2103 = vmul.f32 %v2099, 1.442695
    %v2104 = vpow.pop %v2103
    %v2105 = vmul.f32 %v2100, 1.442695
    %v2106 = vpow.pop %v2105
    %v2107 = vsel %vm400, %v2102, 0.0
    %2108 = vadd.xlane.f32.xlu0 %v2107
    %v2109 = vpop.xlane.xlu0 %2108
    %v2110 = vsel %vm400, %v2104, 0.0
    %2111 = vadd.xlane.f32.xlu0 %v2110
    %v2112 = vpop.xlane.xlu0 %2111
    %v2113 = vsel %vm407, %v2106, 0.0
    %2114 = vadd.xlane.f32.xlu0 %v2113
    %v2115 = vpop.xlane.xlu0 %2114
    %v2116 = vrcp.pop %v2109
    %v2117 = vrcp.pop %v2112
    %v2118 = vrcp.pop %v2115
    %v2119 = vmul.f32 %v2102, %v2116
    %v2120 = vmul.f32 %v2104, %v2117
    %v2121 = vmul.f32 %v2106, %v2118
    %v2122 = vmax.f32 %v1880, %v2119
    %v2123 = vmax.f32 %v1881, %v2120
    %v2124 = vmax.f32 %v1882, %v2121
    %2125 = vrot.lane.b32.xlu0 %v1491, 64
    %v2126 = vpop.permute.xlu0 %2125
    %2127 = vrot.lane.b32.xlu0 %v1496, 64
    %v2128 = vpop.permute.xlu0 %2127
    %2129 = vrot.lane.b32.xlu0 %v1501, 64
    %v2130 = vpop.permute.xlu0 %2129
    %v2134 = vsel %vm400, %v2119, 0
    %v2137 = vsel %vm400, %v2120, 0
    %v2140 = vsel %vm400, %v2121, 0
    %v2142 = vsel %vm163, %v2130, 0
    %2144 = vmatprep.subr.mxu0 0.0
    %2145 = vmatpush1.msra.mxu0 %v2126
    %2146 = vmatprep.subr.mxu0 0.0
    %2147 = vmatpush1.msra.mxu0 %v2128
    %2148 = vmatprep.subr.mxu0 0.0
    %2149 = vmatpush1.msra.mxu0 %v2142
    %2150 = vmatprep.subr.mxu0 0.0
    %2151 = vmatpush1.msra.mxu0 0.0
    %2152 = vmatprep.subr.mxu0 0.0
    %2153 = vmatpush1.msra.mxu0 0.0
    %2154 = vmatprep.subr.mxu0 0.0
    %2155 = vmatpush1.msra.mxu0 0.0
    %2156 = vmatprep.subr.mxu0 0.0
    %2157 = vmatpush1.msra.mxu0 0.0
    %2158 = vmatprep.subr.mxu0 0.0
    %2159 = vmatpush1.msra.mxu0 0.0
    %2160 = vmatprep.subr.mxu0 0.0
    %2161 = vmatpush1.msra.mxu0 0.0
    %2162 = vmatprep.subr.mxu0 0.0
    %2163 = vmatpush1.msra.mxu0 0.0
    %2164 = vmatprep.subr.mxu0 0.0
    %2165 = vmatpush1.msra.mxu0 0.0
    %2166 = vmatprep.subr.mxu0 0.0
    %2167 = vmatpush1.msra.mxu0 0.0
    %2168 = vmatprep.subr.mxu0 0.0
    %2169 = vmatpush1.msra.mxu0 0.0
    %2170 = vmatprep.subr.mxu0 0.0
    %2171 = vmatpush1.msra.mxu0 0.0
    %2172 = vmatprep.subr.mxu0 0.0
    %2173 = vmatpush1.msra.mxu0 0.0
    %2174 = vmatprep.subr.mxu0 0.0
    %2175 = vmatpush1.msra.mxu0 0.0
    %2176 = vmatprep.subr.mxu0 0.0
    %2177 = vmatpush1.msra.mxu0 0.0
    %2178 = vmatprep.subr.mxu0 0.0
    %2179 = vmatpush1.msra.mxu0 0.0
    %2180 = vmatprep.subr.mxu0 0.0
    %2181 = vmatpush1.msra.mxu0 0.0
    %2182 = vmatprep.subr.mxu0 0.0
    %2183 = vmatpush1.msra.mxu0 0.0
    %2184 = vmatprep.subr.mxu0 0.0
    %2185 = vmatpush1.msra.mxu0 0.0
    %2186 = vmatprep.subr.mxu0 0.0
    %2187 = vmatpush1.msra.mxu0 0.0
    %2188 = vmatprep.subr.mxu0 0.0
    %2189 = vmatpush1.msra.mxu0 0.0
    %2190 = vmatprep.subr.mxu0 0.0
    %2191 = vmatpush1.msra.mxu0 0.0
    %2192 = vmatprep.subr.mxu0 0.0
    %2193 = vmatpush1.msra.mxu0 0.0
    %2194 = vmatprep.subr.mxu0 0.0
    %2195 = vmatpush1.msra.mxu0 0.0
    %2196 = vmatprep.subr.mxu0 0.0
    %2197 = vmatpush1.msra.mxu0 0.0
    %2198 = vmatprep.subr.mxu0 0.0
    %2199 = vmatpush1.msra.mxu0 0.0
    %2200 = vmatprep.subr.mxu0 0.0
    %2201 = vmatpush1.msra.mxu0 0.0
    %2202 = vmatprep.subr.mxu0 0.0
    %2203 = vmatpush1.msra.mxu0 0.0
    %2204 = vmatprep.subr.mxu0 0.0
    %2205 = vmatpush1.msra.mxu0 0.0
    %2206 = vmatprep.subr.mxu0 0.0
    %2207 = vmatpush1.msra.mxu0 0.0
    %2208 = vmatprep.mubr.f32.mxu0 0.0
    %2209 = vmatmul.mubr.f32.gmra.mrb[0].mxu0 %v2134
    %v2210 = vpop.f32.mrb[0].mxu0
    %v2211 = vadd.f32 0.0, %v2210
    %v2212 = vpop.f32.mrb[0].mxu0
    %2213 = vmatprep.mubr.f32.mxu0 0.0
    %2214 = vmatmul.mubr.f32.gmra.mrb[0].mxu0 %v2137
    %v2215 = vpop.f32.mrb[0].mxu0
    %v2216 = vadd.f32 0.0, %v2215
    %v2217 = vpop.f32.mrb[0].mxu0
    %2218 = vmatprep.mubr.f32.mxu0 0.0
    %2219 = vmatmul.mubr.f32.gmra.mrb[0].mxu0 %v2140
    %v2220 = vpop.f32.mrb[0].mxu0
    %v2221 = vadd.f32 0.0, %v2220
    %v2222 = vpop.f32.mrb[0].mxu0
    %2223 = vdwg.mxu0
    %2224 = vrot.lane.b32.xlu0 %v1491, 56
    %v2225 = vpop.permute.xlu0 %2224
    %2226 = vrot.lane.b32.xlu0 %v1496, 56
    %v2227 = vpop.permute.xlu0 %2226
    %2228 = vrot.lane.b32.xlu0 %v1501, 56
    %v2229 = vpop.permute.xlu0 %2228
    %2230 = vrot.lane.b32.xlu0 %v1491, 48
    %v2231 = vpop.permute.xlu0 %2230
    %2232 = vrot.lane.b32.xlu0 %v1496, 48
    %v2233 = vpop.permute.xlu0 %2232
    %2234 = vrot.lane.b32.xlu0 %v1501, 48
    %v2235 = vpop.permute.xlu0 %2234
    %v2236 = vsel %vm304, %v2225, 0
    %v2238 = vsel %vm304, %v2227, 0
    %v2240 = vsel %vm304, %v2229, 0
    %v2242 = vsel %vm304, %v2231, 0
    %v2244 = vsel %vm304, %v2233, 0
    %v2246 = vsel %vm304, %v2235, 0
    %2248 = vmatprep.subr.mxu0 0.0
    %2249 = vmatpush1.xpose.msra.mxu0 %v2242
    %2250 = vmatprep.subr.mxu0 0.0
    %2251 = vmatpush1.xpose.msra.mxu0 %v2244
    %2252 = vmatprep.subr.mxu0 0.0
    %2253 = vmatpush1.xpose.msra.mxu0 %v2246
    %2254 = vmatprep.subr.mxu0 0.0
    %2255 = vmatpush1.xpose.msra.mxu0 0.0
    %2256 = vmatprep.subr.mxu0 0.0
    %2257 = vmatpush1.xpose.msra.mxu0 0.0
    %2258 = vmatprep.subr.mxu0 0.0
    %2259 = vmatpush1.xpose.msra.mxu0 0.0
    %2260 = vmatprep.subr.mxu0 0.0
    %2261 = vmatpush1.xpose.msra.mxu0 0.0
    %2262 = vmatprep.subr.mxu0 0.0
    %2263 = vmatpush1.xpose.msra.mxu0 0.0
    %2264 = vmatprep.subr.mxu0 0.0
    %2265 = vmatpush1.xpose.msra.mxu0 0.0
    %2266 = vmatprep.subr.mxu0 0.0
    %2267 = vmatpush1.xpose.msra.mxu0 0.0
    %2268 = vmatprep.subr.mxu0 0.0
    %2269 = vmatpush1.xpose.msra.mxu0 0.0
    %2270 = vmatprep.subr.mxu0 0.0
    %2271 = vmatpush1.xpose.msra.mxu0 0.0
    %2272 = vmatprep.subr.mxu0 0.0
    %2273 = vmatpush1.xpose.msra.mxu0 0.0
    %2274 = vmatprep.subr.mxu0 0.0
    %2275 = vmatpush1.xpose.msra.mxu0 0.0
    %2276 = vmatprep.subr.mxu0 0.0
    %2277 = vmatpush1.xpose.msra.mxu0 0.0
    %2278 = vmatprep.subr.mxu0 0.0
    %2279 = vmatpush1.xpose.msra.mxu0 0.0
    %2280 = vmatprep.subr.mxu0 0.0
    %2281 = vmatpush1.xpose.msra.mxu0 0.0
    %2282 = vmatprep.subr.mxu0 0.0
    %2283 = vmatpush1.xpose.msra.mxu0 0.0
    %2284 = vmatprep.subr.mxu0 0.0
    %2285 = vmatpush1.xpose.msra.mxu0 0.0
    %2286 = vmatprep.subr.mxu0 0.0
    %2287 = vmatpush1.xpose.msra.mxu0 0.0
    %2288 = vmatprep.subr.mxu0 0.0
    %2289 = vmatpush1.xpose.msra.mxu0 0.0
    %2290 = vmatprep.subr.mxu0 0.0
    %2291 = vmatpush1.xpose.msra.mxu0 0.0
    %2292 = vmatprep.subr.mxu0 0.0
    %2293 = vmatpush1.xpose.msra.mxu0 0.0
    %2294 = vmatprep.subr.mxu0 0.0
    %2295 = vmatpush1.xpose.msra.mxu0 0.0
    %2296 = vmatprep.subr.mxu0 0.0
    %2297 = vmatpush1.xpose.msra.mxu0 0.0
    %2298 = vmatprep.subr.mxu0 0.0
    %2299 = vmatpush1.xpose.msra.mxu0 0.0
    %2300 = vmatprep.subr.mxu0 0.0
    %2301 = vmatpush1.xpose.msra.mxu0 0.0
    %2302 = vmatprep.subr.mxu0 0.0
    %2303 = vmatpush1.xpose.msra.mxu0 0.0
    %2304 = vmatprep.subr.mxu0 0.0
    %2305 = vmatpush1.xpose.msra.mxu0 0.0
    %2306 = vmatprep.subr.mxu0 0.0
    %2307 = vmatpush1.xpose.msra.mxu0 0.0
    %2308 = vmatprep.subr.mxu0 0.0
    %2309 = vmatpush1.xpose.msra.mxu0 0.0
    %2310 = vmatprep.subr.mxu0 0.0
    %2311 = vmatpush1.xpose.msra.mxu0 0.0
    %2312 = vmatprep.mubr.f32.mxu0 0.0
    %2313 = vmatmul.mubr.f32.gmra.mrb[0].mxu0 %v2236
    %v2314 = vpop.f32.mrb[0].mxu0
    %v2315 = vadd.f32 0.0, %v2314
    %v2316 = vpop.f32.mrb[0].mxu0
    %2317 = vmatprep.mubr.f32.mxu0 0.0
    %2318 = vmatmul.mubr.f32.gmra.mrb[0].mxu0 %v2238
    %v2319 = vpop.f32.mrb[0].mxu0
    %v2320 = vadd.f32 0.0, %v2319
    %v2321 = vpop.f32.mrb[0].mxu0
    %2322 = vmatprep.mubr.f32.mxu0 0.0
    %2323 = vmatmul.mubr.f32.gmra.mrb[0].mxu0 %v2240
    %v2324 = vpop.f32.mrb[0].mxu0
    %v2325 = vadd.f32 0.0, %v2324
    %v2326 = vpop.f32.mrb[0].mxu0
    %2327 = vdwg.mxu0
    %v2328 = vmul.f32 %v2315, 0.35355338
    %v2329 = vmul.f32 %v2320, 0.35355338
    %v2330 = vmul.f32 %v2325, 0.35355338
    %v2331 = vsel %vm400, %v2328, -inf
    %2332 = vmax.xlane.f32.xlu0 %v2331
    %v2333 = vpop.xlane.xlu0 %2332
    %v2334 = vsel %vm400, %v2329, -inf
    %2335 = vmax.xlane.f32.xlu0 %v2334
    %v2336 = vpop.xlane.xlu0 %2335
    %v2337 = vsel %vm407, %v2330, -inf
    %2338 = vmax.xlane.f32.xlu0 %v2337
    %v2339 = vpop.xlane.xlu0 %2338
    %v2340 = vsub.f32 %v2328, %v2333
    %v2341 = vsub.f32 %v2329, %v2336
    %v2342 = vsub.f32 %v2330, %v2339
    %v2343 = vmul.f32 %v2340, 1.442695
    %v2344 = vpow.pop %v2343
    %v2345 = vmul.f32 %v2341, 1.442695
    %v2346 = vpow.pop %v2345
    %v2347 = vmul.f32 %v2342, 1.442695
    %v2348 = vpow.pop %v2347
    %v2349 = vsel %vm400, %v2344, 0.0
    %2350 = vadd.xlane.f32.xlu0 %v2349
    %v2351 = vpop.xlane.xlu0 %2350
    %v2352 = vsel %vm400, %v2346, 0.0
    %2353 = vadd.xlane.f32.xlu0 %v2352
    %v2354 = vpop.xlane.xlu0 %2353
    %v2355 = vsel %vm407, %v2348, 0.0
    %2356 = vadd.xlane.f32.xlu0 %v2355
    %v2357 = vpop.xlane.xlu0 %2356
    %v2358 = vrcp.pop %v2351
    %v2359 = vrcp.pop %v2354
    %v2360 = vrcp.pop %v2357
    %v2361 = vmul.f32 %v2344, %v2358
    %v2362 = vmul.f32 %v2346, %v2359
    %v2363 = vmul.f32 %v2348, %v2360
    %v2364 = vmax.f32 %v2122, %v2361
    %v2365 = vmax.f32 %v2123, %v2362
    %v2366 = vmax.f32 %v2124, %v2363
    %2367 = vrot.lane.b32.xlu0 %v1491, 40
    %v2368 = vpop.permute.xlu0 %2367
    %2369 = vrot.lane.b32.xlu0 %v1496, 40
    %v2370 = vpop.permute.xlu0 %2369
    %2371 = vrot.lane.b32.xlu0 %v1501, 40
    %v2372 = vpop.permute.xlu0 %2371
    %v2376 = vsel %vm400, %v2361, 0
    %v2379 = vsel %vm400, %v2362, 0
    %v2382 = vsel %vm400, %v2363, 0
    %v2384 = vsel %vm163, %v2372, 0
    %2386 = vmatprep.subr.mxu0 0.0
    %2387 = vmatpush1.msra.mxu0 %v2368
    %2388 = vmatprep.subr.mxu0 0.0
    %2389 = vmatpush1.msra.mxu0 %v2370
    %2390 = vmatprep.subr.mxu0 0.0
    %2391 = vmatpush1.msra.mxu0 %v2384
    %2392 = vmatprep.subr.mxu0 0.0
    %2393 = vmatpush1.msra.mxu0 0.0
    %2394 = vmatprep.subr.mxu0 0.0
    %2395 = vmatpush1.msra.mxu0 0.0
    %2396 = vmatprep.subr.mxu0 0.0
    %2397 = vmatpush1.msra.mxu0 0.0
    %2398 = vmatprep.subr.mxu0 0.0
    %2399 = vmatpush1.msra.mxu0 0.0
    %2400 = vmatprep.subr.mxu0 0.0
    %2401 = vmatpush1.msra.mxu0 0.0
    %2402 = vmatprep.subr.mxu0 0.0
    %2403 = vmatpush1.msra.mxu0 0.0
    %2404 = vmatprep.subr.mxu0 0.0
    %2405 = vmatpush1.msra.mxu0 0.0
    %2406 = vmatprep.subr.mxu0 0.0
    %2407 = vmatpush1.msra.mxu0 0.0
    %2408 = vmatprep.subr.mxu0 0.0
    %2409 = vmatpush1.msra.mxu0 0.0
    %2410 = vmatprep.subr.mxu0 0.0
    %2411 = vmatpush1.msra.mxu0 0.0
    %2412 = vmatprep.subr.mxu0 0.0
    %2413 = vmatpush1.msra.mxu0 0.0
    %2414 = vmatprep.subr.mxu0 0.0
    %2415 = vmatpush1.msra.mxu0 0.0
    %2416 = vmatprep.subr.mxu0 0.0
    %2417 = vmatpush1.msra.mxu0 0.0
    %2418 = vmatprep.subr.mxu0 0.0
    %2419 = vmatpush1.msra.mxu0 0.0
    %2420 = vmatprep.subr.mxu0 0.0
    %2421 = vmatpush1.msra.mxu0 0.0
    %2422 = vmatprep.subr.mxu0 0.0
    %2423 = vmatpush1.msra.mxu0 0.0
    %2424 = vmatprep.subr.mxu0 0.0
    %2425 = vmatpush1.msra.mxu0 0.0
    %2426 = vmatprep.subr.mxu0 0.0
    %2427 = vmatpush1.msra.mxu0 0.0
    %2428 = vmatprep.subr.mxu0 0.0
    %2429 = vmatpush1.msra.mxu0 0.0
    %2430 = vmatprep.subr.mxu0 0.0
    %2431 = vmatpush1.msra.mxu0 0.0
    %2432 = vmatprep.subr.mxu0 0.0
    %2433 = vmatpush1.msra.mxu0 0.0
    %2434 = vmatprep.subr.mxu0 0.0
    %2435 = vmatpush1.msra.mxu0 0.0
    %2436 = vmatprep.subr.mxu0 0.0
    %2437 = vmatpush1.msra.mxu0 0.0
    %2438 = vmatprep.subr.mxu0 0.0
    %2439 = vmatpush1.msra.mxu0 0.0
    %2440 = vmatprep.subr.mxu0 0.0
    %2441 = vmatpush1.msra.mxu0 0.0
    %2442 = vmatprep.subr.mxu0 0.0
    %2443 = vmatpush1.msra.mxu0 0.0
    %2444 = vmatprep.subr.mxu0 0.0
    %2445 = vmatpush1.msra.mxu0 0.0
    %2446 = vmatprep.subr.mxu0 0.0
    %2447 = vmatpush1.msra.mxu0 0.0
    %2448 = vmatprep.subr.mxu0 0.0
    %2449 = vmatpush1.msra.mxu0 0.0
    %2450 = vmatprep.mubr.f32.mxu0 0.0
    %2451 = vmatmul.mubr.f32.gmra.mrb[0].mxu0 %v2376
    %v2452 = vpop.f32.mrb[0].mxu0
    %v2453 = vadd.f32 0.0, %v2452
    %v2454 = vpop.f32.mrb[0].mxu0
    %2455 = vmatprep.mubr.f32.mxu0 0.0
    %2456 = vmatmul.mubr.f32.gmra.mrb[0].mxu0 %v2379
    %v2457 = vpop.f32.mrb[0].mxu0
    %v2458 = vadd.f32 0.0, %v2457
    %v2459 = vpop.f32.mrb[0].mxu0
    %2460 = vmatprep.mubr.f32.mxu0 0.0
    %2461 = vmatmul.mubr.f32.gmra.mrb[0].mxu0 %v2382
    %v2462 = vpop.f32.mrb[0].mxu0
    %v2463 = vadd.f32 0.0, %v2462
    %v2464 = vpop.f32.mrb[0].mxu0
    %2465 = vdwg.mxu0
    %s2466 = scalar_lea.vmem %s6, 24
    %2467 = vst.msk [vmem:[%s2466] sm:$0xff] %vm400, %v2364
    %2468 = vst.msk [vmem:[%s2466 + $0x8] sm:$0xff] %vm400, %v2365
    %2469 = vst.msk [vmem:[%s2466 + $0x10] sm:$0x1] %vm407, %v2366
    %2473 = vrot.lane.b32.xlu0 %v1969, 8
    %v2474 = vpop.permute.xlu0 %2473
    %2475 = vrot.lane.b32.xlu0 %v1974, 8
    %v2476 = vpop.permute.xlu0 %2475
    %2477 = vrot.lane.b32.xlu0 %v1979, 8
    %v2478 = vpop.permute.xlu0 %2477
    %2485 = vrot.lane.b32.xlu0 %v2211, 16
    %v2486 = vpop.permute.xlu0 %2485
    %2487 = vrot.lane.b32.xlu0 %v2216, 16
    %v2488 = vpop.permute.xlu0 %2487
    %2489 = vrot.lane.b32.xlu0 %v2221, 16
    %v2490 = vpop.permute.xlu0 %2489
    %2497 = vrot.lane.b32.xlu0 %v2453, 24
    %v2498 = vpop.permute.xlu0 %2497
    %2499 = vrot.lane.b32.xlu0 %v2458, 24
    %v2500 = vpop.permute.xlu0 %2499
    %2501 = vrot.lane.b32.xlu0 %v2463, 24
    %v2502 = vpop.permute.xlu0 %2501
    %v2506 = vsel %vm304, %v1727, %v2474
    %v2507 = vsel %vm304, %v1732, %v2476
    %v2508 = vsel %vm304, %v1737, %v2478
    %v2509 = vsel %vm1302, %v2506, %v2486
    %v2510 = vsel %vm1302, %v2507, %v2488
    %v2511 = vsel %vm1302, %v2508, %v2490
    %v2512 = vsel %vm1306, %v2509, %v2498
    %v2513 = vsel %vm1306, %v2510, %v2500
    %v2514 = vsel %vm1306, %v2511, %v2502
    %v2516 = vsel %vm171, %v2512, 0
    %v2519 = vsel %vm171, %v2513, 0
    %v2522 = vsel %vm171, %v2514, 0
    %2524 = vmatprep.subr.mxu0 0.0
    %2525 = vmatpush1.msra.mxu0 %v195
    %2526 = vmatprep.subr.mxu0 0.0
    %2527 = vmatpush1.msra.mxu0 %v196
    %2528 = vmatprep.subr.mxu0 0.0
    %2529 = vmatpush1.msra.mxu0 %v197
    %2530 = vmatprep.subr.mxu0 0.0
    %2531 = vmatpush1.msra.mxu0 %v198
    %2532 = vmatprep.subr.mxu0 0.0
    %2533 = vmatpush1.msra.mxu0 0.0
    %2534 = vmatprep.subr.mxu0 0.0
    %2535 = vmatpush1.msra.mxu0 0.0
    %2536 = vmatprep.subr.mxu0 0.0
    %2537 = vmatpush1.msra.mxu0 0.0
    %2538 = vmatprep.subr.mxu0 0.0
    %2539 = vmatpush1.msra.mxu0 0.0
    %2540 = vmatprep.subr.mxu0 0.0
    %2541 = vmatpush1.msra.mxu0 0.0
    %2542 = vmatprep.subr.mxu0 0.0
    %2543 = vmatpush1.msra.mxu0 0.0
    %2544 = vmatprep.subr.mxu0 0.0
    %2545 = vmatpush1.msra.mxu0 0.0
    %2546 = vmatprep.subr.mxu0 0.0
    %2547 = vmatpush1.msra.mxu0 0.0
    %2548 = vmatprep.subr.mxu0 0.0
    %2549 = vmatpush1.msra.mxu0 0.0
    %2550 = vmatprep.subr.mxu0 0.0
    %2551 = vmatpush1.msra.mxu0 0.0
    %2552 = vmatprep.subr.mxu0 0.0
    %2553 = vmatpush1.msra.mxu0 0.0
    %2554 = vmatprep.subr.mxu0 0.0
    %2555 = vmatpush1.msra.mxu0 0.0
    %2556 = vmatprep.subr.mxu0 0.0
    %2557 = vmatpush1.msra.mxu0 0.0
    %2558 = vmatprep.subr.mxu0 0.0
    %2559 = vmatpush1.msra.mxu0 0.0
    %2560 = vmatprep.subr.mxu0 0.0
    %2561 = vmatpush1.msra.mxu0 0.0
    %2562 = vmatprep.subr.mxu0 0.0
    %2563 = vmatpush1.msra.mxu0 0.0
    %2564 = vmatprep.subr.mxu0 0.0
    %2565 = vmatpush1.msra.mxu0 0.0
    %2566 = vmatprep.subr.mxu0 0.0
    %2567 = vmatpush1.msra.mxu0 0.0
    %2568 = vmatprep.subr.mxu0 0.0
    %2569 = vmatpush1.msra.mxu0 0.0
    %2570 = vmatprep.subr.mxu0 0.0
    %2571 = vmatpush1.msra.mxu0 0.0
    %2572 = vmatprep.subr.mxu0 0.0
    %2573 = vmatpush1.msra.mxu0 0.0
    %2574 = vmatprep.subr.mxu0 0.0
    %2575 = vmatpush1.msra.mxu0 0.0
    %2576 = vmatprep.subr.mxu0 0.0
    %2577 = vmatpush1.msra.mxu0 0.0
    %2578 = vmatprep.subr.mxu0 0.0
    %2579 = vmatpush1.msra.mxu0 0.0
    %2580 = vmatprep.subr.mxu0 0.0
    %2581 = vmatpush1.msra.mxu0 0.0
    %2582 = vmatprep.subr.mxu0 0.0
    %2583 = vmatpush1.msra.mxu0 0.0
    %2584 = vmatprep.subr.mxu0 0.0
    %2585 = vmatpush1.msra.mxu0 0.0
    %2586 = vmatprep.subr.mxu0 0.0
    %2587 = vmatpush1.msra.mxu0 0.0
    %2588 = vmatprep.mubr.f32.mxu0 0.0
    %2589 = vmatmul.mubr.f32.gmra.mrb[0].mxu0 %v2516
    %v2590 = vpop.f32.mrb[0].mxu0
    %v2591 = vadd.f32 0.0, %v2590
    %v2592 = vpop.f32.mrb[0].mxu0
    %2593 = vmatprep.mubr.f32.mxu0 0.0
    %2594 = vmatmul.mubr.f32.gmra.mrb[0].mxu0 %v2519
    %v2595 = vpop.f32.mrb[0].mxu0
    %v2596 = vadd.f32 0.0, %v2595
    %v2597 = vpop.f32.mrb[0].mxu0
    %2598 = vmatprep.mubr.f32.mxu0 0.0
    %2599 = vmatmul.mubr.f32.gmra.mrb[0].mxu0 %v2522
    %v2600 = vpop.f32.mrb[0].mxu0
    %v2601 = vadd.f32 0.0, %v2600
    %v2602 = vpop.f32.mrb[0].mxu0
    %2603 = vdwg.mxu0
    %v2604 = vadd.f32 %v1412, %v2591
    %v2605 = vadd.f32 %v1413, %v2596
    %v2606 = vadd.f32 %v1414, %v2601
    %v2607 = vadd.f32 %v2604, %v1405
    %v2608 = vadd.f32 %v2605, %v1405
    %v2609 = vadd.f32 %v2606, %v1405
    %2610 = vst.msk [vmem:[%s187] sm:$0xff] %vm171, %v2607
    %2611 = vst.msk [vmem:[%s187 + $0x8] sm:$0xff] %vm171, %v2608
    %2612 = vst.msk [vmem:[%s187 + $0x10] sm:$0x1] %vm174, %v2609
    %s2613 = scalar_lea.vmem %s2, 32
    %v2614 = vld [vmem:[%s2613] sm:$0xff]
    %v2615 = vld [vmem:[%s2613 + $0x8] sm:$0xff]
    %v2616 = vld [vmem:[%s2613 + $0x10] sm:$0xff]
    %v2617 = vld [vmem:[%s2613 + $0x18] sm:$0xff]
    %s2618 = scalar_lea.vmem %s3, 32
    %v2619 = vld [vmem:[%s2618] sm:$0xff]
    %v2620 = vld [vmem:[%s2618 + $0x8] sm:$0xff]
    %v2621 = vld [vmem:[%s2618 + $0x10] sm:$0xff]
    %v2622 = vld [vmem:[%s2618 + $0x18] sm:$0xff]
    %v2623 = vld [vmem:[#allocation2] sm:$0xff]
    %v2624 = vld [vmem:[#allocation2 + $0x8] sm:$0xff]
    %v2625 = vld [vmem:[#allocation2 + $0x10] sm:$0x1]
    %v2626 = vlaneseq
    %v2627 = vshrl.u32 %v2626, 7
    %v2628 = vsub.s32 4, %v2627
    %v2629 = vrot.slane %v25, %v2628
    %v2631 = vsel %vm171, %v2623, 0
    %v2634 = vsel %vm171, %v2624, 0
    %v2637 = vsel %vm171, %v2625, 0
    %2639 = vmatprep.subr.mxu0 0.0
    %2640 = vmatpush1.msra.mxu0 %v2614
    %2641 = vmatprep.subr.mxu0 0.0
    %2642 = vmatpush1.msra.mxu0 %v2615
    %2643 = vmatprep.subr.mxu0 0.0
    %2644 = vmatpush1.msra.mxu0 %v2616
    %2645 = vmatprep.subr.mxu0 0.0
    %2646 = vmatpush1.msra.mxu0 %v2617
    %2647 = vmatprep.subr.mxu0 0.0
    %2648 = vmatpush1.msra.mxu0 0.0
    %2649 = vmatprep.subr.mxu0 0.0
    %2650 = vmatpush1.msra.mxu0 0.0
    %2651 = vmatprep.subr.mxu0 0.0
    %2652 = vmatpush1.msra.mxu0 0.0
    %2653 = vmatprep.subr.mxu0 0.0
    %2654 = vmatpush1.msra.mxu0 0.0
    %2655 = vmatprep.subr.mxu0 0.0
    %2656 = vmatpush1.msra.mxu0 0.0
    %2657 = vmatprep.subr.mxu0 0.0
    %2658 = vmatpush1.msra.mxu0 0.0
    %2659 = vmatprep.subr.mxu0 0.0
    %2660 = vmatpush1.msra.mxu0 0.0
    %2661 = vmatprep.subr.mxu0 0.0
    %2662 = vmatpush1.msra.mxu0 0.0
    %2663 = vmatprep.subr.mxu0 0.0
    %2664 = vmatpush1.msra.mxu0 0.0
    %2665 = vmatprep.subr.mxu0 0.0
    %2666 = vmatpush1.msra.mxu0 0.0
    %2667 = vmatprep.subr.mxu0 0.0
    %2668 = vmatpush1.msra.mxu0 0.0
    %2669 = vmatprep.subr.mxu0 0.0
    %2670 = vmatpush1.msra.mxu0 0.0
    %2671 = vmatprep.subr.mxu0 0.0
    %2672 = vmatpush1.msra.mxu0 0.0
    %2673 = vmatprep.subr.mxu0 0.0
    %2674 = vmatpush1.msra.mxu0 0.0
    %2675 = vmatprep.subr.mxu0 0.0
    %2676 = vmatpush1.msra.mxu0 0.0
    %2677 = vmatprep.subr.mxu0 0.0
    %2678 = vmatpush1.msra.mxu0 0.0
    %2679 = vmatprep.subr.mxu0 0.0
    %2680 = vmatpush1.msra.mxu0 0.0
    %2681 = vmatprep.subr.mxu0 0.0
    %2682 = vmatpush1.msra.mxu0 0.0
    %2683 = vmatprep.subr.mxu0 0.0
    %2684 = vmatpush1.msra.mxu0 0.0
    %2685 = vmatprep.subr.mxu0 0.0
    %2686 = vmatpush1.msra.mxu0 0.0
    %2687 = vmatprep.subr.mxu0 0.0
    %2688 = vmatpush1.msra.mxu0 0.0
    %2689 = vmatprep.subr.mxu0 0.0
    %2690 = vmatpush1.msra.mxu0 0.0
    %2691 = vmatprep.subr.mxu0 0.0
    %2692 = vmatpush1.msra.mxu0 0.0
    %2693 = vmatprep.subr.mxu0 0.0
    %2694 = vmatpush1.msra.mxu0 0.0
    %2695 = vmatprep.subr.mxu0 0.0
    %2696 = vmatpush1.msra.mxu0 0.0
    %2697 = vmatprep.subr.mxu0 0.0
    %2698 = vmatpush1.msra.mxu0 0.0
    %2699 = vmatprep.subr.mxu0 0.0
    %2700 = vmatpush1.msra.mxu0 0.0
    %2701 = vmatprep.subr.mxu0 0.0
    %2702 = vmatpush1.msra.mxu0 0.0
    %2703 = vmatprep.mubr.f32.mxu0 0.0
    %2704 = vmatmul.mubr.f32.gmra.mrb[0].mxu0 %v2631
    %v2705 = vpop.f32.mrb[0].mxu0
    %v2706 = vadd.f32 %v2629, %v2705
    %v2707 = vpop.f32.mrb[0].mxu0
    %2708 = vmatprep.mubr.f32.mxu0 0.0
    %2709 = vmatmul.mubr.f32.gmra.mrb[0].mxu0 %v2634
    %v2710 = vpop.f32.mrb[0].mxu0
    %v2711 = vadd.f32 %v2629, %v2710
    %v2712 = vpop.f32.mrb[0].mxu0
    %2713 = vmatprep.mubr.f32.mxu0 0.0
    %2714 = vmatmul.mubr.f32.gmra.mrb[0].mxu0 %v2637
    %v2715 = vpop.f32.mrb[0].mxu0
    %v2716 = vadd.f32 %v2629, %v2715
    %v2717 = vpop.f32.mrb[0].mxu0
    %2718 = vdwg.mxu0
    %2722 = vrot.lane.b32.xlu0 %v2706, 120
    %v2723 = vpop.permute.xlu0 %2722
    %2724 = vrot.lane.b32.xlu0 %v2711, 120
    %v2725 = vpop.permute.xlu0 %2724
    %2726 = vrot.lane.b32.xlu0 %v2716, 120
    %v2727 = vpop.permute.xlu0 %2726
    %v2728 = vsel %vm304, %v2706, 0
    %v2730 = vsel %vm304, %v2711, 0
    %v2732 = vsel %vm304, %v2716, 0
    %v2734 = vsel %vm304, %v2723, 0
    %v2736 = vsel %vm304, %v2725, 0
    %v2738 = vsel %vm304, %v2727, 0
    %2740 = vmatprep.subr.mxu0 0.0
    %2741 = vmatpush1.xpose.msra.mxu0 %v2734
    %2742 = vmatprep.subr.mxu0 0.0
    %2743 = vmatpush1.xpose.msra.mxu0 %v2736
    %2744 = vmatprep.subr.mxu0 0.0
    %2745 = vmatpush1.xpose.msra.mxu0 %v2738
    %2746 = vmatprep.subr.mxu0 0.0
    %2747 = vmatpush1.xpose.msra.mxu0 0.0
    %2748 = vmatprep.subr.mxu0 0.0
    %2749 = vmatpush1.xpose.msra.mxu0 0.0
    %2750 = vmatprep.subr.mxu0 0.0
    %2751 = vmatpush1.xpose.msra.mxu0 0.0
    %2752 = vmatprep.subr.mxu0 0.0
    %2753 = vmatpush1.xpose.msra.mxu0 0.0
    %2754 = vmatprep.subr.mxu0 0.0
    %2755 = vmatpush1.xpose.msra.mxu0 0.0
    %2756 = vmatprep.subr.mxu0 0.0
    %2757 = vmatpush1.xpose.msra.mxu0 0.0
    %2758 = vmatprep.subr.mxu0 0.0
    %2759 = vmatpush1.xpose.msra.mxu0 0.0
    %2760 = vmatprep.subr.mxu0 0.0
    %2761 = vmatpush1.xpose.msra.mxu0 0.0
    %2762 = vmatprep.subr.mxu0 0.0
    %2763 = vmatpush1.xpose.msra.mxu0 0.0
    %2764 = vmatprep.subr.mxu0 0.0
    %2765 = vmatpush1.xpose.msra.mxu0 0.0
    %2766 = vmatprep.subr.mxu0 0.0
    %2767 = vmatpush1.xpose.msra.mxu0 0.0
    %2768 = vmatprep.subr.mxu0 0.0
    %2769 = vmatpush1.xpose.msra.mxu0 0.0
    %2770 = vmatprep.subr.mxu0 0.0
    %2771 = vmatpush1.xpose.msra.mxu0 0.0
    %2772 = vmatprep.subr.mxu0 0.0
    %2773 = vmatpush1.xpose.msra.mxu0 0.0
    %2774 = vmatprep.subr.mxu0 0.0
    %2775 = vmatpush1.xpose.msra.mxu0 0.0
    %2776 = vmatprep.subr.mxu0 0.0
    %2777 = vmatpush1.xpose.msra.mxu0 0.0
    %2778 = vmatprep.subr.mxu0 0.0
    %2779 = vmatpush1.xpose.msra.mxu0 0.0
    %2780 = vmatprep.subr.mxu0 0.0
    %2781 = vmatpush1.xpose.msra.mxu0 0.0
    %2782 = vmatprep.subr.mxu0 0.0
    %2783 = vmatpush1.xpose.msra.mxu0 0.0
    %2784 = vmatprep.subr.mxu0 0.0
    %2785 = vmatpush1.xpose.msra.mxu0 0.0
    %2786 = vmatprep.subr.mxu0 0.0
    %2787 = vmatpush1.xpose.msra.mxu0 0.0
    %2788 = vmatprep.subr.mxu0 0.0
    %2789 = vmatpush1.xpose.msra.mxu0 0.0
    %2790 = vmatprep.subr.mxu0 0.0
    %2791 = vmatpush1.xpose.msra.mxu0 0.0
    %2792 = vmatprep.subr.mxu0 0.0
    %2793 = vmatpush1.xpose.msra.mxu0 0.0
    %2794 = vmatprep.subr.mxu0 0.0
    %2795 = vmatpush1.xpose.msra.mxu0 0.0
    %2796 = vmatprep.subr.mxu0 0.0
    %2797 = vmatpush1.xpose.msra.mxu0 0.0
    %2798 = vmatprep.subr.mxu0 0.0
    %2799 = vmatpush1.xpose.msra.mxu0 0.0
    %2800 = vmatprep.subr.mxu0 0.0
    %2801 = vmatpush1.xpose.msra.mxu0 0.0
    %2802 = vmatprep.subr.mxu0 0.0
    %2803 = vmatpush1.xpose.msra.mxu0 0.0
    %2804 = vmatprep.mubr.f32.mxu0 0.0
    %2805 = vmatmul.mubr.f32.gmra.mrb[0].mxu0 %v2728
    %v2806 = vpop.f32.mrb[0].mxu0
    %v2807 = vadd.f32 0.0, %v2806
    %v2808 = vpop.f32.mrb[0].mxu0
    %2809 = vmatprep.mubr.f32.mxu0 0.0
    %2810 = vmatmul.mubr.f32.gmra.mrb[0].mxu0 %v2730
    %v2811 = vpop.f32.mrb[0].mxu0
    %v2812 = vadd.f32 0.0, %v2811
    %v2813 = vpop.f32.mrb[0].mxu0
    %2814 = vmatprep.mubr.f32.mxu0 0.0
    %2815 = vmatmul.mubr.f32.gmra.mrb[0].mxu0 %v2732
    %v2816 = vpop.f32.mrb[0].mxu0
    %v2817 = vadd.f32 0.0, %v2816
    %v2818 = vpop.f32.mrb[0].mxu0
    %2819 = vdwg.mxu0
    %v2820 = vmul.f32 %v2807, 0.35355338
    %v2821 = vmul.f32 %v2812, 0.35355338
    %v2822 = vmul.f32 %v2817, 0.35355338
    %v2823 = vsel %vm400, %v2820, -inf
    %2824 = vmax.xlane.f32.xlu0 %v2823
    %v2825 = vpop.xlane.xlu0 %2824
    %v2826 = vsel %vm400, %v2821, -inf
    %2827 = vmax.xlane.f32.xlu0 %v2826
    %v2828 = vpop.xlane.xlu0 %2827
    %v2829 = vsel %vm407, %v2822, -inf
    %2830 = vmax.xlane.f32.xlu0 %v2829
    %v2831 = vpop.xlane.xlu0 %2830
    %v2832 = vsub.f32 %v2820, %v2825
    %v2833 = vsub.f32 %v2821, %v2828
    %v2834 = vsub.f32 %v2822, %v2831
    %v2835 = vmul.f32 %v2832, 1.442695
    %v2836 = vpow.pop %v2835
    %v2837 = vmul.f32 %v2833, 1.442695
    %v2838 = vpow.pop %v2837
    %v2839 = vmul.f32 %v2834, 1.442695
    %v2840 = vpow.pop %v2839
    %v2841 = vsel %vm400, %v2836, 0.0
    %2842 = vadd.xlane.f32.xlu0 %v2841
    %v2843 = vpop.xlane.xlu0 %2842
    %v2844 = vsel %vm400, %v2838, 0.0
    %2845 = vadd.xlane.f32.xlu0 %v2844
    %v2846 = vpop.xlane.xlu0 %2845
    %v2847 = vsel %vm407, %v2840, 0.0
    %2848 = vadd.xlane.f32.xlu0 %v2847
    %v2849 = vpop.xlane.xlu0 %2848
    %v2850 = vrcp.pop %v2843
    %v2851 = vrcp.pop %v2846
    %v2852 = vrcp.pop %v2849
    %v2853 = vmul.f32 %v2836, %v2850
    %v2854 = vmul.f32 %v2838, %v2851
    %v2855 = vmul.f32 %v2840, %v2852
    %2856 = vrot.lane.b32.xlu0 %v2706, 112
    %v2857 = vpop.permute.xlu0 %2856
    %2858 = vrot.lane.b32.xlu0 %v2711, 112
    %v2859 = vpop.permute.xlu0 %2858
    %2860 = vrot.lane.b32.xlu0 %v2716, 112
    %v2861 = vpop.permute.xlu0 %2860
    %v2865 = vsel %vm400, %v2853, 0
    %v2868 = vsel %vm400, %v2854, 0
    %v2871 = vsel %vm400, %v2855, 0
    %v2873 = vsel %vm163, %v2861, 0
    %2875 = vmatprep.subr.mxu0 0.0
    %2876 = vmatpush1.msra.mxu0 %v2857
    %2877 = vmatprep.subr.mxu0 0.0
    %2878 = vmatpush1.msra.mxu0 %v2859
    %2879 = vmatprep.subr.mxu0 0.0
    %2880 = vmatpush1.msra.mxu0 %v2873
    %2881 = vmatprep.subr.mxu0 0.0
    %2882 = vmatpush1.msra.mxu0 0.0
    %2883 = vmatprep.subr.mxu0 0.0
    %2884 = vmatpush1.msra.mxu0 0.0
    %2885 = vmatprep.subr.mxu0 0.0
    %2886 = vmatpush1.msra.mxu0 0.0
    %2887 = vmatprep.subr.mxu0 0.0
    %2888 = vmatpush1.msra.mxu0 0.0
    %2889 = vmatprep.subr.mxu0 0.0
    %2890 = vmatpush1.msra.mxu0 0.0
    %2891 = vmatprep.subr.mxu0 0.0
    %2892 = vmatpush1.msra.mxu0 0.0
    %2893 = vmatprep.subr.mxu0 0.0
    %2894 = vmatpush1.msra.mxu0 0.0
    %2895 = vmatprep.subr.mxu0 0.0
    %2896 = vmatpush1.msra.mxu0 0.0
    %2897 = vmatprep.subr.mxu0 0.0
    %2898 = vmatpush1.msra.mxu0 0.0
    %2899 = vmatprep.subr.mxu0 0.0
    %2900 = vmatpush1.msra.mxu0 0.0
    %2901 = vmatprep.subr.mxu0 0.0
    %2902 = vmatpush1.msra.mxu0 0.0
    %2903 = vmatprep.subr.mxu0 0.0
    %2904 = vmatpush1.msra.mxu0 0.0
    %2905 = vmatprep.subr.mxu0 0.0
    %2906 = vmatpush1.msra.mxu0 0.0
    %2907 = vmatprep.subr.mxu0 0.0
    %2908 = vmatpush1.msra.mxu0 0.0
    %2909 = vmatprep.subr.mxu0 0.0
    %2910 = vmatpush1.msra.mxu0 0.0
    %2911 = vmatprep.subr.mxu0 0.0
    %2912 = vmatpush1.msra.mxu0 0.0
    %2913 = vmatprep.subr.mxu0 0.0
    %2914 = vmatpush1.msra.mxu0 0.0
    %2915 = vmatprep.subr.mxu0 0.0
    %2916 = vmatpush1.msra.mxu0 0.0
    %2917 = vmatprep.subr.mxu0 0.0
    %2918 = vmatpush1.msra.mxu0 0.0
    %2919 = vmatprep.subr.mxu0 0.0
    %2920 = vmatpush1.msra.mxu0 0.0
    %2921 = vmatprep.subr.mxu0 0.0
    %2922 = vmatpush1.msra.mxu0 0.0
    %2923 = vmatprep.subr.mxu0 0.0
    %2924 = vmatpush1.msra.mxu0 0.0
    %2925 = vmatprep.subr.mxu0 0.0
    %2926 = vmatpush1.msra.mxu0 0.0
    %2927 = vmatprep.subr.mxu0 0.0
    %2928 = vmatpush1.msra.mxu0 0.0
    %2929 = vmatprep.subr.mxu0 0.0
    %2930 = vmatpush1.msra.mxu0 0.0
    %2931 = vmatprep.subr.mxu0 0.0
    %2932 = vmatpush1.msra.mxu0 0.0
    %2933 = vmatprep.subr.mxu0 0.0
    %2934 = vmatpush1.msra.mxu0 0.0
    %2935 = vmatprep.subr.mxu0 0.0
    %2936 = vmatpush1.msra.mxu0 0.0
    %2937 = vmatprep.subr.mxu0 0.0
    %2938 = vmatpush1.msra.mxu0 0.0
    %2939 = vmatprep.mubr.f32.mxu0 0.0
    %2940 = vmatmul.mubr.f32.gmra.mrb[0].mxu0 %v2865
    %v2941 = vpop.f32.mrb[0].mxu0
    %v2942 = vadd.f32 0.0, %v2941
    %v2943 = vpop.f32.mrb[0].mxu0
    %2944 = vmatprep.mubr.f32.mxu0 0.0
    %2945 = vmatmul.mubr.f32.gmra.mrb[0].mxu0 %v2868
    %v2946 = vpop.f32.mrb[0].mxu0
    %v2947 = vadd.f32 0.0, %v2946
    %v2948 = vpop.f32.mrb[0].mxu0
    %2949 = vmatprep.mubr.f32.mxu0 0.0
    %2950 = vmatmul.mubr.f32.gmra.mrb[0].mxu0 %v2871
    %v2951 = vpop.f32.mrb[0].mxu0
    %v2952 = vadd.f32 0.0, %v2951
    %v2953 = vpop.f32.mrb[0].mxu0
    %2954 = vdwg.mxu0
    %2955 = vrot.lane.b32.xlu0 %v2706, 104
    %v2956 = vpop.permute.xlu0 %2955
    %2957 = vrot.lane.b32.xlu0 %v2711, 104
    %v2958 = vpop.permute.xlu0 %2957
    %2959 = vrot.lane.b32.xlu0 %v2716, 104
    %v2960 = vpop.permute.xlu0 %2959
    %2961 = vrot.lane.b32.xlu0 %v2706, 96
    %v2962 = vpop.permute.xlu0 %2961
    %2963 = vrot.lane.b32.xlu0 %v2711, 96
    %v2964 = vpop.permute.xlu0 %2963
    %2965 = vrot.lane.b32.xlu0 %v2716, 96
    %v2966 = vpop.permute.xlu0 %2965
    %v2967 = vsel %vm304, %v2956, 0
    %v2969 = vsel %vm304, %v2958, 0
    %v2971 = vsel %vm304, %v2960, 0
    %v2973 = vsel %vm304, %v2962, 0
    %v2975 = vsel %vm304, %v2964, 0
    %v2977 = vsel %vm304, %v2966, 0
    %2979 = vmatprep.subr.mxu0 0.0
    %2980 = vmatpush1.xpose.msra.mxu0 %v2973
    %2981 = vmatprep.subr.mxu0 0.0
    %2982 = vmatpush1.xpose.msra.mxu0 %v2975
    %2983 = vmatprep.subr.mxu0 0.0
    %2984 = vmatpush1.xpose.msra.mxu0 %v2977
    %2985 = vmatprep.subr.mxu0 0.0
    %2986 = vmatpush1.xpose.msra.mxu0 0.0
    %2987 = vmatprep.subr.mxu0 0.0
    %2988 = vmatpush1.xpose.msra.mxu0 0.0
    %2989 = vmatprep.subr.mxu0 0.0
    %2990 = vmatpush1.xpose.msra.mxu0 0.0
    %2991 = vmatprep.subr.mxu0 0.0
    %2992 = vmatpush1.xpose.msra.mxu0 0.0
    %2993 = vmatprep.subr.mxu0 0.0
    %2994 = vmatpush1.xpose.msra.mxu0 0.0
    %2995 = vmatprep.subr.mxu0 0.0
    %2996 = vmatpush1.xpose.msra.mxu0 0.0
    %2997 = vmatprep.subr.mxu0 0.0
    %2998 = vmatpush1.xpose.msra.mxu0 0.0
    %2999 = vmatprep.subr.mxu0 0.0
    %3000 = vmatpush1.xpose.msra.mxu0 0.0
    %3001 = vmatprep.subr.mxu0 0.0
    %3002 = vmatpush1.xpose.msra.mxu0 0.0
    %3003 = vmatprep.subr.mxu0 0.0
    %3004 = vmatpush1.xpose.msra.mxu0 0.0
    %3005 = vmatprep.subr.mxu0 0.0
    %3006 = vmatpush1.xpose.msra.mxu0 0.0
    %3007 = vmatprep.subr.mxu0 0.0
    %3008 = vmatpush1.xpose.msra.mxu0 0.0
    %3009 = vmatprep.subr.mxu0 0.0
    %3010 = vmatpush1.xpose.msra.mxu0 0.0
    %3011 = vmatprep.subr.mxu0 0.0
    %3012 = vmatpush1.xpose.msra.mxu0 0.0
    %3013 = vmatprep.subr.mxu0 0.0
    %3014 = vmatpush1.xpose.msra.mxu0 0.0
    %3015 = vmatprep.subr.mxu0 0.0
    %3016 = vmatpush1.xpose.msra.mxu0 0.0
    %3017 = vmatprep.subr.mxu0 0.0
    %3018 = vmatpush1.xpose.msra.mxu0 0.0
    %3019 = vmatprep.subr.mxu0 0.0
    %3020 = vmatpush1.xpose.msra.mxu0 0.0
    %3021 = vmatprep.subr.mxu0 0.0
    %3022 = vmatpush1.xpose.msra.mxu0 0.0
    %3023 = vmatprep.subr.mxu0 0.0
    %3024 = vmatpush1.xpose.msra.mxu0 0.0
    %3025 = vmatprep.subr.mxu0 0.0
    %3026 = vmatpush1.xpose.msra.mxu0 0.0
    %3027 = vmatprep.subr.mxu0 0.0
    %3028 = vmatpush1.xpose.msra.mxu0 0.0
    %3029 = vmatprep.subr.mxu0 0.0
    %3030 = vmatpush1.xpose.msra.mxu0 0.0
    %3031 = vmatprep.subr.mxu0 0.0
    %3032 = vmatpush1.xpose.msra.mxu0 0.0
    %3033 = vmatprep.subr.mxu0 0.0
    %3034 = vmatpush1.xpose.msra.mxu0 0.0
    %3035 = vmatprep.subr.mxu0 0.0
    %3036 = vmatpush1.xpose.msra.mxu0 0.0
    %3037 = vmatprep.subr.mxu0 0.0
    %3038 = vmatpush1.xpose.msra.mxu0 0.0
    %3039 = vmatprep.subr.mxu0 0.0
    %3040 = vmatpush1.xpose.msra.mxu0 0.0
    %3041 = vmatprep.subr.mxu0 0.0
    %3042 = vmatpush1.xpose.msra.mxu0 0.0
    %3043 = vmatprep.mubr.f32.mxu0 0.0
    %3044 = vmatmul.mubr.f32.gmra.mrb[0].mxu0 %v2967
    %v3045 = vpop.f32.mrb[0].mxu0
    %v3046 = vadd.f32 0.0, %v3045
    %v3047 = vpop.f32.mrb[0].mxu0
    %3048 = vmatprep.mubr.f32.mxu0 0.0
    %3049 = vmatmul.mubr.f32.gmra.mrb[0].mxu0 %v2969
    %v3050 = vpop.f32.mrb[0].mxu0
    %v3051 = vadd.f32 0.0, %v3050
    %v3052 = vpop.f32.mrb[0].mxu0
    %3053 = vmatprep.mubr.f32.mxu0 0.0
    %3054 = vmatmul.mubr.f32.gmra.mrb[0].mxu0 %v2971
    %v3055 = vpop.f32.mrb[0].mxu0
    %v3056 = vadd.f32 0.0, %v3055
    %v3057 = vpop.f32.mrb[0].mxu0
    %3058 = vdwg.mxu0
    %v3059 = vmul.f32 %v3046, 0.35355338
    %v3060 = vmul.f32 %v3051, 0.35355338
    %v3061 = vmul.f32 %v3056, 0.35355338
    %v3062 = vsel %vm400, %v3059, -inf
    %3063 = vmax.xlane.f32.xlu0 %v3062
    %v3064 = vpop.xlane.xlu0 %3063
    %v3065 = vsel %vm400, %v3060, -inf
    %3066 = vmax.xlane.f32.xlu0 %v3065
    %v3067 = vpop.xlane.xlu0 %3066
    %v3068 = vsel %vm407, %v3061, -inf
    %3069 = vmax.xlane.f32.xlu0 %v3068
    %v3070 = vpop.xlane.xlu0 %3069
    %v3071 = vsub.f32 %v3059, %v3064
    %v3072 = vsub.f32 %v3060, %v3067
    %v3073 = vsub.f32 %v3061, %v3070
    %v3074 = vmul.f32 %v3071, 1.442695
    %v3075 = vpow.pop %v3074
    %v3076 = vmul.f32 %v3072, 1.442695
    %v3077 = vpow.pop %v3076
    %v3078 = vmul.f32 %v3073, 1.442695
    %v3079 = vpow.pop %v3078
    %v3080 = vsel %vm400, %v3075, 0.0
    %3081 = vadd.xlane.f32.xlu0 %v3080
    %v3082 = vpop.xlane.xlu0 %3081
    %v3083 = vsel %vm400, %v3077, 0.0
    %3084 = vadd.xlane.f32.xlu0 %v3083
    %v3085 = vpop.xlane.xlu0 %3084
    %v3086 = vsel %vm407, %v3079, 0.0
    %3087 = vadd.xlane.f32.xlu0 %v3086
    %v3088 = vpop.xlane.xlu0 %3087
    %v3089 = vrcp.pop %v3082
    %v3090 = vrcp.pop %v3085
    %v3091 = vrcp.pop %v3088
    %v3092 = vmul.f32 %v3075, %v3089
    %v3093 = vmul.f32 %v3077, %v3090
    %v3094 = vmul.f32 %v3079, %v3091
    %v3095 = vmax.f32 %v2853, %v3092
    %v3096 = vmax.f32 %v2854, %v3093
    %v3097 = vmax.f32 %v2855, %v3094
    %3098 = vrot.lane.b32.xlu0 %v2706, 88
    %v3099 = vpop.permute.xlu0 %3098
    %3100 = vrot.lane.b32.xlu0 %v2711, 88
    %v3101 = vpop.permute.xlu0 %3100
    %3102 = vrot.lane.b32.xlu0 %v2716, 88
    %v3103 = vpop.permute.xlu0 %3102
    %v3107 = vsel %vm400, %v3092, 0
    %v3110 = vsel %vm400, %v3093, 0
    %v3113 = vsel %vm400, %v3094, 0
    %v3115 = vsel %vm163, %v3103, 0
    %3117 = vmatprep.subr.mxu0 0.0
    %3118 = vmatpush1.msra.mxu0 %v3099
    %3119 = vmatprep.subr.mxu0 0.0
    %3120 = vmatpush1.msra.mxu0 %v3101
    %3121 = vmatprep.subr.mxu0 0.0
    %3122 = vmatpush1.msra.mxu0 %v3115
    %3123 = vmatprep.subr.mxu0 0.0
    %3124 = vmatpush1.msra.mxu0 0.0
    %3125 = vmatprep.subr.mxu0 0.0
    %3126 = vmatpush1.msra.mxu0 0.0
    %3127 = vmatprep.subr.mxu0 0.0
    %3128 = vmatpush1.msra.mxu0 0.0
    %3129 = vmatprep.subr.mxu0 0.0
    %3130 = vmatpush1.msra.mxu0 0.0
    %3131 = vmatprep.subr.mxu0 0.0
    %3132 = vmatpush1.msra.mxu0 0.0
    %3133 = vmatprep.subr.mxu0 0.0
    %3134 = vmatpush1.msra.mxu0 0.0
    %3135 = vmatprep.subr.mxu0 0.0
    %3136 = vmatpush1.msra.mxu0 0.0
    %3137 = vmatprep.subr.mxu0 0.0
    %3138 = vmatpush1.msra.mxu0 0.0
    %3139 = vmatprep.subr.mxu0 0.0
    %3140 = vmatpush1.msra.mxu0 0.0
    %3141 = vmatprep.subr.mxu0 0.0
    %3142 = vmatpush1.msra.mxu0 0.0
    %3143 = vmatprep.subr.mxu0 0.0
    %3144 = vmatpush1.msra.mxu0 0.0
    %3145 = vmatprep.subr.mxu0 0.0
    %3146 = vmatpush1.msra.mxu0 0.0
    %3147 = vmatprep.subr.mxu0 0.0
    %3148 = vmatpush1.msra.mxu0 0.0
    %3149 = vmatprep.subr.mxu0 0.0
    %3150 = vmatpush1.msra.mxu0 0.0
    %3151 = vmatprep.subr.mxu0 0.0
    %3152 = vmatpush1.msra.mxu0 0.0
    %3153 = vmatprep.subr.mxu0 0.0
    %3154 = vmatpush1.msra.mxu0 0.0
    %3155 = vmatprep.subr.mxu0 0.0
    %3156 = vmatpush1.msra.mxu0 0.0
    %3157 = vmatprep.subr.mxu0 0.0
    %3158 = vmatpush1.msra.mxu0 0.0
    %3159 = vmatprep.subr.mxu0 0.0
    %3160 = vmatpush1.msra.mxu0 0.0
    %3161 = vmatprep.subr.mxu0 0.0
    %3162 = vmatpush1.msra.mxu0 0.0
    %3163 = vmatprep.subr.mxu0 0.0
    %3164 = vmatpush1.msra.mxu0 0.0
    %3165 = vmatprep.subr.mxu0 0.0
    %3166 = vmatpush1.msra.mxu0 0.0
    %3167 = vmatprep.subr.mxu0 0.0
    %3168 = vmatpush1.msra.mxu0 0.0
    %3169 = vmatprep.subr.mxu0 0.0
    %3170 = vmatpush1.msra.mxu0 0.0
    %3171 = vmatprep.subr.mxu0 0.0
    %3172 = vmatpush1.msra.mxu0 0.0
    %3173 = vmatprep.subr.mxu0 0.0
    %3174 = vmatpush1.msra.mxu0 0.0
    %3175 = vmatprep.subr.mxu0 0.0
    %3176 = vmatpush1.msra.mxu0 0.0
    %3177 = vmatprep.subr.mxu0 0.0
    %3178 = vmatpush1.msra.mxu0 0.0
    %3179 = vmatprep.subr.mxu0 0.0
    %3180 = vmatpush1.msra.mxu0 0.0
    %3181 = vmatprep.mubr.f32.mxu0 0.0
    %3182 = vmatmul.mubr.f32.gmra.mrb[0].mxu0 %v3107
    %v3183 = vpop.f32.mrb[0].mxu0
    %v3184 = vadd.f32 0.0, %v3183
    %v3185 = vpop.f32.mrb[0].mxu0
    %3186 = vmatprep.mubr.f32.mxu0 0.0
    %3187 = vmatmul.mubr.f32.gmra.mrb[0].mxu0 %v3110
    %v3188 = vpop.f32.mrb[0].mxu0
    %v3189 = vadd.f32 0.0, %v3188
    %v3190 = vpop.f32.mrb[0].mxu0
    %3191 = vmatprep.mubr.f32.mxu0 0.0
    %3192 = vmatmul.mubr.f32.gmra.mrb[0].mxu0 %v3113
    %v3193 = vpop.f32.mrb[0].mxu0
    %v3194 = vadd.f32 0.0, %v3193
    %v3195 = vpop.f32.mrb[0].mxu0
    %3196 = vdwg.mxu0
    %3197 = vrot.lane.b32.xlu0 %v2706, 80
    %v3198 = vpop.permute.xlu0 %3197
    %3199 = vrot.lane.b32.xlu0 %v2711, 80
    %v3200 = vpop.permute.xlu0 %3199
    %3201 = vrot.lane.b32.xlu0 %v2716, 80
    %v3202 = vpop.permute.xlu0 %3201
    %3203 = vrot.lane.b32.xlu0 %v2706, 72
    %v3204 = vpop.permute.xlu0 %3203
    %3205 = vrot.lane.b32.xlu0 %v2711, 72
    %v3206 = vpop.permute.xlu0 %3205
    %3207 = vrot.lane.b32.xlu0 %v2716, 72
    %v3208 = vpop.permute.xlu0 %3207
    %v3209 = vsel %vm304, %v3198, 0
    %v3211 = vsel %vm304, %v3200, 0
    %v3213 = vsel %vm304, %v3202, 0
    %v3215 = vsel %vm304, %v3204, 0
    %v3217 = vsel %vm304, %v3206, 0
    %v3219 = vsel %vm304, %v3208, 0
    %3221 = vmatprep.subr.mxu0 0.0
    %3222 = vmatpush1.xpose.msra.mxu0 %v3215
    %3223 = vmatprep.subr.mxu0 0.0
    %3224 = vmatpush1.xpose.msra.mxu0 %v3217
    %3225 = vmatprep.subr.mxu0 0.0
    %3226 = vmatpush1.xpose.msra.mxu0 %v3219
    %3227 = vmatprep.subr.mxu0 0.0
    %3228 = vmatpush1.xpose.msra.mxu0 0.0
    %3229 = vmatprep.subr.mxu0 0.0
    %3230 = vmatpush1.xpose.msra.mxu0 0.0
    %3231 = vmatprep.subr.mxu0 0.0
    %3232 = vmatpush1.xpose.msra.mxu0 0.0
    %3233 = vmatprep.subr.mxu0 0.0
    %3234 = vmatpush1.xpose.msra.mxu0 0.0
    %3235 = vmatprep.subr.mxu0 0.0
    %3236 = vmatpush1.xpose.msra.mxu0 0.0
    %3237 = vmatprep.subr.mxu0 0.0
    %3238 = vmatpush1.xpose.msra.mxu0 0.0
    %3239 = vmatprep.subr.mxu0 0.0
    %3240 = vmatpush1.xpose.msra.mxu0 0.0
    %3241 = vmatprep.subr.mxu0 0.0
    %3242 = vmatpush1.xpose.msra.mxu0 0.0
    %3243 = vmatprep.subr.mxu0 0.0
    %3244 = vmatpush1.xpose.msra.mxu0 0.0
    %3245 = vmatprep.subr.mxu0 0.0
    %3246 = vmatpush1.xpose.msra.mxu0 0.0
    %3247 = vmatprep.subr.mxu0 0.0
    %3248 = vmatpush1.xpose.msra.mxu0 0.0
    %3249 = vmatprep.subr.mxu0 0.0
    %3250 = vmatpush1.xpose.msra.mxu0 0.0
    %3251 = vmatprep.subr.mxu0 0.0
    %3252 = vmatpush1.xpose.msra.mxu0 0.0
    %3253 = vmatprep.subr.mxu0 0.0
    %3254 = vmatpush1.xpose.msra.mxu0 0.0
    %3255 = vmatprep.subr.mxu0 0.0
    %3256 = vmatpush1.xpose.msra.mxu0 0.0
    %3257 = vmatprep.subr.mxu0 0.0
    %3258 = vmatpush1.xpose.msra.mxu0 0.0
    %3259 = vmatprep.subr.mxu0 0.0
    %3260 = vmatpush1.xpose.msra.mxu0 0.0
    %3261 = vmatprep.subr.mxu0 0.0
    %3262 = vmatpush1.xpose.msra.mxu0 0.0
    %3263 = vmatprep.subr.mxu0 0.0
    %3264 = vmatpush1.xpose.msra.mxu0 0.0
    %3265 = vmatprep.subr.mxu0 0.0
    %3266 = vmatpush1.xpose.msra.mxu0 0.0
    %3267 = vmatprep.subr.mxu0 0.0
    %3268 = vmatpush1.xpose.msra.mxu0 0.0
    %3269 = vmatprep.subr.mxu0 0.0
    %3270 = vmatpush1.xpose.msra.mxu0 0.0
    %3271 = vmatprep.subr.mxu0 0.0
    %3272 = vmatpush1.xpose.msra.mxu0 0.0
    %3273 = vmatprep.subr.mxu0 0.0
    %3274 = vmatpush1.xpose.msra.mxu0 0.0
    %3275 = vmatprep.subr.mxu0 0.0
    %3276 = vmatpush1.xpose.msra.mxu0 0.0
    %3277 = vmatprep.subr.mxu0 0.0
    %3278 = vmatpush1.xpose.msra.mxu0 0.0
    %3279 = vmatprep.subr.mxu0 0.0
    %3280 = vmatpush1.xpose.msra.mxu0 0.0
    %3281 = vmatprep.subr.mxu0 0.0
    %3282 = vmatpush1.xpose.msra.mxu0 0.0
    %3283 = vmatprep.subr.mxu0 0.0
    %3284 = vmatpush1.xpose.msra.mxu0 0.0
    %3285 = vmatprep.mubr.f32.mxu0 0.0
    %3286 = vmatmul.mubr.f32.gmra.mrb[0].mxu0 %v3209
    %v3287 = vpop.f32.mrb[0].mxu0
    %v3288 = vadd.f32 0.0, %v3287
    %v3289 = vpop.f32.mrb[0].mxu0
    %3290 = vmatprep.mubr.f32.mxu0 0.0
    %3291 = vmatmul.mubr.f32.gmra.mrb[0].mxu0 %v3211
    %v3292 = vpop.f32.mrb[0].mxu0
    %v3293 = vadd.f32 0.0, %v3292
    %v3294 = vpop.f32.mrb[0].mxu0
    %3295 = vmatprep.mubr.f32.mxu0 0.0
    %3296 = vmatmul.mubr.f32.gmra.mrb[0].mxu0 %v3213
    %v3297 = vpop.f32.mrb[0].mxu0
    %v3298 = vadd.f32 0.0, %v3297
    %v3299 = vpop.f32.mrb[0].mxu0
    %3300 = vdwg.mxu0
    %v3301 = vmul.f32 %v3288, 0.35355338
    %v3302 = vmul.f32 %v3293, 0.35355338
    %v3303 = vmul.f32 %v3298, 0.35355338
    %v3304 = vsel %vm400, %v3301, -inf
    %3305 = vmax.xlane.f32.xlu0 %v3304
    %v3306 = vpop.xlane.xlu0 %3305
    %v3307 = vsel %vm400, %v3302, -inf
    %3308 = vmax.xlane.f32.xlu0 %v3307
    %v3309 = vpop.xlane.xlu0 %3308
    %v3310 = vsel %vm407, %v3303, -inf
    %3311 = vmax.xlane.f32.xlu0 %v3310
    %v3312 = vpop.xlane.xlu0 %3311
    %v3313 = vsub.f32 %v3301, %v3306
    %v3314 = vsub.f32 %v3302, %v3309
    %v3315 = vsub.f32 %v3303, %v3312
    %v3316 = vmul.f32 %v3313, 1.442695
    %v3317 = vpow.pop %v3316
    %v3318 = vmul.f32 %v3314, 1.442695
    %v3319 = vpow.pop %v3318
    %v3320 = vmul.f32 %v3315, 1.442695
    %v3321 = vpow.pop %v3320
    %v3322 = vsel %vm400, %v3317, 0.0
    %3323 = vadd.xlane.f32.xlu0 %v3322
    %v3324 = vpop.xlane.xlu0 %3323
    %v3325 = vsel %vm400, %v3319, 0.0
    %3326 = vadd.xlane.f32.xlu0 %v3325
    %v3327 = vpop.xlane.xlu0 %3326
    %v3328 = vsel %vm407, %v3321, 0.0
    %3329 = vadd.xlane.f32.xlu0 %v3328
    %v3330 = vpop.xlane.xlu0 %3329
    %v3331 = vrcp.pop %v3324
    %v3332 = vrcp.pop %v3327
    %v3333 = vrcp.pop %v3330
    %v3334 = vmul.f32 %v3317, %v3331
    %v3335 = vmul.f32 %v3319, %v3332
    %v3336 = vmul.f32 %v3321, %v3333
    %v3337 = vmax.f32 %v3095, %v3334
    %v3338 = vmax.f32 %v3096, %v3335
    %v3339 = vmax.f32 %v3097, %v3336
    %3340 = vrot.lane.b32.xlu0 %v2706, 64
    %v3341 = vpop.permute.xlu0 %3340
    %3342 = vrot.lane.b32.xlu0 %v2711, 64
    %v3343 = vpop.permute.xlu0 %3342
    %3344 = vrot.lane.b32.xlu0 %v2716, 64
    %v3345 = vpop.permute.xlu0 %3344
    %v3349 = vsel %vm400, %v3334, 0
    %v3352 = vsel %vm400, %v3335, 0
    %v3355 = vsel %vm400, %v3336, 0
    %v3357 = vsel %vm163, %v3345, 0
    %3359 = vmatprep.subr.mxu0 0.0
    %3360 = vmatpush1.msra.mxu0 %v3341
    %3361 = vmatprep.subr.mxu0 0.0
    %3362 = vmatpush1.msra.mxu0 %v3343
    %3363 = vmatprep.subr.mxu0 0.0
    %3364 = vmatpush1.msra.mxu0 %v3357
    %3365 = vmatprep.subr.mxu0 0.0
    %3366 = vmatpush1.msra.mxu0 0.0
    %3367 = vmatprep.subr.mxu0 0.0
    %3368 = vmatpush1.msra.mxu0 0.0
    %3369 = vmatprep.subr.mxu0 0.0
    %3370 = vmatpush1.msra.mxu0 0.0
    %3371 = vmatprep.subr.mxu0 0.0
    %3372 = vmatpush1.msra.mxu0 0.0
    %3373 = vmatprep.subr.mxu0 0.0
    %3374 = vmatpush1.msra.mxu0 0.0
    %3375 = vmatprep.subr.mxu0 0.0
    %3376 = vmatpush1.msra.mxu0 0.0
    %3377 = vmatprep.subr.mxu0 0.0
    %3378 = vmatpush1.msra.mxu0 0.0
    %3379 = vmatprep.subr.mxu0 0.0
    %3380 = vmatpush1.msra.mxu0 0.0
    %3381 = vmatprep.subr.mxu0 0.0
    %3382 = vmatpush1.msra.mxu0 0.0
    %3383 = vmatprep.subr.mxu0 0.0
    %3384 = vmatpush1.msra.mxu0 0.0
    %3385 = vmatprep.subr.mxu0 0.0
    %3386 = vmatpush1.msra.mxu0 0.0
    %3387 = vmatprep.subr.mxu0 0.0
    %3388 = vmatpush1.msra.mxu0 0.0
    %3389 = vmatprep.subr.mxu0 0.0
    %3390 = vmatpush1.msra.mxu0 0.0
    %3391 = vmatprep.subr.mxu0 0.0
    %3392 = vmatpush1.msra.mxu0 0.0
    %3393 = vmatprep.subr.mxu0 0.0
    %3394 = vmatpush1.msra.mxu0 0.0
    %3395 = vmatprep.subr.mxu0 0.0
    %3396 = vmatpush1.msra.mxu0 0.0
    %3397 = vmatprep.subr.mxu0 0.0
    %3398 = vmatpush1.msra.mxu0 0.0
    %3399 = vmatprep.subr.mxu0 0.0
    %3400 = vmatpush1.msra.mxu0 0.0
    %3401 = vmatprep.subr.mxu0 0.0
    %3402 = vmatpush1.msra.mxu0 0.0
    %3403 = vmatprep.subr.mxu0 0.0
    %3404 = vmatpush1.msra.mxu0 0.0
    %3405 = vmatprep.subr.mxu0 0.0
    %3406 = vmatpush1.msra.mxu0 0.0
    %3407 = vmatprep.subr.mxu0 0.0
    %3408 = vmatpush1.msra.mxu0 0.0
    %3409 = vmatprep.subr.mxu0 0.0
    %3410 = vmatpush1.msra.mxu0 0.0
    %3411 = vmatprep.subr.mxu0 0.0
    %3412 = vmatpush1.msra.mxu0 0.0
    %3413 = vmatprep.subr.mxu0 0.0
    %3414 = vmatpush1.msra.mxu0 0.0
    %3415 = vmatprep.subr.mxu0 0.0
    %3416 = vmatpush1.msra.mxu0 0.0
    %3417 = vmatprep.subr.mxu0 0.0
    %3418 = vmatpush1.msra.mxu0 0.0
    %3419 = vmatprep.subr.mxu0 0.0
    %3420 = vmatpush1.msra.mxu0 0.0
    %3421 = vmatprep.subr.mxu0 0.0
    %3422 = vmatpush1.msra.mxu0 0.0
    %3423 = vmatprep.mubr.f32.mxu0 0.0
    %3424 = vmatmul.mubr.f32.gmra.mrb[0].mxu0 %v3349
    %v3425 = vpop.f32.mrb[0].mxu0
    %v3426 = vadd.f32 0.0, %v3425
    %v3427 = vpop.f32.mrb[0].mxu0
    %3428 = vmatprep.mubr.f32.mxu0 0.0
    %3429 = vmatmul.mubr.f32.gmra.mrb[0].mxu0 %v3352
    %v3430 = vpop.f32.mrb[0].mxu0
    %v3431 = vadd.f32 0.0, %v3430
    %v3432 = vpop.f32.mrb[0].mxu0
    %3433 = vmatprep.mubr.f32.mxu0 0.0
    %3434 = vmatmul.mubr.f32.gmra.mrb[0].mxu0 %v3355
    %v3435 = vpop.f32.mrb[0].mxu0
    %v3436 = vadd.f32 0.0, %v3435
    %v3437 = vpop.f32.mrb[0].mxu0
    %3438 = vdwg.mxu0
    %3439 = vrot.lane.b32.xlu0 %v2706, 56
    %v3440 = vpop.permute.xlu0 %3439
    %3441 = vrot.lane.b32.xlu0 %v2711, 56
    %v3442 = vpop.permute.xlu0 %3441
    %3443 = vrot.lane.b32.xlu0 %v2716, 56
    %v3444 = vpop.permute.xlu0 %3443
    %3445 = vrot.lane.b32.xlu0 %v2706, 48
    %v3446 = vpop.permute.xlu0 %3445
    %3447 = vrot.lane.b32.xlu0 %v2711, 48
    %v3448 = vpop.permute.xlu0 %3447
    %3449 = vrot.lane.b32.xlu0 %v2716, 48
    %v3450 = vpop.permute.xlu0 %3449
    %v3451 = vsel %vm304, %v3440, 0
    %v3453 = vsel %vm304, %v3442, 0
    %v3455 = vsel %vm304, %v3444, 0
    %v3457 = vsel %vm304, %v3446, 0
    %v3459 = vsel %vm304, %v3448, 0
    %v3461 = vsel %vm304, %v3450, 0
    %3463 = vmatprep.subr.mxu0 0.0
    %3464 = vmatpush1.xpose.msra.mxu0 %v3457
    %3465 = vmatprep.subr.mxu0 0.0
    %3466 = vmatpush1.xpose.msra.mxu0 %v3459
    %3467 = vmatprep.subr.mxu0 0.0
    %3468 = vmatpush1.xpose.msra.mxu0 %v3461
    %3469 = vmatprep.subr.mxu0 0.0
    %3470 = vmatpush1.xpose.msra.mxu0 0.0
    %3471 = vmatprep.subr.mxu0 0.0
    %3472 = vmatpush1.xpose.msra.mxu0 0.0
    %3473 = vmatprep.subr.mxu0 0.0
    %3474 = vmatpush1.xpose.msra.mxu0 0.0
    %3475 = vmatprep.subr.mxu0 0.0
    %3476 = vmatpush1.xpose.msra.mxu0 0.0
    %3477 = vmatprep.subr.mxu0 0.0
    %3478 = vmatpush1.xpose.msra.mxu0 0.0
    %3479 = vmatprep.subr.mxu0 0.0
    %3480 = vmatpush1.xpose.msra.mxu0 0.0
    %3481 = vmatprep.subr.mxu0 0.0
    %3482 = vmatpush1.xpose.msra.mxu0 0.0
    %3483 = vmatprep.subr.mxu0 0.0
    %3484 = vmatpush1.xpose.msra.mxu0 0.0
    %3485 = vmatprep.subr.mxu0 0.0
    %3486 = vmatpush1.xpose.msra.mxu0 0.0
    %3487 = vmatprep.subr.mxu0 0.0
    %3488 = vmatpush1.xpose.msra.mxu0 0.0
    %3489 = vmatprep.subr.mxu0 0.0
    %3490 = vmatpush1.xpose.msra.mxu0 0.0
    %3491 = vmatprep.subr.mxu0 0.0
    %3492 = vmatpush1.xpose.msra.mxu0 0.0
    %3493 = vmatprep.subr.mxu0 0.0
    %3494 = vmatpush1.xpose.msra.mxu0 0.0
    %3495 = vmatprep.subr.mxu0 0.0
    %3496 = vmatpush1.xpose.msra.mxu0 0.0
    %3497 = vmatprep.subr.mxu0 0.0
    %3498 = vmatpush1.xpose.msra.mxu0 0.0
    %3499 = vmatprep.subr.mxu0 0.0
    %3500 = vmatpush1.xpose.msra.mxu0 0.0
    %3501 = vmatprep.subr.mxu0 0.0
    %3502 = vmatpush1.xpose.msra.mxu0 0.0
    %3503 = vmatprep.subr.mxu0 0.0
    %3504 = vmatpush1.xpose.msra.mxu0 0.0
    %3505 = vmatprep.subr.mxu0 0.0
    %3506 = vmatpush1.xpose.msra.mxu0 0.0
    %3507 = vmatprep.subr.mxu0 0.0
    %3508 = vmatpush1.xpose.msra.mxu0 0.0
    %3509 = vmatprep.subr.mxu0 0.0
    %3510 = vmatpush1.xpose.msra.mxu0 0.0
    %3511 = vmatprep.subr.mxu0 0.0
    %3512 = vmatpush1.xpose.msra.mxu0 0.0
    %3513 = vmatprep.subr.mxu0 0.0
    %3514 = vmatpush1.xpose.msra.mxu0 0.0
    %3515 = vmatprep.subr.mxu0 0.0
    %3516 = vmatpush1.xpose.msra.mxu0 0.0
    %3517 = vmatprep.subr.mxu0 0.0
    %3518 = vmatpush1.xpose.msra.mxu0 0.0
    %3519 = vmatprep.subr.mxu0 0.0
    %3520 = vmatpush1.xpose.msra.mxu0 0.0
    %3521 = vmatprep.subr.mxu0 0.0
    %3522 = vmatpush1.xpose.msra.mxu0 0.0
    %3523 = vmatprep.subr.mxu0 0.0
    %3524 = vmatpush1.xpose.msra.mxu0 0.0
    %3525 = vmatprep.subr.mxu0 0.0
    %3526 = vmatpush1.xpose.msra.mxu0 0.0
    %3527 = vmatprep.mubr.f32.mxu0 0.0
    %3528 = vmatmul.mubr.f32.gmra.mrb[0].mxu0 %v3451
    %v3529 = vpop.f32.mrb[0].mxu0
    %v3530 = vadd.f32 0.0, %v3529
    %v3531 = vpop.f32.mrb[0].mxu0
    %3532 = vmatprep.mubr.f32.mxu0 0.0
    %3533 = vmatmul.mubr.f32.gmra.mrb[0].mxu0 %v3453
    %v3534 = vpop.f32.mrb[0].mxu0
    %v3535 = vadd.f32 0.0, %v3534
    %v3536 = vpop.f32.mrb[0].mxu0
    %3537 = vmatprep.mubr.f32.mxu0 0.0
    %3538 = vmatmul.mubr.f32.gmra.mrb[0].mxu0 %v3455
    %v3539 = vpop.f32.mrb[0].mxu0
    %v3540 = vadd.f32 0.0, %v3539
    %v3541 = vpop.f32.mrb[0].mxu0
    %3542 = vdwg.mxu0
    %v3543 = vmul.f32 %v3530, 0.35355338
    %v3544 = vmul.f32 %v3535, 0.35355338
    %v3545 = vmul.f32 %v3540, 0.35355338
    %v3546 = vsel %vm400, %v3543, -inf
    %3547 = vmax.xlane.f32.xlu0 %v3546
    %v3548 = vpop.xlane.xlu0 %3547
    %v3549 = vsel %vm400, %v3544, -inf
    %3550 = vmax.xlane.f32.xlu0 %v3549
    %v3551 = vpop.xlane.xlu0 %3550
    %v3552 = vsel %vm407, %v3545, -inf
    %3553 = vmax.xlane.f32.xlu0 %v3552
    %v3554 = vpop.xlane.xlu0 %3553
    %v3555 = vsub.f32 %v3543, %v3548
    %v3556 = vsub.f32 %v3544, %v3551
    %v3557 = vsub.f32 %v3545, %v3554
    %v3558 = vmul.f32 %v3555, 1.442695
    %v3559 = vpow.pop %v3558
    %v3560 = vmul.f32 %v3556, 1.442695
    %v3561 = vpow.pop %v3560
    %v3562 = vmul.f32 %v3557, 1.442695
    %v3563 = vpow.pop %v3562
    %v3564 = vsel %vm400, %v3559, 0.0
    %3565 = vadd.xlane.f32.xlu0 %v3564
    %v3566 = vpop.xlane.xlu0 %3565
    %v3567 = vsel %vm400, %v3561, 0.0
    %3568 = vadd.xlane.f32.xlu0 %v3567
    %v3569 = vpop.xlane.xlu0 %3568
    %v3570 = vsel %vm407, %v3563, 0.0
    %3571 = vadd.xlane.f32.xlu0 %v3570
    %v3572 = vpop.xlane.xlu0 %3571
    %v3573 = vrcp.pop %v3566
    %v3574 = vrcp.pop %v3569
    %v3575 = vrcp.pop %v3572
    %v3576 = vmul.f32 %v3559, %v3573
    %v3577 = vmul.f32 %v3561, %v3574
    %v3578 = vmul.f32 %v3563, %v3575
    %v3579 = vmax.f32 %v3337, %v3576
    %v3580 = vmax.f32 %v3338, %v3577
    %v3581 = vmax.f32 %v3339, %v3578
    %3582 = vrot.lane.b32.xlu0 %v2706, 40
    %v3583 = vpop.permute.xlu0 %3582
    %3584 = vrot.lane.b32.xlu0 %v2711, 40
    %v3585 = vpop.permute.xlu0 %3584
    %3586 = vrot.lane.b32.xlu0 %v2716, 40
    %v3587 = vpop.permute.xlu0 %3586
    %v3591 = vsel %vm400, %v3576, 0
    %v3594 = vsel %vm400, %v3577, 0
    %v3597 = vsel %vm400, %v3578, 0
    %v3599 = vsel %vm163, %v3587, 0
    %3601 = vmatprep.subr.mxu0 0.0
    %3602 = vmatpush1.msra.mxu0 %v3583
    %3603 = vmatprep.subr.mxu0 0.0
    %3604 = vmatpush1.msra.mxu0 %v3585
    %3605 = vmatprep.subr.mxu0 0.0
    %3606 = vmatpush1.msra.mxu0 %v3599
    %3607 = vmatprep.subr.mxu0 0.0
    %3608 = vmatpush1.msra.mxu0 0.0
    %3609 = vmatprep.subr.mxu0 0.0
    %3610 = vmatpush1.msra.mxu0 0.0
    %3611 = vmatprep.subr.mxu0 0.0
    %3612 = vmatpush1.msra.mxu0 0.0
    %3613 = vmatprep.subr.mxu0 0.0
    %3614 = vmatpush1.msra.mxu0 0.0
    %3615 = vmatprep.subr.mxu0 0.0
    %3616 = vmatpush1.msra.mxu0 0.0
    %3617 = vmatprep.subr.mxu0 0.0
    %3618 = vmatpush1.msra.mxu0 0.0
    %3619 = vmatprep.subr.mxu0 0.0
    %3620 = vmatpush1.msra.mxu0 0.0
    %3621 = vmatprep.subr.mxu0 0.0
    %3622 = vmatpush1.msra.mxu0 0.0
    %3623 = vmatprep.subr.mxu0 0.0
    %3624 = vmatpush1.msra.mxu0 0.0
    %3625 = vmatprep.subr.mxu0 0.0
    %3626 = vmatpush1.msra.mxu0 0.0
    %3627 = vmatprep.subr.mxu0 0.0
    %3628 = vmatpush1.msra.mxu0 0.0
    %3629 = vmatprep.subr.mxu0 0.0
    %3630 = vmatpush1.msra.mxu0 0.0
    %3631 = vmatprep.subr.mxu0 0.0
    %3632 = vmatpush1.msra.mxu0 0.0
    %3633 = vmatprep.subr.mxu0 0.0
    %3634 = vmatpush1.msra.mxu0 0.0
    %3635 = vmatprep.subr.mxu0 0.0
    %3636 = vmatpush1.msra.mxu0 0.0
    %3637 = vmatprep.subr.mxu0 0.0
    %3638 = vmatpush1.msra.mxu0 0.0
    %3639 = vmatprep.subr.mxu0 0.0
    %3640 = vmatpush1.msra.mxu0 0.0
    %3641 = vmatprep.subr.mxu0 0.0
    %3642 = vmatpush1.msra.mxu0 0.0
    %3643 = vmatprep.subr.mxu0 0.0
    %3644 = vmatpush1.msra.mxu0 0.0
    %3645 = vmatprep.subr.mxu0 0.0
    %3646 = vmatpush1.msra.mxu0 0.0
    %3647 = vmatprep.subr.mxu0 0.0
    %3648 = vmatpush1.msra.mxu0 0.0
    %3649 = vmatprep.subr.mxu0 0.0
    %3650 = vmatpush1.msra.mxu0 0.0
    %3651 = vmatprep.subr.mxu0 0.0
    %3652 = vmatpush1.msra.mxu0 0.0
    %3653 = vmatprep.subr.mxu0 0.0
    %3654 = vmatpush1.msra.mxu0 0.0
    %3655 = vmatprep.subr.mxu0 0.0
    %3656 = vmatpush1.msra.mxu0 0.0
    %3657 = vmatprep.subr.mxu0 0.0
    %3658 = vmatpush1.msra.mxu0 0.0
    %3659 = vmatprep.subr.mxu0 0.0
    %3660 = vmatpush1.msra.mxu0 0.0
    %3661 = vmatprep.subr.mxu0 0.0
    %3662 = vmatpush1.msra.mxu0 0.0
    %3663 = vmatprep.subr.mxu0 0.0
    %3664 = vmatpush1.msra.mxu0 0.0
    %3665 = vmatprep.mubr.f32.mxu0 0.0
    %3666 = vmatmul.mubr.f32.gmra.mrb[0].mxu0 %v3591
    %v3667 = vpop.f32.mrb[0].mxu0
    %v3668 = vadd.f32 0.0, %v3667
    %v3669 = vpop.f32.mrb[0].mxu0
    %3670 = vmatprep.mubr.f32.mxu0 0.0
    %3671 = vmatmul.mubr.f32.gmra.mrb[0].mxu0 %v3594
    %v3672 = vpop.f32.mrb[0].mxu0
    %v3673 = vadd.f32 0.0, %v3672
    %v3674 = vpop.f32.mrb[0].mxu0
    %3675 = vmatprep.mubr.f32.mxu0 0.0
    %3676 = vmatmul.mubr.f32.gmra.mrb[0].mxu0 %v3597
    %v3677 = vpop.f32.mrb[0].mxu0
    %v3678 = vadd.f32 0.0, %v3677
    %v3679 = vpop.f32.mrb[0].mxu0
    %3680 = vdwg.mxu0
    %s3681 = scalar_lea.vmem %s6, 48
    %3682 = vst.msk [vmem:[%s3681] sm:$0xff] %vm400, %v3579
    %3683 = vst.msk [vmem:[%s3681 + $0x8] sm:$0xff] %vm400, %v3580
    %3684 = vst.msk [vmem:[%s3681 + $0x10] sm:$0x1] %vm407, %v3581
    %3688 = vrot.lane.b32.xlu0 %v3184, 8
    %v3689 = vpop.permute.xlu0 %3688
    %3690 = vrot.lane.b32.xlu0 %v3189, 8
    %v3691 = vpop.permute.xlu0 %3690
    %3692 = vrot.lane.b32.xlu0 %v3194, 8
    %v3693 = vpop.permute.xlu0 %3692
    %3700 = vrot.lane.b32.xlu0 %v3426, 16
    %v3701 = vpop.permute.xlu0 %3700
    %3702 = vrot.lane.b32.xlu0 %v3431, 16
    %v3703 = vpop.permute.xlu0 %3702
    %3704 = vrot.lane.b32.xlu0 %v3436, 16
    %v3705 = vpop.permute.xlu0 %3704
    %3712 = vrot.lane.b32.xlu0 %v3668, 24
    %v3713 = vpop.permute.xlu0 %3712
    %3714 = vrot.lane.b32.xlu0 %v3673, 24
    %v3715 = vpop.permute.xlu0 %3714
    %3716 = vrot.lane.b32.xlu0 %v3678, 24
    %v3717 = vpop.permute.xlu0 %3716
    %v3721 = vsel %vm304, %v2942, %v3689
    %v3722 = vsel %vm304, %v2947, %v3691
    %v3723 = vsel %vm304, %v2952, %v3693
    %v3724 = vsel %vm1302, %v3721, %v3701
    %v3725 = vsel %vm1302, %v3722, %v3703
    %v3726 = vsel %vm1302, %v3723, %v3705
    %v3727 = vsel %vm1306, %v3724, %v3713
    %v3728 = vsel %vm1306, %v3725, %v3715
    %v3729 = vsel %vm1306, %v3726, %v3717
    %v3731 = vsel %vm171, %v3727, 0
    %v3734 = vsel %vm171, %v3728, 0
    %v3737 = vsel %vm171, %v3729, 0
    %3739 = vmatprep.subr.mxu0 0.0
    %3740 = vmatpush1.msra.mxu0 %v2619
    %3741 = vmatprep.subr.mxu0 0.0
    %3742 = vmatpush1.msra.mxu0 %v2620
    %3743 = vmatprep.subr.mxu0 0.0
    %3744 = vmatpush1.msra.mxu0 %v2621
    %3745 = vmatprep.subr.mxu0 0.0
    %3746 = vmatpush1.msra.mxu0 %v2622
    %3747 = vmatprep.subr.mxu0 0.0
    %3748 = vmatpush1.msra.mxu0 0.0
    %3749 = vmatprep.subr.mxu0 0.0
    %3750 = vmatpush1.msra.mxu0 0.0
    %3751 = vmatprep.subr.mxu0 0.0
    %3752 = vmatpush1.msra.mxu0 0.0
    %3753 = vmatprep.subr.mxu0 0.0
    %3754 = vmatpush1.msra.mxu0 0.0
    %3755 = vmatprep.subr.mxu0 0.0
    %3756 = vmatpush1.msra.mxu0 0.0
    %3757 = vmatprep.subr.mxu0 0.0
    %3758 = vmatpush1.msra.mxu0 0.0
    %3759 = vmatprep.subr.mxu0 0.0
    %3760 = vmatpush1.msra.mxu0 0.0
    %3761 = vmatprep.subr.mxu0 0.0
    %3762 = vmatpush1.msra.mxu0 0.0
    %3763 = vmatprep.subr.mxu0 0.0
    %3764 = vmatpush1.msra.mxu0 0.0
    %3765 = vmatprep.subr.mxu0 0.0
    %3766 = vmatpush1.msra.mxu0 0.0
    %3767 = vmatprep.subr.mxu0 0.0
    %3768 = vmatpush1.msra.mxu0 0.0
    %3769 = vmatprep.subr.mxu0 0.0
    %3770 = vmatpush1.msra.mxu0 0.0
    %3771 = vmatprep.subr.mxu0 0.0
    %3772 = vmatpush1.msra.mxu0 0.0
    %3773 = vmatprep.subr.mxu0 0.0
    %3774 = vmatpush1.msra.mxu0 0.0
    %3775 = vmatprep.subr.mxu0 0.0
    %3776 = vmatpush1.msra.mxu0 0.0
    %3777 = vmatprep.subr.mxu0 0.0
    %3778 = vmatpush1.msra.mxu0 0.0
    %3779 = vmatprep.subr.mxu0 0.0
    %3780 = vmatpush1.msra.mxu0 0.0
    %3781 = vmatprep.subr.mxu0 0.0
    %3782 = vmatpush1.msra.mxu0 0.0
    %3783 = vmatprep.subr.mxu0 0.0
    %3784 = vmatpush1.msra.mxu0 0.0
    %3785 = vmatprep.subr.mxu0 0.0
    %3786 = vmatpush1.msra.mxu0 0.0
    %3787 = vmatprep.subr.mxu0 0.0
    %3788 = vmatpush1.msra.mxu0 0.0
    %3789 = vmatprep.subr.mxu0 0.0
    %3790 = vmatpush1.msra.mxu0 0.0
    %3791 = vmatprep.subr.mxu0 0.0
    %3792 = vmatpush1.msra.mxu0 0.0
    %3793 = vmatprep.subr.mxu0 0.0
    %3794 = vmatpush1.msra.mxu0 0.0
    %3795 = vmatprep.subr.mxu0 0.0
    %3796 = vmatpush1.msra.mxu0 0.0
    %3797 = vmatprep.subr.mxu0 0.0
    %3798 = vmatpush1.msra.mxu0 0.0
    %3799 = vmatprep.subr.mxu0 0.0
    %3800 = vmatpush1.msra.mxu0 0.0
    %3801 = vmatprep.subr.mxu0 0.0
    %3802 = vmatpush1.msra.mxu0 0.0
    %3803 = vmatprep.mubr.f32.mxu0 0.0
    %3804 = vmatmul.mubr.f32.gmra.mrb[0].mxu0 %v3731
    %v3805 = vpop.f32.mrb[0].mxu0
    %v3806 = vadd.f32 0.0, %v3805
    %v3807 = vpop.f32.mrb[0].mxu0
    %3808 = vmatprep.mubr.f32.mxu0 0.0
    %3809 = vmatmul.mubr.f32.gmra.mrb[0].mxu0 %v3734
    %v3810 = vpop.f32.mrb[0].mxu0
    %v3811 = vadd.f32 0.0, %v3810
    %v3812 = vpop.f32.mrb[0].mxu0
    %3813 = vmatprep.mubr.f32.mxu0 0.0
    %3814 = vmatmul.mubr.f32.gmra.mrb[0].mxu0 %v3737
    %v3815 = vpop.f32.mrb[0].mxu0
    %v3816 = vadd.f32 0.0, %v3815
    %v3817 = vpop.f32.mrb[0].mxu0
    %3818 = vdwg.mxu0
    %v3819 = vadd.f32 %v2623, %v3806
    %v3820 = vadd.f32 %v2624, %v3811
    %v3821 = vadd.f32 %v2625, %v3816
    %v3822 = vlaneseq
    %v3823 = vshrl.u32 %v3822, 7
    %v3824 = vsub.s32 6, %v3823
    %v3825 = vrot.slane %v25, %v3824
    %v3826 = vadd.f32 %v3819, %v3825
    %v3827 = vadd.f32 %v3820, %v3825
    %v3828 = vadd.f32 %v3821, %v3825
    %3829 = vst.msk [vmem:[#allocation2] sm:$0xff] %vm171, %v3826
    %3830 = vst.msk [vmem:[#allocation2 + $0x8] sm:$0xff] %vm171, %v3827
    %3831 = vst.msk [vmem:[#allocation2 + $0x10] sm:$0x1] %vm174, %v3828
    %v3832 = vld [vmem:[%s187] sm:$0xff]
    %v3833 = vld [vmem:[%s187 + $0x8] sm:$0xff]
    %v3834 = vld [vmem:[%s187 + $0x10] sm:$0x1]
    %v3836 = vsel %vm171, %v3832, 0
    %v3839 = vsel %vm171, %v3833, 0
    %v3842 = vsel %vm171, %v3834, 0
    %3844 = vmatprep.subr.mxu0 0.0
    %3845 = vmatpush1.msra.mxu0 %v2614
    %3846 = vmatprep.subr.mxu0 0.0
    %3847 = vmatpush1.msra.mxu0 %v2615
    %3848 = vmatprep.subr.mxu0 0.0
    %3849 = vmatpush1.msra.mxu0 %v2616
    %3850 = vmatprep.subr.mxu0 0.0
    %3851 = vmatpush1.msra.mxu0 %v2617
    %3852 = vmatprep.subr.mxu0 0.0
    %3853 = vmatpush1.msra.mxu0 0.0
    %3854 = vmatprep.subr.mxu0 0.0
    %3855 = vmatpush1.msra.mxu0 0.0
    %3856 = vmatprep.subr.mxu0 0.0
    %3857 = vmatpush1.msra.mxu0 0.0
    %3858 = vmatprep.subr.mxu0 0.0
    %3859 = vmatpush1.msra.mxu0 0.0
    %3860 = vmatprep.subr.mxu0 0.0
    %3861 = vmatpush1.msra.mxu0 0.0
    %3862 = vmatprep.subr.mxu0 0.0
    %3863 = vmatpush1.msra.mxu0 0.0
    %3864 = vmatprep.subr.mxu0 0.0
    %3865 = vmatpush1.msra.mxu0 0.0
    %3866 = vmatprep.subr.mxu0 0.0
    %3867 = vmatpush1.msra.mxu0 0.0
    %3868 = vmatprep.subr.mxu0 0.0
    %3869 = vmatpush1.msra.mxu0 0.0
    %3870 = vmatprep.subr.mxu0 0.0
    %3871 = vmatpush1.msra.mxu0 0.0
    %3872 = vmatprep.subr.mxu0 0.0
    %3873 = vmatpush1.msra.mxu0 0.0
    %3874 = vmatprep.subr.mxu0 0.0
    %3875 = vmatpush1.msra.mxu0 0.0
    %3876 = vmatprep.subr.mxu0 0.0
    %3877 = vmatpush1.msra.mxu0 0.0
    %3878 = vmatprep.subr.mxu0 0.0
    %3879 = vmatpush1.msra.mxu0 0.0
    %3880 = vmatprep.subr.mxu0 0.0
    %3881 = vmatpush1.msra.mxu0 0.0
    %3882 = vmatprep.subr.mxu0 0.0
    %3883 = vmatpush1.msra.mxu0 0.0
    %3884 = vmatprep.subr.mxu0 0.0
    %3885 = vmatpush1.msra.mxu0 0.0
    %3886 = vmatprep.subr.mxu0 0.0
    %3887 = vmatpush1.msra.mxu0 0.0
    %3888 = vmatprep.subr.mxu0 0.0
    %3889 = vmatpush1.msra.mxu0 0.0
    %3890 = vmatprep.subr.mxu0 0.0
    %3891 = vmatpush1.msra.mxu0 0.0
    %3892 = vmatprep.subr.mxu0 0.0
    %3893 = vmatpush1.msra.mxu0 0.0
    %3894 = vmatprep.subr.mxu0 0.0
    %3895 = vmatpush1.msra.mxu0 0.0
    %3896 = vmatprep.subr.mxu0 0.0
    %3897 = vmatpush1.msra.mxu0 0.0
    %3898 = vmatprep.subr.mxu0 0.0
    %3899 = vmatpush1.msra.mxu0 0.0
    %3900 = vmatprep.subr.mxu0 0.0
    %3901 = vmatpush1.msra.mxu0 0.0
    %3902 = vmatprep.subr.mxu0 0.0
    %3903 = vmatpush1.msra.mxu0 0.0
    %3904 = vmatprep.subr.mxu0 0.0
    %3905 = vmatpush1.msra.mxu0 0.0
    %3906 = vmatprep.subr.mxu0 0.0
    %3907 = vmatpush1.msra.mxu0 0.0
    %3908 = vmatprep.mubr.f32.mxu0 0.0
    %3909 = vmatmul.mubr.f32.gmra.mrb[0].mxu0 %v3836
    %v3910 = vpop.f32.mrb[0].mxu0
    %v3911 = vadd.f32 %v2629, %v3910
    %v3912 = vpop.f32.mrb[0].mxu0
    %3913 = vmatprep.mubr.f32.mxu0 0.0
    %3914 = vmatmul.mubr.f32.gmra.mrb[0].mxu0 %v3839
    %v3915 = vpop.f32.mrb[0].mxu0
    %v3916 = vadd.f32 %v2629, %v3915
    %v3917 = vpop.f32.mrb[0].mxu0
    %3918 = vmatprep.mubr.f32.mxu0 0.0
    %3919 = vmatmul.mubr.f32.gmra.mrb[0].mxu0 %v3842
    %v3920 = vpop.f32.mrb[0].mxu0
    %v3921 = vadd.f32 %v2629, %v3920
    %v3922 = vpop.f32.mrb[0].mxu0
    %3923 = vdwg.mxu0
    %3927 = vrot.lane.b32.xlu0 %v3911, 120
    %v3928 = vpop.permute.xlu0 %3927
    %3929 = vrot.lane.b32.xlu0 %v3916, 120
    %v3930 = vpop.permute.xlu0 %3929
    %3931 = vrot.lane.b32.xlu0 %v3921, 120
    %v3932 = vpop.permute.xlu0 %3931
    %v3933 = vsel %vm304, %v3911, 0
    %v3935 = vsel %vm304, %v3916, 0
    %v3937 = vsel %vm304, %v3921, 0
    %v3939 = vsel %vm304, %v3928, 0
    %v3941 = vsel %vm304, %v3930, 0
    %v3943 = vsel %vm304, %v3932, 0
    %3945 = vmatprep.subr.mxu0 0.0
    %3946 = vmatpush1.xpose.msra.mxu0 %v3939
    %3947 = vmatprep.subr.mxu0 0.0
    %3948 = vmatpush1.xpose.msra.mxu0 %v3941
    %3949 = vmatprep.subr.mxu0 0.0
    %3950 = vmatpush1.xpose.msra.mxu0 %v3943
    %3951 = vmatprep.subr.mxu0 0.0
    %3952 = vmatpush1.xpose.msra.mxu0 0.0
    %3953 = vmatprep.subr.mxu0 0.0
    %3954 = vmatpush1.xpose.msra.mxu0 0.0
    %3955 = vmatprep.subr.mxu0 0.0
    %3956 = vmatpush1.xpose.msra.mxu0 0.0
    %3957 = vmatprep.subr.mxu0 0.0
    %3958 = vmatpush1.xpose.msra.mxu0 0.0
    %3959 = vmatprep.subr.mxu0 0.0
    %3960 = vmatpush1.xpose.msra.mxu0 0.0
    %3961 = vmatprep.subr.mxu0 0.0
    %3962 = vmatpush1.xpose.msra.mxu0 0.0
    %3963 = vmatprep.subr.mxu0 0.0
    %3964 = vmatpush1.xpose.msra.mxu0 0.0
    %3965 = vmatprep.subr.mxu0 0.0
    %3966 = vmatpush1.xpose.msra.mxu0 0.0
    %3967 = vmatprep.subr.mxu0 0.0
    %3968 = vmatpush1.xpose.msra.mxu0 0.0
    %3969 = vmatprep.subr.mxu0 0.0
    %3970 = vmatpush1.xpose.msra.mxu0 0.0
    %3971 = vmatprep.subr.mxu0 0.0
    %3972 = vmatpush1.xpose.msra.mxu0 0.0
    %3973 = vmatprep.subr.mxu0 0.0
    %3974 = vmatpush1.xpose.msra.mxu0 0.0
    %3975 = vmatprep.subr.mxu0 0.0
    %3976 = vmatpush1.xpose.msra.mxu0 0.0
    %3977 = vmatprep.subr.mxu0 0.0
    %3978 = vmatpush1.xpose.msra.mxu0 0.0
    %3979 = vmatprep.subr.mxu0 0.0
    %3980 = vmatpush1.xpose.msra.mxu0 0.0
    %3981 = vmatprep.subr.mxu0 0.0
    %3982 = vmatpush1.xpose.msra.mxu0 0.0
    %3983 = vmatprep.subr.mxu0 0.0
    %3984 = vmatpush1.xpose.msra.mxu0 0.0
    %3985 = vmatprep.subr.mxu0 0.0
    %3986 = vmatpush1.xpose.msra.mxu0 0.0
    %3987 = vmatprep.subr.mxu0 0.0
    %3988 = vmatpush1.xpose.msra.mxu0 0.0
    %3989 = vmatprep.subr.mxu0 0.0
    %3990 = vmatpush1.xpose.msra.mxu0 0.0
    %3991 = vmatprep.subr.mxu0 0.0
    %3992 = vmatpush1.xpose.msra.mxu0 0.0
    %3993 = vmatprep.subr.mxu0 0.0
    %3994 = vmatpush1.xpose.msra.mxu0 0.0
    %3995 = vmatprep.subr.mxu0 0.0
    %3996 = vmatpush1.xpose.msra.mxu0 0.0
    %3997 = vmatprep.subr.mxu0 0.0
    %3998 = vmatpush1.xpose.msra.mxu0 0.0
    %3999 = vmatprep.subr.mxu0 0.0
    %4000 = vmatpush1.xpose.msra.mxu0 0.0
    %4001 = vmatprep.subr.mxu0 0.0
    %4002 = vmatpush1.xpose.msra.mxu0 0.0
    %4003 = vmatprep.subr.mxu0 0.0
    %4004 = vmatpush1.xpose.msra.mxu0 0.0
    %4005 = vmatprep.subr.mxu0 0.0
    %4006 = vmatpush1.xpose.msra.mxu0 0.0
    %4007 = vmatprep.subr.mxu0 0.0
    %4008 = vmatpush1.xpose.msra.mxu0 0.0
    %4009 = vmatprep.mubr.f32.mxu0 0.0
    %4010 = vmatmul.mubr.f32.gmra.mrb[0].mxu0 %v3933
    %v4011 = vpop.f32.mrb[0].mxu0
    %v4012 = vadd.f32 0.0, %v4011
    %v4013 = vpop.f32.mrb[0].mxu0
    %4014 = vmatprep.mubr.f32.mxu0 0.0
    %4015 = vmatmul.mubr.f32.gmra.mrb[0].mxu0 %v3935
    %v4016 = vpop.f32.mrb[0].mxu0
    %v4017 = vadd.f32 0.0, %v4016
    %v4018 = vpop.f32.mrb[0].mxu0
    %4019 = vmatprep.mubr.f32.mxu0 0.0
    %4020 = vmatmul.mubr.f32.gmra.mrb[0].mxu0 %v3937
    %v4021 = vpop.f32.mrb[0].mxu0
    %v4022 = vadd.f32 0.0, %v4021
    %v4023 = vpop.f32.mrb[0].mxu0
    %4024 = vdwg.mxu0
    %v4025 = vmul.f32 %v4012, 0.35355338
    %v4026 = vmul.f32 %v4017, 0.35355338
    %v4027 = vmul.f32 %v4022, 0.35355338
    %v4028 = vsel %vm400, %v4025, -inf
    %4029 = vmax.xlane.f32.xlu0 %v4028
    %v4030 = vpop.xlane.xlu0 %4029
    %v4031 = vsel %vm400, %v4026, -inf
    %4032 = vmax.xlane.f32.xlu0 %v4031
    %v4033 = vpop.xlane.xlu0 %4032
    %v4034 = vsel %vm407, %v4027, -inf
    %4035 = vmax.xlane.f32.xlu0 %v4034
    %v4036 = vpop.xlane.xlu0 %4035
    %v4037 = vsub.f32 %v4025, %v4030
    %v4038 = vsub.f32 %v4026, %v4033
    %v4039 = vsub.f32 %v4027, %v4036
    %v4040 = vmul.f32 %v4037, 1.442695
    %v4041 = vpow.pop %v4040
    %v4042 = vmul.f32 %v4038, 1.442695
    %v4043 = vpow.pop %v4042
    %v4044 = vmul.f32 %v4039, 1.442695
    %v4045 = vpow.pop %v4044
    %v4046 = vsel %vm400, %v4041, 0.0
    %4047 = vadd.xlane.f32.xlu0 %v4046
    %v4048 = vpop.xlane.xlu0 %4047
    %v4049 = vsel %vm400, %v4043, 0.0
    %4050 = vadd.xlane.f32.xlu0 %v4049
    %v4051 = vpop.xlane.xlu0 %4050
    %v4052 = vsel %vm407, %v4045, 0.0
    %4053 = vadd.xlane.f32.xlu0 %v4052
    %v4054 = vpop.xlane.xlu0 %4053
    %v4055 = vrcp.pop %v4048
    %v4056 = vrcp.pop %v4051
    %v4057 = vrcp.pop %v4054
    %v4058 = vmul.f32 %v4041, %v4055
    %v4059 = vmul.f32 %v4043, %v4056
    %v4060 = vmul.f32 %v4045, %v4057
    %4061 = vrot.lane.b32.xlu0 %v3911, 112
    %v4062 = vpop.permute.xlu0 %4061
    %4063 = vrot.lane.b32.xlu0 %v3916, 112
    %v4064 = vpop.permute.xlu0 %4063
    %4065 = vrot.lane.b32.xlu0 %v3921, 112
    %v4066 = vpop.permute.xlu0 %4065
    %v4070 = vsel %vm400, %v4058, 0
    %v4073 = vsel %vm400, %v4059, 0
    %v4076 = vsel %vm400, %v4060, 0
    %v4078 = vsel %vm163, %v4066, 0
    %4080 = vmatprep.subr.mxu0 0.0
    %4081 = vmatpush1.msra.mxu0 %v4062
    %4082 = vmatprep.subr.mxu0 0.0
    %4083 = vmatpush1.msra.mxu0 %v4064
    %4084 = vmatprep.subr.mxu0 0.0
    %4085 = vmatpush1.msra.mxu0 %v4078
    %4086 = vmatprep.subr.mxu0 0.0
    %4087 = vmatpush1.msra.mxu0 0.0
    %4088 = vmatprep.subr.mxu0 0.0
    %4089 = vmatpush1.msra.mxu0 0.0
    %4090 = vmatprep.subr.mxu0 0.0
    %4091 = vmatpush1.msra.mxu0 0.0
    %4092 = vmatprep.subr.mxu0 0.0
    %4093 = vmatpush1.msra.mxu0 0.0
    %4094 = vmatprep.subr.mxu0 0.0
    %4095 = vmatpush1.msra.mxu0 0.0
    %4096 = vmatprep.subr.mxu0 0.0
    %4097 = vmatpush1.msra.mxu0 0.0
    %4098 = vmatprep.subr.mxu0 0.0
    %4099 = vmatpush1.msra.mxu0 0.0
    %4100 = vmatprep.subr.mxu0 0.0
    %4101 = vmatpush1.msra.mxu0 0.0
    %4102 = vmatprep.subr.mxu0 0.0
    %4103 = vmatpush1.msra.mxu0 0.0
    %4104 = vmatprep.subr.mxu0 0.0
    %4105 = vmatpush1.msra.mxu0 0.0
    %4106 = vmatprep.subr.mxu0 0.0
    %4107 = vmatpush1.msra.mxu0 0.0
    %4108 = vmatprep.subr.mxu0 0.0
    %4109 = vmatpush1.msra.mxu0 0.0
    %4110 = vmatprep.subr.mxu0 0.0
    %4111 = vmatpush1.msra.mxu0 0.0
    %4112 = vmatprep.subr.mxu0 0.0
    %4113 = vmatpush1.msra.mxu0 0.0
    %4114 = vmatprep.subr.mxu0 0.0
    %4115 = vmatpush1.msra.mxu0 0.0
    %4116 = vmatprep.subr.mxu0 0.0
    %4117 = vmatpush1.msra.mxu0 0.0
    %4118 = vmatprep.subr.mxu0 0.0
    %4119 = vmatpush1.msra.mxu0 0.0
    %4120 = vmatprep.subr.mxu0 0.0
    %4121 = vmatpush1.msra.mxu0 0.0
    %4122 = vmatprep.subr.mxu0 0.0
    %4123 = vmatpush1.msra.mxu0 0.0
    %4124 = vmatprep.subr.mxu0 0.0
    %4125 = vmatpush1.msra.mxu0 0.0
    %4126 = vmatprep.subr.mxu0 0.0
    %4127 = vmatpush1.msra.mxu0 0.0
    %4128 = vmatprep.subr.mxu0 0.0
    %4129 = vmatpush1.msra.mxu0 0.0
    %4130 = vmatprep.subr.mxu0 0.0
    %4131 = vmatpush1.msra.mxu0 0.0
    %4132 = vmatprep.subr.mxu0 0.0
    %4133 = vmatpush1.msra.mxu0 0.0
    %4134 = vmatprep.subr.mxu0 0.0
    %4135 = vmatpush1.msra.mxu0 0.0
    %4136 = vmatprep.subr.mxu0 0.0
    %4137 = vmatpush1.msra.mxu0 0.0
    %4138 = vmatprep.subr.mxu0 0.0
    %4139 = vmatpush1.msra.mxu0 0.0
    %4140 = vmatprep.subr.mxu0 0.0
    %4141 = vmatpush1.msra.mxu0 0.0
    %4142 = vmatprep.subr.mxu0 0.0
    %4143 = vmatpush1.msra.mxu0 0.0
    %4144 = vmatprep.mubr.f32.mxu0 0.0
    %4145 = vmatmul.mubr.f32.gmra.mrb[0].mxu0 %v4070
    %v4146 = vpop.f32.mrb[0].mxu0
    %v4147 = vadd.f32 0.0, %v4146
    %v4148 = vpop.f32.mrb[0].mxu0
    %4149 = vmatprep.mubr.f32.mxu0 0.0
    %4150 = vmatmul.mubr.f32.gmra.mrb[0].mxu0 %v4073
    %v4151 = vpop.f32.mrb[0].mxu0
    %v4152 = vadd.f32 0.0, %v4151
    %v4153 = vpop.f32.mrb[0].mxu0
    %4154 = vmatprep.mubr.f32.mxu0 0.0
    %4155 = vmatmul.mubr.f32.gmra.mrb[0].mxu0 %v4076
    %v4156 = vpop.f32.mrb[0].mxu0
    %v4157 = vadd.f32 0.0, %v4156
    %v4158 = vpop.f32.mrb[0].mxu0
    %4159 = vdwg.mxu0
    %4160 = vrot.lane.b32.xlu0 %v3911, 104
    %v4161 = vpop.permute.xlu0 %4160
    %4162 = vrot.lane.b32.xlu0 %v3916, 104
    %v4163 = vpop.permute.xlu0 %4162
    %4164 = vrot.lane.b32.xlu0 %v3921, 104
    %v4165 = vpop.permute.xlu0 %4164
    %4166 = vrot.lane.b32.xlu0 %v3911, 96
    %v4167 = vpop.permute.xlu0 %4166
    %4168 = vrot.lane.b32.xlu0 %v3916, 96
    %v4169 = vpop.permute.xlu0 %4168
    %4170 = vrot.lane.b32.xlu0 %v3921, 96
    %v4171 = vpop.permute.xlu0 %4170
    %v4172 = vsel %vm304, %v4161, 0
    %v4174 = vsel %vm304, %v4163, 0
    %v4176 = vsel %vm304, %v4165, 0
    %v4178 = vsel %vm304, %v4167, 0
    %v4180 = vsel %vm304, %v4169, 0
    %v4182 = vsel %vm304, %v4171, 0
    %4184 = vmatprep.subr.mxu0 0.0
    %4185 = vmatpush1.xpose.msra.mxu0 %v4178
    %4186 = vmatprep.subr.mxu0 0.0
    %4187 = vmatpush1.xpose.msra.mxu0 %v4180
    %4188 = vmatprep.subr.mxu0 0.0
    %4189 = vmatpush1.xpose.msra.mxu0 %v4182
    %4190 = vmatprep.subr.mxu0 0.0
    %4191 = vmatpush1.xpose.msra.mxu0 0.0
    %4192 = vmatprep.subr.mxu0 0.0
    %4193 = vmatpush1.xpose.msra.mxu0 0.0
    %4194 = vmatprep.subr.mxu0 0.0
    %4195 = vmatpush1.xpose.msra.mxu0 0.0
    %4196 = vmatprep.subr.mxu0 0.0
    %4197 = vmatpush1.xpose.msra.mxu0 0.0
    %4198 = vmatprep.subr.mxu0 0.0
    %4199 = vmatpush1.xpose.msra.mxu0 0.0
    %4200 = vmatprep.subr.mxu0 0.0
    %4201 = vmatpush1.xpose.msra.mxu0 0.0
    %4202 = vmatprep.subr.mxu0 0.0
    %4203 = vmatpush1.xpose.msra.mxu0 0.0
    %4204 = vmatprep.subr.mxu0 0.0
    %4205 = vmatpush1.xpose.msra.mxu0 0.0
    %4206 = vmatprep.subr.mxu0 0.0
    %4207 = vmatpush1.xpose.msra.mxu0 0.0
    %4208 = vmatprep.subr.mxu0 0.0
    %4209 = vmatpush1.xpose.msra.mxu0 0.0
    %4210 = vmatprep.subr.mxu0 0.0
    %4211 = vmatpush1.xpose.msra.mxu0 0.0
    %4212 = vmatprep.subr.mxu0 0.0
    %4213 = vmatpush1.xpose.msra.mxu0 0.0
    %4214 = vmatprep.subr.mxu0 0.0
    %4215 = vmatpush1.xpose.msra.mxu0 0.0
    %4216 = vmatprep.subr.mxu0 0.0
    %4217 = vmatpush1.xpose.msra.mxu0 0.0
    %4218 = vmatprep.subr.mxu0 0.0
    %4219 = vmatpush1.xpose.msra.mxu0 0.0
    %4220 = vmatprep.subr.mxu0 0.0
    %4221 = vmatpush1.xpose.msra.mxu0 0.0
    %4222 = vmatprep.subr.mxu0 0.0
    %4223 = vmatpush1.xpose.msra.mxu0 0.0
    %4224 = vmatprep.subr.mxu0 0.0
    %4225 = vmatpush1.xpose.msra.mxu0 0.0
    %4226 = vmatprep.subr.mxu0 0.0
    %4227 = vmatpush1.xpose.msra.mxu0 0.0
    %4228 = vmatprep.subr.mxu0 0.0
    %4229 = vmatpush1.xpose.msra.mxu0 0.0
    %4230 = vmatprep.subr.mxu0 0.0
    %4231 = vmatpush1.xpose.msra.mxu0 0.0
    %4232 = vmatprep.subr.mxu0 0.0
    %4233 = vmatpush1.xpose.msra.mxu0 0.0
    %4234 = vmatprep.subr.mxu0 0.0
    %4235 = vmatpush1.xpose.msra.mxu0 0.0
    %4236 = vmatprep.subr.mxu0 0.0
    %4237 = vmatpush1.xpose.msra.mxu0 0.0
    %4238 = vmatprep.subr.mxu0 0.0
    %4239 = vmatpush1.xpose.msra.mxu0 0.0
    %4240 = vmatprep.subr.mxu0 0.0
    %4241 = vmatpush1.xpose.msra.mxu0 0.0
    %4242 = vmatprep.subr.mxu0 0.0
    %4243 = vmatpush1.xpose.msra.mxu0 0.0
    %4244 = vmatprep.subr.mxu0 0.0
    %4245 = vmatpush1.xpose.msra.mxu0 0.0
    %4246 = vmatprep.subr.mxu0 0.0
    %4247 = vmatpush1.xpose.msra.mxu0 0.0
    %4248 = vmatprep.mubr.f32.mxu0 0.0
    %4249 = vmatmul.mubr.f32.gmra.mrb[0].mxu0 %v4172
    %v4250 = vpop.f32.mrb[0].mxu0
    %v4251 = vadd.f32 0.0, %v4250
    %v4252 = vpop.f32.mrb[0].mxu0
    %4253 = vmatprep.mubr.f32.mxu0 0.0
    %4254 = vmatmul.mubr.f32.gmra.mrb[0].mxu0 %v4174
    %v4255 = vpop.f32.mrb[0].mxu0
    %v4256 = vadd.f32 0.0, %v4255
    %v4257 = vpop.f32.mrb[0].mxu0
    %4258 = vmatprep.mubr.f32.mxu0 0.0
    %4259 = vmatmul.mubr.f32.gmra.mrb[0].mxu0 %v4176
    %v4260 = vpop.f32.mrb[0].mxu0
    %v4261 = vadd.f32 0.0, %v4260
    %v4262 = vpop.f32.mrb[0].mxu0
    %4263 = vdwg.mxu0
    %v4264 = vmul.f32 %v4251, 0.35355338
    %v4265 = vmul.f32 %v4256, 0.35355338
    %v4266 = vmul.f32 %v4261, 0.35355338
    %v4267 = vsel %vm400, %v4264, -inf
    %4268 = vmax.xlane.f32.xlu0 %v4267
    %v4269 = vpop.xlane.xlu0 %4268
    %v4270 = vsel %vm400, %v4265, -inf
    %4271 = vmax.xlane.f32.xlu0 %v4270
    %v4272 = vpop.xlane.xlu0 %4271
    %v4273 = vsel %vm407, %v4266, -inf
    %4274 = vmax.xlane.f32.xlu0 %v4273
    %v4275 = vpop.xlane.xlu0 %4274
    %v4276 = vsub.f32 %v4264, %v4269
    %v4277 = vsub.f32 %v4265, %v4272
    %v4278 = vsub.f32 %v4266, %v4275
    %v4279 = vmul.f32 %v4276, 1.442695
    %v4280 = vpow.pop %v4279
    %v4281 = vmul.f32 %v4277, 1.442695
    %v4282 = vpow.pop %v4281
    %v4283 = vmul.f32 %v4278, 1.442695
    %v4284 = vpow.pop %v4283
    %v4285 = vsel %vm400, %v4280, 0.0
    %4286 = vadd.xlane.f32.xlu0 %v4285
    %v4287 = vpop.xlane.xlu0 %4286
    %v4288 = vsel %vm400, %v4282, 0.0
    %4289 = vadd.xlane.f32.xlu0 %v4288
    %v4290 = vpop.xlane.xlu0 %4289
    %v4291 = vsel %vm407, %v4284, 0.0
    %4292 = vadd.xlane.f32.xlu0 %v4291
    %v4293 = vpop.xlane.xlu0 %4292
    %v4294 = vrcp.pop %v4287
    %v4295 = vrcp.pop %v4290
    %v4296 = vrcp.pop %v4293
    %v4297 = vmul.f32 %v4280, %v4294
    %v4298 = vmul.f32 %v4282, %v4295
    %v4299 = vmul.f32 %v4284, %v4296
    %v4300 = vmax.f32 %v4058, %v4297
    %v4301 = vmax.f32 %v4059, %v4298
    %v4302 = vmax.f32 %v4060, %v4299
    %4303 = vrot.lane.b32.xlu0 %v3911, 88
    %v4304 = vpop.permute.xlu0 %4303
    %4305 = vrot.lane.b32.xlu0 %v3916, 88
    %v4306 = vpop.permute.xlu0 %4305
    %4307 = vrot.lane.b32.xlu0 %v3921, 88
    %v4308 = vpop.permute.xlu0 %4307
    %v4312 = vsel %vm400, %v4297, 0
    %v4315 = vsel %vm400, %v4298, 0
    %v4318 = vsel %vm400, %v4299, 0
    %v4320 = vsel %vm163, %v4308, 0
    %4322 = vmatprep.subr.mxu0 0.0
    %4323 = vmatpush1.msra.mxu0 %v4304
    %4324 = vmatprep.subr.mxu0 0.0
    %4325 = vmatpush1.msra.mxu0 %v4306
    %4326 = vmatprep.subr.mxu0 0.0
    %4327 = vmatpush1.msra.mxu0 %v4320
    %4328 = vmatprep.subr.mxu0 0.0
    %4329 = vmatpush1.msra.mxu0 0.0
    %4330 = vmatprep.subr.mxu0 0.0
    %4331 = vmatpush1.msra.mxu0 0.0
    %4332 = vmatprep.subr.mxu0 0.0
    %4333 = vmatpush1.msra.mxu0 0.0
    %4334 = vmatprep.subr.mxu0 0.0
    %4335 = vmatpush1.msra.mxu0 0.0
    %4336 = vmatprep.subr.mxu0 0.0
    %4337 = vmatpush1.msra.mxu0 0.0
    %4338 = vmatprep.subr.mxu0 0.0
    %4339 = vmatpush1.msra.mxu0 0.0
    %4340 = vmatprep.subr.mxu0 0.0
    %4341 = vmatpush1.msra.mxu0 0.0
    %4342 = vmatprep.subr.mxu0 0.0
    %4343 = vmatpush1.msra.mxu0 0.0
    %4344 = vmatprep.subr.mxu0 0.0
    %4345 = vmatpush1.msra.mxu0 0.0
    %4346 = vmatprep.subr.mxu0 0.0
    %4347 = vmatpush1.msra.mxu0 0.0
    %4348 = vmatprep.subr.mxu0 0.0
    %4349 = vmatpush1.msra.mxu0 0.0
    %4350 = vmatprep.subr.mxu0 0.0
    %4351 = vmatpush1.msra.mxu0 0.0
    %4352 = vmatprep.subr.mxu0 0.0
    %4353 = vmatpush1.msra.mxu0 0.0
    %4354 = vmatprep.subr.mxu0 0.0
    %4355 = vmatpush1.msra.mxu0 0.0
    %4356 = vmatprep.subr.mxu0 0.0
    %4357 = vmatpush1.msra.mxu0 0.0
    %4358 = vmatprep.subr.mxu0 0.0
    %4359 = vmatpush1.msra.mxu0 0.0
    %4360 = vmatprep.subr.mxu0 0.0
    %4361 = vmatpush1.msra.mxu0 0.0
    %4362 = vmatprep.subr.mxu0 0.0
    %4363 = vmatpush1.msra.mxu0 0.0
    %4364 = vmatprep.subr.mxu0 0.0
    %4365 = vmatpush1.msra.mxu0 0.0
    %4366 = vmatprep.subr.mxu0 0.0
    %4367 = vmatpush1.msra.mxu0 0.0
    %4368 = vmatprep.subr.mxu0 0.0
    %4369 = vmatpush1.msra.mxu0 0.0
    %4370 = vmatprep.subr.mxu0 0.0
    %4371 = vmatpush1.msra.mxu0 0.0
    %4372 = vmatprep.subr.mxu0 0.0
    %4373 = vmatpush1.msra.mxu0 0.0
    %4374 = vmatprep.subr.mxu0 0.0
    %4375 = vmatpush1.msra.mxu0 0.0
    %4376 = vmatprep.subr.mxu0 0.0
    %4377 = vmatpush1.msra.mxu0 0.0
    %4378 = vmatprep.subr.mxu0 0.0
    %4379 = vmatpush1.msra.mxu0 0.0
    %4380 = vmatprep.subr.mxu0 0.0
    %4381 = vmatpush1.msra.mxu0 0.0
    %4382 = vmatprep.subr.mxu0 0.0
    %4383 = vmatpush1.msra.mxu0 0.0
    %4384 = vmatprep.subr.mxu0 0.0
    %4385 = vmatpush1.msra.mxu0 0.0
    %4386 = vmatprep.mubr.f32.mxu0 0.0
    %4387 = vmatmul.mubr.f32.gmra.mrb[0].mxu0 %v4312
    %v4388 = vpop.f32.mrb[0].mxu0
    %v4389 = vadd.f32 0.0, %v4388
    %v4390 = vpop.f32.mrb[0].mxu0
    %4391 = vmatprep.mubr.f32.mxu0 0.0
    %4392 = vmatmul.mubr.f32.gmra.mrb[0].mxu0 %v4315
    %v4393 = vpop.f32.mrb[0].mxu0
    %v4394 = vadd.f32 0.0, %v4393
    %v4395 = vpop.f32.mrb[0].mxu0
    %4396 = vmatprep.mubr.f32.mxu0 0.0
    %4397 = vmatmul.mubr.f32.gmra.mrb[0].mxu0 %v4318
    %v4398 = vpop.f32.mrb[0].mxu0
    %v4399 = vadd.f32 0.0, %v4398
    %v4400 = vpop.f32.mrb[0].mxu0
    %4401 = vdwg.mxu0
    %4402 = vrot.lane.b32.xlu0 %v3911, 80
    %v4403 = vpop.permute.xlu0 %4402
    %4404 = vrot.lane.b32.xlu0 %v3916, 80
    %v4405 = vpop.permute.xlu0 %4404
    %4406 = vrot.lane.b32.xlu0 %v3921, 80
    %v4407 = vpop.permute.xlu0 %4406
    %4408 = vrot.lane.b32.xlu0 %v3911, 72
    %v4409 = vpop.permute.xlu0 %4408
    %4410 = vrot.lane.b32.xlu0 %v3916, 72
    %v4411 = vpop.permute.xlu0 %4410
    %4412 = vrot.lane.b32.xlu0 %v3921, 72
    %v4413 = vpop.permute.xlu0 %4412
    %v4414 = vsel %vm304, %v4403, 0
    %v4416 = vsel %vm304, %v4405, 0
    %v4418 = vsel %vm304, %v4407, 0
    %v4420 = vsel %vm304, %v4409, 0
    %v4422 = vsel %vm304, %v4411, 0
    %v4424 = vsel %vm304, %v4413, 0
    %4426 = vmatprep.subr.mxu0 0.0
    %4427 = vmatpush1.xpose.msra.mxu0 %v4420
    %4428 = vmatprep.subr.mxu0 0.0
    %4429 = vmatpush1.xpose.msra.mxu0 %v4422
    %4430 = vmatprep.subr.mxu0 0.0
    %4431 = vmatpush1.xpose.msra.mxu0 %v4424
    %4432 = vmatprep.subr.mxu0 0.0
    %4433 = vmatpush1.xpose.msra.mxu0 0.0
    %4434 = vmatprep.subr.mxu0 0.0
    %4435 = vmatpush1.xpose.msra.mxu0 0.0
    %4436 = vmatprep.subr.mxu0 0.0
    %4437 = vmatpush1.xpose.msra.mxu0 0.0
    %4438 = vmatprep.subr.mxu0 0.0
    %4439 = vmatpush1.xpose.msra.mxu0 0.0
    %4440 = vmatprep.subr.mxu0 0.0
    %4441 = vmatpush1.xpose.msra.mxu0 0.0
    %4442 = vmatprep.subr.mxu0 0.0
    %4443 = vmatpush1.xpose.msra.mxu0 0.0
    %4444 = vmatprep.subr.mxu0 0.0
    %4445 = vmatpush1.xpose.msra.mxu0 0.0
    %4446 = vmatprep.subr.mxu0 0.0
    %4447 = vmatpush1.xpose.msra.mxu0 0.0
    %4448 = vmatprep.subr.mxu0 0.0
    %4449 = vmatpush1.xpose.msra.mxu0 0.0
    %4450 = vmatprep.subr.mxu0 0.0
    %4451 = vmatpush1.xpose.msra.mxu0 0.0
    %4452 = vmatprep.subr.mxu0 0.0
    %4453 = vmatpush1.xpose.msra.mxu0 0.0
    %4454 = vmatprep.subr.mxu0 0.0
    %4455 = vmatpush1.xpose.msra.mxu0 0.0
    %4456 = vmatprep.subr.mxu0 0.0
    %4457 = vmatpush1.xpose.msra.mxu0 0.0
    %4458 = vmatprep.subr.mxu0 0.0
    %4459 = vmatpush1.xpose.msra.mxu0 0.0
    %4460 = vmatprep.subr.mxu0 0.0
    %4461 = vmatpush1.xpose.msra.mxu0 0.0
    %4462 = vmatprep.subr.mxu0 0.0
    %4463 = vmatpush1.xpose.msra.mxu0 0.0
    %4464 = vmatprep.subr.mxu0 0.0
    %4465 = vmatpush1.xpose.msra.mxu0 0.0
    %4466 = vmatprep.subr.mxu0 0.0
    %4467 = vmatpush1.xpose.msra.mxu0 0.0
    %4468 = vmatprep.subr.mxu0 0.0
    %4469 = vmatpush1.xpose.msra.mxu0 0.0
    %4470 = vmatprep.subr.mxu0 0.0
    %4471 = vmatpush1.xpose.msra.mxu0 0.0
    %4472 = vmatprep.subr.mxu0 0.0
    %4473 = vmatpush1.xpose.msra.mxu0 0.0
    %4474 = vmatprep.subr.mxu0 0.0
    %4475 = vmatpush1.xpose.msra.mxu0 0.0
    %4476 = vmatprep.subr.mxu0 0.0
    %4477 = vmatpush1.xpose.msra.mxu0 0.0
    %4478 = vmatprep.subr.mxu0 0.0
    %4479 = vmatpush1.xpose.msra.mxu0 0.0
    %4480 = vmatprep.subr.mxu0 0.0
    %4481 = vmatpush1.xpose.msra.mxu0 0.0
    %4482 = vmatprep.subr.mxu0 0.0
    %4483 = vmatpush1.xpose.msra.mxu0 0.0
    %4484 = vmatprep.subr.mxu0 0.0
    %4485 = vmatpush1.xpose.msra.mxu0 0.0
    %4486 = vmatprep.subr.mxu0 0.0
    %4487 = vmatpush1.xpose.msra.mxu0 0.0
    %4488 = vmatprep.subr.mxu0 0.0
    %4489 = vmatpush1.xpose.msra.mxu0 0.0
    %4490 = vmatprep.mubr.f32.mxu0 0.0
    %4491 = vmatmul.mubr.f32.gmra.mrb[0].mxu0 %v4414
    %v4492 = vpop.f32.mrb[0].mxu0
    %v4493 = vadd.f32 0.0, %v4492
    %v4494 = vpop.f32.mrb[0].mxu0
    %4495 = vmatprep.mubr.f32.mxu0 0.0
    %4496 = vmatmul.mubr.f32.gmra.mrb[0].mxu0 %v4416
    %v4497 = vpop.f32.mrb[0].mxu0
    %v4498 = vadd.f32 0.0, %v4497
    %v4499 = vpop.f32.mrb[0].mxu0
    %4500 = vmatprep.mubr.f32.mxu0 0.0
    %4501 = vmatmul.mubr.f32.gmra.mrb[0].mxu0 %v4418
    %v4502 = vpop.f32.mrb[0].mxu0
    %v4503 = vadd.f32 0.0, %v4502
    %v4504 = vpop.f32.mrb[0].mxu0
    %4505 = vdwg.mxu0
    %v4506 = vmul.f32 %v4493, 0.35355338
    %v4507 = vmul.f32 %v4498, 0.35355338
    %v4508 = vmul.f32 %v4503, 0.35355338
    %v4509 = vsel %vm400, %v4506, -inf
    %4510 = vmax.xlane.f32.xlu0 %v4509
    %v4511 = vpop.xlane.xlu0 %4510
    %v4512 = vsel %vm400, %v4507, -inf
    %4513 = vmax.xlane.f32.xlu0 %v4512
    %v4514 = vpop.xlane.xlu0 %4513
    %v4515 = vsel %vm407, %v4508, -inf
    %4516 = vmax.xlane.f32.xlu0 %v4515
    %v4517 = vpop.xlane.xlu0 %4516
    %v4518 = vsub.f32 %v4506, %v4511
    %v4519 = vsub.f32 %v4507, %v4514
    %v4520 = vsub.f32 %v4508, %v4517
    %v4521 = vmul.f32 %v4518, 1.442695
    %v4522 = vpow.pop %v4521
    %v4523 = vmul.f32 %v4519, 1.442695
    %v4524 = vpow.pop %v4523
    %v4525 = vmul.f32 %v4520, 1.442695
    %v4526 = vpow.pop %v4525
    %v4527 = vsel %vm400, %v4522, 0.0
    %4528 = vadd.xlane.f32.xlu0 %v4527
    %v4529 = vpop.xlane.xlu0 %4528
    %v4530 = vsel %vm400, %v4524, 0.0
    %4531 = vadd.xlane.f32.xlu0 %v4530
    %v4532 = vpop.xlane.xlu0 %4531
    %v4533 = vsel %vm407, %v4526, 0.0
    %4534 = vadd.xlane.f32.xlu0 %v4533
    %v4535 = vpop.xlane.xlu0 %4534
    %v4536 = vrcp.pop %v4529
    %v4537 = vrcp.pop %v4532
    %v4538 = vrcp.pop %v4535
    %v4539 = vmul.f32 %v4522, %v4536
    %v4540 = vmul.f32 %v4524, %v4537
    %v4541 = vmul.f32 %v4526, %v4538
    %v4542 = vmax.f32 %v4300, %v4539
    %v4543 = vmax.f32 %v4301, %v4540
    %v4544 = vmax.f32 %v4302, %v4541
    %4545 = vrot.lane.b32.xlu0 %v3911, 64
    %v4546 = vpop.permute.xlu0 %4545
    %4547 = vrot.lane.b32.xlu0 %v3916, 64
    %v4548 = vpop.permute.xlu0 %4547
    %4549 = vrot.lane.b32.xlu0 %v3921, 64
    %v4550 = vpop.permute.xlu0 %4549
    %v4554 = vsel %vm400, %v4539, 0
    %v4557 = vsel %vm400, %v4540, 0
    %v4560 = vsel %vm400, %v4541, 0
    %v4562 = vsel %vm163, %v4550, 0
    %4564 = vmatprep.subr.mxu0 0.0
    %4565 = vmatpush1.msra.mxu0 %v4546
    %4566 = vmatprep.subr.mxu0 0.0
    %4567 = vmatpush1.msra.mxu0 %v4548
    %4568 = vmatprep.subr.mxu0 0.0
    %4569 = vmatpush1.msra.mxu0 %v4562
    %4570 = vmatprep.subr.mxu0 0.0
    %4571 = vmatpush1.msra.mxu0 0.0
    %4572 = vmatprep.subr.mxu0 0.0
    %4573 = vmatpush1.msra.mxu0 0.0
    %4574 = vmatprep.subr.mxu0 0.0
    %4575 = vmatpush1.msra.mxu0 0.0
    %4576 = vmatprep.subr.mxu0 0.0
    %4577 = vmatpush1.msra.mxu0 0.0
    %4578 = vmatprep.subr.mxu0 0.0
    %4579 = vmatpush1.msra.mxu0 0.0
    %4580 = vmatprep.subr.mxu0 0.0
    %4581 = vmatpush1.msra.mxu0 0.0
    %4582 = vmatprep.subr.mxu0 0.0
    %4583 = vmatpush1.msra.mxu0 0.0
    %4584 = vmatprep.subr.mxu0 0.0
    %4585 = vmatpush1.msra.mxu0 0.0
    %4586 = vmatprep.subr.mxu0 0.0
    %4587 = vmatpush1.msra.mxu0 0.0
    %4588 = vmatprep.subr.mxu0 0.0
    %4589 = vmatpush1.msra.mxu0 0.0
    %4590 = vmatprep.subr.mxu0 0.0
    %4591 = vmatpush1.msra.mxu0 0.0
    %4592 = vmatprep.subr.mxu0 0.0
    %4593 = vmatpush1.msra.mxu0 0.0
    %4594 = vmatprep.subr.mxu0 0.0
    %4595 = vmatpush1.msra.mxu0 0.0
    %4596 = vmatprep.subr.mxu0 0.0
    %4597 = vmatpush1.msra.mxu0 0.0
    %4598 = vmatprep.subr.mxu0 0.0
    %4599 = vmatpush1.msra.mxu0 0.0
    %4600 = vmatprep.subr.mxu0 0.0
    %4601 = vmatpush1.msra.mxu0 0.0
    %4602 = vmatprep.subr.mxu0 0.0
    %4603 = vmatpush1.msra.mxu0 0.0
    %4604 = vmatprep.subr.mxu0 0.0
    %4605 = vmatpush1.msra.mxu0 0.0
    %4606 = vmatprep.subr.mxu0 0.0
    %4607 = vmatpush1.msra.mxu0 0.0
    %4608 = vmatprep.subr.mxu0 0.0
    %4609 = vmatpush1.msra.mxu0 0.0
    %4610 = vmatprep.subr.mxu0 0.0
    %4611 = vmatpush1.msra.mxu0 0.0
    %4612 = vmatprep.subr.mxu0 0.0
    %4613 = vmatpush1.msra.mxu0 0.0
    %4614 = vmatprep.subr.mxu0 0.0
    %4615 = vmatpush1.msra.mxu0 0.0
    %4616 = vmatprep.subr.mxu0 0.0
    %4617 = vmatpush1.msra.mxu0 0.0
    %4618 = vmatprep.subr.mxu0 0.0
    %4619 = vmatpush1.msra.mxu0 0.0
    %4620 = vmatprep.subr.mxu0 0.0
    %4621 = vmatpush1.msra.mxu0 0.0
    %4622 = vmatprep.subr.mxu0 0.0
    %4623 = vmatpush1.msra.mxu0 0.0
    %4624 = vmatprep.subr.mxu0 0.0
    %4625 = vmatpush1.msra.mxu0 0.0
    %4626 = vmatprep.subr.mxu0 0.0
    %4627 = vmatpush1.msra.mxu0 0.0
    %4628 = vmatprep.mubr.f32.mxu0 0.0
    %4629 = vmatmul.mubr.f32.gmra.mrb[0].mxu0 %v4554
    %v4630 = vpop.f32.mrb[0].mxu0
    %v4631 = vadd.f32 0.0, %v4630
    %v4632 = vpop.f32.mrb[0].mxu0
    %4633 = vmatprep.mubr.f32.mxu0 0.0
    %4634 = vmatmul.mubr.f32.gmra.mrb[0].mxu0 %v4557
    %v4635 = vpop.f32.mrb[0].mxu0
    %v4636 = vadd.f32 0.0, %v4635
    %v4637 = vpop.f32.mrb[0].mxu0
    %4638 = vmatprep.mubr.f32.mxu0 0.0
    %4639 = vmatmul.mubr.f32.gmra.mrb[0].mxu0 %v4560
    %v4640 = vpop.f32.mrb[0].mxu0
    %v4641 = vadd.f32 0.0, %v4640
    %v4642 = vpop.f32.mrb[0].mxu0
    %4643 = vdwg.mxu0
    %4644 = vrot.lane.b32.xlu0 %v3911, 56
    %v4645 = vpop.permute.xlu0 %4644
    %4646 = vrot.lane.b32.xlu0 %v3916, 56
    %v4647 = vpop.permute.xlu0 %4646
    %4648 = vrot.lane.b32.xlu0 %v3921, 56
    %v4649 = vpop.permute.xlu0 %4648
    %4650 = vrot.lane.b32.xlu0 %v3911, 48
    %v4651 = vpop.permute.xlu0 %4650
    %4652 = vrot.lane.b32.xlu0 %v3916, 48
    %v4653 = vpop.permute.xlu0 %4652
    %4654 = vrot.lane.b32.xlu0 %v3921, 48
    %v4655 = vpop.permute.xlu0 %4654
    %v4656 = vsel %vm304, %v4645, 0
    %v4658 = vsel %vm304, %v4647, 0
    %v4660 = vsel %vm304, %v4649, 0
    %v4662 = vsel %vm304, %v4651, 0
    %v4664 = vsel %vm304, %v4653, 0
    %v4666 = vsel %vm304, %v4655, 0
    %4668 = vmatprep.subr.mxu0 0.0
    %4669 = vmatpush1.xpose.msra.mxu0 %v4662
    %4670 = vmatprep.subr.mxu0 0.0
    %4671 = vmatpush1.xpose.msra.mxu0 %v4664
    %4672 = vmatprep.subr.mxu0 0.0
    %4673 = vmatpush1.xpose.msra.mxu0 %v4666
    %4674 = vmatprep.subr.mxu0 0.0
    %4675 = vmatpush1.xpose.msra.mxu0 0.0
    %4676 = vmatprep.subr.mxu0 0.0
    %4677 = vmatpush1.xpose.msra.mxu0 0.0
    %4678 = vmatprep.subr.mxu0 0.0
    %4679 = vmatpush1.xpose.msra.mxu0 0.0
    %4680 = vmatprep.subr.mxu0 0.0
    %4681 = vmatpush1.xpose.msra.mxu0 0.0
    %4682 = vmatprep.subr.mxu0 0.0
    %4683 = vmatpush1.xpose.msra.mxu0 0.0
    %4684 = vmatprep.subr.mxu0 0.0
    %4685 = vmatpush1.xpose.msra.mxu0 0.0
    %4686 = vmatprep.subr.mxu0 0.0
    %4687 = vmatpush1.xpose.msra.mxu0 0.0
    %4688 = vmatprep.subr.mxu0 0.0
    %4689 = vmatpush1.xpose.msra.mxu0 0.0
    %4690 = vmatprep.subr.mxu0 0.0
    %4691 = vmatpush1.xpose.msra.mxu0 0.0
    %4692 = vmatprep.subr.mxu0 0.0
    %4693 = vmatpush1.xpose.msra.mxu0 0.0
    %4694 = vmatprep.subr.mxu0 0.0
    %4695 = vmatpush1.xpose.msra.mxu0 0.0
    %4696 = vmatprep.subr.mxu0 0.0
    %4697 = vmatpush1.xpose.msra.mxu0 0.0
    %4698 = vmatprep.subr.mxu0 0.0
    %4699 = vmatpush1.xpose.msra.mxu0 0.0
    %4700 = vmatprep.subr.mxu0 0.0
    %4701 = vmatpush1.xpose.msra.mxu0 0.0
    %4702 = vmatprep.subr.mxu0 0.0
    %4703 = vmatpush1.xpose.msra.mxu0 0.0
    %4704 = vmatprep.subr.mxu0 0.0
    %4705 = vmatpush1.xpose.msra.mxu0 0.0
    %4706 = vmatprep.subr.mxu0 0.0
    %4707 = vmatpush1.xpose.msra.mxu0 0.0
    %4708 = vmatprep.subr.mxu0 0.0
    %4709 = vmatpush1.xpose.msra.mxu0 0.0
    %4710 = vmatprep.subr.mxu0 0.0
    %4711 = vmatpush1.xpose.msra.mxu0 0.0
    %4712 = vmatprep.subr.mxu0 0.0
    %4713 = vmatpush1.xpose.msra.mxu0 0.0
    %4714 = vmatprep.subr.mxu0 0.0
    %4715 = vmatpush1.xpose.msra.mxu0 0.0
    %4716 = vmatprep.subr.mxu0 0.0
    %4717 = vmatpush1.xpose.msra.mxu0 0.0
    %4718 = vmatprep.subr.mxu0 0.0
    %4719 = vmatpush1.xpose.msra.mxu0 0.0
    %4720 = vmatprep.subr.mxu0 0.0
    %4721 = vmatpush1.xpose.msra.mxu0 0.0
    %4722 = vmatprep.subr.mxu0 0.0
    %4723 = vmatpush1.xpose.msra.mxu0 0.0
    %4724 = vmatprep.subr.mxu0 0.0
    %4725 = vmatpush1.xpose.msra.mxu0 0.0
    %4726 = vmatprep.subr.mxu0 0.0
    %4727 = vmatpush1.xpose.msra.mxu0 0.0
    %4728 = vmatprep.subr.mxu0 0.0
    %4729 = vmatpush1.xpose.msra.mxu0 0.0
    %4730 = vmatprep.subr.mxu0 0.0
    %4731 = vmatpush1.xpose.msra.mxu0 0.0
    %4732 = vmatprep.mubr.f32.mxu0 0.0
    %4733 = vmatmul.mubr.f32.gmra.mrb[0].mxu0 %v4656
    %v4734 = vpop.f32.mrb[0].mxu0
    %v4735 = vadd.f32 0.0, %v4734
    %v4736 = vpop.f32.mrb[0].mxu0
    %4737 = vmatprep.mubr.f32.mxu0 0.0
    %4738 = vmatmul.mubr.f32.gmra.mrb[0].mxu0 %v4658
    %v4739 = vpop.f32.mrb[0].mxu0
    %v4740 = vadd.f32 0.0, %v4739
    %v4741 = vpop.f32.mrb[0].mxu0
    %4742 = vmatprep.mubr.f32.mxu0 0.0
    %4743 = vmatmul.mubr.f32.gmra.mrb[0].mxu0 %v4660
    %v4744 = vpop.f32.mrb[0].mxu0
    %v4745 = vadd.f32 0.0, %v4744
    %v4746 = vpop.f32.mrb[0].mxu0
    %4747 = vdwg.mxu0
    %v4748 = vmul.f32 %v4735, 0.35355338
    %v4749 = vmul.f32 %v4740, 0.35355338
    %v4750 = vmul.f32 %v4745, 0.35355338
    %v4751 = vsel %vm400, %v4748, -inf
    %4752 = vmax.xlane.f32.xlu0 %v4751
    %v4753 = vpop.xlane.xlu0 %4752
    %v4754 = vsel %vm400, %v4749, -inf
    %4755 = vmax.xlane.f32.xlu0 %v4754
    %v4756 = vpop.xlane.xlu0 %4755
    %v4757 = vsel %vm407, %v4750, -inf
    %4758 = vmax.xlane.f32.xlu0 %v4757
    %v4759 = vpop.xlane.xlu0 %4758
    %v4760 = vsub.f32 %v4748, %v4753
    %v4761 = vsub.f32 %v4749, %v4756
    %v4762 = vsub.f32 %v4750, %v4759
    %v4763 = vmul.f32 %v4760, 1.442695
    %v4764 = vpow.pop %v4763
    %v4765 = vmul.f32 %v4761, 1.442695
    %v4766 = vpow.pop %v4765
    %v4767 = vmul.f32 %v4762, 1.442695
    %v4768 = vpow.pop %v4767
    %v4769 = vsel %vm400, %v4764, 0.0
    %4770 = vadd.xlane.f32.xlu0 %v4769
    %v4771 = vpop.xlane.xlu0 %4770
    %v4772 = vsel %vm400, %v4766, 0.0
    %4773 = vadd.xlane.f32.xlu0 %v4772
    %v4774 = vpop.xlane.xlu0 %4773
    %v4775 = vsel %vm407, %v4768, 0.0
    %4776 = vadd.xlane.f32.xlu0 %v4775
    %v4777 = vpop.xlane.xlu0 %4776
    %v4778 = vrcp.pop %v4771
    %v4779 = vrcp.pop %v4774
    %v4780 = vrcp.pop %v4777
    %v4781 = vmul.f32 %v4764, %v4778
    %v4782 = vmul.f32 %v4766, %v4779
    %v4783 = vmul.f32 %v4768, %v4780
    %v4784 = vmax.f32 %v4542, %v4781
    %v4785 = vmax.f32 %v4543, %v4782
    %v4786 = vmax.f32 %v4544, %v4783
    %4787 = vrot.lane.b32.xlu0 %v3911, 40
    %v4788 = vpop.permute.xlu0 %4787
    %4789 = vrot.lane.b32.xlu0 %v3916, 40
    %v4790 = vpop.permute.xlu0 %4789
    %4791 = vrot.lane.b32.xlu0 %v3921, 40
    %v4792 = vpop.permute.xlu0 %4791
    %v4796 = vsel %vm400, %v4781, 0
    %v4799 = vsel %vm400, %v4782, 0
    %v4802 = vsel %vm400, %v4783, 0
    %v4804 = vsel %vm163, %v4792, 0
    %4806 = vmatprep.subr.mxu0 0.0
    %4807 = vmatpush1.msra.mxu0 %v4788
    %4808 = vmatprep.subr.mxu0 0.0
    %4809 = vmatpush1.msra.mxu0 %v4790
    %4810 = vmatprep.subr.mxu0 0.0
    %4811 = vmatpush1.msra.mxu0 %v4804
    %4812 = vmatprep.subr.mxu0 0.0
    %4813 = vmatpush1.msra.mxu0 0.0
    %4814 = vmatprep.subr.mxu0 0.0
    %4815 = vmatpush1.msra.mxu0 0.0
    %4816 = vmatprep.subr.mxu0 0.0
    %4817 = vmatpush1.msra.mxu0 0.0
    %4818 = vmatprep.subr.mxu0 0.0
    %4819 = vmatpush1.msra.mxu0 0.0
    %4820 = vmatprep.subr.mxu0 0.0
    %4821 = vmatpush1.msra.mxu0 0.0
    %4822 = vmatprep.subr.mxu0 0.0
    %4823 = vmatpush1.msra.mxu0 0.0
    %4824 = vmatprep.subr.mxu0 0.0
    %4825 = vmatpush1.msra.mxu0 0.0
    %4826 = vmatprep.subr.mxu0 0.0
    %4827 = vmatpush1.msra.mxu0 0.0
    %4828 = vmatprep.subr.mxu0 0.0
    %4829 = vmatpush1.msra.mxu0 0.0
    %4830 = vmatprep.subr.mxu0 0.0
    %4831 = vmatpush1.msra.mxu0 0.0
    %4832 = vmatprep.subr.mxu0 0.0
    %4833 = vmatpush1.msra.mxu0 0.0
    %4834 = vmatprep.subr.mxu0 0.0
    %4835 = vmatpush1.msra.mxu0 0.0
    %4836 = vmatprep.subr.mxu0 0.0
    %4837 = vmatpush1.msra.mxu0 0.0
    %4838 = vmatprep.subr.mxu0 0.0
    %4839 = vmatpush1.msra.mxu0 0.0
    %4840 = vmatprep.subr.mxu0 0.0
    %4841 = vmatpush1.msra.mxu0 0.0
    %4842 = vmatprep.subr.mxu0 0.0
    %4843 = vmatpush1.msra.mxu0 0.0
    %4844 = vmatprep.subr.mxu0 0.0
    %4845 = vmatpush1.msra.mxu0 0.0
    %4846 = vmatprep.subr.mxu0 0.0
    %4847 = vmatpush1.msra.mxu0 0.0
    %4848 = vmatprep.subr.mxu0 0.0
    %4849 = vmatpush1.msra.mxu0 0.0
    %4850 = vmatprep.subr.mxu0 0.0
    %4851 = vmatpush1.msra.mxu0 0.0
    %4852 = vmatprep.subr.mxu0 0.0
    %4853 = vmatpush1.msra.mxu0 0.0
    %4854 = vmatprep.subr.mxu0 0.0
    %4855 = vmatpush1.msra.mxu0 0.0
    %4856 = vmatprep.subr.mxu0 0.0
    %4857 = vmatpush1.msra.mxu0 0.0
    %4858 = vmatprep.subr.mxu0 0.0
    %4859 = vmatpush1.msra.mxu0 0.0
    %4860 = vmatprep.subr.mxu0 0.0
    %4861 = vmatpush1.msra.mxu0 0.0
    %4862 = vmatprep.subr.mxu0 0.0
    %4863 = vmatpush1.msra.mxu0 0.0
    %4864 = vmatprep.subr.mxu0 0.0
    %4865 = vmatpush1.msra.mxu0 0.0
    %4866 = vmatprep.subr.mxu0 0.0
    %4867 = vmatpush1.msra.mxu0 0.0
    %4868 = vmatprep.subr.mxu0 0.0
    %4869 = vmatpush1.msra.mxu0 0.0
    %4870 = vmatprep.mubr.f32.mxu0 0.0
    %4871 = vmatmul.mubr.f32.gmra.mrb[0].mxu0 %v4796
    %v4872 = vpop.f32.mrb[0].mxu0
    %v4873 = vadd.f32 0.0, %v4872
    %v4874 = vpop.f32.mrb[0].mxu0
    %4875 = vmatprep.mubr.f32.mxu0 0.0
    %4876 = vmatmul.mubr.f32.gmra.mrb[0].mxu0 %v4799
    %v4877 = vpop.f32.mrb[0].mxu0
    %v4878 = vadd.f32 0.0, %v4877
    %v4879 = vpop.f32.mrb[0].mxu0
    %4880 = vmatprep.mubr.f32.mxu0 0.0
    %4881 = vmatmul.mubr.f32.gmra.mrb[0].mxu0 %v4802
    %v4882 = vpop.f32.mrb[0].mxu0
    %v4883 = vadd.f32 0.0, %v4882
    %v4884 = vpop.f32.mrb[0].mxu0
    %4885 = vdwg.mxu0
    %s4886 = scalar_lea.vmem %s6, 72
    %4887 = vst.msk [vmem:[%s4886] sm:$0xff] %vm400, %v4784
    %4888 = vst.msk [vmem:[%s4886 + $0x8] sm:$0xff] %vm400, %v4785
    %4889 = vst.msk [vmem:[%s4886 + $0x10] sm:$0x1] %vm407, %v4786
    %4893 = vrot.lane.b32.xlu0 %v4389, 8
    %v4894 = vpop.permute.xlu0 %4893
    %4895 = vrot.lane.b32.xlu0 %v4394, 8
    %v4896 = vpop.permute.xlu0 %4895
    %4897 = vrot.lane.b32.xlu0 %v4399, 8
    %v4898 = vpop.permute.xlu0 %4897
    %4905 = vrot.lane.b32.xlu0 %v4631, 16
    %v4906 = vpop.permute.xlu0 %4905
    %4907 = vrot.lane.b32.xlu0 %v4636, 16
    %v4908 = vpop.permute.xlu0 %4907
    %4909 = vrot.lane.b32.xlu0 %v4641, 16
    %v4910 = vpop.permute.xlu0 %4909
    %4917 = vrot.lane.b32.xlu0 %v4873, 24
    %v4918 = vpop.permute.xlu0 %4917
    %4919 = vrot.lane.b32.xlu0 %v4878, 24
    %v4920 = vpop.permute.xlu0 %4919
    %4921 = vrot.lane.b32.xlu0 %v4883, 24
    %v4922 = vpop.permute.xlu0 %4921
    %v4926 = vsel %vm304, %v4147, %v4894
    %v4927 = vsel %vm304, %v4152, %v4896
    %v4928 = vsel %vm304, %v4157, %v4898
    %v4929 = vsel %vm1302, %v4926, %v4906
    %v4930 = vsel %vm1302, %v4927, %v4908
    %v4931 = vsel %vm1302, %v4928, %v4910
    %v4932 = vsel %vm1306, %v4929, %v4918
    %v4933 = vsel %vm1306, %v4930, %v4920
    %v4934 = vsel %vm1306, %v4931, %v4922
    %v4936 = vsel %vm171, %v4932, 0
    %v4939 = vsel %vm171, %v4933, 0
    %v4942 = vsel %vm171, %v4934, 0
    %4944 = vmatprep.subr.mxu0 0.0
    %4945 = vmatpush1.msra.mxu0 %v2619
    %4946 = vmatprep.subr.mxu0 0.0
    %4947 = vmatpush1.msra.mxu0 %v2620
    %4948 = vmatprep.subr.mxu0 0.0
    %4949 = vmatpush1.msra.mxu0 %v2621
    %4950 = vmatprep.subr.mxu0 0.0
    %4951 = vmatpush1.msra.mxu0 %v2622
    %4952 = vmatprep.subr.mxu0 0.0
    %4953 = vmatpush1.msra.mxu0 0.0
    %4954 = vmatprep.subr.mxu0 0.0
    %4955 = vmatpush1.msra.mxu0 0.0
    %4956 = vmatprep.subr.mxu0 0.0
    %4957 = vmatpush1.msra.mxu0 0.0
    %4958 = vmatprep.subr.mxu0 0.0
    %4959 = vmatpush1.msra.mxu0 0.0
    %4960 = vmatprep.subr.mxu0 0.0
    %4961 = vmatpush1.msra.mxu0 0.0
    %4962 = vmatprep.subr.mxu0 0.0
    %4963 = vmatpush1.msra.mxu0 0.0
    %4964 = vmatprep.subr.mxu0 0.0
    %4965 = vmatpush1.msra.mxu0 0.0
    %4966 = vmatprep.subr.mxu0 0.0
    %4967 = vmatpush1.msra.mxu0 0.0
    %4968 = vmatprep.subr.mxu0 0.0
    %4969 = vmatpush1.msra.mxu0 0.0
    %4970 = vmatprep.subr.mxu0 0.0
    %4971 = vmatpush1.msra.mxu0 0.0
    %4972 = vmatprep.subr.mxu0 0.0
    %4973 = vmatpush1.msra.mxu0 0.0
    %4974 = vmatprep.subr.mxu0 0.0
    %4975 = vmatpush1.msra.mxu0 0.0
    %4976 = vmatprep.subr.mxu0 0.0
    %4977 = vmatpush1.msra.mxu0 0.0
    %4978 = vmatprep.subr.mxu0 0.0
    %4979 = vmatpush1.msra.mxu0 0.0
    %4980 = vmatprep.subr.mxu0 0.0
    %4981 = vmatpush1.msra.mxu0 0.0
    %4982 = vmatprep.subr.mxu0 0.0
    %4983 = vmatpush1.msra.mxu0 0.0
    %4984 = vmatprep.subr.mxu0 0.0
    %4985 = vmatpush1.msra.mxu0 0.0
    %4986 = vmatprep.subr.mxu0 0.0
    %4987 = vmatpush1.msra.mxu0 0.0
    %4988 = vmatprep.subr.mxu0 0.0
    %4989 = vmatpush1.msra.mxu0 0.0
    %4990 = vmatprep.subr.mxu0 0.0
    %4991 = vmatpush1.msra.mxu0 0.0
    %4992 = vmatprep.subr.mxu0 0.0
    %4993 = vmatpush1.msra.mxu0 0.0
    %4994 = vmatprep.subr.mxu0 0.0
    %4995 = vmatpush1.msra.mxu0 0.0
    %4996 = vmatprep.subr.mxu0 0.0
    %4997 = vmatpush1.msra.mxu0 0.0
    %4998 = vmatprep.subr.mxu0 0.0
    %4999 = vmatpush1.msra.mxu0 0.0
    %5000 = vmatprep.subr.mxu0 0.0
    %5001 = vmatpush1.msra.mxu0 0.0
    %5002 = vmatprep.subr.mxu0 0.0
    %5003 = vmatpush1.msra.mxu0 0.0
    %5004 = vmatprep.subr.mxu0 0.0
    %5005 = vmatpush1.msra.mxu0 0.0
    %5006 = vmatprep.subr.mxu0 0.0
    %5007 = vmatpush1.msra.mxu0 0.0
    %5008 = vmatprep.mubr.f32.mxu0 0.0
    %5009 = vmatmul.mubr.f32.gmra.mrb[0].mxu0 %v4936
    %v5010 = vpop.f32.mrb[0].mxu0
    %v5011 = vadd.f32 0.0, %v5010
    %v5012 = vpop.f32.mrb[0].mxu0
    %5013 = vmatprep.mubr.f32.mxu0 0.0
    %5014 = vmatmul.mubr.f32.gmra.mrb[0].mxu0 %v4939
    %v5015 = vpop.f32.mrb[0].mxu0
    %v5016 = vadd.f32 0.0, %v5015
    %v5017 = vpop.f32.mrb[0].mxu0
    %5018 = vmatprep.mubr.f32.mxu0 0.0
    %5019 = vmatmul.mubr.f32.gmra.mrb[0].mxu0 %v4942
    %v5020 = vpop.f32.mrb[0].mxu0
    %v5021 = vadd.f32 0.0, %v5020
    %v5022 = vpop.f32.mrb[0].mxu0
    %5023 = vdwg.mxu0
    %v5024 = vadd.f32 %v3832, %v5011
    %v5025 = vadd.f32 %v3833, %v5016
    %v5026 = vadd.f32 %v3834, %v5021
    %v5027 = vadd.f32 %v5024, %v3825
    %v5028 = vadd.f32 %v5025, %v3825
    %v5029 = vadd.f32 %v5026, %v3825
    %5030 = vst.msk [vmem:[%s187] sm:$0xff] %vm171, %v5027
    %5031 = vst.msk [vmem:[%s187 + $0x8] sm:$0xff] %vm171, %v5028
    %5032 = vst.msk [vmem:[%s187 + $0x10] sm:$0x1] %vm174, %v5029
    %v5033 = vld [vmem:[#allocation2] sm:$0xff]
    %v5034 = vld [vmem:[%s187] sm:$0xff]
    %v5036 = vrot.slane %v5034, 7
    %v5038 = vsel %vm163, %v5033, %v5036
    %v5039 = vlaneseq
    %v5040 = vshrl.u32 %v5039, 7
    %v5041 = vsub.s32 7, %v5040
    %v5042 = vrot.slane %v25, %v5041
    %v5044 = vsel %vm171, %v5038, 0
    %5046 = vmatprep.subr.mxu0 0.0
    %5047 = vmatpush1.msra.mxu0 %v26
    %5048 = vmatprep.subr.mxu0 0.0
    %5049 = vmatpush1.msra.mxu0 %v27
    %5050 = vmatprep.subr.mxu0 0.0
    %5051 = vmatpush1.msra.mxu0 %v28
    %5052 = vmatprep.subr.mxu0 0.0
    %5053 = vmatpush1.msra.mxu0 %v29
    %5054 = vmatprep.subr.mxu0 0.0
    %5055 = vmatpush1.msra.mxu0 0.0
    %5056 = vmatprep.subr.mxu0 0.0
    %5057 = vmatpush1.msra.mxu0 0.0
    %5058 = vmatprep.subr.mxu0 0.0
    %5059 = vmatpush1.msra.mxu0 0.0
    %5060 = vmatprep.subr.mxu0 0.0
    %5061 = vmatpush1.msra.mxu0 0.0
    %5062 = vmatprep.subr.mxu0 0.0
    %5063 = vmatpush1.msra.mxu0 0.0
    %5064 = vmatprep.subr.mxu0 0.0
    %5065 = vmatpush1.msra.mxu0 0.0
    %5066 = vmatprep.subr.mxu0 0.0
    %5067 = vmatpush1.msra.mxu0 0.0
    %5068 = vmatprep.subr.mxu0 0.0
    %5069 = vmatpush1.msra.mxu0 0.0
    %5070 = vmatprep.subr.mxu0 0.0
    %5071 = vmatpush1.msra.mxu0 0.0
    %5072 = vmatprep.subr.mxu0 0.0
    %5073 = vmatpush1.msra.mxu0 0.0
    %5074 = vmatprep.subr.mxu0 0.0
    %5075 = vmatpush1.msra.mxu0 0.0
    %5076 = vmatprep.subr.mxu0 0.0
    %5077 = vmatpush1.msra.mxu0 0.0
    %5078 = vmatprep.subr.mxu0 0.0
    %5079 = vmatpush1.msra.mxu0 0.0
    %5080 = vmatprep.subr.mxu0 0.0
    %5081 = vmatpush1.msra.mxu0 0.0
    %5082 = vmatprep.subr.mxu0 0.0
    %5083 = vmatpush1.msra.mxu0 0.0
    %5084 = vmatprep.subr.mxu0 0.0
    %5085 = vmatpush1.msra.mxu0 0.0
    %5086 = vmatprep.subr.mxu0 0.0
    %5087 = vmatpush1.msra.mxu0 0.0
    %5088 = vmatprep.subr.mxu0 0.0
    %5089 = vmatpush1.msra.mxu0 0.0
    %5090 = vmatprep.subr.mxu0 0.0
    %5091 = vmatpush1.msra.mxu0 0.0
    %5092 = vmatprep.subr.mxu0 0.0
    %5093 = vmatpush1.msra.mxu0 0.0
    %5094 = vmatprep.subr.mxu0 0.0
    %5095 = vmatpush1.msra.mxu0 0.0
    %5096 = vmatprep.subr.mxu0 0.0
    %5097 = vmatpush1.msra.mxu0 0.0
    %5098 = vmatprep.subr.mxu0 0.0
    %5099 = vmatpush1.msra.mxu0 0.0
    %5100 = vmatprep.subr.mxu0 0.0
    %5101 = vmatpush1.msra.mxu0 0.0
    %5102 = vmatprep.subr.mxu0 0.0
    %5103 = vmatpush1.msra.mxu0 0.0
    %5104 = vmatprep.subr.mxu0 0.0
    %5105 = vmatpush1.msra.mxu0 0.0
    %5106 = vmatprep.subr.mxu0 0.0
    %5107 = vmatpush1.msra.mxu0 0.0
    %5108 = vmatprep.subr.mxu0 0.0
    %5109 = vmatpush1.msra.mxu0 0.0
    %5110 = vmatprep.mubr.f32.mxu0 0.0
    %5111 = vmatmul.mubr.f32.gmra.mrb[0].mxu0 %v5044
    %v5112 = vpop.f32.mrb[0].mxu0
    %v5113 = vadd.f32 %v5042, %v5112
    %v5114 = vpop.f32.mrb[0].mxu0
    %5115 = vdwg.mxu0
    %vm5116 = vcmask 74752
    %5117 = vst.msk [vmem:[#allocation3] sm:$0x3] %vm5116, %v5113
    // Predicated region
    $region22: #{recorder_forward.2} parent=1 // pred_check
      _
    $region23: #{recorder_forward.2} parent=1 // pred_check_branch
      %5119 = sbr.rel (0) target = $region25
    $region24: #{recorder_forward.2} parent=1 // pred_region
      %s5121 = ssub.s32 32, 32
      %5122 = vsyncadd [#allocation4], %s5121
      %s5124 = sshll.u32 [#allocation3], 4
      %s5125 = int_to_ptr.vmem [resolvable:$true] %s5124
      %5127 = dma.vmem_to_hbm [thread:$0]  %s5125, 32, %s5, [#allocation4]
    $region25: #{recorder_forward.2} parent=1 // pred_fallthru
      _
    // Predicated region
    $region26: #{recorder_forward.2} parent=1 // pred_check
      _
    $region27: #{recorder_forward.2} parent=1 // pred_check_branch
      %5129 = sbr.rel (0) target = $region29
    $region28: #{recorder_forward.2} parent=1 // pred_region
      _
    $region29: #{recorder_forward.2} parent=1 // pred_fallthru
      _
    // Predicated region
    $region30: #{recorder_forward.2} parent=1 // pred_check
      _
    $region31: #{recorder_forward.2} parent=1 // pred_check_branch
      %5131 = sbr.rel (0) target = $region33
    $region32: #{recorder_forward.2} parent=1 // pred_region
      %5132 = dma.done [#allocation4], 32
    $region33: #{recorder_forward.2} parent=1 // pred_fallthru
      _
    // Predicated region
    $region34: #{recorder_forward.2} parent=1 // pred_check
      _
    $region35: #{recorder_forward.2} parent=1 // pred_check_branch
      %5134 = sbr.rel (0) target = $region37
    $region36: #{recorder_forward.2} parent=1 // pred_region
      _
    $region37: #{recorder_forward.2} parent=1 // pred_fallthru
      _
    %5135 = vsyncpa [#allocation4], 1

</llo_original>
